<compile_context>
chip_gen: v7x
topology: tpu7x:2x2x1
jax: 0.10.0
libtpu: 0.0.40
codegen_flags: <defaults>
</compile_context>

<pallas_src>
import jax
import jax.numpy as jnp
from jax.experimental import pallas as pl
from jax.experimental.pallas import tpu as pltpu

# ---------------- small synthetic mT5 config ----------------
VOCAB = 64
D_MODEL = 32
D_KV = 8
N_HEADS = 4          # inner dim = N_HEADS * D_KV = 32
HD = N_HEADS * D_KV
D_FF = 64
N_LAYERS = 2         # encoder layers == decoder layers
REL_BUCKETS = 8
REL_MAX_DIST = 16
EPS = 1e-6
PAD_ID = 0
DEC_START_ID = 0     # decoder_start_token_id


# ============================ in-kernel helpers ============================

def _rms(x, w):
    # T5LayerNorm: x * rsqrt(mean(x^2) + eps) * w  (no mean subtraction/bias)
    xf = x.astype(jnp.float32)
    var = jnp.mean(xf * xf, axis=-1, keepdims=True)
    return xf * jax.lax.rsqrt(var + EPS) * w


def _attention(q, k, v, bias, wo, residual):
    """T5 attention (NO 1/sqrt(d) scaling) + fused output projection + residual.

    q: (Tq, H*dk) f32, k/v: (Tk, H*dk) f32, bias: (H, Tq, Tk) f32 or None,
    wo: (H*dk, D) bf16, residual: (Tq, D) f32.
    Per-head scores/softmax/context via a static loop; the head contexts are
    concatenated (lane-contiguous) and projected with ONE (Tq,HD)@(HD,D)
    matmul followed by a single residual add.
    """
    ctx = []
    for h in range(N_HEADS):
        lo, hi = h * D_KV, (h + 1) * D_KV
        qh = q[:, lo:hi].astype(jnp.bfloat16)
        kh = k[:, lo:hi].astype(jnp.bfloat16)
        vh = v[:, lo:hi].astype(jnp.bfloat16)
        # scores = q @ k^T  (contraction on the head dim of both)
        s = jax.lax.dot_general(qh, kh, (((1,), (1,)), ((), ())),
                                preferred_element_type=jnp.float32)
        if bias is not None:
            s = s + bias[h]
        # softmax in f32, EUP reciprocal for the denominator
        s = s - jnp.max(s, axis=-1, keepdims=True)
        p = jnp.exp(s)
        p = p * pl.reciprocal(jnp.sum(p, axis=-1, keepdims=True), approx=True)
        ctx.append(jnp.dot(p.astype(jnp.bfloat16), vh,
                           preferred_element_type=jnp.float32))       # (Tq, dk)
    ctx = jnp.concatenate(ctx, axis=-1).astype(jnp.bfloat16)           # (Tq, HD)
    return residual + jnp.dot(ctx, wo, preferred_element_type=jnp.float32)


def _gated_ffn(x, ln_w, wi, wo):
    # mT5 gated-gelu FFN with residual: x + wo( gelu_new(x@wi0) * (x@wi1) )
    h = _rms(x, ln_w).astype(jnp.bfloat16)
    hi = jnp.dot(h, wi, preferred_element_type=jnp.float32)            # (M, 2*D_FF)
    g = jax.nn.gelu(hi[:, :D_FF], approximate=True)                    # f32 gelu_new
    return x + jnp.dot((g * hi[:, D_FF:]).astype(jnp.bfloat16), wo,
                       preferred_element_type=jnp.float32)


# ============================ Pallas kernels ============================

def _encoder_stack_kernel(x_ref, bias_ref, ln_ref, wqkv_ref, wo_a_ref,
                          wi_ref, wo_f_ref, o_ref):
    """Whole encoder stack + final layer-norm for one batch element."""
    x = x_ref[...]                                                     # (T, D) f32
    bias = bias_ref[...]                                               # (H, T, T)
    lns = ln_ref[...]                                                  # (2L+1, D)
    for l in range(N_LAYERS):
        # ---- self-attention sublayer (fused qkv projection) ----
        h = _rms(x, lns[2 * l:2 * l + 1, :]).astype(jnp.bfloat16)
        qkv = jnp.dot(h, wqkv_ref[l], preferred_element_type=jnp.float32)
        x = _attention(qkv[:, :HD], qkv[:, HD:2 * HD], qkv[:, 2 * HD:],
                       bias, wo_a_ref[l], x)
        # ---- gated-gelu FFN sublayer ----
        x = _gated_ffn(x, lns[2 * l + 1:2 * l + 2, :], wi_ref[l], wo_f_ref[l])
    # ---- encoder final layer-norm (fused; no separate rmsnorm call) ----
    o_ref[...] = _rms(x, lns[2 * N_LAYERS:2 * N_LAYERS + 1, :])


def _decoder_stack_kernel(y_ref, enc_ref, bias_ref, ln_ref, wqkv_ref, wo_ref,
                          wi_ref, wo_f_ref, o_ref):
    """Whole decoder stack + final layer-norm for one batch element."""
    y = y_ref[...]                                                     # (Td, D) f32
    enc = enc_ref[...].astype(jnp.bfloat16)                            # (Te, D)
    bias = bias_ref[...]                                               # (H, Td, Td)
    lns = ln_ref[...]                                                  # (3L+1, D)
    for l in range(N_LAYERS):
        w_qkv = wqkv_ref[l]        # (D, 6*HD): [sa q|k|v | ca q | ca k|v]
        w_o = wo_ref[l]            # (2*HD, D): [sa wo ; ca wo]
        # ---- causal self-attention (relative position bias + causal mask) ----
        h = _rms(y, lns[3 * l:3 * l + 1, :]).astype(jnp.bfloat16)
        qkv = jnp.dot(h, w_qkv[:, :3 * HD], preferred_element_type=jnp.float32)
        y = _attention(qkv[:, :HD], qkv[:, HD:2 * HD], qkv[:, 2 * HD:],
                       bias, w_o[:HD, :], y)
        # ---- cross-attention (T5 cross-attn has zero position bias) ----
        h = _rms(y, lns[3 * l + 1:3 * l + 2, :]).astype(jnp.bfloat16)
        q = jnp.dot(h, w_qkv[:, 3 * HD:4 * HD],
                    preferred_element_type=jnp.float32)
        kv = jnp.dot(enc, w_qkv[:, 4 * HD:],
                     preferred_element_type=jnp.float32)
        y = _attention(q, kv[:, :HD], kv[:, HD:], None, w_o[HD:, :], y)
        # ---- gated-gelu FFN sublayer ----
        y = _gated_ffn(y, lns[3 * l + 2:3 * l + 3, :], wi_ref[l], wo_f_ref[l])
    # ---- decoder final layer-norm (fused) ----
    o_ref[...] = _rms(y, lns[3 * N_LAYERS:3 * N_LAYERS + 1, :])


def _lm_head_ce_kernel(x_ref, wlm_ref, labels_ref, logits_ref, loss_ref):
    # lm_head + mean CE (ignore_index = -100), fused.  Input is already
    # final-layer-normed by the decoder stack kernel.
    # TODO(synk): at real mT5 scale (vocab ~250k) tile over vocab with a grid
    #             axis and an online log-sum-exp (m/l accumulators in VMEM
    #             scratch) so logits never hit HBM -- mandatory on v7x (64 MiB
    #             VMEM) -- and set vmem_limit_bytes explicitly.
    x = x_ref[...].astype(jnp.bfloat16)                                # (N, D)
    logits = jnp.dot(x, wlm_ref[...], preferred_element_type=jnp.float32)
    logits_ref[...] = logits
    labels = labels_ref[...]                                           # (N, 1) int32
    m = jnp.max(logits, axis=-1, keepdims=True)
    lse = m + jnp.log(jnp.sum(jnp.exp(logits - m), axis=-1, keepdims=True))
    iota = jax.lax.broadcasted_iota(jnp.int32, logits.shape, 1)
    picked = jnp.sum(jnp.where(iota == labels, logits, 0.0),
                     axis=-1, keepdims=True)
    valid = (labels != -100).astype(jnp.float32)
    nll = (lse - picked) * valid                                       # (N, 1)
    # NOTE: if every label were -100 this returns 0 (denom clamp) rather than
    # PyTorch's NaN -- documented divergence, harmless here.
    denom = jnp.maximum(jnp.sum(valid, axis=0, keepdims=True), 1.0)    # (1, 1)
    loss = jnp.sum(nll, axis=0, keepdims=True) / denom                 # exact divide
    loss_ref[0, 0] = loss[0, 0]


# ============================ pallas_call wrappers ============================

_PARALLEL = pltpu.CompilerParams(dimension_semantics=("parallel",))


def encoder_stack(x2d, ep, bias, B, T):
    D, L = D_MODEL, N_LAYERS
    return pl.pallas_call(
        _encoder_stack_kernel,
        out_shape=jax.ShapeDtypeStruct((B * T, D), jnp.float32),
        grid=(B,),
        in_specs=[
            pl.BlockSpec((T, D), lambda b: (b, 0)),                 # x (per batch)
            pl.BlockSpec((N_HEADS, T, T), lambda b: (0, 0, 0)),     # bias, shared
            pl.BlockSpec((2 * L + 1, D), lambda b: (0, 0)),         # all LN weights
            pl.BlockSpec((L, D, 3 * HD), lambda b: (0, 0, 0)),      # fused wqkv
            pl.BlockSpec((L, HD, D), lambda b: (0, 0, 0)),          # attn wo
            pl.BlockSpec((L, D, 2 * D_FF), lambda b: (0, 0, 0)),    # fused wi0|wi1
            pl.BlockSpec((L, D_FF, D), lambda b: (0, 0, 0)),        # ffn wo
        ],
        out_specs=pl.BlockSpec((T, D), lambda b: (b, 0)),
        compiler_params=_PARALLEL,
    )(x2d, bias, ep['ln'], ep['wqkv'], ep['wo_attn'], ep['wi'], ep['wo_ff'])


def decoder_stack(y2d, enc2d, dp, self_bias, B, Td, Te):
    D, L = D_MODEL, N_LAYERS
    return pl.pallas_call(
        _decoder_stack_kernel,
        out_shape=jax.ShapeDtypeStruct((B * Td, D), jnp.float32),
        grid=(B,),
        in_specs=[
            pl.BlockSpec((Td, D), lambda b: (b, 0)),                # y (per batch)
            pl.BlockSpec((Te, D), lambda b: (b, 0)),                # encoder out
            pl.BlockSpec((N_HEADS, Td, Td), lambda b: (0, 0, 0)),   # self bias+causal
            pl.BlockSpec((3 * L + 1, D), lambda b: (0, 0)),         # all LN weights
            pl.BlockSpec((L, D, 6 * HD), lambda b: (0, 0, 0)),      # sa qkv|ca q|ca kv
            pl.BlockSpec((L, 2 * HD, D), lambda b: (0, 0, 0)),      # sa wo ; ca wo
            pl.BlockSpec((L, D, 2 * D_FF), lambda b: (0, 0, 0)),    # fused wi0|wi1
            pl.BlockSpec((L, D_FF, D), lambda b: (0, 0, 0)),        # ffn wo
        ],
        out_specs=pl.BlockSpec((Td, D), lambda b: (b, 0)),
        compiler_params=_PARALLEL,
    )(y2d, enc2d, self_bias, dp['ln'], dp['wqkv'], dp['wo'], dp['wi'], dp['wo_ff'])


def lm_head_and_loss(dec2d, w_lm, labels1d):
    N = dec2d.shape[0]
    # labels stay in VMEM: the one-hot comparison needs them as a vector
    # (SMEM -> vector loads are not the natural path); the scalar loss goes
    # to SMEM.
    labels2d = labels1d.reshape(N, 1).astype(jnp.int32)
    logits, loss = pl.pallas_call(
        _lm_head_ce_kernel,
        out_shape=(jax.ShapeDtypeStruct((N, VOCAB), jnp.float32),
                   jax.ShapeDtypeStruct((1, 1), jnp.float32)),
        in_specs=[pl.BlockSpec((N, D_MODEL), lambda: (0, 0)),
                  pl.BlockSpec((D_MODEL, VOCAB), lambda: (0, 0)),
                  pl.BlockSpec((N, 1), lambda: (0, 0))],
        out_specs=(pl.BlockSpec((N, VOCAB), lambda: (0, 0)),
                   pl.BlockSpec(memory_space=pltpu.MemorySpace.SMEM)),
    )(dec2d, w_lm, labels2d)
    return loss[0, 0], logits


# ============================ JAX glue (scalar/gather-heavy) ============================

def relative_position_bucket(rel_pos, bidirectional, num_buckets, max_distance):
    rel_pos = rel_pos.astype(jnp.int32)
    relative_buckets = jnp.zeros_like(rel_pos)
    if bidirectional:
        num_buckets //= 2
        relative_buckets = relative_buckets + (rel_pos > 0).astype(jnp.int32) * num_buckets
        rel_pos = jnp.abs(rel_pos)
    else:
        rel_pos = -jnp.minimum(rel_pos, 0)
    max_exact = num_buckets // 2
    is_small = rel_pos < max_exact
    safe = jnp.maximum(rel_pos, 1).astype(jnp.float32)
    rel_if_large = max_exact + (
        jnp.log(safe / max_exact) / jnp.log(max_distance / max_exact)
        * (num_buckets - max_exact)
    ).astype(jnp.int32)
    rel_if_large = jnp.minimum(rel_if_large, num_buckets - 1)
    return relative_buckets + jnp.where(is_small, rel_pos, rel_if_large)


def compute_position_bias(rel_emb, q_len, k_len, bidirectional):
    context = jnp.arange(q_len)[:, None]
    memory = jnp.arange(k_len)[None, :]
    rel_pos = memory - context                               # (q, k)
    buckets = relative_position_bucket(rel_pos, bidirectional,
                                       REL_BUCKETS, REL_MAX_DIST)
    vals = rel_emb[buckets]                                  # (q, k, H)
    return jnp.transpose(vals, (2, 0, 1)).astype(jnp.float32)  # (H, q, k)


def shift_right(labels):
    B = labels.shape[0]
    shifted = jnp.concatenate(
        [jnp.full((B, 1), DEC_START_ID, labels.dtype), labels[:, :-1]], axis=1)
    return jnp.where(shifted == -100, PAD_ID, shifted)


def mt5_forward(params, input_ids, labels):
    B, Te = input_ids.shape
    _, Td = labels.shape

    # -------- encoder: ONE fused pallas_call for the whole stack --------
    x2d = params['shared'][input_ids].reshape(B * Te, D_MODEL)
    enc_bias = compute_position_bias(params['enc_rel'], Te, Te, True)   # (H,Te,Te)
    enc_out2d = encoder_stack(x2d, params['enc'], enc_bias, B, Te)

    # -------- decoder: ONE fused pallas_call for the whole stack --------
    dec_ids = shift_right(labels)
    y2d = params['shared'][dec_ids].reshape(B * Td, D_MODEL)
    dec_bias = compute_position_bias(params['dec_rel'], Td, Td, False)  # (H,Td,Td)
    # causal mask kept in f32 (do NOT cast the bias to bf16: -1e9 would saturate)
    causal = jnp.where(jnp.arange(Td)[None, :] > jnp.arange(Td)[:, None],
                       -1e9, 0.0).astype(jnp.float32)
    dec_bias = dec_bias + causal[None, :, :]
    dec_out2d = decoder_stack(y2d, enc_out2d, params['dec'], dec_bias, B, Td, Te)

    # -------- lm head + loss (mT5: untied lm_head, no d_model**-0.5) --------
    loss, logits2d = lm_head_and_loss(dec_out2d, params['lm_head'],
                                      labels.reshape(-1))
    return loss, logits2d.reshape(B, Td, VOCAB)


# ============================ parameter init ============================

def init_params(key):
    keys = iter(jax.random.split(key, 64))
    W = jnp.bfloat16   # matmul-weight storage dtype (MXU bf16, halved HBM traffic)

    def nrm(shape, dtype=jnp.float32, scale=0.05):
        return (scale * jax.random.normal(next(keys), shape, jnp.float32)).astype(dtype)

    L = N_LAYERS
    return {
        'shared': nrm((VOCAB, D_MODEL)),                      # embedding (f32)
        'enc_rel': nrm((REL_BUCKETS, N_HEADS)),
        'dec_rel': nrm((REL_BUCKETS, N_HEADS)),
        'lm_head': nrm((D_MODEL, VOCAB), W),
        'enc': {
            # rows: [l0 ln1, l0 ln2, l1 ln1, l1 ln2, ..., final_ln]
            'ln': jnp.ones((2 * L + 1, D_MODEL), jnp.float32),
            'wqkv': nrm((L, D_MODEL, 3 * HD), W),             # fused q|k|v
            'wo_attn': nrm((L, HD, D_MODEL), W),
            'wi': nrm((L, D_MODEL, 2 * D_FF), W),             # fused wi_0|wi_1
            'wo_ff': nrm((L, D_FF, D_MODEL), W),
        },
        'dec': {
            # rows: [l0 ln1, l0 ln2, l0 ln3, l1 ln1, ..., final_ln]
            'ln': jnp.ones((3 * L + 1, D_MODEL), jnp.float32),
            'wqkv': nrm((L, D_MODEL, 6 * HD), W),             # sa q|k|v | ca q | ca k|v
            'wo': nrm((L, 2 * HD, D_MODEL), W),               # sa wo ; ca wo
            'wi': nrm((L, D_MODEL, 2 * D_FF), W),
            'wo_ff': nrm((L, D_FF, D_MODEL), W),
        },
    }


# ============================ main ============================

if __name__ == "__main__":
    key = jax.random.PRNGKey(0)
    pkey, ikey, lkey = jax.random.split(key, 3)
    params = init_params(pkey)

    B, T_ENC, T_DEC = 2, 8, 8
    # TODO(synk): no PAD / -100 tokens generated, so no encoder padding mask is needed.
    input_ids = jax.random.randint(ikey, (B, T_ENC), 1, VOCAB, dtype=jnp.int32)
    labels = jax.random.randint(lkey, (B, T_DEC), 1, VOCAB, dtype=jnp.int32)

    loss, logits = jax.jit(mt5_forward)(params, input_ids, labels)
    jax.block_until_ready((loss, logits))
    assert logits.shape == (B, T_DEC, VOCAB)
    assert bool(jnp.isfinite(loss))
    print("KERNEL_OK")
</pallas_src>

<mosaic_0001>
module attributes {stable_mosaic.version = 11 : i64} {
  func.func @_encoder_stack_kernel(%arg0: i32, %arg1: memref<8x32xf32, #tpu.memory_space<vmem>>, %arg2: memref<4x8x8xf32, #tpu.memory_space<vmem>>, %arg3: memref<5x32xf32, #tpu.memory_space<vmem>>, %arg4: memref<2x32x96xbf16, #tpu.memory_space<vmem>>, %arg5: memref<2x32x32xbf16, #tpu.memory_space<vmem>>, %arg6: memref<2x32x128xbf16, #tpu.memory_space<vmem>>, %arg7: memref<2x64x32xbf16, #tpu.memory_space<vmem>>, %arg8: memref<8x32xf32, #tpu.memory_space<vmem>>) attributes {dimension_semantics = [#tpu.dimension_semantics<parallel>], iteration_bounds = array<i64: 2>, scalar_prefetch = 0 : i64, scratch_operands = 0 : i64, tpu.core_type = #tpu.core_type<tc>, window_params = [{transform_indices = @transform_0, window_bounds = array<i64: 8, 32>}, {pipeline_mode = #tpu.pipeline_mode<synchronous>, transform_indices = @transform_1, window_bounds = array<i64: 4, 8, 8>}, {pipeline_mode = #tpu.pipeline_mode<synchronous>, transform_indices = @transform_2, window_bounds = array<i64: 5, 32>}, {pipeline_mode = #tpu.pipeline_mode<synchronous>, transform_indices = @transform_3, window_bounds = array<i64: 2, 32, 96>}, {pipeline_mode = #tpu.pipeline_mode<synchronous>, transform_indices = @transform_4, window_bounds = array<i64: 2, 32, 32>}, {pipeline_mode = #tpu.pipeline_mode<synchronous>, transform_indices = @transform_5, window_bounds = array<i64: 2, 32, 128>}, {pipeline_mode = #tpu.pipeline_mode<synchronous>, transform_indices = @transform_6, window_bounds = array<i64: 2, 64, 32>}, {transform_indices = @transform_7, window_bounds = array<i64: 8, 32>}]} {
    %c0 = arith.constant 0 : index
    %c0_0 = arith.constant 0 : index
    %0 = vector.load %arg1[%c0, %c0_0] : memref<8x32xf32, #tpu.memory_space<vmem>>, vector<8x32xf32>
    %c0_1 = arith.constant 0 : index
    %c0_2 = arith.constant 0 : index
    %c0_3 = arith.constant 0 : index
    %1 = vector.load %arg2[%c0_1, %c0_2, %c0_3] : memref<4x8x8xf32, #tpu.memory_space<vmem>>, vector<4x8x8xf32>
    %c0_4 = arith.constant 0 : index
    %c0_5 = arith.constant 0 : index
    %2 = vector.load %arg3[%c0_4, %c0_5] : memref<5x32xf32, #tpu.memory_space<vmem>>, vector<5x32xf32>
    %3 = vector.extract_strided_slice %2 {offsets = [0, 0], sizes = [1, 32], strides = [1, 1]} : vector<5x32xf32> to vector<1x32xf32>
    %4 = arith.mulf %0, %0 : vector<8x32xf32>
    %cst = arith.constant dense<0.000000e+00> : vector<8xf32>
    %5 = vector.multi_reduction <add>, %4, %cst [1] : vector<8x32xf32> to vector<8xf32>
    %6 = vector.shape_cast %5 : vector<8xf32> to vector<8x1xf32>
    %cst_6 = arith.constant 3.200000e+01 : f32
    %7 = vector.broadcast %cst_6 : f32 to vector<8x1xf32>
    %8 = arith.divf %6, %7 : vector<8x1xf32>
    %cst_7 = arith.constant 9.99999997E-7 : f32
    %9 = vector.broadcast %cst_7 : f32 to vector<8x1xf32>
    %10 = arith.addf %8, %9 : vector<8x1xf32>
    %11 = math.rsqrt %10 : vector<8x1xf32>
    %12 = vector.broadcast %11 : vector<8x1xf32> to vector<8x32xf32>
    %13 = arith.mulf %0, %12 : vector<8x32xf32>
    %14 = vector.broadcast %3 : vector<1x32xf32> to vector<8x32xf32>
    %15 = arith.mulf %13, %14 : vector<8x32xf32>
    %16 = arith.truncf %15 : vector<8x32xf32> to vector<8x32xbf16>
    %c0_8 = arith.constant 0 : index
    %c0_9 = arith.constant 0 : index
    %c0_10 = arith.constant 0 : index
    %17 = vector.load %arg4[%c0_8, %c0_9, %c0_10] : memref<2x32x96xbf16, #tpu.memory_space<vmem>>, vector<1x32x96xbf16>
    %18 = vector.shape_cast %17 : vector<1x32x96xbf16> to vector<32x96xbf16>
    %cst_11 = arith.constant dense<0.000000e+00> : vector<8x96xf32>
    %19 = tpu.matmul %16, %18, %cst_11 {dimension_numbers = #tpu.dot_dimension_numbers<[1], [0], [0], [1], [0, 0, 1, 1], [], []>} : vector<8x32xbf16>, vector<32x96xbf16>, vector<8x96xf32> -> vector<8x96xf32>
    %20 = vector.extract_strided_slice %19 {offsets = [0, 0], sizes = [8, 32], strides = [1, 1]} : vector<8x96xf32> to vector<8x32xf32>
    %21 = vector.extract_strided_slice %19 {offsets = [0, 32], sizes = [8, 32], strides = [1, 1]} : vector<8x96xf32> to vector<8x32xf32>
    %22 = vector.extract_strided_slice %19 {offsets = [0, 64], sizes = [8, 32], strides = [1, 1]} : vector<8x96xf32> to vector<8x32xf32>
    %c0_12 = arith.constant 0 : index
    %c0_13 = arith.constant 0 : index
    %c0_14 = arith.constant 0 : index
    %23 = vector.load %arg5[%c0_12, %c0_13, %c0_14] : memref<2x32x32xbf16, #tpu.memory_space<vmem>>, vector<1x32x32xbf16>
    %24 = vector.shape_cast %23 : vector<1x32x32xbf16> to vector<32x32xbf16>
    %25 = vector.extract_strided_slice %20 {offsets = [0, 0], sizes = [8, 8], strides = [1, 1]} : vector<8x32xf32> to vector<8x8xf32>
    %26 = arith.truncf %25 : vector<8x8xf32> to vector<8x8xbf16>
    %27 = vector.extract_strided_slice %21 {offsets = [0, 0], sizes = [8, 8], strides = [1, 1]} : vector<8x32xf32> to vector<8x8xf32>
    %28 = arith.truncf %27 : vector<8x8xf32> to vector<8x8xbf16>
    %29 = vector.extract_strided_slice %22 {offsets = [0, 0], sizes = [8, 8], strides = [1, 1]} : vector<8x32xf32> to vector<8x8xf32>
    %30 = arith.truncf %29 : vector<8x8xf32> to vector<8x8xbf16>
    %cst_15 = arith.constant dense<0.000000e+00> : vector<8x8xf32>
    %31 = tpu.matmul %26, %28, %cst_15 {dimension_numbers = #tpu.dot_dimension_numbers<[1], [1], [0], [0], [0, 0, 1, 0], [], []>} : vector<8x8xbf16>, vector<8x8xbf16>, vector<8x8xf32> -> vector<8x8xf32>
    %32 = vector.extract_strided_slice %1 {offsets = [0, 0, 0], sizes = [1, 8, 8], strides = [1, 1, 1]} : vector<4x8x8xf32> to vector<1x8x8xf32>
    %33 = vector.shape_cast %32 : vector<1x8x8xf32> to vector<8x8xf32>
    %34 = arith.addf %31, %33 : vector<8x8xf32>
    %cst_16 = arith.constant dense<0xFF800000> : vector<8xf32>
    %35 = vector.multi_reduction <maximumf>, %34, %cst_16 [1] : vector<8x8xf32> to vector<8xf32>
    %36 = vector.shape_cast %35 : vector<8xf32> to vector<8x1xf32>
    %37 = vector.broadcast %36 : vector<8x1xf32> to vector<8x8xf32>
    %38 = arith.subf %34, %37 : vector<8x8xf32>
    %39 = math.exp %38 : vector<8x8xf32>
    %cst_17 = arith.constant dense<0.000000e+00> : vector<8xf32>
    %40 = vector.multi_reduction <add>, %39, %cst_17 [1] : vector<8x8xf32> to vector<8xf32>
    %41 = vector.shape_cast %40 : vector<8xf32> to vector<8x1xf32>
    %42 = tpu.reciprocal %41 {approx = true} : vector<8x1xf32> -> vector<8x1xf32>
    %43 = vector.broadcast %42 : vector<8x1xf32> to vector<8x8xf32>
    %44 = arith.mulf %39, %43 : vector<8x8xf32>
    %45 = arith.truncf %44 : vector<8x8xf32> to vector<8x8xbf16>
    %cst_18 = arith.constant dense<0.000000e+00> : vector<8x8xf32>
    %46 = tpu.matmul %45, %30, %cst_18 {dimension_numbers = #tpu.dot_dimension_numbers<[1], [0], [0], [1], [0, 0, 1, 1], [], []>} : vector<8x8xbf16>, vector<8x8xbf16>, vector<8x8xf32> -> vector<8x8xf32>
    %47 = vector.extract_strided_slice %20 {offsets = [0, 8], sizes = [8, 8], strides = [1, 1]} : vector<8x32xf32> to vector<8x8xf32>
    %48 = arith.truncf %47 : vector<8x8xf32> to vector<8x8xbf16>
    %49 = vector.extract_strided_slice %21 {offsets = [0, 8], sizes = [8, 8], strides = [1, 1]} : vector<8x32xf32> to vector<8x8xf32>
    %50 = arith.truncf %49 : vector<8x8xf32> to vector<8x8xbf16>
    %51 = vector.extract_strided_slice %22 {offsets = [0, 8], sizes = [8, 8], strides = [1, 1]} : vector<8x32xf32> to vector<8x8xf32>
    %52 = arith.truncf %51 : vector<8x8xf32> to vector<8x8xbf16>
    %cst_19 = arith.constant dense<0.000000e+00> : vector<8x8xf32>
    %53 = tpu.matmul %48, %50, %cst_19 {dimension_numbers = #tpu.dot_dimension_numbers<[1], [1], [0], [0], [0, 0, 1, 0], [], []>} : vector<8x8xbf16>, vector<8x8xbf16>, vector<8x8xf32> -> vector<8x8xf32>
    %54 = vector.extract_strided_slice %1 {offsets = [1, 0, 0], sizes = [1, 8, 8], strides = [1, 1, 1]} : vector<4x8x8xf32> to vector<1x8x8xf32>
    %55 = vector.shape_cast %54 : vector<1x8x8xf32> to vector<8x8xf32>
    %56 = arith.addf %53, %55 : vector<8x8xf32>
    %cst_20 = arith.constant dense<0xFF800000> : vector<8xf32>
    %57 = vector.multi_reduction <maximumf>, %56, %cst_20 [1] : vector<8x8xf32> to vector<8xf32>
    %58 = vector.shape_cast %57 : vector<8xf32> to vector<8x1xf32>
    %59 = vector.broadcast %58 : vector<8x1xf32> to vector<8x8xf32>
    %60 = arith.subf %56, %59 : vector<8x8xf32>
    %61 = math.exp %60 : vector<8x8xf32>
    %cst_21 = arith.constant dense<0.000000e+00> : vector<8xf32>
    %62 = vector.multi_reduction <add>, %61, %cst_21 [1] : vector<8x8xf32> to vector<8xf32>
    %63 = vector.shape_cast %62 : vector<8xf32> to vector<8x1xf32>
    %64 = tpu.reciprocal %63 {approx = true} : vector<8x1xf32> -> vector<8x1xf32>
    %65 = vector.broadcast %64 : vector<8x1xf32> to vector<8x8xf32>
    %66 = arith.mulf %61, %65 : vector<8x8xf32>
    %67 = arith.truncf %66 : vector<8x8xf32> to vector<8x8xbf16>
    %cst_22 = arith.constant dense<0.000000e+00> : vector<8x8xf32>
    %68 = tpu.matmul %67, %52, %cst_22 {dimension_numbers = #tpu.dot_dimension_numbers<[1], [0], [0], [1], [0, 0, 1, 1], [], []>} : vector<8x8xbf16>, vector<8x8xbf16>, vector<8x8xf32> -> vector<8x8xf32>
    %69 = vector.extract_strided_slice %20 {offsets = [0, 16], sizes = [8, 8], strides = [1, 1]} : vector<8x32xf32> to vector<8x8xf32>
    %70 = arith.truncf %69 : vector<8x8xf32> to vector<8x8xbf16>
    %71 = vector.extract_strided_slice %21 {offsets = [0, 16], sizes = [8, 8], strides = [1, 1]} : vector<8x32xf32> to vector<8x8xf32>
    %72 = arith.truncf %71 : vector<8x8xf32> to vector<8x8xbf16>
    %73 = vector.extract_strided_slice %22 {offsets = [0, 16], sizes = [8, 8], strides = [1, 1]} : vector<8x32xf32> to vector<8x8xf32>
    %74 = arith.truncf %73 : vector<8x8xf32> to vector<8x8xbf16>
    %cst_23 = arith.constant dense<0.000000e+00> : vector<8x8xf32>
    %75 = tpu.matmul %70, %72, %cst_23 {dimension_numbers = #tpu.dot_dimension_numbers<[1], [1], [0], [0], [0, 0, 1, 0], [], []>} : vector<8x8xbf16>, vector<8x8xbf16>, vector<8x8xf32> -> vector<8x8xf32>
    %76 = vector.extract_strided_slice %1 {offsets = [2, 0, 0], sizes = [1, 8, 8], strides = [1, 1, 1]} : vector<4x8x8xf32> to vector<1x8x8xf32>
    %77 = vector.shape_cast %76 : vector<1x8x8xf32> to vector<8x8xf32>
    %78 = arith.addf %75, %77 : vector<8x8xf32>
    %cst_24 = arith.constant dense<0xFF800000> : vector<8xf32>
    %79 = vector.multi_reduction <maximumf>, %78, %cst_24 [1] : vector<8x8xf32> to vector<8xf32>
    %80 = vector.shape_cast %79 : vector<8xf32> to vector<8x1xf32>
    %81 = vector.broadcast %80 : vector<8x1xf32> to vector<8x8xf32>
    %82 = arith.subf %78, %81 : vector<8x8xf32>
    %83 = math.exp %82 : vector<8x8xf32>
    %cst_25 = arith.constant dense<0.000000e+00> : vector<8xf32>
    %84 = vector.multi_reduction <add>, %83, %cst_25 [1] : vector<8x8xf32> to vector<8xf32>
    %85 = vector.shape_cast %84 : vector<8xf32> to vector<8x1xf32>
    %86 = tpu.reciprocal %85 {approx = true} : vector<8x1xf32> -> vector<8x1xf32>
    %87 = vector.broadcast %86 : vector<8x1xf32> to vector<8x8xf32>
    %88 = arith.mulf %83, %87 : vector<8x8xf32>
    %89 = arith.truncf %88 : vector<8x8xf32> to vector<8x8xbf16>
    %cst_26 = arith.constant dense<0.000000e+00> : vector<8x8xf32>
    %90 = tpu.matmul %89, %74, %cst_26 {dimension_numbers = #tpu.dot_dimension_numbers<[1], [0], [0], [1], [0, 0, 1, 1], [], []>} : vector<8x8xbf16>, vector<8x8xbf16>, vector<8x8xf32> -> vector<8x8xf32>
    %91 = vector.extract_strided_slice %20 {offsets = [0, 24], sizes = [8, 8], strides = [1, 1]} : vector<8x32xf32> to vector<8x8xf32>
    %92 = arith.truncf %91 : vector<8x8xf32> to vector<8x8xbf16>
    %93 = vector.extract_strided_slice %21 {offsets = [0, 24], sizes = [8, 8], strides = [1, 1]} : vector<8x32xf32> to vector<8x8xf32>
    %94 = arith.truncf %93 : vector<8x8xf32> to vector<8x8xbf16>
    %95 = vector.extract_strided_slice %22 {offsets = [0, 24], sizes = [8, 8], strides = [1, 1]} : vector<8x32xf32> to vector<8x8xf32>
    %96 = arith.truncf %95 : vector<8x8xf32> to vector<8x8xbf16>
    %cst_27 = arith.constant dense<0.000000e+00> : vector<8x8xf32>
    %97 = tpu.matmul %92, %94, %cst_27 {dimension_numbers = #tpu.dot_dimension_numbers<[1], [1], [0], [0], [0, 0, 1, 0], [], []>} : vector<8x8xbf16>, vector<8x8xbf16>, vector<8x8xf32> -> vector<8x8xf32>
    %98 = vector.extract_strided_slice %1 {offsets = [3, 0, 0], sizes = [1, 8, 8], strides = [1, 1, 1]} : vector<4x8x8xf32> to vector<1x8x8xf32>
    %99 = vector.shape_cast %98 : vector<1x8x8xf32> to vector<8x8xf32>
    %100 = arith.addf %97, %99 : vector<8x8xf32>
    %cst_28 = arith.constant dense<0xFF800000> : vector<8xf32>
    %101 = vector.multi_reduction <maximumf>, %100, %cst_28 [1] : vector<8x8xf32> to vector<8xf32>
    %102 = vector.shape_cast %101 : vector<8xf32> to vector<8x1xf32>
    %103 = vector.broadcast %102 : vector<8x1xf32> to vector<8x8xf32>
    %104 = arith.subf %100, %103 : vector<8x8xf32>
    %105 = math.exp %104 : vector<8x8xf32>
    %cst_29 = arith.constant dense<0.000000e+00> : vector<8xf32>
    %106 = vector.multi_reduction <add>, %105, %cst_29 [1] : vector<8x8xf32> to vector<8xf32>
    %107 = vector.shape_cast %106 : vector<8xf32> to vector<8x1xf32>
    %108 = tpu.reciprocal %107 {approx = true} : vector<8x1xf32> -> vector<8x1xf32>
    %109 = vector.broadcast %108 : vector<8x1xf32> to vector<8x8xf32>
    %110 = arith.mulf %105, %109 : vector<8x8xf32>
    %111 = arith.truncf %110 : vector<8x8xf32> to vector<8x8xbf16>
    %cst_30 = arith.constant dense<0.000000e+00> : vector<8x8xf32>
    %112 = tpu.matmul %111, %96, %cst_30 {dimension_numbers = #tpu.dot_dimension_numbers<[1], [0], [0], [1], [0, 0, 1, 1], [], []>} : vector<8x8xbf16>, vector<8x8xbf16>, vector<8x8xf32> -> vector<8x8xf32>
    %113 = tpu.concatenate %46, %68, %90, %112 in 1 : vector<8x8xf32>, vector<8x8xf32>, vector<8x8xf32>, vector<8x8xf32> -> vector<8x32xf32>
    %114 = arith.truncf %113 : vector<8x32xf32> to vector<8x32xbf16>
    %cst_31 = arith.constant dense<0.000000e+00> : vector<8x32xf32>
    %115 = tpu.matmul %114, %24, %cst_31 {dimension_numbers = #tpu.dot_dimension_numbers<[1], [0], [0], [1], [0, 0, 1, 1], [], []>} : vector<8x32xbf16>, vector<32x32xbf16>, vector<8x32xf32> -> vector<8x32xf32>
    %116 = arith.addf %0, %115 : vector<8x32xf32>
    %117 = vector.extract_strided_slice %2 {offsets = [1, 0], sizes = [1, 32], strides = [1, 1]} : vector<5x32xf32> to vector<1x32xf32>
    %c0_32 = arith.constant 0 : index
    %c0_33 = arith.constant 0 : index
    %c0_34 = arith.constant 0 : index
    %118 = vector.load %arg6[%c0_32, %c0_33, %c0_34] : memref<2x32x128xbf16, #tpu.memory_space<vmem>>, vector<1x32x128xbf16>
    %119 = vector.shape_cast %118 : vector<1x32x128xbf16> to vector<32x128xbf16>
    %c0_35 = arith.constant 0 : index
    %c0_36 = arith.constant 0 : index
    %c0_37 = arith.constant 0 : index
    %120 = vector.load %arg7[%c0_35, %c0_36, %c0_37] : memref<2x64x32xbf16, #tpu.memory_space<vmem>>, vector<1x64x32xbf16>
    %121 = vector.shape_cast %120 : vector<1x64x32xbf16> to vector<64x32xbf16>
    %122 = arith.mulf %116, %116 : vector<8x32xf32>
    %cst_38 = arith.constant dense<0.000000e+00> : vector<8xf32>
    %123 = vector.multi_reduction <add>, %122, %cst_38 [1] : vector<8x32xf32> to vector<8xf32>
    %124 = vector.shape_cast %123 : vector<8xf32> to vector<8x1xf32>
    %cst_39 = arith.constant 3.200000e+01 : f32
    %125 = vector.broadcast %cst_39 : f32 to vector<8x1xf32>
    %126 = arith.divf %124, %125 : vector<8x1xf32>
    %cst_40 = arith.constant 9.99999997E-7 : f32
    %127 = vector.broadcast %cst_40 : f32 to vector<8x1xf32>
    %128 = arith.addf %126, %127 : vector<8x1xf32>
    %129 = math.rsqrt %128 : vector<8x1xf32>
    %130 = vector.broadcast %129 : vector<8x1xf32> to vector<8x32xf32>
    %131 = arith.mulf %116, %130 : vector<8x32xf32>
    %132 = vector.broadcast %117 : vector<1x32xf32> to vector<8x32xf32>
    %133 = arith.mulf %131, %132 : vector<8x32xf32>
    %134 = arith.truncf %133 : vector<8x32xf32> to vector<8x32xbf16>
    %cst_41 = arith.constant dense<0.000000e+00> : vector<8x128xf32>
    %135 = tpu.matmul %134, %119, %cst_41 {dimension_numbers = #tpu.dot_dimension_numbers<[1], [0], [0], [1], [0, 0, 1, 1], [], []>} : vector<8x32xbf16>, vector<32x128xbf16>, vector<8x128xf32> -> vector<8x128xf32>
    %136 = vector.extract_strided_slice %135 {offsets = [0, 0], sizes = [8, 64], strides = [1, 1]} : vector<8x128xf32> to vector<8x64xf32>
    %137 = arith.mulf %136, %136 : vector<8x64xf32>
    %138 = arith.mulf %136, %137 : vector<8x64xf32>
    %cst_42 = arith.constant 4.471500e-02 : f32
    %139 = vector.broadcast %cst_42 : f32 to vector<8x64xf32>
    %140 = arith.mulf %139, %138 : vector<8x64xf32>
    %141 = arith.addf %136, %140 : vector<8x64xf32>
    %cst_43 = arith.constant 0.797884583 : f32
    %142 = vector.broadcast %cst_43 : f32 to vector<8x64xf32>
    %143 = arith.mulf %142, %141 : vector<8x64xf32>
    %144 = math.tanh %143 : vector<8x64xf32>
    %cst_44 = arith.constant 1.000000e+00 : f32
    %145 = vector.broadcast %cst_44 : f32 to vector<8x64xf32>
    %146 = arith.addf %145, %144 : vector<8x64xf32>
    %cst_45 = arith.constant 5.000000e-01 : f32
    %147 = vector.broadcast %cst_45 : f32 to vector<8x64xf32>
    %148 = arith.mulf %147, %146 : vector<8x64xf32>
    %149 = arith.mulf %136, %148 : vector<8x64xf32>
    %150 = vector.extract_strided_slice %135 {offsets = [0, 64], sizes = [8, 64], strides = [1, 1]} : vector<8x128xf32> to vector<8x64xf32>
    %151 = arith.mulf %149, %150 : vector<8x64xf32>
    %152 = arith.truncf %151 : vector<8x64xf32> to vector<8x64xbf16>
    %cst_46 = arith.constant dense<0.000000e+00> : vector<8x32xf32>
    %153 = tpu.matmul %152, %121, %cst_46 {dimension_numbers = #tpu.dot_dimension_numbers<[1], [0], [0], [1], [0, 0, 1, 1], [], []>} : vector<8x64xbf16>, vector<64x32xbf16>, vector<8x32xf32> -> vector<8x32xf32>
    %154 = arith.addf %116, %153 : vector<8x32xf32>
    %155 = vector.extract_strided_slice %2 {offsets = [2, 0], sizes = [1, 32], strides = [1, 1]} : vector<5x32xf32> to vector<1x32xf32>
    %156 = arith.mulf %154, %154 : vector<8x32xf32>
    %cst_47 = arith.constant dense<0.000000e+00> : vector<8xf32>
    %157 = vector.multi_reduction <add>, %156, %cst_47 [1] : vector<8x32xf32> to vector<8xf32>
    %158 = vector.shape_cast %157 : vector<8xf32> to vector<8x1xf32>
    %cst_48 = arith.constant 3.200000e+01 : f32
    %159 = vector.broadcast %cst_48 : f32 to vector<8x1xf32>
    %160 = arith.divf %158, %159 : vector<8x1xf32>
    %cst_49 = arith.constant 9.99999997E-7 : f32
    %161 = vector.broadcast %cst_49 : f32 to vector<8x1xf32>
    %162 = arith.addf %160, %161 : vector<8x1xf32>
    %163 = math.rsqrt %162 : vector<8x1xf32>
    %164 = vector.broadcast %163 : vector<8x1xf32> to vector<8x32xf32>
    %165 = arith.mulf %154, %164 : vector<8x32xf32>
    %166 = vector.broadcast %155 : vector<1x32xf32> to vector<8x32xf32>
    %167 = arith.mulf %165, %166 : vector<8x32xf32>
    %168 = arith.truncf %167 : vector<8x32xf32> to vector<8x32xbf16>
    %c1 = arith.constant 1 : index
    %c0_50 = arith.constant 0 : index
    %c0_51 = arith.constant 0 : index
    %169 = vector.load %arg4[%c1, %c0_50, %c0_51] : memref<2x32x96xbf16, #tpu.memory_space<vmem>>, vector<1x32x96xbf16>
    %170 = vector.shape_cast %169 : vector<1x32x96xbf16> to vector<32x96xbf16>
    %cst_52 = arith.constant dense<0.000000e+00> : vector<8x96xf32>
    %171 = tpu.matmul %168, %170, %cst_52 {dimension_numbers = #tpu.dot_dimension_numbers<[1], [0], [0], [1], [0, 0, 1, 1], [], []>} : vector<8x32xbf16>, vector<32x96xbf16>, vector<8x96xf32> -> vector<8x96xf32>
    %172 = vector.extract_strided_slice %171 {offsets = [0, 0], sizes = [8, 32], strides = [1, 1]} : vector<8x96xf32> to vector<8x32xf32>
    %173 = vector.extract_strided_slice %171 {offsets = [0, 32], sizes = [8, 32], strides = [1, 1]} : vector<8x96xf32> to vector<8x32xf32>
    %174 = vector.extract_strided_slice %171 {offsets = [0, 64], sizes = [8, 32], strides = [1, 1]} : vector<8x96xf32> to vector<8x32xf32>
    %c1_53 = arith.constant 1 : index
    %c0_54 = arith.constant 0 : index
    %c0_55 = arith.constant 0 : index
    %175 = vector.load %arg5[%c1_53, %c0_54, %c0_55] : memref<2x32x32xbf16, #tpu.memory_space<vmem>>, vector<1x32x32xbf16>
    %176 = vector.shape_cast %175 : vector<1x32x32xbf16> to vector<32x32xbf16>
    %177 = vector.extract_strided_slice %172 {offsets = [0, 0], sizes = [8, 8], strides = [1, 1]} : vector<8x32xf32> to vector<8x8xf32>
    %178 = arith.truncf %177 : vector<8x8xf32> to vector<8x8xbf16>
    %179 = vector.extract_strided_slice %173 {offsets = [0, 0], sizes = [8, 8], strides = [1, 1]} : vector<8x32xf32> to vector<8x8xf32>
    %180 = arith.truncf %179 : vector<8x8xf32> to vector<8x8xbf16>
    %181 = vector.extract_strided_slice %174 {offsets = [0, 0], sizes = [8, 8], strides = [1, 1]} : vector<8x32xf32> to vector<8x8xf32>
    %182 = arith.truncf %181 : vector<8x8xf32> to vector<8x8xbf16>
    %cst_56 = arith.constant dense<0.000000e+00> : vector<8x8xf32>
    %183 = tpu.matmul %178, %180, %cst_56 {dimension_numbers = #tpu.dot_dimension_numbers<[1], [1], [0], [0], [0, 0, 1, 0], [], []>} : vector<8x8xbf16>, vector<8x8xbf16>, vector<8x8xf32> -> vector<8x8xf32>
    %184 = vector.extract_strided_slice %1 {offsets = [0, 0, 0], sizes = [1, 8, 8], strides = [1, 1, 1]} : vector<4x8x8xf32> to vector<1x8x8xf32>
    %185 = vector.shape_cast %184 : vector<1x8x8xf32> to vector<8x8xf32>
    %186 = arith.addf %183, %185 : vector<8x8xf32>
    %cst_57 = arith.constant dense<0xFF800000> : vector<8xf32>
    %187 = vector.multi_reduction <maximumf>, %186, %cst_57 [1] : vector<8x8xf32> to vector<8xf32>
    %188 = vector.shape_cast %187 : vector<8xf32> to vector<8x1xf32>
    %189 = vector.broadcast %188 : vector<8x1xf32> to vector<8x8xf32>
    %190 = arith.subf %186, %189 : vector<8x8xf32>
    %191 = math.exp %190 : vector<8x8xf32>
    %cst_58 = arith.constant dense<0.000000e+00> : vector<8xf32>
    %192 = vector.multi_reduction <add>, %191, %cst_58 [1] : vector<8x8xf32> to vector<8xf32>
    %193 = vector.shape_cast %192 : vector<8xf32> to vector<8x1xf32>
    %194 = tpu.reciprocal %193 {approx = true} : vector<8x1xf32> -> vector<8x1xf32>
    %195 = vector.broadcast %194 : vector<8x1xf32> to vector<8x8xf32>
    %196 = arith.mulf %191, %195 : vector<8x8xf32>
    %197 = arith.truncf %196 : vector<8x8xf32> to vector<8x8xbf16>
    %cst_59 = arith.constant dense<0.000000e+00> : vector<8x8xf32>
    %198 = tpu.matmul %197, %182, %cst_59 {dimension_numbers = #tpu.dot_dimension_numbers<[1], [0], [0], [1], [0, 0, 1, 1], [], []>} : vector<8x8xbf16>, vector<8x8xbf16>, vector<8x8xf32> -> vector<8x8xf32>
    %199 = vector.extract_strided_slice %172 {offsets = [0, 8], sizes = [8, 8], strides = [1, 1]} : vector<8x32xf32> to vector<8x8xf32>
    %200 = arith.truncf %199 : vector<8x8xf32> to vector<8x8xbf16>
    %201 = vector.extract_strided_slice %173 {offsets = [0, 8], sizes = [8, 8], strides = [1, 1]} : vector<8x32xf32> to vector<8x8xf32>
    %202 = arith.truncf %201 : vector<8x8xf32> to vector<8x8xbf16>
    %203 = vector.extract_strided_slice %174 {offsets = [0, 8], sizes = [8, 8], strides = [1, 1]} : vector<8x32xf32> to vector<8x8xf32>
    %204 = arith.truncf %203 : vector<8x8xf32> to vector<8x8xbf16>
    %cst_60 = arith.constant dense<0.000000e+00> : vector<8x8xf32>
    %205 = tpu.matmul %200, %202, %cst_60 {dimension_numbers = #tpu.dot_dimension_numbers<[1], [1], [0], [0], [0, 0, 1, 0], [], []>} : vector<8x8xbf16>, vector<8x8xbf16>, vector<8x8xf32> -> vector<8x8xf32>
    %206 = vector.extract_strided_slice %1 {offsets = [1, 0, 0], sizes = [1, 8, 8], strides = [1, 1, 1]} : vector<4x8x8xf32> to vector<1x8x8xf32>
    %207 = vector.shape_cast %206 : vector<1x8x8xf32> to vector<8x8xf32>
    %208 = arith.addf %205, %207 : vector<8x8xf32>
    %cst_61 = arith.constant dense<0xFF800000> : vector<8xf32>
    %209 = vector.multi_reduction <maximumf>, %208, %cst_61 [1] : vector<8x8xf32> to vector<8xf32>
    %210 = vector.shape_cast %209 : vector<8xf32> to vector<8x1xf32>
    %211 = vector.broadcast %210 : vector<8x1xf32> to vector<8x8xf32>
    %212 = arith.subf %208, %211 : vector<8x8xf32>
    %213 = math.exp %212 : vector<8x8xf32>
    %cst_62 = arith.constant dense<0.000000e+00> : vector<8xf32>
    %214 = vector.multi_reduction <add>, %213, %cst_62 [1] : vector<8x8xf32> to vector<8xf32>
    %215 = vector.shape_cast %214 : vector<8xf32> to vector<8x1xf32>
    %216 = tpu.reciprocal %215 {approx = true} : vector<8x1xf32> -> vector<8x1xf32>
    %217 = vector.broadcast %216 : vector<8x1xf32> to vector<8x8xf32>
    %218 = arith.mulf %213, %217 : vector<8x8xf32>
    %219 = arith.truncf %218 : vector<8x8xf32> to vector<8x8xbf16>
    %cst_63 = arith.constant dense<0.000000e+00> : vector<8x8xf32>
    %220 = tpu.matmul %219, %204, %cst_63 {dimension_numbers = #tpu.dot_dimension_numbers<[1], [0], [0], [1], [0, 0, 1, 1], [], []>} : vector<8x8xbf16>, vector<8x8xbf16>, vector<8x8xf32> -> vector<8x8xf32>
    %221 = vector.extract_strided_slice %172 {offsets = [0, 16], sizes = [8, 8], strides = [1, 1]} : vector<8x32xf32> to vector<8x8xf32>
    %222 = arith.truncf %221 : vector<8x8xf32> to vector<8x8xbf16>
    %223 = vector.extract_strided_slice %173 {offsets = [0, 16], sizes = [8, 8], strides = [1, 1]} : vector<8x32xf32> to vector<8x8xf32>
    %224 = arith.truncf %223 : vector<8x8xf32> to vector<8x8xbf16>
    %225 = vector.extract_strided_slice %174 {offsets = [0, 16], sizes = [8, 8], strides = [1, 1]} : vector<8x32xf32> to vector<8x8xf32>
    %226 = arith.truncf %225 : vector<8x8xf32> to vector<8x8xbf16>
    %cst_64 = arith.constant dense<0.000000e+00> : vector<8x8xf32>
    %227 = tpu.matmul %222, %224, %cst_64 {dimension_numbers = #tpu.dot_dimension_numbers<[1], [1], [0], [0], [0, 0, 1, 0], [], []>} : vector<8x8xbf16>, vector<8x8xbf16>, vector<8x8xf32> -> vector<8x8xf32>
    %228 = vector.extract_strided_slice %1 {offsets = [2, 0, 0], sizes = [1, 8, 8], strides = [1, 1, 1]} : vector<4x8x8xf32> to vector<1x8x8xf32>
    %229 = vector.shape_cast %228 : vector<1x8x8xf32> to vector<8x8xf32>
    %230 = arith.addf %227, %229 : vector<8x8xf32>
    %cst_65 = arith.constant dense<0xFF800000> : vector<8xf32>
    %231 = vector.multi_reduction <maximumf>, %230, %cst_65 [1] : vector<8x8xf32> to vector<8xf32>
    %232 = vector.shape_cast %231 : vector<8xf32> to vector<8x1xf32>
    %233 = vector.broadcast %232 : vector<8x1xf32> to vector<8x8xf32>
    %234 = arith.subf %230, %233 : vector<8x8xf32>
    %235 = math.exp %234 : vector<8x8xf32>
    %cst_66 = arith.constant dense<0.000000e+00> : vector<8xf32>
    %236 = vector.multi_reduction <add>, %235, %cst_66 [1] : vector<8x8xf32> to vector<8xf32>
    %237 = vector.shape_cast %236 : vector<8xf32> to vector<8x1xf32>
    %238 = tpu.reciprocal %237 {approx = true} : vector<8x1xf32> -> vector<8x1xf32>
    %239 = vector.broadcast %238 : vector<8x1xf32> to vector<8x8xf32>
    %240 = arith.mulf %235, %239 : vector<8x8xf32>
    %241 = arith.truncf %240 : vector<8x8xf32> to vector<8x8xbf16>
    %cst_67 = arith.constant dense<0.000000e+00> : vector<8x8xf32>
    %242 = tpu.matmul %241, %226, %cst_67 {dimension_numbers = #tpu.dot_dimension_numbers<[1], [0], [0], [1], [0, 0, 1, 1], [], []>} : vector<8x8xbf16>, vector<8x8xbf16>, vector<8x8xf32> -> vector<8x8xf32>
    %243 = vector.extract_strided_slice %172 {offsets = [0, 24], sizes = [8, 8], strides = [1, 1]} : vector<8x32xf32> to vector<8x8xf32>
    %244 = arith.truncf %243 : vector<8x8xf32> to vector<8x8xbf16>
    %245 = vector.extract_strided_slice %173 {offsets = [0, 24], sizes = [8, 8], strides = [1, 1]} : vector<8x32xf32> to vector<8x8xf32>
    %246 = arith.truncf %245 : vector<8x8xf32> to vector<8x8xbf16>
    %247 = vector.extract_strided_slice %174 {offsets = [0, 24], sizes = [8, 8], strides = [1, 1]} : vector<8x32xf32> to vector<8x8xf32>
    %248 = arith.truncf %247 : vector<8x8xf32> to vector<8x8xbf16>
    %cst_68 = arith.constant dense<0.000000e+00> : vector<8x8xf32>
    %249 = tpu.matmul %244, %246, %cst_68 {dimension_numbers = #tpu.dot_dimension_numbers<[1], [1], [0], [0], [0, 0, 1, 0], [], []>} : vector<8x8xbf16>, vector<8x8xbf16>, vector<8x8xf32> -> vector<8x8xf32>
    %250 = vector.extract_strided_slice %1 {offsets = [3, 0, 0], sizes = [1, 8, 8], strides = [1, 1, 1]} : vector<4x8x8xf32> to vector<1x8x8xf32>
    %251 = vector.shape_cast %250 : vector<1x8x8xf32> to vector<8x8xf32>
    %252 = arith.addf %249, %251 : vector<8x8xf32>
    %cst_69 = arith.constant dense<0xFF800000> : vector<8xf32>
    %253 = vector.multi_reduction <maximumf>, %252, %cst_69 [1] : vector<8x8xf32> to vector<8xf32>
    %254 = vector.shape_cast %253 : vector<8xf32> to vector<8x1xf32>
    %255 = vector.broadcast %254 : vector<8x1xf32> to vector<8x8xf32>
    %256 = arith.subf %252, %255 : vector<8x8xf32>
    %257 = math.exp %256 : vector<8x8xf32>
    %cst_70 = arith.constant dense<0.000000e+00> : vector<8xf32>
    %258 = vector.multi_reduction <add>, %257, %cst_70 [1] : vector<8x8xf32> to vector<8xf32>
    %259 = vector.shape_cast %258 : vector<8xf32> to vector<8x1xf32>
    %260 = tpu.reciprocal %259 {approx = true} : vector<8x1xf32> -> vector<8x1xf32>
    %261 = vector.broadcast %260 : vector<8x1xf32> to vector<8x8xf32>
    %262 = arith.mulf %257, %261 : vector<8x8xf32>
    %263 = arith.truncf %262 : vector<8x8xf32> to vector<8x8xbf16>
    %cst_71 = arith.constant dense<0.000000e+00> : vector<8x8xf32>
    %264 = tpu.matmul %263, %248, %cst_71 {dimension_numbers = #tpu.dot_dimension_numbers<[1], [0], [0], [1], [0, 0, 1, 1], [], []>} : vector<8x8xbf16>, vector<8x8xbf16>, vector<8x8xf32> -> vector<8x8xf32>
    %265 = tpu.concatenate %198, %220, %242, %264 in 1 : vector<8x8xf32>, vector<8x8xf32>, vector<8x8xf32>, vector<8x8xf32> -> vector<8x32xf32>
    %266 = arith.truncf %265 : vector<8x32xf32> to vector<8x32xbf16>
    %cst_72 = arith.constant dense<0.000000e+00> : vector<8x32xf32>
    %267 = tpu.matmul %266, %176, %cst_72 {dimension_numbers = #tpu.dot_dimension_numbers<[1], [0], [0], [1], [0, 0, 1, 1], [], []>} : vector<8x32xbf16>, vector<32x32xbf16>, vector<8x32xf32> -> vector<8x32xf32>
    %268 = arith.addf %154, %267 : vector<8x32xf32>
    %269 = vector.extract_strided_slice %2 {offsets = [3, 0], sizes = [1, 32], strides = [1, 1]} : vector<5x32xf32> to vector<1x32xf32>
    %c1_73 = arith.constant 1 : index
    %c0_74 = arith.constant 0 : index
    %c0_75 = arith.constant 0 : index
    %270 = vector.load %arg6[%c1_73, %c0_74, %c0_75] : memref<2x32x128xbf16, #tpu.memory_space<vmem>>, vector<1x32x128xbf16>
    %271 = vector.shape_cast %270 : vector<1x32x128xbf16> to vector<32x128xbf16>
    %c1_76 = arith.constant 1 : index
    %c0_77 = arith.constant 0 : index
    %c0_78 = arith.constant 0 : index
    %272 = vector.load %arg7[%c1_76, %c0_77, %c0_78] : memref<2x64x32xbf16, #tpu.memory_space<vmem>>, vector<1x64x32xbf16>
    %273 = vector.shape_cast %272 : vector<1x64x32xbf16> to vector<64x32xbf16>
    %274 = arith.mulf %268, %268 : vector<8x32xf32>
    %cst_79 = arith.constant dense<0.000000e+00> : vector<8xf32>
    %275 = vector.multi_reduction <add>, %274, %cst_79 [1] : vector<8x32xf32> to vector<8xf32>
    %276 = vector.shape_cast %275 : vector<8xf32> to vector<8x1xf32>
    %cst_80 = arith.constant 3.200000e+01 : f32
    %277 = vector.broadcast %cst_80 : f32 to vector<8x1xf32>
    %278 = arith.divf %276, %277 : vector<8x1xf32>
    %cst_81 = arith.constant 9.99999997E-7 : f32
    %279 = vector.broadcast %cst_81 : f32 to vector<8x1xf32>
    %280 = arith.addf %278, %279 : vector<8x1xf32>
    %281 = math.rsqrt %280 : vector<8x1xf32>
    %282 = vector.broadcast %281 : vector<8x1xf32> to vector<8x32xf32>
    %283 = arith.mulf %268, %282 : vector<8x32xf32>
    %284 = vector.broadcast %269 : vector<1x32xf32> to vector<8x32xf32>
    %285 = arith.mulf %283, %284 : vector<8x32xf32>
    %286 = arith.truncf %285 : vector<8x32xf32> to vector<8x32xbf16>
    %cst_82 = arith.constant dense<0.000000e+00> : vector<8x128xf32>
    %287 = tpu.matmul %286, %271, %cst_82 {dimension_numbers = #tpu.dot_dimension_numbers<[1], [0], [0], [1], [0, 0, 1, 1], [], []>} : vector<8x32xbf16>, vector<32x128xbf16>, vector<8x128xf32> -> vector<8x128xf32>
    %288 = vector.extract_strided_slice %287 {offsets = [0, 0], sizes = [8, 64], strides = [1, 1]} : vector<8x128xf32> to vector<8x64xf32>
    %289 = arith.mulf %288, %288 : vector<8x64xf32>
    %290 = arith.mulf %288, %289 : vector<8x64xf32>
    %cst_83 = arith.constant 4.471500e-02 : f32
    %291 = vector.broadcast %cst_83 : f32 to vector<8x64xf32>
    %292 = arith.mulf %291, %290 : vector<8x64xf32>
    %293 = arith.addf %288, %292 : vector<8x64xf32>
    %cst_84 = arith.constant 0.797884583 : f32
    %294 = vector.broadcast %cst_84 : f32 to vector<8x64xf32>
    %295 = arith.mulf %294, %293 : vector<8x64xf32>
    %296 = math.tanh %295 : vector<8x64xf32>
    %cst_85 = arith.constant 1.000000e+00 : f32
    %297 = vector.broadcast %cst_85 : f32 to vector<8x64xf32>
    %298 = arith.addf %297, %296 : vector<8x64xf32>
    %cst_86 = arith.constant 5.000000e-01 : f32
    %299 = vector.broadcast %cst_86 : f32 to vector<8x64xf32>
    %300 = arith.mulf %299, %298 : vector<8x64xf32>
    %301 = arith.mulf %288, %300 : vector<8x64xf32>
    %302 = vector.extract_strided_slice %287 {offsets = [0, 64], sizes = [8, 64], strides = [1, 1]} : vector<8x128xf32> to vector<8x64xf32>
    %303 = arith.mulf %301, %302 : vector<8x64xf32>
    %304 = arith.truncf %303 : vector<8x64xf32> to vector<8x64xbf16>
    %cst_87 = arith.constant dense<0.000000e+00> : vector<8x32xf32>
    %305 = tpu.matmul %304, %273, %cst_87 {dimension_numbers = #tpu.dot_dimension_numbers<[1], [0], [0], [1], [0, 0, 1, 1], [], []>} : vector<8x64xbf16>, vector<64x32xbf16>, vector<8x32xf32> -> vector<8x32xf32>
    %306 = arith.addf %268, %305 : vector<8x32xf32>
    %307 = vector.extract_strided_slice %2 {offsets = [4, 0], sizes = [1, 32], strides = [1, 1]} : vector<5x32xf32> to vector<1x32xf32>
    %308 = arith.mulf %306, %306 : vector<8x32xf32>
    %cst_88 = arith.constant dense<0.000000e+00> : vector<8xf32>
    %309 = vector.multi_reduction <add>, %308, %cst_88 [1] : vector<8x32xf32> to vector<8xf32>
    %310 = vector.shape_cast %309 : vector<8xf32> to vector<8x1xf32>
    %cst_89 = arith.constant 3.200000e+01 : f32
    %311 = vector.broadcast %cst_89 : f32 to vector<8x1xf32>
    %312 = arith.divf %310, %311 : vector<8x1xf32>
    %cst_90 = arith.constant 9.99999997E-7 : f32
    %313 = vector.broadcast %cst_90 : f32 to vector<8x1xf32>
    %314 = arith.addf %312, %313 : vector<8x1xf32>
    %315 = math.rsqrt %314 : vector<8x1xf32>
    %316 = vector.broadcast %315 : vector<8x1xf32> to vector<8x32xf32>
    %317 = arith.mulf %306, %316 : vector<8x32xf32>
    %318 = vector.broadcast %307 : vector<1x32xf32> to vector<8x32xf32>
    %319 = arith.mulf %317, %318 : vector<8x32xf32>
    %c0_91 = arith.constant 0 : index
    %c0_92 = arith.constant 0 : index
    %320 = vector.load %arg8[%c0_91, %c0_92] : memref<8x32xf32, #tpu.memory_space<vmem>>, vector<8x32xf32>
    tpu.vector_store %arg8[%c0_91, %c0_92], %319 {strides = array<i32>} : memref<8x32xf32, #tpu.memory_space<vmem>>, vector<8x32xf32>,
    return
  }
  func.func @transform_0(%arg0: i32) -> (i32, i32) {
    %c0_i32 = arith.constant 0 : i32
    %c0_i32_0 = arith.constant 0 : i32
    return %arg0, %c0_i32 : i32, i32
  }
  func.func @transform_1(%arg0: i32) -> (i32, i32, i32) {
    %c0_i32 = arith.constant 0 : i32
    %c0_i32_0 = arith.constant 0 : i32
    %c0_i32_1 = arith.constant 0 : i32
    %c0_i32_2 = arith.constant 0 : i32
    return %c0_i32, %c0_i32_0, %c0_i32_1 : i32, i32, i32
  }
  func.func @transform_2(%arg0: i32) -> (i32, i32) {
    %c0_i32 = arith.constant 0 : i32
    %c0_i32_0 = arith.constant 0 : i32
    %c0_i32_1 = arith.constant 0 : i32
    return %c0_i32, %c0_i32_0 : i32, i32
  }
  func.func @transform_3(%arg0: i32) -> (i32, i32, i32) {
    %c0_i32 = arith.constant 0 : i32
    %c0_i32_0 = arith.constant 0 : i32
    %c0_i32_1 = arith.constant 0 : i32
    %c0_i32_2 = arith.constant 0 : i32
    return %c0_i32, %c0_i32_0, %c0_i32_1 : i32, i32, i32
  }
  func.func @transform_4(%arg0: i32) -> (i32, i32, i32) {
    %c0_i32 = arith.constant 0 : i32
    %c0_i32_0 = arith.constant 0 : i32
    %c0_i32_1 = arith.constant 0 : i32
    %c0_i32_2 = arith.constant 0 : i32
    return %c0_i32, %c0_i32_0, %c0_i32_1 : i32, i32, i32
  }
  func.func @transform_5(%arg0: i32) -> (i32, i32, i32) {
    %c0_i32 = arith.constant 0 : i32
    %c0_i32_0 = arith.constant 0 : i32
    %c0_i32_1 = arith.constant 0 : i32
    %c0_i32_2 = arith.constant 0 : i32
    return %c0_i32, %c0_i32_0, %c0_i32_1 : i32, i32, i32
  }
  func.func @transform_6(%arg0: i32) -> (i32, i32, i32) {
    %c0_i32 = arith.constant 0 : i32
    %c0_i32_0 = arith.constant 0 : i32
    %c0_i32_1 = arith.constant 0 : i32
    %c0_i32_2 = arith.constant 0 : i32
    return %c0_i32, %c0_i32_0, %c0_i32_1 : i32, i32, i32
  }
  func.func @transform_7(%arg0: i32) -> (i32, i32) {
    %c0_i32 = arith.constant 0 : i32
    %c0_i32_0 = arith.constant 0 : i32
    return %arg0, %c0_i32 : i32, i32
  }
}

module attributes {stable_mosaic.version = 11 : i64} {
  func.func @_lm_head_ce_kernel(%arg0: memref<16x32xf32, #tpu.memory_space<vmem>>, %arg1: memref<32x64xbf16, #tpu.memory_space<vmem>>, %arg2: memref<16x1xi32, #tpu.memory_space<vmem>>, %arg3: memref<16x64xf32, #tpu.memory_space<vmem>>, %arg4: memref<1x1xf32, #tpu.memory_space<smem>>) attributes {dimension_semantics = [], scalar_prefetch = 0 : i64, scratch_operands = 0 : i64, tpu.core_type = #tpu.core_type<tc>} {
    %c0 = arith.constant 0 : index
    %c0_0 = arith.constant 0 : index
    %0 = vector.load %arg0[%c0, %c0_0] : memref<16x32xf32, #tpu.memory_space<vmem>>, vector<16x32xf32>
    %1 = arith.truncf %0 : vector<16x32xf32> to vector<16x32xbf16>
    %c0_1 = arith.constant 0 : index
    %c0_2 = arith.constant 0 : index
    %2 = vector.load %arg1[%c0_1, %c0_2] : memref<32x64xbf16, #tpu.memory_space<vmem>>, vector<32x64xbf16>
    %cst = arith.constant dense<0.000000e+00> : vector<16x64xf32>
    %3 = tpu.matmul %1, %2, %cst {dimension_numbers = #tpu.dot_dimension_numbers<[1], [0], [0], [1], [0, 0, 1, 1], [], []>} : vector<16x32xbf16>, vector<32x64xbf16>, vector<16x64xf32> -> vector<16x64xf32>
    %c0_3 = arith.constant 0 : index
    %c0_4 = arith.constant 0 : index
    %4 = vector.load %arg3[%c0_3, %c0_4] : memref<16x64xf32, #tpu.memory_space<vmem>>, vector<16x64xf32>
    tpu.vector_store %arg3[%c0_3, %c0_4], %3 {strides = array<i32>} : memref<16x64xf32, #tpu.memory_space<vmem>>, vector<16x64xf32>,
    %c0_5 = arith.constant 0 : index
    %c0_6 = arith.constant 0 : index
    %5 = vector.load %arg2[%c0_5, %c0_6] : memref<16x1xi32, #tpu.memory_space<vmem>>, vector<16x1xi32>
    %cst_7 = arith.constant dense<0xFF800000> : vector<16xf32>
    %6 = vector.multi_reduction <maximumf>, %3, %cst_7 [1] : vector<16x64xf32> to vector<16xf32>
    %7 = vector.shape_cast %6 : vector<16xf32> to vector<16x1xf32>
    %8 = vector.broadcast %7 : vector<16x1xf32> to vector<16x64xf32>
    %9 = arith.subf %3, %8 : vector<16x64xf32>
    %10 = math.exp %9 : vector<16x64xf32>
    %cst_8 = arith.constant dense<0.000000e+00> : vector<16xf32>
    %11 = vector.multi_reduction <add>, %10, %cst_8 [1] : vector<16x64xf32> to vector<16xf32>
    %12 = vector.shape_cast %11 : vector<16xf32> to vector<16x1xf32>
    %13 = math.log %12 : vector<16x1xf32>
    %14 = arith.addf %7, %13 : vector<16x1xf32>
    %15 = tpu.iota {dimensions = array<i32: 1>} : vector<16x64xi32>
    %16 = vector.broadcast %5 : vector<16x1xi32> to vector<16x64xi32>
    %17 = arith.cmpi eq, %15, %16 : vector<16x64xi32>
    %cst_9 = arith.constant 0.000000e+00 : f32
    %18 = vector.broadcast %cst_9 : f32 to vector<16x64xf32>
    %19 = arith.select %17, %3, %18 : vector<16x64xi1>, vector<16x64xf32>
    %cst_10 = arith.constant dense<0.000000e+00> : vector<16xf32>
    %20 = vector.multi_reduction <add>, %19, %cst_10 [1] : vector<16x64xf32> to vector<16xf32>
    %21 = vector.shape_cast %20 : vector<16xf32> to vector<16x1xf32>
    %c-100_i32 = arith.constant -100 : i32
    %22 = vector.broadcast %c-100_i32 : i32 to vector<16x1xi32>
    %23 = arith.cmpi ne, %5, %22 : vector<16x1xi32>
    %24 = arith.extui %23 : vector<16x1xi1> to vector<16x1xi32>
    %25 = arith.sitofp %24 : vector<16x1xi32> to vector<16x1xf32>
    %26 = arith.subf %14, %21 : vector<16x1xf32>
    %27 = arith.mulf %26, %25 : vector<16x1xf32>
    %cst_11 = arith.constant dense<0.000000e+00> : vector<1xf32>
    %28 = vector.multi_reduction <add>, %25, %cst_11 [0] : vector<16x1xf32> to vector<1xf32>
    %29 = vector.shape_cast %28 : vector<1xf32> to vector<1x1xf32>
    %cst_12 = arith.constant 1.000000e+00 : f32
    %30 = vector.broadcast %cst_12 : f32 to vector<1x1xf32>
    %31 = arith.maximumf %29, %30 : vector<1x1xf32>
    %cst_13 = arith.constant dense<0.000000e+00> : vector<1xf32>
    %32 = vector.multi_reduction <add>, %27, %cst_13 [0] : vector<16x1xf32> to vector<1xf32>
    %33 = vector.shape_cast %32 : vector<1xf32> to vector<1x1xf32>
    %34 = arith.divf %33, %31 : vector<1x1xf32>
    %35 = vector.extract %34[0, 0] : f32 from vector<1x1xf32>
    %c0_14 = arith.constant 0 : index
    %c0_15 = arith.constant 0 : index
    %36 = memref.load %arg4[%c0_14, %c0_15] : memref<1x1xf32, #tpu.memory_space<smem>>
    memref.store %35, %arg4[%c0_14, %c0_15] : memref<1x1xf32, #tpu.memory_space<smem>>
    return
  }
}

module attributes {stable_mosaic.version = 11 : i64} {
  func.func @_decoder_stack_kernel(%arg0: i32, %arg1: memref<8x32xf32, #tpu.memory_space<vmem>>, %arg2: memref<8x32xf32, #tpu.memory_space<vmem>>, %arg3: memref<4x8x8xf32, #tpu.memory_space<vmem>>, %arg4: memref<7x32xf32, #tpu.memory_space<vmem>>, %arg5: memref<2x32x192xbf16, #tpu.memory_space<vmem>>, %arg6: memref<2x64x32xbf16, #tpu.memory_space<vmem>>, %arg7: memref<2x32x128xbf16, #tpu.memory_space<vmem>>, %arg8: memref<2x64x32xbf16, #tpu.memory_space<vmem>>, %arg9: memref<8x32xf32, #tpu.memory_space<vmem>>) attributes {dimension_semantics = [#tpu.dimension_semantics<parallel>], iteration_bounds = array<i64: 2>, scalar_prefetch = 0 : i64, scratch_operands = 0 : i64, tpu.core_type = #tpu.core_type<tc>, window_params = [{transform_indices = @transform_0, window_bounds = array<i64: 8, 32>}, {transform_indices = @transform_1, window_bounds = array<i64: 8, 32>}, {pipeline_mode = #tpu.pipeline_mode<synchronous>, transform_indices = @transform_2, window_bounds = array<i64: 4, 8, 8>}, {pipeline_mode = #tpu.pipeline_mode<synchronous>, transform_indices = @transform_3, window_bounds = array<i64: 7, 32>}, {pipeline_mode = #tpu.pipeline_mode<synchronous>, transform_indices = @transform_4, window_bounds = array<i64: 2, 32, 192>}, {pipeline_mode = #tpu.pipeline_mode<synchronous>, transform_indices = @transform_5, window_bounds = array<i64: 2, 64, 32>}, {pipeline_mode = #tpu.pipeline_mode<synchronous>, transform_indices = @transform_6, window_bounds = array<i64: 2, 32, 128>}, {pipeline_mode = #tpu.pipeline_mode<synchronous>, transform_indices = @transform_7, window_bounds = array<i64: 2, 64, 32>}, {transform_indices = @transform_8, window_bounds = array<i64: 8, 32>}]} {
    %c0 = arith.constant 0 : index
    %c0_0 = arith.constant 0 : index
    %0 = vector.load %arg1[%c0, %c0_0] : memref<8x32xf32, #tpu.memory_space<vmem>>, vector<8x32xf32>
    %c0_1 = arith.constant 0 : index
    %c0_2 = arith.constant 0 : index
    %1 = vector.load %arg2[%c0_1, %c0_2] : memref<8x32xf32, #tpu.memory_space<vmem>>, vector<8x32xf32>
    %2 = arith.truncf %1 : vector<8x32xf32> to vector<8x32xbf16>
    %c0_3 = arith.constant 0 : index
    %c0_4 = arith.constant 0 : index
    %c0_5 = arith.constant 0 : index
    %3 = vector.load %arg3[%c0_3, %c0_4, %c0_5] : memref<4x8x8xf32, #tpu.memory_space<vmem>>, vector<4x8x8xf32>
    %c0_6 = arith.constant 0 : index
    %c0_7 = arith.constant 0 : index
    %4 = vector.load %arg4[%c0_6, %c0_7] : memref<7x32xf32, #tpu.memory_space<vmem>>, vector<7x32xf32>
    %c0_8 = arith.constant 0 : index
    %c0_9 = arith.constant 0 : index
    %c0_10 = arith.constant 0 : index
    %5 = vector.load %arg5[%c0_8, %c0_9, %c0_10] : memref<2x32x192xbf16, #tpu.memory_space<vmem>>, vector<1x32x192xbf16>
    %6 = vector.shape_cast %5 : vector<1x32x192xbf16> to vector<32x192xbf16>
    %c0_11 = arith.constant 0 : index
    %c0_12 = arith.constant 0 : index
    %c0_13 = arith.constant 0 : index
    %7 = vector.load %arg6[%c0_11, %c0_12, %c0_13] : memref<2x64x32xbf16, #tpu.memory_space<vmem>>, vector<1x64x32xbf16>
    %8 = vector.shape_cast %7 : vector<1x64x32xbf16> to vector<64x32xbf16>
    %9 = vector.extract_strided_slice %4 {offsets = [0, 0], sizes = [1, 32], strides = [1, 1]} : vector<7x32xf32> to vector<1x32xf32>
    %10 = arith.mulf %0, %0 : vector<8x32xf32>
    %cst = arith.constant dense<0.000000e+00> : vector<8xf32>
    %11 = vector.multi_reduction <add>, %10, %cst [1] : vector<8x32xf32> to vector<8xf32>
    %12 = vector.shape_cast %11 : vector<8xf32> to vector<8x1xf32>
    %cst_14 = arith.constant 3.200000e+01 : f32
    %13 = vector.broadcast %cst_14 : f32 to vector<8x1xf32>
    %14 = arith.divf %12, %13 : vector<8x1xf32>
    %cst_15 = arith.constant 9.99999997E-7 : f32
    %15 = vector.broadcast %cst_15 : f32 to vector<8x1xf32>
    %16 = arith.addf %14, %15 : vector<8x1xf32>
    %17 = math.rsqrt %16 : vector<8x1xf32>
    %18 = vector.broadcast %17 : vector<8x1xf32> to vector<8x32xf32>
    %19 = arith.mulf %0, %18 : vector<8x32xf32>
    %20 = vector.broadcast %9 : vector<1x32xf32> to vector<8x32xf32>
    %21 = arith.mulf %19, %20 : vector<8x32xf32>
    %22 = arith.truncf %21 : vector<8x32xf32> to vector<8x32xbf16>
    %23 = vector.extract_strided_slice %6 {offsets = [0, 0], sizes = [32, 96], strides = [1, 1]} : vector<32x192xbf16> to vector<32x96xbf16>
    %cst_16 = arith.constant dense<0.000000e+00> : vector<8x96xf32>
    %24 = tpu.matmul %22, %23, %cst_16 {dimension_numbers = #tpu.dot_dimension_numbers<[1], [0], [0], [1], [0, 0, 1, 1], [], []>} : vector<8x32xbf16>, vector<32x96xbf16>, vector<8x96xf32> -> vector<8x96xf32>
    %25 = vector.extract_strided_slice %24 {offsets = [0, 0], sizes = [8, 32], strides = [1, 1]} : vector<8x96xf32> to vector<8x32xf32>
    %26 = vector.extract_strided_slice %24 {offsets = [0, 32], sizes = [8, 32], strides = [1, 1]} : vector<8x96xf32> to vector<8x32xf32>
    %27 = vector.extract_strided_slice %24 {offsets = [0, 64], sizes = [8, 32], strides = [1, 1]} : vector<8x96xf32> to vector<8x32xf32>
    %28 = vector.extract_strided_slice %8 {offsets = [0, 0], sizes = [32, 32], strides = [1, 1]} : vector<64x32xbf16> to vector<32x32xbf16>
    %29 = vector.extract_strided_slice %25 {offsets = [0, 0], sizes = [8, 8], strides = [1, 1]} : vector<8x32xf32> to vector<8x8xf32>
    %30 = arith.truncf %29 : vector<8x8xf32> to vector<8x8xbf16>
    %31 = vector.extract_strided_slice %26 {offsets = [0, 0], sizes = [8, 8], strides = [1, 1]} : vector<8x32xf32> to vector<8x8xf32>
    %32 = arith.truncf %31 : vector<8x8xf32> to vector<8x8xbf16>
    %33 = vector.extract_strided_slice %27 {offsets = [0, 0], sizes = [8, 8], strides = [1, 1]} : vector<8x32xf32> to vector<8x8xf32>
    %34 = arith.truncf %33 : vector<8x8xf32> to vector<8x8xbf16>
    %cst_17 = arith.constant dense<0.000000e+00> : vector<8x8xf32>
    %35 = tpu.matmul %30, %32, %cst_17 {dimension_numbers = #tpu.dot_dimension_numbers<[1], [1], [0], [0], [0, 0, 1, 0], [], []>} : vector<8x8xbf16>, vector<8x8xbf16>, vector<8x8xf32> -> vector<8x8xf32>
    %36 = vector.extract_strided_slice %3 {offsets = [0, 0, 0], sizes = [1, 8, 8], strides = [1, 1, 1]} : vector<4x8x8xf32> to vector<1x8x8xf32>
    %37 = vector.shape_cast %36 : vector<1x8x8xf32> to vector<8x8xf32>
    %38 = arith.addf %35, %37 : vector<8x8xf32>
    %cst_18 = arith.constant dense<0xFF800000> : vector<8xf32>
    %39 = vector.multi_reduction <maximumf>, %38, %cst_18 [1] : vector<8x8xf32> to vector<8xf32>
    %40 = vector.shape_cast %39 : vector<8xf32> to vector<8x1xf32>
    %41 = vector.broadcast %40 : vector<8x1xf32> to vector<8x8xf32>
    %42 = arith.subf %38, %41 : vector<8x8xf32>
    %43 = math.exp %42 : vector<8x8xf32>
    %cst_19 = arith.constant dense<0.000000e+00> : vector<8xf32>
    %44 = vector.multi_reduction <add>, %43, %cst_19 [1] : vector<8x8xf32> to vector<8xf32>
    %45 = vector.shape_cast %44 : vector<8xf32> to vector<8x1xf32>
    %46 = tpu.reciprocal %45 {approx = true} : vector<8x1xf32> -> vector<8x1xf32>
    %47 = vector.broadcast %46 : vector<8x1xf32> to vector<8x8xf32>
    %48 = arith.mulf %43, %47 : vector<8x8xf32>
    %49 = arith.truncf %48 : vector<8x8xf32> to vector<8x8xbf16>
    %cst_20 = arith.constant dense<0.000000e+00> : vector<8x8xf32>
    %50 = tpu.matmul %49, %34, %cst_20 {dimension_numbers = #tpu.dot_dimension_numbers<[1], [0], [0], [1], [0, 0, 1, 1], [], []>} : vector<8x8xbf16>, vector<8x8xbf16>, vector<8x8xf32> -> vector<8x8xf32>
    %51 = vector.extract_strided_slice %25 {offsets = [0, 8], sizes = [8, 8], strides = [1, 1]} : vector<8x32xf32> to vector<8x8xf32>
    %52 = arith.truncf %51 : vector<8x8xf32> to vector<8x8xbf16>
    %53 = vector.extract_strided_slice %26 {offsets = [0, 8], sizes = [8, 8], strides = [1, 1]} : vector<8x32xf32> to vector<8x8xf32>
    %54 = arith.truncf %53 : vector<8x8xf32> to vector<8x8xbf16>
    %55 = vector.extract_strided_slice %27 {offsets = [0, 8], sizes = [8, 8], strides = [1, 1]} : vector<8x32xf32> to vector<8x8xf32>
    %56 = arith.truncf %55 : vector<8x8xf32> to vector<8x8xbf16>
    %cst_21 = arith.constant dense<0.000000e+00> : vector<8x8xf32>
    %57 = tpu.matmul %52, %54, %cst_21 {dimension_numbers = #tpu.dot_dimension_numbers<[1], [1], [0], [0], [0, 0, 1, 0], [], []>} : vector<8x8xbf16>, vector<8x8xbf16>, vector<8x8xf32> -> vector<8x8xf32>
    %58 = vector.extract_strided_slice %3 {offsets = [1, 0, 0], sizes = [1, 8, 8], strides = [1, 1, 1]} : vector<4x8x8xf32> to vector<1x8x8xf32>
    %59 = vector.shape_cast %58 : vector<1x8x8xf32> to vector<8x8xf32>
    %60 = arith.addf %57, %59 : vector<8x8xf32>
    %cst_22 = arith.constant dense<0xFF800000> : vector<8xf32>
    %61 = vector.multi_reduction <maximumf>, %60, %cst_22 [1] : vector<8x8xf32> to vector<8xf32>
    %62 = vector.shape_cast %61 : vector<8xf32> to vector<8x1xf32>
    %63 = vector.broadcast %62 : vector<8x1xf32> to vector<8x8xf32>
    %64 = arith.subf %60, %63 : vector<8x8xf32>
    %65 = math.exp %64 : vector<8x8xf32>
    %cst_23 = arith.constant dense<0.000000e+00> : vector<8xf32>
    %66 = vector.multi_reduction <add>, %65, %cst_23 [1] : vector<8x8xf32> to vector<8xf32>
    %67 = vector.shape_cast %66 : vector<8xf32> to vector<8x1xf32>
    %68 = tpu.reciprocal %67 {approx = true} : vector<8x1xf32> -> vector<8x1xf32>
    %69 = vector.broadcast %68 : vector<8x1xf32> to vector<8x8xf32>
    %70 = arith.mulf %65, %69 : vector<8x8xf32>
    %71 = arith.truncf %70 : vector<8x8xf32> to vector<8x8xbf16>
    %cst_24 = arith.constant dense<0.000000e+00> : vector<8x8xf32>
    %72 = tpu.matmul %71, %56, %cst_24 {dimension_numbers = #tpu.dot_dimension_numbers<[1], [0], [0], [1], [0, 0, 1, 1], [], []>} : vector<8x8xbf16>, vector<8x8xbf16>, vector<8x8xf32> -> vector<8x8xf32>
    %73 = vector.extract_strided_slice %25 {offsets = [0, 16], sizes = [8, 8], strides = [1, 1]} : vector<8x32xf32> to vector<8x8xf32>
    %74 = arith.truncf %73 : vector<8x8xf32> to vector<8x8xbf16>
    %75 = vector.extract_strided_slice %26 {offsets = [0, 16], sizes = [8, 8], strides = [1, 1]} : vector<8x32xf32> to vector<8x8xf32>
    %76 = arith.truncf %75 : vector<8x8xf32> to vector<8x8xbf16>
    %77 = vector.extract_strided_slice %27 {offsets = [0, 16], sizes = [8, 8], strides = [1, 1]} : vector<8x32xf32> to vector<8x8xf32>
    %78 = arith.truncf %77 : vector<8x8xf32> to vector<8x8xbf16>
    %cst_25 = arith.constant dense<0.000000e+00> : vector<8x8xf32>
    %79 = tpu.matmul %74, %76, %cst_25 {dimension_numbers = #tpu.dot_dimension_numbers<[1], [1], [0], [0], [0, 0, 1, 0], [], []>} : vector<8x8xbf16>, vector<8x8xbf16>, vector<8x8xf32> -> vector<8x8xf32>
    %80 = vector.extract_strided_slice %3 {offsets = [2, 0, 0], sizes = [1, 8, 8], strides = [1, 1, 1]} : vector<4x8x8xf32> to vector<1x8x8xf32>
    %81 = vector.shape_cast %80 : vector<1x8x8xf32> to vector<8x8xf32>
    %82 = arith.addf %79, %81 : vector<8x8xf32>
    %cst_26 = arith.constant dense<0xFF800000> : vector<8xf32>
    %83 = vector.multi_reduction <maximumf>, %82, %cst_26 [1] : vector<8x8xf32> to vector<8xf32>
    %84 = vector.shape_cast %83 : vector<8xf32> to vector<8x1xf32>
    %85 = vector.broadcast %84 : vector<8x1xf32> to vector<8x8xf32>
    %86 = arith.subf %82, %85 : vector<8x8xf32>
    %87 = math.exp %86 : vector<8x8xf32>
    %cst_27 = arith.constant dense<0.000000e+00> : vector<8xf32>
    %88 = vector.multi_reduction <add>, %87, %cst_27 [1] : vector<8x8xf32> to vector<8xf32>
    %89 = vector.shape_cast %88 : vector<8xf32> to vector<8x1xf32>
    %90 = tpu.reciprocal %89 {approx = true} : vector<8x1xf32> -> vector<8x1xf32>
    %91 = vector.broadcast %90 : vector<8x1xf32> to vector<8x8xf32>
    %92 = arith.mulf %87, %91 : vector<8x8xf32>
    %93 = arith.truncf %92 : vector<8x8xf32> to vector<8x8xbf16>
    %cst_28 = arith.constant dense<0.000000e+00> : vector<8x8xf32>
    %94 = tpu.matmul %93, %78, %cst_28 {dimension_numbers = #tpu.dot_dimension_numbers<[1], [0], [0], [1], [0, 0, 1, 1], [], []>} : vector<8x8xbf16>, vector<8x8xbf16>, vector<8x8xf32> -> vector<8x8xf32>
    %95 = vector.extract_strided_slice %25 {offsets = [0, 24], sizes = [8, 8], strides = [1, 1]} : vector<8x32xf32> to vector<8x8xf32>
    %96 = arith.truncf %95 : vector<8x8xf32> to vector<8x8xbf16>
    %97 = vector.extract_strided_slice %26 {offsets = [0, 24], sizes = [8, 8], strides = [1, 1]} : vector<8x32xf32> to vector<8x8xf32>
    %98 = arith.truncf %97 : vector<8x8xf32> to vector<8x8xbf16>
    %99 = vector.extract_strided_slice %27 {offsets = [0, 24], sizes = [8, 8], strides = [1, 1]} : vector<8x32xf32> to vector<8x8xf32>
    %100 = arith.truncf %99 : vector<8x8xf32> to vector<8x8xbf16>
    %cst_29 = arith.constant dense<0.000000e+00> : vector<8x8xf32>
    %101 = tpu.matmul %96, %98, %cst_29 {dimension_numbers = #tpu.dot_dimension_numbers<[1], [1], [0], [0], [0, 0, 1, 0], [], []>} : vector<8x8xbf16>, vector<8x8xbf16>, vector<8x8xf32> -> vector<8x8xf32>
    %102 = vector.extract_strided_slice %3 {offsets = [3, 0, 0], sizes = [1, 8, 8], strides = [1, 1, 1]} : vector<4x8x8xf32> to vector<1x8x8xf32>
    %103 = vector.shape_cast %102 : vector<1x8x8xf32> to vector<8x8xf32>
    %104 = arith.addf %101, %103 : vector<8x8xf32>
    %cst_30 = arith.constant dense<0xFF800000> : vector<8xf32>
    %105 = vector.multi_reduction <maximumf>, %104, %cst_30 [1] : vector<8x8xf32> to vector<8xf32>
    %106 = vector.shape_cast %105 : vector<8xf32> to vector<8x1xf32>
    %107 = vector.broadcast %106 : vector<8x1xf32> to vector<8x8xf32>
    %108 = arith.subf %104, %107 : vector<8x8xf32>
    %109 = math.exp %108 : vector<8x8xf32>
    %cst_31 = arith.constant dense<0.000000e+00> : vector<8xf32>
    %110 = vector.multi_reduction <add>, %109, %cst_31 [1] : vector<8x8xf32> to vector<8xf32>
    %111 = vector.shape_cast %110 : vector<8xf32> to vector<8x1xf32>
    %112 = tpu.reciprocal %111 {approx = true} : vector<8x1xf32> -> vector<8x1xf32>
    %113 = vector.broadcast %112 : vector<8x1xf32> to vector<8x8xf32>
    %114 = arith.mulf %109, %113 : vector<8x8xf32>
    %115 = arith.truncf %114 : vector<8x8xf32> to vector<8x8xbf16>
    %cst_32 = arith.constant dense<0.000000e+00> : vector<8x8xf32>
    %116 = tpu.matmul %115, %100, %cst_32 {dimension_numbers = #tpu.dot_dimension_numbers<[1], [0], [0], [1], [0, 0, 1, 1], [], []>} : vector<8x8xbf16>, vector<8x8xbf16>, vector<8x8xf32> -> vector<8x8xf32>
    %117 = tpu.concatenate %50, %72, %94, %116 in 1 : vector<8x8xf32>, vector<8x8xf32>, vector<8x8xf32>, vector<8x8xf32> -> vector<8x32xf32>
    %118 = arith.truncf %117 : vector<8x32xf32> to vector<8x32xbf16>
    %cst_33 = arith.constant dense<0.000000e+00> : vector<8x32xf32>
    %119 = tpu.matmul %118, %28, %cst_33 {dimension_numbers = #tpu.dot_dimension_numbers<[1], [0], [0], [1], [0, 0, 1, 1], [], []>} : vector<8x32xbf16>, vector<32x32xbf16>, vector<8x32xf32> -> vector<8x32xf32>
    %120 = arith.addf %0, %119 : vector<8x32xf32>
    %121 = vector.extract_strided_slice %4 {offsets = [1, 0], sizes = [1, 32], strides = [1, 1]} : vector<7x32xf32> to vector<1x32xf32>
    %122 = arith.mulf %120, %120 : vector<8x32xf32>
    %cst_34 = arith.constant dense<0.000000e+00> : vector<8xf32>
    %123 = vector.multi_reduction <add>, %122, %cst_34 [1] : vector<8x32xf32> to vector<8xf32>
    %124 = vector.shape_cast %123 : vector<8xf32> to vector<8x1xf32>
    %cst_35 = arith.constant 3.200000e+01 : f32
    %125 = vector.broadcast %cst_35 : f32 to vector<8x1xf32>
    %126 = arith.divf %124, %125 : vector<8x1xf32>
    %cst_36 = arith.constant 9.99999997E-7 : f32
    %127 = vector.broadcast %cst_36 : f32 to vector<8x1xf32>
    %128 = arith.addf %126, %127 : vector<8x1xf32>
    %129 = math.rsqrt %128 : vector<8x1xf32>
    %130 = vector.broadcast %129 : vector<8x1xf32> to vector<8x32xf32>
    %131 = arith.mulf %120, %130 : vector<8x32xf32>
    %132 = vector.broadcast %121 : vector<1x32xf32> to vector<8x32xf32>
    %133 = arith.mulf %131, %132 : vector<8x32xf32>
    %134 = arith.truncf %133 : vector<8x32xf32> to vector<8x32xbf16>
    %135 = vector.extract_strided_slice %6 {offsets = [0, 96], sizes = [32, 32], strides = [1, 1]} : vector<32x192xbf16> to vector<32x32xbf16>
    %cst_37 = arith.constant dense<0.000000e+00> : vector<8x32xf32>
    %136 = tpu.matmul %134, %135, %cst_37 {dimension_numbers = #tpu.dot_dimension_numbers<[1], [0], [0], [1], [0, 0, 1, 1], [], []>} : vector<8x32xbf16>, vector<32x32xbf16>, vector<8x32xf32> -> vector<8x32xf32>
    %137 = vector.extract_strided_slice %6 {offsets = [0, 128], sizes = [32, 64], strides = [1, 1]} : vector<32x192xbf16> to vector<32x64xbf16>
    %cst_38 = arith.constant dense<0.000000e+00> : vector<8x64xf32>
    %138 = tpu.matmul %2, %137, %cst_38 {dimension_numbers = #tpu.dot_dimension_numbers<[1], [0], [0], [1], [0, 0, 1, 1], [], []>} : vector<8x32xbf16>, vector<32x64xbf16>, vector<8x64xf32> -> vector<8x64xf32>
    %139 = vector.extract_strided_slice %138 {offsets = [0, 0], sizes = [8, 32], strides = [1, 1]} : vector<8x64xf32> to vector<8x32xf32>
    %140 = vector.extract_strided_slice %138 {offsets = [0, 32], sizes = [8, 32], strides = [1, 1]} : vector<8x64xf32> to vector<8x32xf32>
    %141 = vector.extract_strided_slice %8 {offsets = [32, 0], sizes = [32, 32], strides = [1, 1]} : vector<64x32xbf16> to vector<32x32xbf16>
    %142 = vector.extract_strided_slice %136 {offsets = [0, 0], sizes = [8, 8], strides = [1, 1]} : vector<8x32xf32> to vector<8x8xf32>
    %143 = arith.truncf %142 : vector<8x8xf32> to vector<8x8xbf16>
    %144 = vector.extract_strided_slice %139 {offsets = [0, 0], sizes = [8, 8], strides = [1, 1]} : vector<8x32xf32> to vector<8x8xf32>
    %145 = arith.truncf %144 : vector<8x8xf32> to vector<8x8xbf16>
    %146 = vector.extract_strided_slice %140 {offsets = [0, 0], sizes = [8, 8], strides = [1, 1]} : vector<8x32xf32> to vector<8x8xf32>
    %147 = arith.truncf %146 : vector<8x8xf32> to vector<8x8xbf16>
    %cst_39 = arith.constant dense<0.000000e+00> : vector<8x8xf32>
    %148 = tpu.matmul %143, %145, %cst_39 {dimension_numbers = #tpu.dot_dimension_numbers<[1], [1], [0], [0], [0, 0, 1, 0], [], []>} : vector<8x8xbf16>, vector<8x8xbf16>, vector<8x8xf32> -> vector<8x8xf32>
    %cst_40 = arith.constant dense<0xFF800000> : vector<8xf32>
    %149 = vector.multi_reduction <maximumf>, %148, %cst_40 [1] : vector<8x8xf32> to vector<8xf32>
    %150 = vector.shape_cast %149 : vector<8xf32> to vector<8x1xf32>
    %151 = vector.broadcast %150 : vector<8x1xf32> to vector<8x8xf32>
    %152 = arith.subf %148, %151 : vector<8x8xf32>
    %153 = math.exp %152 : vector<8x8xf32>
    %cst_41 = arith.constant dense<0.000000e+00> : vector<8xf32>
    %154 = vector.multi_reduction <add>, %153, %cst_41 [1] : vector<8x8xf32> to vector<8xf32>
    %155 = vector.shape_cast %154 : vector<8xf32> to vector<8x1xf32>
    %156 = tpu.reciprocal %155 {approx = true} : vector<8x1xf32> -> vector<8x1xf32>
    %157 = vector.broadcast %156 : vector<8x1xf32> to vector<8x8xf32>
    %158 = arith.mulf %153, %157 : vector<8x8xf32>
    %159 = arith.truncf %158 : vector<8x8xf32> to vector<8x8xbf16>
    %cst_42 = arith.constant dense<0.000000e+00> : vector<8x8xf32>
    %160 = tpu.matmul %159, %147, %cst_42 {dimension_numbers = #tpu.dot_dimension_numbers<[1], [0], [0], [1], [0, 0, 1, 1], [], []>} : vector<8x8xbf16>, vector<8x8xbf16>, vector<8x8xf32> -> vector<8x8xf32>
    %161 = vector.extract_strided_slice %136 {offsets = [0, 8], sizes = [8, 8], strides = [1, 1]} : vector<8x32xf32> to vector<8x8xf32>
    %162 = arith.truncf %161 : vector<8x8xf32> to vector<8x8xbf16>
    %163 = vector.extract_strided_slice %139 {offsets = [0, 8], sizes = [8, 8], strides = [1, 1]} : vector<8x32xf32> to vector<8x8xf32>
    %164 = arith.truncf %163 : vector<8x8xf32> to vector<8x8xbf16>
    %165 = vector.extract_strided_slice %140 {offsets = [0, 8], sizes = [8, 8], strides = [1, 1]} : vector<8x32xf32> to vector<8x8xf32>
    %166 = arith.truncf %165 : vector<8x8xf32> to vector<8x8xbf16>
    %cst_43 = arith.constant dense<0.000000e+00> : vector<8x8xf32>
    %167 = tpu.matmul %162, %164, %cst_43 {dimension_numbers = #tpu.dot_dimension_numbers<[1], [1], [0], [0], [0, 0, 1, 0], [], []>} : vector<8x8xbf16>, vector<8x8xbf16>, vector<8x8xf32> -> vector<8x8xf32>
    %cst_44 = arith.constant dense<0xFF800000> : vector<8xf32>
    %168 = vector.multi_reduction <maximumf>, %167, %cst_44 [1] : vector<8x8xf32> to vector<8xf32>
    %169 = vector.shape_cast %168 : vector<8xf32> to vector<8x1xf32>
    %170 = vector.broadcast %169 : vector<8x1xf32> to vector<8x8xf32>
    %171 = arith.subf %167, %170 : vector<8x8xf32>
    %172 = math.exp %171 : vector<8x8xf32>
    %cst_45 = arith.constant dense<0.000000e+00> : vector<8xf32>
    %173 = vector.multi_reduction <add>, %172, %cst_45 [1] : vector<8x8xf32> to vector<8xf32>
    %174 = vector.shape_cast %173 : vector<8xf32> to vector<8x1xf32>
    %175 = tpu.reciprocal %174 {approx = true} : vector<8x1xf32> -> vector<8x1xf32>
    %176 = vector.broadcast %175 : vector<8x1xf32> to vector<8x8xf32>
    %177 = arith.mulf %172, %176 : vector<8x8xf32>
    %178 = arith.truncf %177 : vector<8x8xf32> to vector<8x8xbf16>
    %cst_46 = arith.constant dense<0.000000e+00> : vector<8x8xf32>
    %179 = tpu.matmul %178, %166, %cst_46 {dimension_numbers = #tpu.dot_dimension_numbers<[1], [0], [0], [1], [0, 0, 1, 1], [], []>} : vector<8x8xbf16>, vector<8x8xbf16>, vector<8x8xf32> -> vector<8x8xf32>
    %180 = vector.extract_strided_slice %136 {offsets = [0, 16], sizes = [8, 8], strides = [1, 1]} : vector<8x32xf32> to vector<8x8xf32>
    %181 = arith.truncf %180 : vector<8x8xf32> to vector<8x8xbf16>
    %182 = vector.extract_strided_slice %139 {offsets = [0, 16], sizes = [8, 8], strides = [1, 1]} : vector<8x32xf32> to vector<8x8xf32>
    %183 = arith.truncf %182 : vector<8x8xf32> to vector<8x8xbf16>
    %184 = vector.extract_strided_slice %140 {offsets = [0, 16], sizes = [8, 8], strides = [1, 1]} : vector<8x32xf32> to vector<8x8xf32>
    %185 = arith.truncf %184 : vector<8x8xf32> to vector<8x8xbf16>
    %cst_47 = arith.constant dense<0.000000e+00> : vector<8x8xf32>
    %186 = tpu.matmul %181, %183, %cst_47 {dimension_numbers = #tpu.dot_dimension_numbers<[1], [1], [0], [0], [0, 0, 1, 0], [], []>} : vector<8x8xbf16>, vector<8x8xbf16>, vector<8x8xf32> -> vector<8x8xf32>
    %cst_48 = arith.constant dense<0xFF800000> : vector<8xf32>
    %187 = vector.multi_reduction <maximumf>, %186, %cst_48 [1] : vector<8x8xf32> to vector<8xf32>
    %188 = vector.shape_cast %187 : vector<8xf32> to vector<8x1xf32>
    %189 = vector.broadcast %188 : vector<8x1xf32> to vector<8x8xf32>
    %190 = arith.subf %186, %189 : vector<8x8xf32>
    %191 = math.exp %190 : vector<8x8xf32>
    %cst_49 = arith.constant dense<0.000000e+00> : vector<8xf32>
    %192 = vector.multi_reduction <add>, %191, %cst_49 [1] : vector<8x8xf32> to vector<8xf32>
    %193 = vector.shape_cast %192 : vector<8xf32> to vector<8x1xf32>
    %194 = tpu.reciprocal %193 {approx = true} : vector<8x1xf32> -> vector<8x1xf32>
    %195 = vector.broadcast %194 : vector<8x1xf32> to vector<8x8xf32>
    %196 = arith.mulf %191, %195 : vector<8x8xf32>
    %197 = arith.truncf %196 : vector<8x8xf32> to vector<8x8xbf16>
    %cst_50 = arith.constant dense<0.000000e+00> : vector<8x8xf32>
    %198 = tpu.matmul %197, %185, %cst_50 {dimension_numbers = #tpu.dot_dimension_numbers<[1], [0], [0], [1], [0, 0, 1, 1], [], []>} : vector<8x8xbf16>, vector<8x8xbf16>, vector<8x8xf32> -> vector<8x8xf32>
    %199 = vector.extract_strided_slice %136 {offsets = [0, 24], sizes = [8, 8], strides = [1, 1]} : vector<8x32xf32> to vector<8x8xf32>
    %200 = arith.truncf %199 : vector<8x8xf32> to vector<8x8xbf16>
    %201 = vector.extract_strided_slice %139 {offsets = [0, 24], sizes = [8, 8], strides = [1, 1]} : vector<8x32xf32> to vector<8x8xf32>
    %202 = arith.truncf %201 : vector<8x8xf32> to vector<8x8xbf16>
    %203 = vector.extract_strided_slice %140 {offsets = [0, 24], sizes = [8, 8], strides = [1, 1]} : vector<8x32xf32> to vector<8x8xf32>
    %204 = arith.truncf %203 : vector<8x8xf32> to vector<8x8xbf16>
    %cst_51 = arith.constant dense<0.000000e+00> : vector<8x8xf32>
    %205 = tpu.matmul %200, %202, %cst_51 {dimension_numbers = #tpu.dot_dimension_numbers<[1], [1], [0], [0], [0, 0, 1, 0], [], []>} : vector<8x8xbf16>, vector<8x8xbf16>, vector<8x8xf32> -> vector<8x8xf32>
    %cst_52 = arith.constant dense<0xFF800000> : vector<8xf32>
    %206 = vector.multi_reduction <maximumf>, %205, %cst_52 [1] : vector<8x8xf32> to vector<8xf32>
    %207 = vector.shape_cast %206 : vector<8xf32> to vector<8x1xf32>
    %208 = vector.broadcast %207 : vector<8x1xf32> to vector<8x8xf32>
    %209 = arith.subf %205, %208 : vector<8x8xf32>
    %210 = math.exp %209 : vector<8x8xf32>
    %cst_53 = arith.constant dense<0.000000e+00> : vector<8xf32>
    %211 = vector.multi_reduction <add>, %210, %cst_53 [1] : vector<8x8xf32> to vector<8xf32>
    %212 = vector.shape_cast %211 : vector<8xf32> to vector<8x1xf32>
    %213 = tpu.reciprocal %212 {approx = true} : vector<8x1xf32> -> vector<8x1xf32>
    %214 = vector.broadcast %213 : vector<8x1xf32> to vector<8x8xf32>
    %215 = arith.mulf %210, %214 : vector<8x8xf32>
    %216 = arith.truncf %215 : vector<8x8xf32> to vector<8x8xbf16>
    %cst_54 = arith.constant dense<0.000000e+00> : vector<8x8xf32>
    %217 = tpu.matmul %216, %204, %cst_54 {dimension_numbers = #tpu.dot_dimension_numbers<[1], [0], [0], [1], [0, 0, 1, 1], [], []>} : vector<8x8xbf16>, vector<8x8xbf16>, vector<8x8xf32> -> vector<8x8xf32>
    %218 = tpu.concatenate %160, %179, %198, %217 in 1 : vector<8x8xf32>, vector<8x8xf32>, vector<8x8xf32>, vector<8x8xf32> -> vector<8x32xf32>
    %219 = arith.truncf %218 : vector<8x32xf32> to vector<8x32xbf16>
    %cst_55 = arith.constant dense<0.000000e+00> : vector<8x32xf32>
    %220 = tpu.matmul %219, %141, %cst_55 {dimension_numbers = #tpu.dot_dimension_numbers<[1], [0], [0], [1], [0, 0, 1, 1], [], []>} : vector<8x32xbf16>, vector<32x32xbf16>, vector<8x32xf32> -> vector<8x32xf32>
    %221 = arith.addf %120, %220 : vector<8x32xf32>
    %222 = vector.extract_strided_slice %4 {offsets = [2, 0], sizes = [1, 32], strides = [1, 1]} : vector<7x32xf32> to vector<1x32xf32>
    %c0_56 = arith.constant 0 : index
    %c0_57 = arith.constant 0 : index
    %c0_58 = arith.constant 0 : index
    %223 = vector.load %arg7[%c0_56, %c0_57, %c0_58] : memref<2x32x128xbf16, #tpu.memory_space<vmem>>, vector<1x32x128xbf16>
    %224 = vector.shape_cast %223 : vector<1x32x128xbf16> to vector<32x128xbf16>
    %c0_59 = arith.constant 0 : index
    %c0_60 = arith.constant 0 : index
    %c0_61 = arith.constant 0 : index
    %225 = vector.load %arg8[%c0_59, %c0_60, %c0_61] : memref<2x64x32xbf16, #tpu.memory_space<vmem>>, vector<1x64x32xbf16>
    %226 = vector.shape_cast %225 : vector<1x64x32xbf16> to vector<64x32xbf16>
    %227 = arith.mulf %221, %221 : vector<8x32xf32>
    %cst_62 = arith.constant dense<0.000000e+00> : vector<8xf32>
    %228 = vector.multi_reduction <add>, %227, %cst_62 [1] : vector<8x32xf32> to vector<8xf32>
    %229 = vector.shape_cast %228 : vector<8xf32> to vector<8x1xf32>
    %cst_63 = arith.constant 3.200000e+01 : f32
    %230 = vector.broadcast %cst_63 : f32 to vector<8x1xf32>
    %231 = arith.divf %229, %230 : vector<8x1xf32>
    %cst_64 = arith.constant 9.99999997E-7 : f32
    %232 = vector.broadcast %cst_64 : f32 to vector<8x1xf32>
    %233 = arith.addf %231, %232 : vector<8x1xf32>
    %234 = math.rsqrt %233 : vector<8x1xf32>
    %235 = vector.broadcast %234 : vector<8x1xf32> to vector<8x32xf32>
    %236 = arith.mulf %221, %235 : vector<8x32xf32>
    %237 = vector.broadcast %222 : vector<1x32xf32> to vector<8x32xf32>
    %238 = arith.mulf %236, %237 : vector<8x32xf32>
    %239 = arith.truncf %238 : vector<8x32xf32> to vector<8x32xbf16>
    %cst_65 = arith.constant dense<0.000000e+00> : vector<8x128xf32>
    %240 = tpu.matmul %239, %224, %cst_65 {dimension_numbers = #tpu.dot_dimension_numbers<[1], [0], [0], [1], [0, 0, 1, 1], [], []>} : vector<8x32xbf16>, vector<32x128xbf16>, vector<8x128xf32> -> vector<8x128xf32>
    %241 = vector.extract_strided_slice %240 {offsets = [0, 0], sizes = [8, 64], strides = [1, 1]} : vector<8x128xf32> to vector<8x64xf32>
    %242 = arith.mulf %241, %241 : vector<8x64xf32>
    %243 = arith.mulf %241, %242 : vector<8x64xf32>
    %cst_66 = arith.constant 4.471500e-02 : f32
    %244 = vector.broadcast %cst_66 : f32 to vector<8x64xf32>
    %245 = arith.mulf %244, %243 : vector<8x64xf32>
    %246 = arith.addf %241, %245 : vector<8x64xf32>
    %cst_67 = arith.constant 0.797884583 : f32
    %247 = vector.broadcast %cst_67 : f32 to vector<8x64xf32>
    %248 = arith.mulf %247, %246 : vector<8x64xf32>
    %249 = math.tanh %248 : vector<8x64xf32>
    %cst_68 = arith.constant 1.000000e+00 : f32
    %250 = vector.broadcast %cst_68 : f32 to vector<8x64xf32>
    %251 = arith.addf %250, %249 : vector<8x64xf32>
    %cst_69 = arith.constant 5.000000e-01 : f32
    %252 = vector.broadcast %cst_69 : f32 to vector<8x64xf32>
    %253 = arith.mulf %252, %251 : vector<8x64xf32>
    %254 = arith.mulf %241, %253 : vector<8x64xf32>
    %255 = vector.extract_strided_slice %240 {offsets = [0, 64], sizes = [8, 64], strides = [1, 1]} : vector<8x128xf32> to vector<8x64xf32>
    %256 = arith.mulf %254, %255 : vector<8x64xf32>
    %257 = arith.truncf %256 : vector<8x64xf32> to vector<8x64xbf16>
    %cst_70 = arith.constant dense<0.000000e+00> : vector<8x32xf32>
    %258 = tpu.matmul %257, %226, %cst_70 {dimension_numbers = #tpu.dot_dimension_numbers<[1], [0], [0], [1], [0, 0, 1, 1], [], []>} : vector<8x64xbf16>, vector<64x32xbf16>, vector<8x32xf32> -> vector<8x32xf32>
    %259 = arith.addf %221, %258 : vector<8x32xf32>
    %c1 = arith.constant 1 : index
    %c0_71 = arith.constant 0 : index
    %c0_72 = arith.constant 0 : index
    %260 = vector.load %arg5[%c1, %c0_71, %c0_72] : memref<2x32x192xbf16, #tpu.memory_space<vmem>>, vector<1x32x192xbf16>
    %261 = vector.shape_cast %260 : vector<1x32x192xbf16> to vector<32x192xbf16>
    %c1_73 = arith.constant 1 : index
    %c0_74 = arith.constant 0 : index
    %c0_75 = arith.constant 0 : index
    %262 = vector.load %arg6[%c1_73, %c0_74, %c0_75] : memref<2x64x32xbf16, #tpu.memory_space<vmem>>, vector<1x64x32xbf16>
    %263 = vector.shape_cast %262 : vector<1x64x32xbf16> to vector<64x32xbf16>
    %264 = vector.extract_strided_slice %4 {offsets = [3, 0], sizes = [1, 32], strides = [1, 1]} : vector<7x32xf32> to vector<1x32xf32>
    %265 = arith.mulf %259, %259 : vector<8x32xf32>
    %cst_76 = arith.constant dense<0.000000e+00> : vector<8xf32>
    %266 = vector.multi_reduction <add>, %265, %cst_76 [1] : vector<8x32xf32> to vector<8xf32>
    %267 = vector.shape_cast %266 : vector<8xf32> to vector<8x1xf32>
    %cst_77 = arith.constant 3.200000e+01 : f32
    %268 = vector.broadcast %cst_77 : f32 to vector<8x1xf32>
    %269 = arith.divf %267, %268 : vector<8x1xf32>
    %cst_78 = arith.constant 9.99999997E-7 : f32
    %270 = vector.broadcast %cst_78 : f32 to vector<8x1xf32>
    %271 = arith.addf %269, %270 : vector<8x1xf32>
    %272 = math.rsqrt %271 : vector<8x1xf32>
    %273 = vector.broadcast %272 : vector<8x1xf32> to vector<8x32xf32>
    %274 = arith.mulf %259, %273 : vector<8x32xf32>
    %275 = vector.broadcast %264 : vector<1x32xf32> to vector<8x32xf32>
    %276 = arith.mulf %274, %275 : vector<8x32xf32>
    %277 = arith.truncf %276 : vector<8x32xf32> to vector<8x32xbf16>
    %278 = vector.extract_strided_slice %261 {offsets = [0, 0], sizes = [32, 96], strides = [1, 1]} : vector<32x192xbf16> to vector<32x96xbf16>
    %cst_79 = arith.constant dense<0.000000e+00> : vector<8x96xf32>
    %279 = tpu.matmul %277, %278, %cst_79 {dimension_numbers = #tpu.dot_dimension_numbers<[1], [0], [0], [1], [0, 0, 1, 1], [], []>} : vector<8x32xbf16>, vector<32x96xbf16>, vector<8x96xf32> -> vector<8x96xf32>
    %280 = vector.extract_strided_slice %279 {offsets = [0, 0], sizes = [8, 32], strides = [1, 1]} : vector<8x96xf32> to vector<8x32xf32>
    %281 = vector.extract_strided_slice %279 {offsets = [0, 32], sizes = [8, 32], strides = [1, 1]} : vector<8x96xf32> to vector<8x32xf32>
    %282 = vector.extract_strided_slice %279 {offsets = [0, 64], sizes = [8, 32], strides = [1, 1]} : vector<8x96xf32> to vector<8x32xf32>
    %283 = vector.extract_strided_slice %263 {offsets = [0, 0], sizes = [32, 32], strides = [1, 1]} : vector<64x32xbf16> to vector<32x32xbf16>
    %284 = vector.extract_strided_slice %280 {offsets = [0, 0], sizes = [8, 8], strides = [1, 1]} : vector<8x32xf32> to vector<8x8xf32>
    %285 = arith.truncf %284 : vector<8x8xf32> to vector<8x8xbf16>
    %286 = vector.extract_strided_slice %281 {offsets = [0, 0], sizes = [8, 8], strides = [1, 1]} : vector<8x32xf32> to vector<8x8xf32>
    %287 = arith.truncf %286 : vector<8x8xf32> to vector<8x8xbf16>
    %288 = vector.extract_strided_slice %282 {offsets = [0, 0], sizes = [8, 8], strides = [1, 1]} : vector<8x32xf32> to vector<8x8xf32>
    %289 = arith.truncf %288 : vector<8x8xf32> to vector<8x8xbf16>
    %cst_80 = arith.constant dense<0.000000e+00> : vector<8x8xf32>
    %290 = tpu.matmul %285, %287, %cst_80 {dimension_numbers = #tpu.dot_dimension_numbers<[1], [1], [0], [0], [0, 0, 1, 0], [], []>} : vector<8x8xbf16>, vector<8x8xbf16>, vector<8x8xf32> -> vector<8x8xf32>
    %291 = vector.extract_strided_slice %3 {offsets = [0, 0, 0], sizes = [1, 8, 8], strides = [1, 1, 1]} : vector<4x8x8xf32> to vector<1x8x8xf32>
    %292 = vector.shape_cast %291 : vector<1x8x8xf32> to vector<8x8xf32>
    %293 = arith.addf %290, %292 : vector<8x8xf32>
    %cst_81 = arith.constant dense<0xFF800000> : vector<8xf32>
    %294 = vector.multi_reduction <maximumf>, %293, %cst_81 [1] : vector<8x8xf32> to vector<8xf32>
    %295 = vector.shape_cast %294 : vector<8xf32> to vector<8x1xf32>
    %296 = vector.broadcast %295 : vector<8x1xf32> to vector<8x8xf32>
    %297 = arith.subf %293, %296 : vector<8x8xf32>
    %298 = math.exp %297 : vector<8x8xf32>
    %cst_82 = arith.constant dense<0.000000e+00> : vector<8xf32>
    %299 = vector.multi_reduction <add>, %298, %cst_82 [1] : vector<8x8xf32> to vector<8xf32>
    %300 = vector.shape_cast %299 : vector<8xf32> to vector<8x1xf32>
    %301 = tpu.reciprocal %300 {approx = true} : vector<8x1xf32> -> vector<8x1xf32>
    %302 = vector.broadcast %301 : vector<8x1xf32> to vector<8x8xf32>
    %303 = arith.mulf %298, %302 : vector<8x8xf32>
    %304 = arith.truncf %303 : vector<8x8xf32> to vector<8x8xbf16>
    %cst_83 = arith.constant dense<0.000000e+00> : vector<8x8xf32>
    %305 = tpu.matmul %304, %289, %cst_83 {dimension_numbers = #tpu.dot_dimension_numbers<[1], [0], [0], [1], [0, 0, 1, 1], [], []>} : vector<8x8xbf16>, vector<8x8xbf16>, vector<8x8xf32> -> vector<8x8xf32>
    %306 = vector.extract_strided_slice %280 {offsets = [0, 8], sizes = [8, 8], strides = [1, 1]} : vector<8x32xf32> to vector<8x8xf32>
    %307 = arith.truncf %306 : vector<8x8xf32> to vector<8x8xbf16>
    %308 = vector.extract_strided_slice %281 {offsets = [0, 8], sizes = [8, 8], strides = [1, 1]} : vector<8x32xf32> to vector<8x8xf32>
    %309 = arith.truncf %308 : vector<8x8xf32> to vector<8x8xbf16>
    %310 = vector.extract_strided_slice %282 {offsets = [0, 8], sizes = [8, 8], strides = [1, 1]} : vector<8x32xf32> to vector<8x8xf32>
    %311 = arith.truncf %310 : vector<8x8xf32> to vector<8x8xbf16>
    %cst_84 = arith.constant dense<0.000000e+00> : vector<8x8xf32>
    %312 = tpu.matmul %307, %309, %cst_84 {dimension_numbers = #tpu.dot_dimension_numbers<[1], [1], [0], [0], [0, 0, 1, 0], [], []>} : vector<8x8xbf16>, vector<8x8xbf16>, vector<8x8xf32> -> vector<8x8xf32>
    %313 = vector.extract_strided_slice %3 {offsets = [1, 0, 0], sizes = [1, 8, 8], strides = [1, 1, 1]} : vector<4x8x8xf32> to vector<1x8x8xf32>
    %314 = vector.shape_cast %313 : vector<1x8x8xf32> to vector<8x8xf32>
    %315 = arith.addf %312, %314 : vector<8x8xf32>
    %cst_85 = arith.constant dense<0xFF800000> : vector<8xf32>
    %316 = vector.multi_reduction <maximumf>, %315, %cst_85 [1] : vector<8x8xf32> to vector<8xf32>
    %317 = vector.shape_cast %316 : vector<8xf32> to vector<8x1xf32>
    %318 = vector.broadcast %317 : vector<8x1xf32> to vector<8x8xf32>
    %319 = arith.subf %315, %318 : vector<8x8xf32>
    %320 = math.exp %319 : vector<8x8xf32>
    %cst_86 = arith.constant dense<0.000000e+00> : vector<8xf32>
    %321 = vector.multi_reduction <add>, %320, %cst_86 [1] : vector<8x8xf32> to vector<8xf32>
    %322 = vector.shape_cast %321 : vector<8xf32> to vector<8x1xf32>
    %323 = tpu.reciprocal %322 {approx = true} : vector<8x1xf32> -> vector<8x1xf32>
    %324 = vector.broadcast %323 : vector<8x1xf32> to vector<8x8xf32>
    %325 = arith.mulf %320, %324 : vector<8x8xf32>
    %326 = arith.truncf %325 : vector<8x8xf32> to vector<8x8xbf16>
    %cst_87 = arith.constant dense<0.000000e+00> : vector<8x8xf32>
    %327 = tpu.matmul %326, %311, %cst_87 {dimension_numbers = #tpu.dot_dimension_numbers<[1], [0], [0], [1], [0, 0, 1, 1], [], []>} : vector<8x8xbf16>, vector<8x8xbf16>, vector<8x8xf32> -> vector<8x8xf32>
    %328 = vector.extract_strided_slice %280 {offsets = [0, 16], sizes = [8, 8], strides = [1, 1]} : vector<8x32xf32> to vector<8x8xf32>
    %329 = arith.truncf %328 : vector<8x8xf32> to vector<8x8xbf16>
    %330 = vector.extract_strided_slice %281 {offsets = [0, 16], sizes = [8, 8], strides = [1, 1]} : vector<8x32xf32> to vector<8x8xf32>
    %331 = arith.truncf %330 : vector<8x8xf32> to vector<8x8xbf16>
    %332 = vector.extract_strided_slice %282 {offsets = [0, 16], sizes = [8, 8], strides = [1, 1]} : vector<8x32xf32> to vector<8x8xf32>
    %333 = arith.truncf %332 : vector<8x8xf32> to vector<8x8xbf16>
    %cst_88 = arith.constant dense<0.000000e+00> : vector<8x8xf32>
    %334 = tpu.matmul %329, %331, %cst_88 {dimension_numbers = #tpu.dot_dimension_numbers<[1], [1], [0], [0], [0, 0, 1, 0], [], []>} : vector<8x8xbf16>, vector<8x8xbf16>, vector<8x8xf32> -> vector<8x8xf32>
    %335 = vector.extract_strided_slice %3 {offsets = [2, 0, 0], sizes = [1, 8, 8], strides = [1, 1, 1]} : vector<4x8x8xf32> to vector<1x8x8xf32>
    %336 = vector.shape_cast %335 : vector<1x8x8xf32> to vector<8x8xf32>
    %337 = arith.addf %334, %336 : vector<8x8xf32>
    %cst_89 = arith.constant dense<0xFF800000> : vector<8xf32>
    %338 = vector.multi_reduction <maximumf>, %337, %cst_89 [1] : vector<8x8xf32> to vector<8xf32>
    %339 = vector.shape_cast %338 : vector<8xf32> to vector<8x1xf32>
    %340 = vector.broadcast %339 : vector<8x1xf32> to vector<8x8xf32>
    %341 = arith.subf %337, %340 : vector<8x8xf32>
    %342 = math.exp %341 : vector<8x8xf32>
    %cst_90 = arith.constant dense<0.000000e+00> : vector<8xf32>
    %343 = vector.multi_reduction <add>, %342, %cst_90 [1] : vector<8x8xf32> to vector<8xf32>
    %344 = vector.shape_cast %343 : vector<8xf32> to vector<8x1xf32>
    %345 = tpu.reciprocal %344 {approx = true} : vector<8x1xf32> -> vector<8x1xf32>
    %346 = vector.broadcast %345 : vector<8x1xf32> to vector<8x8xf32>
    %347 = arith.mulf %342, %346 : vector<8x8xf32>
    %348 = arith.truncf %347 : vector<8x8xf32> to vector<8x8xbf16>
    %cst_91 = arith.constant dense<0.000000e+00> : vector<8x8xf32>
    %349 = tpu.matmul %348, %333, %cst_91 {dimension_numbers = #tpu.dot_dimension_numbers<[1], [0], [0], [1], [0, 0, 1, 1], [], []>} : vector<8x8xbf16>, vector<8x8xbf16>, vector<8x8xf32> -> vector<8x8xf32>
    %350 = vector.extract_strided_slice %280 {offsets = [0, 24], sizes = [8, 8], strides = [1, 1]} : vector<8x32xf32> to vector<8x8xf32>
    %351 = arith.truncf %350 : vector<8x8xf32> to vector<8x8xbf16>
    %352 = vector.extract_strided_slice %281 {offsets = [0, 24], sizes = [8, 8], strides = [1, 1]} : vector<8x32xf32> to vector<8x8xf32>
    %353 = arith.truncf %352 : vector<8x8xf32> to vector<8x8xbf16>
    %354 = vector.extract_strided_slice %282 {offsets = [0, 24], sizes = [8, 8], strides = [1, 1]} : vector<8x32xf32> to vector<8x8xf32>
    %355 = arith.truncf %354 : vector<8x8xf32> to vector<8x8xbf16>
    %cst_92 = arith.constant dense<0.000000e+00> : vector<8x8xf32>
    %356 = tpu.matmul %351, %353, %cst_92 {dimension_numbers = #tpu.dot_dimension_numbers<[1], [1], [0], [0], [0, 0, 1, 0], [], []>} : vector<8x8xbf16>, vector<8x8xbf16>, vector<8x8xf32> -> vector<8x8xf32>
    %357 = vector.extract_strided_slice %3 {offsets = [3, 0, 0], sizes = [1, 8, 8], strides = [1, 1, 1]} : vector<4x8x8xf32> to vector<1x8x8xf32>
    %358 = vector.shape_cast %357 : vector<1x8x8xf32> to vector<8x8xf32>
    %359 = arith.addf %356, %358 : vector<8x8xf32>
    %cst_93 = arith.constant dense<0xFF800000> : vector<8xf32>
    %360 = vector.multi_reduction <maximumf>, %359, %cst_93 [1] : vector<8x8xf32> to vector<8xf32>
    %361 = vector.shape_cast %360 : vector<8xf32> to vector<8x1xf32>
    %362 = vector.broadcast %361 : vector<8x1xf32> to vector<8x8xf32>
    %363 = arith.subf %359, %362 : vector<8x8xf32>
    %364 = math.exp %363 : vector<8x8xf32>
    %cst_94 = arith.constant dense<0.000000e+00> : vector<8xf32>
    %365 = vector.multi_reduction <add>, %364, %cst_94 [1] : vector<8x8xf32> to vector<8xf32>
    %366 = vector.shape_cast %365 : vector<8xf32> to vector<8x1xf32>
    %367 = tpu.reciprocal %366 {approx = true} : vector<8x1xf32> -> vector<8x1xf32>
    %368 = vector.broadcast %367 : vector<8x1xf32> to vector<8x8xf32>
    %369 = arith.mulf %364, %368 : vector<8x8xf32>
    %370 = arith.truncf %369 : vector<8x8xf32> to vector<8x8xbf16>
    %cst_95 = arith.constant dense<0.000000e+00> : vector<8x8xf32>
    %371 = tpu.matmul %370, %355, %cst_95 {dimension_numbers = #tpu.dot_dimension_numbers<[1], [0], [0], [1], [0, 0, 1, 1], [], []>} : vector<8x8xbf16>, vector<8x8xbf16>, vector<8x8xf32> -> vector<8x8xf32>
    %372 = tpu.concatenate %305, %327, %349, %371 in 1 : vector<8x8xf32>, vector<8x8xf32>, vector<8x8xf32>, vector<8x8xf32> -> vector<8x32xf32>
    %373 = arith.truncf %372 : vector<8x32xf32> to vector<8x32xbf16>
    %cst_96 = arith.constant dense<0.000000e+00> : vector<8x32xf32>
    %374 = tpu.matmul %373, %283, %cst_96 {dimension_numbers = #tpu.dot_dimension_numbers<[1], [0], [0], [1], [0, 0, 1, 1], [], []>} : vector<8x32xbf16>, vector<32x32xbf16>, vector<8x32xf32> -> vector<8x32xf32>
    %375 = arith.addf %259, %374 : vector<8x32xf32>
    %376 = vector.extract_strided_slice %4 {offsets = [4, 0], sizes = [1, 32], strides = [1, 1]} : vector<7x32xf32> to vector<1x32xf32>
    %377 = arith.mulf %375, %375 : vector<8x32xf32>
    %cst_97 = arith.constant dense<0.000000e+00> : vector<8xf32>
    %378 = vector.multi_reduction <add>, %377, %cst_97 [1] : vector<8x32xf32> to vector<8xf32>
    %379 = vector.shape_cast %378 : vector<8xf32> to vector<8x1xf32>
    %cst_98 = arith.constant 3.200000e+01 : f32
    %380 = vector.broadcast %cst_98 : f32 to vector<8x1xf32>
    %381 = arith.divf %379, %380 : vector<8x1xf32>
    %cst_99 = arith.constant 9.99999997E-7 : f32
    %382 = vector.broadcast %cst_99 : f32 to vector<8x1xf32>
    %383 = arith.addf %381, %382 : vector<8x1xf32>
    %384 = math.rsqrt %383 : vector<8x1xf32>
    %385 = vector.broadcast %384 : vector<8x1xf32> to vector<8x32xf32>
    %386 = arith.mulf %375, %385 : vector<8x32xf32>
    %387 = vector.broadcast %376 : vector<1x32xf32> to vector<8x32xf32>
    %388 = arith.mulf %386, %387 : vector<8x32xf32>
    %389 = arith.truncf %388 : vector<8x32xf32> to vector<8x32xbf16>
    %390 = vector.extract_strided_slice %261 {offsets = [0, 96], sizes = [32, 32], strides = [1, 1]} : vector<32x192xbf16> to vector<32x32xbf16>
    %cst_100 = arith.constant dense<0.000000e+00> : vector<8x32xf32>
    %391 = tpu.matmul %389, %390, %cst_100 {dimension_numbers = #tpu.dot_dimension_numbers<[1], [0], [0], [1], [0, 0, 1, 1], [], []>} : vector<8x32xbf16>, vector<32x32xbf16>, vector<8x32xf32> -> vector<8x32xf32>
    %392 = vector.extract_strided_slice %261 {offsets = [0, 128], sizes = [32, 64], strides = [1, 1]} : vector<32x192xbf16> to vector<32x64xbf16>
    %cst_101 = arith.constant dense<0.000000e+00> : vector<8x64xf32>
    %393 = tpu.matmul %2, %392, %cst_101 {dimension_numbers = #tpu.dot_dimension_numbers<[1], [0], [0], [1], [0, 0, 1, 1], [], []>} : vector<8x32xbf16>, vector<32x64xbf16>, vector<8x64xf32> -> vector<8x64xf32>
    %394 = vector.extract_strided_slice %393 {offsets = [0, 0], sizes = [8, 32], strides = [1, 1]} : vector<8x64xf32> to vector<8x32xf32>
    %395 = vector.extract_strided_slice %393 {offsets = [0, 32], sizes = [8, 32], strides = [1, 1]} : vector<8x64xf32> to vector<8x32xf32>
    %396 = vector.extract_strided_slice %263 {offsets = [32, 0], sizes = [32, 32], strides = [1, 1]} : vector<64x32xbf16> to vector<32x32xbf16>
    %397 = vector.extract_strided_slice %391 {offsets = [0, 0], sizes = [8, 8], strides = [1, 1]} : vector<8x32xf32> to vector<8x8xf32>
    %398 = arith.truncf %397 : vector<8x8xf32> to vector<8x8xbf16>
    %399 = vector.extract_strided_slice %394 {offsets = [0, 0], sizes = [8, 8], strides = [1, 1]} : vector<8x32xf32> to vector<8x8xf32>
    %400 = arith.truncf %399 : vector<8x8xf32> to vector<8x8xbf16>
    %401 = vector.extract_strided_slice %395 {offsets = [0, 0], sizes = [8, 8], strides = [1, 1]} : vector<8x32xf32> to vector<8x8xf32>
    %402 = arith.truncf %401 : vector<8x8xf32> to vector<8x8xbf16>
    %cst_102 = arith.constant dense<0.000000e+00> : vector<8x8xf32>
    %403 = tpu.matmul %398, %400, %cst_102 {dimension_numbers = #tpu.dot_dimension_numbers<[1], [1], [0], [0], [0, 0, 1, 0], [], []>} : vector<8x8xbf16>, vector<8x8xbf16>, vector<8x8xf32> -> vector<8x8xf32>
    %cst_103 = arith.constant dense<0xFF800000> : vector<8xf32>
    %404 = vector.multi_reduction <maximumf>, %403, %cst_103 [1] : vector<8x8xf32> to vector<8xf32>
    %405 = vector.shape_cast %404 : vector<8xf32> to vector<8x1xf32>
    %406 = vector.broadcast %405 : vector<8x1xf32> to vector<8x8xf32>
    %407 = arith.subf %403, %406 : vector<8x8xf32>
    %408 = math.exp %407 : vector<8x8xf32>
    %cst_104 = arith.constant dense<0.000000e+00> : vector<8xf32>
    %409 = vector.multi_reduction <add>, %408, %cst_104 [1] : vector<8x8xf32> to vector<8xf32>
    %410 = vector.shape_cast %409 : vector<8xf32> to vector<8x1xf32>
    %411 = tpu.reciprocal %410 {approx = true} : vector<8x1xf32> -> vector<8x1xf32>
    %412 = vector.broadcast %411 : vector<8x1xf32> to vector<8x8xf32>
    %413 = arith.mulf %408, %412 : vector<8x8xf32>
    %414 = arith.truncf %413 : vector<8x8xf32> to vector<8x8xbf16>
    %cst_105 = arith.constant dense<0.000000e+00> : vector<8x8xf32>
    %415 = tpu.matmul %414, %402, %cst_105 {dimension_numbers = #tpu.dot_dimension_numbers<[1], [0], [0], [1], [0, 0, 1, 1], [], []>} : vector<8x8xbf16>, vector<8x8xbf16>, vector<8x8xf32> -> vector<8x8xf32>
    %416 = vector.extract_strided_slice %391 {offsets = [0, 8], sizes = [8, 8], strides = [1, 1]} : vector<8x32xf32> to vector<8x8xf32>
    %417 = arith.truncf %416 : vector<8x8xf32> to vector<8x8xbf16>
    %418 = vector.extract_strided_slice %394 {offsets = [0, 8], sizes = [8, 8], strides = [1, 1]} : vector<8x32xf32> to vector<8x8xf32>
    %419 = arith.truncf %418 : vector<8x8xf32> to vector<8x8xbf16>
    %420 = vector.extract_strided_slice %395 {offsets = [0, 8], sizes = [8, 8], strides = [1, 1]} : vector<8x32xf32> to vector<8x8xf32>
    %421 = arith.truncf %420 : vector<8x8xf32> to vector<8x8xbf16>
    %cst_106 = arith.constant dense<0.000000e+00> : vector<8x8xf32>
    %422 = tpu.matmul %417, %419, %cst_106 {dimension_numbers = #tpu.dot_dimension_numbers<[1], [1], [0], [0], [0, 0, 1, 0], [], []>} : vector<8x8xbf16>, vector<8x8xbf16>, vector<8x8xf32> -> vector<8x8xf32>
    %cst_107 = arith.constant dense<0xFF800000> : vector<8xf32>
    %423 = vector.multi_reduction <maximumf>, %422, %cst_107 [1] : vector<8x8xf32> to vector<8xf32>
    %424 = vector.shape_cast %423 : vector<8xf32> to vector<8x1xf32>
    %425 = vector.broadcast %424 : vector<8x1xf32> to vector<8x8xf32>
    %426 = arith.subf %422, %425 : vector<8x8xf32>
    %427 = math.exp %426 : vector<8x8xf32>
    %cst_108 = arith.constant dense<0.000000e+00> : vector<8xf32>
    %428 = vector.multi_reduction <add>, %427, %cst_108 [1] : vector<8x8xf32> to vector<8xf32>
    %429 = vector.shape_cast %428 : vector<8xf32> to vector<8x1xf32>
    %430 = tpu.reciprocal %429 {approx = true} : vector<8x1xf32> -> vector<8x1xf32>
    %431 = vector.broadcast %430 : vector<8x1xf32> to vector<8x8xf32>
    %432 = arith.mulf %427, %431 : vector<8x8xf32>
    %433 = arith.truncf %432 : vector<8x8xf32> to vector<8x8xbf16>
    %cst_109 = arith.constant dense<0.000000e+00> : vector<8x8xf32>
    %434 = tpu.matmul %433, %421, %cst_109 {dimension_numbers = #tpu.dot_dimension_numbers<[1], [0], [0], [1], [0, 0, 1, 1], [], []>} : vector<8x8xbf16>, vector<8x8xbf16>, vector<8x8xf32> -> vector<8x8xf32>
    %435 = vector.extract_strided_slice %391 {offsets = [0, 16], sizes = [8, 8], strides = [1, 1]} : vector<8x32xf32> to vector<8x8xf32>
    %436 = arith.truncf %435 : vector<8x8xf32> to vector<8x8xbf16>
    %437 = vector.extract_strided_slice %394 {offsets = [0, 16], sizes = [8, 8], strides = [1, 1]} : vector<8x32xf32> to vector<8x8xf32>
    %438 = arith.truncf %437 : vector<8x8xf32> to vector<8x8xbf16>
    %439 = vector.extract_strided_slice %395 {offsets = [0, 16], sizes = [8, 8], strides = [1, 1]} : vector<8x32xf32> to vector<8x8xf32>
    %440 = arith.truncf %439 : vector<8x8xf32> to vector<8x8xbf16>
    %cst_110 = arith.constant dense<0.000000e+00> : vector<8x8xf32>
    %441 = tpu.matmul %436, %438, %cst_110 {dimension_numbers = #tpu.dot_dimension_numbers<[1], [1], [0], [0], [0, 0, 1, 0], [], []>} : vector<8x8xbf16>, vector<8x8xbf16>, vector<8x8xf32> -> vector<8x8xf32>
    %cst_111 = arith.constant dense<0xFF800000> : vector<8xf32>
    %442 = vector.multi_reduction <maximumf>, %441, %cst_111 [1] : vector<8x8xf32> to vector<8xf32>
    %443 = vector.shape_cast %442 : vector<8xf32> to vector<8x1xf32>
    %444 = vector.broadcast %443 : vector<8x1xf32> to vector<8x8xf32>
    %445 = arith.subf %441, %444 : vector<8x8xf32>
    %446 = math.exp %445 : vector<8x8xf32>
    %cst_112 = arith.constant dense<0.000000e+00> : vector<8xf32>
    %447 = vector.multi_reduction <add>, %446, %cst_112 [1] : vector<8x8xf32> to vector<8xf32>
    %448 = vector.shape_cast %447 : vector<8xf32> to vector<8x1xf32>
    %449 = tpu.reciprocal %448 {approx = true} : vector<8x1xf32> -> vector<8x1xf32>
    %450 = vector.broadcast %449 : vector<8x1xf32> to vector<8x8xf32>
    %451 = arith.mulf %446, %450 : vector<8x8xf32>
    %452 = arith.truncf %451 : vector<8x8xf32> to vector<8x8xbf16>
    %cst_113 = arith.constant dense<0.000000e+00> : vector<8x8xf32>
    %453 = tpu.matmul %452, %440, %cst_113 {dimension_numbers = #tpu.dot_dimension_numbers<[1], [0], [0], [1], [0, 0, 1, 1], [], []>} : vector<8x8xbf16>, vector<8x8xbf16>, vector<8x8xf32> -> vector<8x8xf32>
    %454 = vector.extract_strided_slice %391 {offsets = [0, 24], sizes = [8, 8], strides = [1, 1]} : vector<8x32xf32> to vector<8x8xf32>
    %455 = arith.truncf %454 : vector<8x8xf32> to vector<8x8xbf16>
    %456 = vector.extract_strided_slice %394 {offsets = [0, 24], sizes = [8, 8], strides = [1, 1]} : vector<8x32xf32> to vector<8x8xf32>
    %457 = arith.truncf %456 : vector<8x8xf32> to vector<8x8xbf16>
    %458 = vector.extract_strided_slice %395 {offsets = [0, 24], sizes = [8, 8], strides = [1, 1]} : vector<8x32xf32> to vector<8x8xf32>
    %459 = arith.truncf %458 : vector<8x8xf32> to vector<8x8xbf16>
    %cst_114 = arith.constant dense<0.000000e+00> : vector<8x8xf32>
    %460 = tpu.matmul %455, %457, %cst_114 {dimension_numbers = #tpu.dot_dimension_numbers<[1], [1], [0], [0], [0, 0, 1, 0], [], []>} : vector<8x8xbf16>, vector<8x8xbf16>, vector<8x8xf32> -> vector<8x8xf32>
    %cst_115 = arith.constant dense<0xFF800000> : vector<8xf32>
    %461 = vector.multi_reduction <maximumf>, %460, %cst_115 [1] : vector<8x8xf32> to vector<8xf32>
    %462 = vector.shape_cast %461 : vector<8xf32> to vector<8x1xf32>
    %463 = vector.broadcast %462 : vector<8x1xf32> to vector<8x8xf32>
    %464 = arith.subf %460, %463 : vector<8x8xf32>
    %465 = math.exp %464 : vector<8x8xf32>
    %cst_116 = arith.constant dense<0.000000e+00> : vector<8xf32>
    %466 = vector.multi_reduction <add>, %465, %cst_116 [1] : vector<8x8xf32> to vector<8xf32>
    %467 = vector.shape_cast %466 : vector<8xf32> to vector<8x1xf32>
    %468 = tpu.reciprocal %467 {approx = true} : vector<8x1xf32> -> vector<8x1xf32>
    %469 = vector.broadcast %468 : vector<8x1xf32> to vector<8x8xf32>
    %470 = arith.mulf %465, %469 : vector<8x8xf32>
    %471 = arith.truncf %470 : vector<8x8xf32> to vector<8x8xbf16>
    %cst_117 = arith.constant dense<0.000000e+00> : vector<8x8xf32>
    %472 = tpu.matmul %471, %459, %cst_117 {dimension_numbers = #tpu.dot_dimension_numbers<[1], [0], [0], [1], [0, 0, 1, 1], [], []>} : vector<8x8xbf16>, vector<8x8xbf16>, vector<8x8xf32> -> vector<8x8xf32>
    %473 = tpu.concatenate %415, %434, %453, %472 in 1 : vector<8x8xf32>, vector<8x8xf32>, vector<8x8xf32>, vector<8x8xf32> -> vector<8x32xf32>
    %474 = arith.truncf %473 : vector<8x32xf32> to vector<8x32xbf16>
    %cst_118 = arith.constant dense<0.000000e+00> : vector<8x32xf32>
    %475 = tpu.matmul %474, %396, %cst_118 {dimension_numbers = #tpu.dot_dimension_numbers<[1], [0], [0], [1], [0, 0, 1, 1], [], []>} : vector<8x32xbf16>, vector<32x32xbf16>, vector<8x32xf32> -> vector<8x32xf32>
    %476 = arith.addf %375, %475 : vector<8x32xf32>
    %477 = vector.extract_strided_slice %4 {offsets = [5, 0], sizes = [1, 32], strides = [1, 1]} : vector<7x32xf32> to vector<1x32xf32>
    %c1_119 = arith.constant 1 : index
    %c0_120 = arith.constant 0 : index
    %c0_121 = arith.constant 0 : index
    %478 = vector.load %arg7[%c1_119, %c0_120, %c0_121] : memref<2x32x128xbf16, #tpu.memory_space<vmem>>, vector<1x32x128xbf16>
    %479 = vector.shape_cast %478 : vector<1x32x128xbf16> to vector<32x128xbf16>
    %c1_122 = arith.constant 1 : index
    %c0_123 = arith.constant 0 : index
    %c0_124 = arith.constant 0 : index
    %480 = vector.load %arg8[%c1_122, %c0_123, %c0_124] : memref<2x64x32xbf16, #tpu.memory_space<vmem>>, vector<1x64x32xbf16>
    %481 = vector.shape_cast %480 : vector<1x64x32xbf16> to vector<64x32xbf16>
    %482 = arith.mulf %476, %476 : vector<8x32xf32>
    %cst_125 = arith.constant dense<0.000000e+00> : vector<8xf32>
    %483 = vector.multi_reduction <add>, %482, %cst_125 [1] : vector<8x32xf32> to vector<8xf32>
    %484 = vector.shape_cast %483 : vector<8xf32> to vector<8x1xf32>
    %cst_126 = arith.constant 3.200000e+01 : f32
    %485 = vector.broadcast %cst_126 : f32 to vector<8x1xf32>
    %486 = arith.divf %484, %485 : vector<8x1xf32>
    %cst_127 = arith.constant 9.99999997E-7 : f32
    %487 = vector.broadcast %cst_127 : f32 to vector<8x1xf32>
    %488 = arith.addf %486, %487 : vector<8x1xf32>
    %489 = math.rsqrt %488 : vector<8x1xf32>
    %490 = vector.broadcast %489 : vector<8x1xf32> to vector<8x32xf32>
    %491 = arith.mulf %476, %490 : vector<8x32xf32>
    %492 = vector.broadcast %477 : vector<1x32xf32> to vector<8x32xf32>
    %493 = arith.mulf %491, %492 : vector<8x32xf32>
    %494 = arith.truncf %493 : vector<8x32xf32> to vector<8x32xbf16>
    %cst_128 = arith.constant dense<0.000000e+00> : vector<8x128xf32>
    %495 = tpu.matmul %494, %479, %cst_128 {dimension_numbers = #tpu.dot_dimension_numbers<[1], [0], [0], [1], [0, 0, 1, 1], [], []>} : vector<8x32xbf16>, vector<32x128xbf16>, vector<8x128xf32> -> vector<8x128xf32>
    %496 = vector.extract_strided_slice %495 {offsets = [0, 0], sizes = [8, 64], strides = [1, 1]} : vector<8x128xf32> to vector<8x64xf32>
    %497 = arith.mulf %496, %496 : vector<8x64xf32>
    %498 = arith.mulf %496, %497 : vector<8x64xf32>
    %cst_129 = arith.constant 4.471500e-02 : f32
    %499 = vector.broadcast %cst_129 : f32 to vector<8x64xf32>
    %500 = arith.mulf %499, %498 : vector<8x64xf32>
    %501 = arith.addf %496, %500 : vector<8x64xf32>
    %cst_130 = arith.constant 0.797884583 : f32
    %502 = vector.broadcast %cst_130 : f32 to vector<8x64xf32>
    %503 = arith.mulf %502, %501 : vector<8x64xf32>
    %504 = math.tanh %503 : vector<8x64xf32>
    %cst_131 = arith.constant 1.000000e+00 : f32
    %505 = vector.broadcast %cst_131 : f32 to vector<8x64xf32>
    %506 = arith.addf %505, %504 : vector<8x64xf32>
    %cst_132 = arith.constant 5.000000e-01 : f32
    %507 = vector.broadcast %cst_132 : f32 to vector<8x64xf32>
    %508 = arith.mulf %507, %506 : vector<8x64xf32>
    %509 = arith.mulf %496, %508 : vector<8x64xf32>
    %510 = vector.extract_strided_slice %495 {offsets = [0, 64], sizes = [8, 64], strides = [1, 1]} : vector<8x128xf32> to vector<8x64xf32>
    %511 = arith.mulf %509, %510 : vector<8x64xf32>
    %512 = arith.truncf %511 : vector<8x64xf32> to vector<8x64xbf16>
    %cst_133 = arith.constant dense<0.000000e+00> : vector<8x32xf32>
    %513 = tpu.matmul %512, %481, %cst_133 {dimension_numbers = #tpu.dot_dimension_numbers<[1], [0], [0], [1], [0, 0, 1, 1], [], []>} : vector<8x64xbf16>, vector<64x32xbf16>, vector<8x32xf32> -> vector<8x32xf32>
    %514 = arith.addf %476, %513 : vector<8x32xf32>
    %515 = vector.extract_strided_slice %4 {offsets = [6, 0], sizes = [1, 32], strides = [1, 1]} : vector<7x32xf32> to vector<1x32xf32>
    %516 = arith.mulf %514, %514 : vector<8x32xf32>
    %cst_134 = arith.constant dense<0.000000e+00> : vector<8xf32>
    %517 = vector.multi_reduction <add>, %516, %cst_134 [1] : vector<8x32xf32> to vector<8xf32>
    %518 = vector.shape_cast %517 : vector<8xf32> to vector<8x1xf32>
    %cst_135 = arith.constant 3.200000e+01 : f32
    %519 = vector.broadcast %cst_135 : f32 to vector<8x1xf32>
    %520 = arith.divf %518, %519 : vector<8x1xf32>
    %cst_136 = arith.constant 9.99999997E-7 : f32
    %521 = vector.broadcast %cst_136 : f32 to vector<8x1xf32>
    %522 = arith.addf %520, %521 : vector<8x1xf32>
    %523 = math.rsqrt %522 : vector<8x1xf32>
    %524 = vector.broadcast %523 : vector<8x1xf32> to vector<8x32xf32>
    %525 = arith.mulf %514, %524 : vector<8x32xf32>
    %526 = vector.broadcast %515 : vector<1x32xf32> to vector<8x32xf32>
    %527 = arith.mulf %525, %526 : vector<8x32xf32>
    %c0_137 = arith.constant 0 : index
    %c0_138 = arith.constant 0 : index
    %528 = vector.load %arg9[%c0_137, %c0_138] : memref<8x32xf32, #tpu.memory_space<vmem>>, vector<8x32xf32>
    tpu.vector_store %arg9[%c0_137, %c0_138], %527 {strides = array<i32>} : memref<8x32xf32, #tpu.memory_space<vmem>>, vector<8x32xf32>,
    return
  }
  func.func @transform_0(%arg0: i32) -> (i32, i32) {
    %c0_i32 = arith.constant 0 : i32
    %c0_i32_0 = arith.constant 0 : i32
    return %arg0, %c0_i32 : i32, i32
  }
  func.func @transform_1(%arg0: i32) -> (i32, i32) {
    %c0_i32 = arith.constant 0 : i32
    %c0_i32_0 = arith.constant 0 : i32
    return %arg0, %c0_i32 : i32, i32
  }
  func.func @transform_2(%arg0: i32) -> (i32, i32, i32) {
    %c0_i32 = arith.constant 0 : i32
    %c0_i32_0 = arith.constant 0 : i32
    %c0_i32_1 = arith.constant 0 : i32
    %c0_i32_2 = arith.constant 0 : i32
    return %c0_i32, %c0_i32_0, %c0_i32_1 : i32, i32, i32
  }
  func.func @transform_3(%arg0: i32) -> (i32, i32) {
    %c0_i32 = arith.constant 0 : i32
    %c0_i32_0 = arith.constant 0 : i32
    %c0_i32_1 = arith.constant 0 : i32
    return %c0_i32, %c0_i32_0 : i32, i32
  }
  func.func @transform_4(%arg0: i32) -> (i32, i32, i32) {
    %c0_i32 = arith.constant 0 : i32
    %c0_i32_0 = arith.constant 0 : i32
    %c0_i32_1 = arith.constant 0 : i32
    %c0_i32_2 = arith.constant 0 : i32
    return %c0_i32, %c0_i32_0, %c0_i32_1 : i32, i32, i32
  }
  func.func @transform_5(%arg0: i32) -> (i32, i32, i32) {
    %c0_i32 = arith.constant 0 : i32
    %c0_i32_0 = arith.constant 0 : i32
    %c0_i32_1 = arith.constant 0 : i32
    %c0_i32_2 = arith.constant 0 : i32
    return %c0_i32, %c0_i32_0, %c0_i32_1 : i32, i32, i32
  }
  func.func @transform_6(%arg0: i32) -> (i32, i32, i32) {
    %c0_i32 = arith.constant 0 : i32
    %c0_i32_0 = arith.constant 0 : i32
    %c0_i32_1 = arith.constant 0 : i32
    %c0_i32_2 = arith.constant 0 : i32
    return %c0_i32, %c0_i32_0, %c0_i32_1 : i32, i32, i32
  }
  func.func @transform_7(%arg0: i32) -> (i32, i32, i32) {
    %c0_i32 = arith.constant 0 : i32
    %c0_i32_0 = arith.constant 0 : i32
    %c0_i32_1 = arith.constant 0 : i32
    %c0_i32_2 = arith.constant 0 : i32
    return %c0_i32, %c0_i32_0, %c0_i32_1 : i32, i32, i32
  }
  func.func @transform_8(%arg0: i32) -> (i32, i32) {
    %c0_i32 = arith.constant 0 : i32
    %c0_i32_0 = arith.constant 0 : i32
    return %arg0, %c0_i32 : i32, i32
  }
}

</mosaic_0001>

<llo_original>
// kernel: mt5_forward.5
$region0: #{mt5_forward.5}
  #allocation0 [shape = 'u32[]', space=smem, size = 0x4, offset = 0x4, fixed_abs, tag = 'smem constant byte address 0x4 - core index']
  #allocation1 [shape = 'u32[144,128]{1,0:T(1,128)}', space=vmem, size = 0x12000, scoped, tag = 'internal scratch']
  %s0 = inlined_call_operand.vmem [shape: f32[16,32], index: 0, kind: input, shape index: {}]
  %s1 = inlined_call_operand.vmem [shape: bf16[32,64], index: 1, kind: input, shape index: {}]
  %s2 = inlined_call_operand.vmem [shape: s32[16,1], index: 2, kind: input, shape index: {}]
  %s3 = inlined_call_operand.hbm [shape: f32[16,64], index: 3, kind: output, shape index: {0}]
  %s4 = inlined_call_operand.hbm [shape: f32[1,1], index: 4, kind: output, shape index: {1}]
  %5 = xla_tuple %s3, %s4
  %s6 = sld [smem:[#allocation0]]
  $region30: #{mt5_forward.5} parent=0
    _
  %s8 = ssub.s32 1, %s6
  %s9 = scalar_select 0, %s8, %s6
  $region1: #{mt5_forward.5} parent=0
    #allocation2 [shape = 'u8[8192]{0}', space=vmem, size = 0x2000, scoped, tag = 'output window, operand 0, single buffered']
    #allocation3 [shape = 's32[1]{0}', space=sflag, size = 0x4, scoped, tag = 'scoped memory for mt5_forward.5']
    #allocation4 [shape = 's32[1]{0}', space=sflag, size = 0x4, scoped, tag = 'scoped memory for mt5_forward.5']
    #allocation5 [shape = 'u8[512]{0}', space=smem, size = 0x200, scoped, tag = 'output window, operand 1, single buffered']
    %10 = vsyncpa [#allocation3], 0
    %11 = vsyncpa [#allocation4], 0
    // Predicated region
    $region2: #{mt5_forward.5} parent=1 // pred_check
      _
    $region3: #{mt5_forward.5} parent=1 // pred_check_branch
      %13 = sbr.rel (0) target = $region5
    $region4: #{mt5_forward.5} parent=1 // pred_region
      _
    $region5: #{mt5_forward.5} parent=1 // pred_fallthru
      _
    // Predicated region
    $region6: #{mt5_forward.5} parent=1 // pred_check
      _
    $region7: #{mt5_forward.5} parent=1 // pred_check_branch
      %15 = sbr.rel (0) target = $region9
    $region8: #{mt5_forward.5} parent=1 // pred_region
      _
    $region9: #{mt5_forward.5} parent=1 // pred_fallthru
      _
    // Predicated region
    $region10: #{mt5_forward.5} parent=1 // pred_check
      _
    $region11: #{mt5_forward.5} parent=1 // pred_check_branch
      %17 = sbr.rel (0) target = $region13
    $region12: #{mt5_forward.5} parent=1 // pred_region
      _
    $region13: #{mt5_forward.5} parent=1 // pred_fallthru
      _
    %v19 = vld [vmem:[%s0] sm:$0xff]
    %v20 = vld [vmem:[%s0 + $0x8] sm:$0xff]
    %v21 = vpack.c.bf16 %v20, %v19
    %v22 = vld [vmem:[%s1] sm:$0xf]
    %v23 = vld [vmem:[%s1 + $0x4] sm:$0xf]
    %v24 = vld [vmem:[%s1 + $0x8] sm:$0xf]
    %v25 = vld [vmem:[%s1 + $0xc] sm:$0xf]
    %v30 = vunpack.c.l.b16 %v22
    %v31 = vunpack.c.l.b16 %v23
    %v32 = vunpack.c.l.b16 %v24
    %v33 = vunpack.c.l.b16 %v25
    %v34 = vpack.c.b16 %v31, %v30
    %v35 = vpack.c.b16 %v33, %v32
    %vm38 = vcmask 261120
    %v40 = vsel %vm38, %v21, 0
    %42 = vmatprep.subr.bf16.mxu0 0
    %43 = vmatpush1.bf16.msra.mxu0 %v34
    %44 = vmatprep.subr.bf16.mxu0 0
    %45 = vmatpush1.bf16.msra.mxu0 %v35
    %46 = vmatprep.subr.bf16.mxu0 0
    %47 = vmatpush1.bf16.msra.mxu0 0
    %48 = vmatprep.subr.bf16.mxu0 0
    %49 = vmatpush1.bf16.msra.mxu0 0
    %50 = vmatprep.subr.bf16.mxu0 0
    %51 = vmatpush1.bf16.msra.mxu0 0
    %52 = vmatprep.subr.bf16.mxu0 0
    %53 = vmatpush1.bf16.msra.mxu0 0
    %54 = vmatprep.subr.bf16.mxu0 0
    %55 = vmatpush1.bf16.msra.mxu0 0
    %56 = vmatprep.subr.bf16.mxu0 0
    %57 = vmatpush1.bf16.msra.mxu0 0
    %58 = vmatprep.subr.bf16.mxu0 0
    %59 = vmatpush1.bf16.msra.mxu0 0
    %60 = vmatprep.subr.bf16.mxu0 0
    %61 = vmatpush1.bf16.msra.mxu0 0
    %62 = vmatprep.subr.bf16.mxu0 0
    %63 = vmatpush1.bf16.msra.mxu0 0
    %64 = vmatprep.subr.bf16.mxu0 0
    %65 = vmatpush1.bf16.msra.mxu0 0
    %66 = vmatprep.subr.bf16.mxu0 0
    %67 = vmatpush1.bf16.msra.mxu0 0
    %68 = vmatprep.subr.bf16.mxu0 0
    %69 = vmatpush1.bf16.msra.mxu0 0
    %70 = vmatprep.subr.bf16.mxu0 0
    %71 = vmatpush1.bf16.msra.mxu0 0
    %72 = vmatprep.subr.bf16.mxu0 0
    %73 = vmatpush1.bf16.msra.mxu0 0
    %74 = vmatprep.mubr.bf16.mxu0 0
    %75 = vmatmul.mubr.bf16.gmra.mrb[0].mxu0 %v40
    %v76 = vpop.f32.mrb[0].mxu0
    %v77 = vadd.f32 0.0, %v76
    %v78 = vpop.f32.mrb[0].mxu0
    %v79 = vpop.f32.mrb[0].mxu0
    %v80 = vadd.f32 0.0, %v79
    %v81 = vpop.f32.mrb[0].mxu0
    %82 = vdwg.mxu0
    %vm83 = vcmask 523264
    %84 = vst.msk [vmem:[#allocation2] sm:$0xff] %vm83, %v77
    %85 = vst.msk [vmem:[#allocation2 + $0x8] sm:$0xff] %vm83, %v80
    %v86 = vld [vmem:[%s2] sm:$0xff]
    %v87 = vld [vmem:[%s2 + $0x8] sm:$0xff]
    %v88 = vsel %vm83, %v77, -inf
    %89 = vmax.xlane.f32.xlu0 %v88
    %v90 = vpop.xlane.xlu0 %89
    %v91 = vsel %vm83, %v80, -inf
    %92 = vmax.xlane.f32.xlu0 %v91
    %v93 = vpop.xlane.xlu0 %92
    %v94 = vsub.f32 %v77, %v90
    %v95 = vsub.f32 %v80, %v93
    %v96 = vmul.f32 %v94, 1.442695
    %v97 = vpow.pop %v96
    %v98 = vmul.f32 %v95, 1.442695
    %v99 = vpow.pop %v98
    %v100 = vsel %vm83, %v97, 0.0
    %101 = vadd.xlane.f32.xlu0 %v100
    %v102 = vpop.xlane.xlu0 %101
    %v103 = vsel %vm83, %v99, 0.0
    %104 = vadd.xlane.f32.xlu0 %v103
    %v105 = vpop.xlane.xlu0 %104
    %v106 = vlog2.pop %v102
    %v107 = vmul.f32 %v106, 0.6931472
    %v108 = vlog2.pop %v105
    %v109 = vmul.f32 %v108, 0.6931472
    %v110 = vadd.f32 %v90, %v107
    %v111 = vadd.f32 %v93, %v109
    %v112 = vlaneseq
    %v113 = vand.u32 %v112, 127
    %114 = vset.pattern.permute.xlu0 0
    %115 = vperm.xlu0 %114, %v86
    %v116 = vpop.permute.xlu0 %115
    %117 = vset.pattern.permute.xlu0 0
    %118 = vperm.xlu0 %117, %v87
    %v119 = vpop.permute.xlu0 %118
    %vm120 = vcmp.eq.s32.totalorder %v113, %v116
    %vm121 = vcmp.eq.s32.totalorder %v113, %v119
    %v122 = vsel %vm120, %v77, 0.0
    %v123 = vsel %vm121, %v80, 0.0
    %v124 = vsel %vm83, %v122, 0.0
    %125 = vadd.xlane.f32.xlu0 %v124
    %v126 = vpop.xlane.xlu0 %125
    %v127 = vsel %vm83, %v123, 0.0
    %128 = vadd.xlane.f32.xlu0 %v127
    %v129 = vpop.xlane.xlu0 %128
    %vm130 = vcmp.ne.s32.totalorder %v86, 4294967196
    %vm131 = vcmp.ne.s32.totalorder %v87, 4294967196
    %v132 = vsel %vm130, 1, 0
    %v133 = vsel %vm131, 1, 0
    %v134 = vcvt.s32.f32 %v132
    %v135 = vcvt.s32.f32 %v133
    %v136 = vsub.f32 %v110, %v126
    %v137 = vsub.f32 %v111, %v129
    %v138 = vmul.f32 %v136, %v134
    %v139 = vmul.f32 %v137, %v135
    %vm140 = vcmask 7168
    %v141 = vsel %vm140, %v134, 0.0
    %v142 = vsel %vm140, %v135, 0.0
    %v143 = vadd.f32 %v141, %v142
    %v144 = vrot.slane %v143, 4
    %v145 = vadd.f32 %v143, %v144
    %v146 = vrot.slane %v145, 2
    %v147 = vadd.f32 %v145, %v146
    %v148 = vrot.slane %v147, 1
    %v149 = vadd.f32 %v147, %v148
    %v150 = vmax.f32 %v149, 1.0
    %v151 = vsel %vm140, %v138, 0.0
    %v152 = vsel %vm140, %v139, 0.0
    %v153 = vadd.f32 %v151, %v152
    %v154 = vrot.slane %v153, 4
    %v155 = vadd.f32 %v153, %v154
    %v156 = vrot.slane %v155, 2
    %v157 = vadd.f32 %v155, %v156
    %v158 = vrot.slane %v157, 1
    %v159 = vadd.f32 %v157, %v158
    %v160 = vrcp.pop %v150
    %v161 = vmul.f32 %v159, %v160
    %s162 = vtos %v161
    %s163 = scalar_lea.smem [#allocation5], 0
    %164 = sst [smem:[%s163]] %s162
    // Predicated region
    $region14: #{mt5_forward.5} parent=1 // pred_check
      _
    $region15: #{mt5_forward.5} parent=1 // pred_check_branch
      %166 = sbr.rel (0) target = $region17
    $region16: #{mt5_forward.5} parent=1 // pred_region
      %s168 = ssub.s32 256, 256
      %169 = vsyncadd [#allocation3], %s168
      %s170 = sshll.u32 [#allocation2], 4
      %s171 = int_to_ptr.vmem [resolvable:$true] %s170
      %176 = dma.vmem_to_hbm [thread:$0]  %s171, 256, %s3, [#allocation3], 128, 128, 8
    $region17: #{mt5_forward.5} parent=1 // pred_fallthru
      _
    // Predicated region
    $region18: #{mt5_forward.5} parent=1 // pred_check
      _
    $region19: #{mt5_forward.5} parent=1 // pred_check_branch
      %178 = sbr.rel (0) target = $region21
    $region20: #{mt5_forward.5} parent=1 // pred_region
      %s180 = ssub.s32 16, 16
      %181 = vsyncadd [#allocation4], %s180
      %184 = dma.smem_to_hbm [#allocation5], 16, %s4, [#allocation4]
    $region21: #{mt5_forward.5} parent=1 // pred_fallthru
      _
    // Predicated region
    $region22: #{mt5_forward.5} parent=1 // pred_check
      _
    $region23: #{mt5_forward.5} parent=1 // pred_check_branch
      %186 = sbr.rel (0) target = $region25
    $region24: #{mt5_forward.5} parent=1 // pred_region
      %187 = dma.done [#allocation3], 256
    $region25: #{mt5_forward.5} parent=1 // pred_fallthru
      _
    // Predicated region
    $region26: #{mt5_forward.5} parent=1 // pred_check
      _
    $region27: #{mt5_forward.5} parent=1 // pred_check_branch
      %189 = sbr.rel (0) target = $region29
    $region28: #{mt5_forward.5} parent=1 // pred_region
      %190 = dma.done [#allocation4], 16
    $region29: #{mt5_forward.5} parent=1 // pred_fallthru
      _
    %191 = sfence
    %192 = vsyncpa [#allocation3], 1
    %193 = vsyncpa [#allocation4], 1

// kernel: mt5_forward.3
$region0: #{mt5_forward.3}
  #allocation0 [shape = 'u32[]', space=smem, size = 0x4, offset = 0x4, fixed_abs, tag = 'smem constant byte address 0x4 - core index']
  #allocation1 [shape = 'u32[144,128]{1,0:T(1,128)}', space=vmem, size = 0x12000, scoped, tag = 'internal scratch']
  %s0 = inlined_call_operand.vmem [shape: f32[16,32], index: 0, kind: input, shape index: {}]
  %s1 = inlined_call_operand.vmem [shape: f32[4,8,8], index: 1, kind: input, shape index: {}]
  %s2 = inlined_call_operand.vmem [shape: f32[5,32], index: 2, kind: input, shape index: {}]
  %s3 = inlined_call_operand.vmem [shape: bf16[2,32,96], index: 3, kind: input, shape index: {}]
  %s4 = inlined_call_operand.vmem [shape: bf16[2,32,32], index: 4, kind: input, shape index: {}]
  %s5 = inlined_call_operand.vmem [shape: bf16[2,32,128], index: 5, kind: input, shape index: {}]
  %s6 = inlined_call_operand.vmem [shape: bf16[2,64,32], index: 6, kind: input, shape index: {}]
  %s7 = inlined_call_operand.vmem [shape: f32[16,32], index: 7, kind: output, shape index: {}]
  %s8 = sld [smem:[#allocation0]]
  $region61: #{mt5_forward.3} parent=0
    _
  %s10 = ssub.s32 1, %s8
  %s11 = scalar_select 0, %s10, %s8
  loop: start=0, step=1, limit=4
  $region2: #{mt5_forward.3} parent=0 // loop_pre_header
    _
  $region3: #{mt5_forward.3} parent=0 // loop_header
    %s13 = sphi 0, %s17
    %p14 = scmp.ge.s32.totalorder %s13, 4
    %s23 = sphi 0, %s25
    %s26 = sphi 0, %s23
    %s27 = sphi 0, %s26
    %s43 = sphi 0, %s27
    %s47 = sphi 0, %s47
    %s49 = sphi 0, %s47
    %s50 = sphi 0, %s49
    %s64 = sphi 0, %s50
    %s68 = sphi 0, %s68
    %s70 = sphi 0, %s68
    %s71 = sphi 0, %s70
    %s85 = sphi 0, %s71
    %s89 = sphi 0, %s89
    %s91 = sphi 0, %s89
    %s92 = sphi 0, %s91
    %s106 = sphi 0, %s92
    %s110 = sphi 0, %s110
    %s112 = sphi 0, %s110
    %s113 = sphi 0, %s112
    %s127 = sphi 0, %s113
    %s131 = sphi 0, %s131
    %s133 = sphi 0, %s131
    %s134 = sphi 0, %s133
    %s148 = sphi 0, %s134
    %s152 = sphi 0, %s152
    %s154 = sphi 0, %s152
    %s155 = sphi 0, %s154
    %s169 = sphi 0, %s155
    %s175 = sphi 0, %s177
    %s178 = sphi 0, %s175
    %s179 = sphi 0, %s178
    %s195 = sphi 0, %s179
  $region4: #{mt5_forward.3} parent=0 // loop_header_branch
    %16 = sbr.rel (%p14) target = $region8
  $region5: #{mt5_forward.3} parent=0 // loop_body
    %s18 = ssub.s32 %s13, 1
    %s19 = ssub.s32 %s13, 2
    %s20 = sadd.s32 %s13, 1
    %s21 = ssub.s32 %s13, %s20
    %p22 = scmp.eq.s32.totalorder %s21, 0
    %s24 = sadd.s32 %s23, 1
    %s25 = scalar_select %p22, %s23, %s24
    %p28 = pneg %p22
    %p29 = scmp.eq.s32.totalorder %s13, 1
    %p30 = por %p28, %p29
    %p31 = scmp.ne.s32.totalorder %s23, %s26
    %p32 = scmp.eq.s32.totalorder %s13, 0
    %p33 = por %p31, %p32
    %p34 = scmp.ne.s32.totalorder %s23, %s26
    %p35 = scmp.eq.s32.totalorder %s18, 1
    %p36 = por %p34, %p35
    %p37 = scmp.ne.s32.totalorder %s26, %s27
    %p38 = scmp.eq.s32.totalorder %s18, 0
    %p39 = por %p37, %p38
    %p40 = scmp.ne.s32.totalorder %s26, %s27
    %p41 = scmp.eq.s32.totalorder %s19, 1
    %p42 = por %p40, %p41
    %p44 = scmp.ne.s32.totalorder %s27, %s43
    %p45 = scmp.eq.s32.totalorder %s19, 0
    %p46 = por %p44, %p45
    %s48 = sadd.s32 %s47, 1
    %p51 = scmp.eq.s32.totalorder %s13, 1
    %p52 = scmp.ne.s32.totalorder %s47, %s49
    %p53 = scmp.eq.s32.totalorder %s13, 0
    %p54 = por %p52, %p53
    %p55 = scmp.ne.s32.totalorder %s47, %s49
    %p56 = scmp.eq.s32.totalorder %s18, 1
    %p57 = por %p55, %p56
    %p58 = scmp.ne.s32.totalorder %s49, %s50
    %p59 = scmp.eq.s32.totalorder %s18, 0
    %p60 = por %p58, %p59
    %p61 = scmp.ne.s32.totalorder %s49, %s50
    %p62 = scmp.eq.s32.totalorder %s19, 1
    %p63 = por %p61, %p62
    %p65 = scmp.ne.s32.totalorder %s50, %s64
    %p66 = scmp.eq.s32.totalorder %s19, 0
    %p67 = por %p65, %p66
    %s69 = sadd.s32 %s68, 1
    %p72 = scmp.eq.s32.totalorder %s13, 1
    %p73 = scmp.ne.s32.totalorder %s68, %s70
    %p74 = scmp.eq.s32.totalorder %s13, 0
    %p75 = por %p73, %p74
    %p76 = scmp.ne.s32.totalorder %s68, %s70
    %p77 = scmp.eq.s32.totalorder %s18, 1
    %p78 = por %p76, %p77
    %p79 = scmp.ne.s32.totalorder %s70, %s71
    %p80 = scmp.eq.s32.totalorder %s18, 0
    %p81 = por %p79, %p80
    %p82 = scmp.ne.s32.totalorder %s70, %s71
    %p83 = scmp.eq.s32.totalorder %s19, 1
    %p84 = por %p82, %p83
    %p86 = scmp.ne.s32.totalorder %s71, %s85
    %p87 = scmp.eq.s32.totalorder %s19, 0
    %p88 = por %p86, %p87
    %s90 = sadd.s32 %s89, 1
    %p93 = scmp.eq.s32.totalorder %s13, 1
    %p94 = scmp.ne.s32.totalorder %s89, %s91
    %p95 = scmp.eq.s32.totalorder %s13, 0
    %p96 = por %p94, %p95
    %p97 = scmp.ne.s32.totalorder %s89, %s91
    %p98 = scmp.eq.s32.totalorder %s18, 1
    %p99 = por %p97, %p98
    %p100 = scmp.ne.s32.totalorder %s91, %s92
    %p101 = scmp.eq.s32.totalorder %s18, 0
    %p102 = por %p100, %p101
    %p103 = scmp.ne.s32.totalorder %s91, %s92
    %p104 = scmp.eq.s32.totalorder %s19, 1
    %p105 = por %p103, %p104
    %p107 = scmp.ne.s32.totalorder %s92, %s106
    %p108 = scmp.eq.s32.totalorder %s19, 0
    %p109 = por %p107, %p108
    %s111 = sadd.s32 %s110, 1
    %p114 = scmp.eq.s32.totalorder %s13, 1
    %p115 = scmp.ne.s32.totalorder %s110, %s112
    %p116 = scmp.eq.s32.totalorder %s13, 0
    %p117 = por %p115, %p116
    %p118 = scmp.ne.s32.totalorder %s110, %s112
    %p119 = scmp.eq.s32.totalorder %s18, 1
    %p120 = por %p118, %p119
    %p121 = scmp.ne.s32.totalorder %s112, %s113
    %p122 = scmp.eq.s32.totalorder %s18, 0
    %p123 = por %p121, %p122
    %p124 = scmp.ne.s32.totalorder %s112, %s113
    %p125 = scmp.eq.s32.totalorder %s19, 1
    %p126 = por %p124, %p125
    %p128 = scmp.ne.s32.totalorder %s113, %s127
    %p129 = scmp.eq.s32.totalorder %s19, 0
    %p130 = por %p128, %p129
    %s132 = sadd.s32 %s131, 1
    %p135 = scmp.eq.s32.totalorder %s13, 1
    %p136 = scmp.ne.s32.totalorder %s131, %s133
    %p137 = scmp.eq.s32.totalorder %s13, 0
    %p138 = por %p136, %p137
    %p139 = scmp.ne.s32.totalorder %s131, %s133
    %p140 = scmp.eq.s32.totalorder %s18, 1
    %p141 = por %p139, %p140
    %p142 = scmp.ne.s32.totalorder %s133, %s134
    %p143 = scmp.eq.s32.totalorder %s18, 0
    %p144 = por %p142, %p143
    %p145 = scmp.ne.s32.totalorder %s133, %s134
    %p146 = scmp.eq.s32.totalorder %s19, 1
    %p147 = por %p145, %p146
    %p149 = scmp.ne.s32.totalorder %s134, %s148
    %p150 = scmp.eq.s32.totalorder %s19, 0
    %p151 = por %p149, %p150
    %s153 = sadd.s32 %s152, 1
    %p156 = scmp.eq.s32.totalorder %s13, 1
    %p157 = scmp.ne.s32.totalorder %s152, %s154
    %p158 = scmp.eq.s32.totalorder %s13, 0
    %p159 = por %p157, %p158
    %p160 = scmp.ne.s32.totalorder %s152, %s154
    %p161 = scmp.eq.s32.totalorder %s18, 1
    %p162 = por %p160, %p161
    %p163 = scmp.ne.s32.totalorder %s154, %s155
    %p164 = scmp.eq.s32.totalorder %s18, 0
    %p165 = por %p163, %p164
    %p166 = scmp.ne.s32.totalorder %s154, %s155
    %p167 = scmp.eq.s32.totalorder %s19, 1
    %p168 = por %p166, %p167
    %p170 = scmp.ne.s32.totalorder %s155, %s169
    %p171 = scmp.eq.s32.totalorder %s19, 0
    %p172 = por %p170, %p171
    %s173 = ssub.s32 %s13, %s20
    %p174 = scmp.eq.s32.totalorder %s173, 0
    %s176 = sadd.s32 %s175, 1
    %s177 = scalar_select %p174, %s175, %s176
    %p180 = pneg %p174
    %p181 = scmp.eq.s32.totalorder %s13, 1
    %p182 = por %p180, %p181
    %p183 = scmp.ne.s32.totalorder %s175, %s178
    %p184 = scmp.eq.s32.totalorder %s13, 0
    %p185 = por %p183, %p184
    %p186 = scmp.ne.s32.totalorder %s175, %s178
    %p187 = scmp.eq.s32.totalorder %s18, 1
    %p188 = por %p186, %p187
    %p189 = scmp.ne.s32.totalorder %s178, %s179
    %p190 = scmp.eq.s32.totalorder %s18, 0
    %p191 = por %p189, %p190
    %p192 = scmp.ne.s32.totalorder %s178, %s179
    %p193 = scmp.eq.s32.totalorder %s19, 1
    %p194 = por %p192, %p193
    %p196 = scmp.ne.s32.totalorder %s179, %s195
    %p197 = scmp.eq.s32.totalorder %s19, 0
    %p198 = por %p196, %p197
    %p199 = scmp.le.s32.totalorder 1, %s13
    %p200 = scmp.lt.s32.totalorder %s13, 3
    %p201 = pnand %p199, %p200
    %p202 = pneg %p201
    // Predicated region
    $region9: #{mt5_forward.3} parent=5 // pred_check
      _
    $region10: #{mt5_forward.3} parent=5 // pred_check_branch
      %204 = sbr.rel (%p201) target = $region12
    $region11: #{mt5_forward.3} parent=5 // pred_region
      %s205 = ssub.s32 %s13, 1
      // Predicated region
      $region13: #{mt5_forward.3} parent=11 // pred_check
        %p206 = pneg %p60
      $region14: #{mt5_forward.3} parent=11 // pred_check_branch
        %208 = sbr.rel (%p206) target = $region16
      $region15: #{mt5_forward.3} parent=11 // pred_region
        _
      $region16: #{mt5_forward.3} parent=11 // pred_fallthru
        _
      // Predicated region
      $region17: #{mt5_forward.3} parent=11 // pred_check
        %p209 = pneg %p81
      $region18: #{mt5_forward.3} parent=11 // pred_check_branch
        %211 = sbr.rel (%p209) target = $region20
      $region19: #{mt5_forward.3} parent=11 // pred_region
        _
      $region20: #{mt5_forward.3} parent=11 // pred_fallthru
        _
      // Predicated region
      $region21: #{mt5_forward.3} parent=11 // pred_check
        %p212 = pneg %p102
      $region22: #{mt5_forward.3} parent=11 // pred_check_branch
        %214 = sbr.rel (%p212) target = $region24
      $region23: #{mt5_forward.3} parent=11 // pred_region
        _
      $region24: #{mt5_forward.3} parent=11 // pred_fallthru
        _
      // Predicated region
      $region25: #{mt5_forward.3} parent=11 // pred_check
        %p215 = pneg %p123
      $region26: #{mt5_forward.3} parent=11 // pred_check_branch
        %217 = sbr.rel (%p215) target = $region28
      $region27: #{mt5_forward.3} parent=11 // pred_region
        _
      $region28: #{mt5_forward.3} parent=11 // pred_fallthru
        _
      // Predicated region
      $region29: #{mt5_forward.3} parent=11 // pred_check
        %p218 = pneg %p144
      $region30: #{mt5_forward.3} parent=11 // pred_check_branch
        %220 = sbr.rel (%p218) target = $region32
      $region31: #{mt5_forward.3} parent=11 // pred_region
        _
      $region32: #{mt5_forward.3} parent=11 // pred_fallthru
        _
      // Predicated region
      $region33: #{mt5_forward.3} parent=11 // pred_check
        %p221 = pneg %p165
      $region34: #{mt5_forward.3} parent=11 // pred_check_branch
        %223 = sbr.rel (%p221) target = $region36
      $region35: #{mt5_forward.3} parent=11 // pred_region
        _
      $region36: #{mt5_forward.3} parent=11 // pred_fallthru
        _
    $region12: #{mt5_forward.3} parent=5 // pred_fallthru
      _
    %p224 = scmp.lt.s32.totalorder %s13, 2
    // Predicated region
    $region37: #{mt5_forward.3} parent=5 // pred_check
      %p225 = pneg %p224
    $region38: #{mt5_forward.3} parent=5 // pred_check_branch
      %227 = sbr.rel (%p225) target = $region40
    $region39: #{mt5_forward.3} parent=5 // pred_region
      // Predicated region
      $region41: #{mt5_forward.3} parent=39 // pred_check
        %p228 = pneg %p33
      $region42: #{mt5_forward.3} parent=39 // pred_check_branch
        %230 = sbr.rel (%p228) target = $region44
      $region43: #{mt5_forward.3} parent=39 // pred_region
        %p231 = scmp.lt.s32.totalorder %s13, 1
        %s232 = scalar_select %p231, %s13, 1
        %s233 = smul.addr %s232, 8
        %s234 = scalar_lea.vmem %s0, %s233
      $region44: #{mt5_forward.3} parent=39 // pred_fallthru
        _
    $region40: #{mt5_forward.3} parent=5 // pred_fallthru
      _
    %p235 = scmp.le.s32.totalorder 1, %s13
    %p236 = scmp.lt.s32.totalorder %s13, 3
    %p237 = pnand %p235, %p236
    %p238 = pneg %p237
    // Predicated region
    $region45: #{mt5_forward.3} parent=5 // pred_check
      _
    $region46: #{mt5_forward.3} parent=5 // pred_check_branch
      %240 = sbr.rel (%p237) target = $region48
    $region47: #{mt5_forward.3} parent=5 // pred_region
      %s241 = ssub.s32 %s13, 1
      %p242 = scmp.lt.s32.totalorder %s18, 1
      %s243 = scalar_select %p242, %s18, 1
      %s244 = smul.addr %s243, 8
      %s245 = scalar_lea.vmem %s0, %s244
      %p246 = pneg %p39
      %p247 = pneg %p36
      %p248 = pneg %p60
      %p249 = pneg %p57
      %p250 = pneg %p81
      %p251 = pneg %p78
      %p252 = pneg %p102
      %p253 = pneg %p99
      %p254 = pneg %p123
      %p255 = pneg %p120
      %p256 = pneg %p144
      %p257 = pneg %p141
      %p258 = pneg %p165
      %p259 = pneg %p162
      %p260 = pneg %p191
      %p261 = pneg %p188
      %p262 = scmp.lt.s32.totalorder %s18, 1
      %s263 = scalar_select %p262, %s18, 1
      %s264 = smul.addr %s263, 8
      %s265 = scalar_lea.vmem %s7, %s264
      %p266 = scmp.lt.s32.totalorder %s18, 1
      %s267 = scalar_select %p266, %s18, 1
      %s268 = smul.addr %s267, 8
      %s269 = scalar_lea.vmem %s0, %s268
      %p270 = scmp.lt.s32.totalorder %s18, 1
      %s271 = scalar_select %p270, %s18, 1
      %s272 = smul.addr %s271, 8
      %s273 = scalar_lea.vmem %s7, %s272
      %v275 = vld [vmem:[%s269] sm:$0xff]
      %v276 = vld [vmem:[%s1] sm:$0xff]
      %v277 = vld [vmem:[%s1 + $0x8] sm:$0xff]
      %v278 = vld [vmem:[%s1 + $0x10] sm:$0xff]
      %v279 = vld [vmem:[%s1 + $0x18] sm:$0xff]
      %v280 = vld [vmem:[%s2] sm:$0x1f]
      %v281 = vmul.f32 %v275, %v275
      %vm282 = vcmask 261120
      %v283 = vsel %vm282, %v281, 0.0
      %284 = vadd.xlane.f32.xlu0 %v283
      %v285 = vpop.xlane.xlu0 %284
      %v286 = vrcp.pop 32.0
      %v287 = vmul.f32 %v285, %v286
      %v288 = vadd.f32 %v287, 1e-06
      %v289 = vrsqrt.pop %v288
      %v290 = vmul.f32 %v275, %v289
      %v291 = vlaneseq
      %v292 = vshrl.u32 %v291, 7
      %v293 = vsub.s32 0, %v292
      %v294 = vrot.slane %v280, %v293
      %v295 = vmul.f32 %v290, %v294
      %v296 = vpack.c.bf16 %v295, %v295
      %v297 = vld [vmem:[%s3] sm:$0xf]
      %v298 = vld [vmem:[%s3 + $0x4] sm:$0xf]
      %v299 = vld [vmem:[%s3 + $0x8] sm:$0xf]
      %v300 = vld [vmem:[%s3 + $0xc] sm:$0xf]
      %v305 = vunpack.c.l.b16 %v297
      %v306 = vunpack.c.l.b16 %v298
      %v307 = vunpack.c.l.b16 %v299
      %v308 = vunpack.c.l.b16 %v300
      %v309 = vpack.c.b16 %v306, %v305
      %v310 = vpack.c.b16 %v308, %v307
      %v314 = vsel %vm282, %v296, 0
      %316 = vmatprep.subr.bf16.mxu0 0
      %317 = vmatpush1.bf16.msra.mxu0 %v309
      %318 = vmatprep.subr.bf16.mxu0 0
      %319 = vmatpush1.bf16.msra.mxu0 %v310
      %320 = vmatprep.subr.bf16.mxu0 0
      %321 = vmatpush1.bf16.msra.mxu0 0
      %322 = vmatprep.subr.bf16.mxu0 0
      %323 = vmatpush1.bf16.msra.mxu0 0
      %324 = vmatprep.subr.bf16.mxu0 0
      %325 = vmatpush1.bf16.msra.mxu0 0
      %326 = vmatprep.subr.bf16.mxu0 0
      %327 = vmatpush1.bf16.msra.mxu0 0
      %328 = vmatprep.subr.bf16.mxu0 0
      %329 = vmatpush1.bf16.msra.mxu0 0
      %330 = vmatprep.subr.bf16.mxu0 0
      %331 = vmatpush1.bf16.msra.mxu0 0
      %332 = vmatprep.subr.bf16.mxu0 0
      %333 = vmatpush1.bf16.msra.mxu0 0
      %334 = vmatprep.subr.bf16.mxu0 0
      %335 = vmatpush1.bf16.msra.mxu0 0
      %336 = vmatprep.subr.bf16.mxu0 0
      %337 = vmatpush1.bf16.msra.mxu0 0
      %338 = vmatprep.subr.bf16.mxu0 0
      %339 = vmatpush1.bf16.msra.mxu0 0
      %340 = vmatprep.subr.bf16.mxu0 0
      %341 = vmatpush1.bf16.msra.mxu0 0
      %342 = vmatprep.subr.bf16.mxu0 0
      %343 = vmatpush1.bf16.msra.mxu0 0
      %344 = vmatprep.subr.bf16.mxu0 0
      %345 = vmatpush1.bf16.msra.mxu0 0
      %346 = vmatprep.subr.bf16.mxu0 0
      %347 = vmatpush1.bf16.msra.mxu0 0
      %348 = vmatprep.mubr.bf16.mxu0 0
      %349 = vmatmul.mubr.bf16.gmra.mrb[0].mxu0 %v314
      %v350 = vpop.f32.mrb[0].mxu0
      %v351 = vadd.f32 0.0, %v350
      %v352 = vpop.f32.mrb[0].mxu0
      %v353 = vpop.f32.mrb[0].mxu0
      %v354 = vpop.f32.mrb[0].mxu0
      %355 = vdwg.mxu0
      %v356 = vld [vmem:[%s4] sm:$0xf]
      %v357 = vld [vmem:[%s4 + $0x4] sm:$0xf]
      %v358 = vld [vmem:[%s4 + $0x8] sm:$0xf]
      %v359 = vld [vmem:[%s4 + $0xc] sm:$0xf]
      %v360 = vpack.c.bf16 %v351, %v351
      %362 = vrot.lane.b32.xlu0 %v360, 96
      %v363 = vpop.permute.xlu0 %362
      %vm364 = vcmask 64512
      %v366 = vsel %vm364, %v360, 0
      %v369 = vsel %vm364, %v363, 0
      %371 = vmatprep.subr.bf16.mxu0 0
      %372 = vmatpush1.bf16.xpose.msra.mxu0 %v369
      %373 = vmatprep.subr.bf16.mxu0 0
      %374 = vmatpush1.bf16.xpose.msra.mxu0 0
      %375 = vmatprep.subr.bf16.mxu0 0
      %376 = vmatpush1.bf16.xpose.msra.mxu0 0
      %377 = vmatprep.subr.bf16.mxu0 0
      %378 = vmatpush1.bf16.xpose.msra.mxu0 0
      %379 = vmatprep.subr.bf16.mxu0 0
      %380 = vmatpush1.bf16.xpose.msra.mxu0 0
      %381 = vmatprep.subr.bf16.mxu0 0
      %382 = vmatpush1.bf16.xpose.msra.mxu0 0
      %383 = vmatprep.subr.bf16.mxu0 0
      %384 = vmatpush1.bf16.xpose.msra.mxu0 0
      %385 = vmatprep.subr.bf16.mxu0 0
      %386 = vmatpush1.bf16.xpose.msra.mxu0 0
      %387 = vmatprep.subr.bf16.mxu0 0
      %388 = vmatpush1.bf16.xpose.msra.mxu0 0
      %389 = vmatprep.subr.bf16.mxu0 0
      %390 = vmatpush1.bf16.xpose.msra.mxu0 0
      %391 = vmatprep.subr.bf16.mxu0 0
      %392 = vmatpush1.bf16.xpose.msra.mxu0 0
      %393 = vmatprep.subr.bf16.mxu0 0
      %394 = vmatpush1.bf16.xpose.msra.mxu0 0
      %395 = vmatprep.subr.bf16.mxu0 0
      %396 = vmatpush1.bf16.xpose.msra.mxu0 0
      %397 = vmatprep.subr.bf16.mxu0 0
      %398 = vmatpush1.bf16.xpose.msra.mxu0 0
      %399 = vmatprep.subr.bf16.mxu0 0
      %400 = vmatpush1.bf16.xpose.msra.mxu0 0
      %401 = vmatprep.subr.bf16.mxu0 0
      %402 = vmatpush1.bf16.xpose.msra.mxu0 0
      %403 = vmatprep.mubr.bf16.mxu0 0
      %404 = vmatmul.mubr.bf16.gmra.mrb[0].mxu0 %v366
      %v405 = vpop.f32.mrb[0].mxu0
      %v406 = vadd.f32 %v276, %v405
      %v407 = vpop.f32.mrb[0].mxu0
      %v408 = vpop.f32.mrb[0].mxu0
      %v409 = vpop.f32.mrb[0].mxu0
      %410 = vdwg.mxu0
      %v411 = vsel %vm364, %v406, -inf
      %412 = vmax.xlane.f32.xlu0 %v411
      %v413 = vpop.xlane.xlu0 %412
      %v414 = vsub.f32 %v406, %v413
      %v415 = vmul.f32 %v414, 1.442695
      %v416 = vpow.pop %v415
      %v417 = vsel %vm364, %v416, 0.0
      %418 = vadd.xlane.f32.xlu0 %v417
      %v419 = vpop.xlane.xlu0 %418
      %v420 = vrcp.pop %v419
      %v421 = vmul.f32 %v416, %v420
      %v422 = vpack.c.bf16 %v421, %v421
      %423 = vrot.lane.b32.xlu0 %v360, 64
      %v424 = vpop.permute.xlu0 %423
      %v426 = vsel %vm364, %v422, 0
      %vm428 = vcmask 1043456
      %v430 = vsel %vm428, %v424, 0
      %432 = vmatprep.subr.bf16.mxu0 0
      %433 = vmatpush1.bf16.msra.mxu0 %v430
      %434 = vmatprep.subr.bf16.mxu0 0
      %435 = vmatpush1.bf16.msra.mxu0 0
      %436 = vmatprep.subr.bf16.mxu0 0
      %437 = vmatpush1.bf16.msra.mxu0 0
      %438 = vmatprep.subr.bf16.mxu0 0
      %439 = vmatpush1.bf16.msra.mxu0 0
      %440 = vmatprep.subr.bf16.mxu0 0
      %441 = vmatpush1.bf16.msra.mxu0 0
      %442 = vmatprep.subr.bf16.mxu0 0
      %443 = vmatpush1.bf16.msra.mxu0 0
      %444 = vmatprep.subr.bf16.mxu0 0
      %445 = vmatpush1.bf16.msra.mxu0 0
      %446 = vmatprep.subr.bf16.mxu0 0
      %447 = vmatpush1.bf16.msra.mxu0 0
      %448 = vmatprep.subr.bf16.mxu0 0
      %449 = vmatpush1.bf16.msra.mxu0 0
      %450 = vmatprep.subr.bf16.mxu0 0
      %451 = vmatpush1.bf16.msra.mxu0 0
      %452 = vmatprep.subr.bf16.mxu0 0
      %453 = vmatpush1.bf16.msra.mxu0 0
      %454 = vmatprep.subr.bf16.mxu0 0
      %455 = vmatpush1.bf16.msra.mxu0 0
      %456 = vmatprep.subr.bf16.mxu0 0
      %457 = vmatpush1.bf16.msra.mxu0 0
      %458 = vmatprep.subr.bf16.mxu0 0
      %459 = vmatpush1.bf16.msra.mxu0 0
      %460 = vmatprep.subr.bf16.mxu0 0
      %461 = vmatpush1.bf16.msra.mxu0 0
      %462 = vmatprep.subr.bf16.mxu0 0
      %463 = vmatpush1.bf16.msra.mxu0 0
      %464 = vmatprep.mubr.bf16.mxu0 0
      %465 = vmatmul.mubr.bf16.gmra.mrb[0].mxu0 %v426
      %v466 = vpop.f32.mrb[0].mxu0
      %v467 = vadd.f32 0.0, %v466
      %v468 = vpop.f32.mrb[0].mxu0
      %v469 = vpop.f32.mrb[0].mxu0
      %v470 = vpop.f32.mrb[0].mxu0
      %471 = vdwg.mxu0
      %472 = vrot.lane.b32.xlu0 %v360, 120
      %v473 = vpop.permute.xlu0 %472
      %474 = vrot.lane.b32.xlu0 %v360, 88
      %v475 = vpop.permute.xlu0 %474
      %v477 = vsel %vm364, %v473, 0
      %v480 = vsel %vm364, %v475, 0
      %482 = vmatprep.subr.bf16.mxu0 0
      %483 = vmatpush1.bf16.xpose.msra.mxu0 %v480
      %484 = vmatprep.subr.bf16.mxu0 0
      %485 = vmatpush1.bf16.xpose.msra.mxu0 0
      %486 = vmatprep.subr.bf16.mxu0 0
      %487 = vmatpush1.bf16.xpose.msra.mxu0 0
      %488 = vmatprep.subr.bf16.mxu0 0
      %489 = vmatpush1.bf16.xpose.msra.mxu0 0
      %490 = vmatprep.subr.bf16.mxu0 0
      %491 = vmatpush1.bf16.xpose.msra.mxu0 0
      %492 = vmatprep.subr.bf16.mxu0 0
      %493 = vmatpush1.bf16.xpose.msra.mxu0 0
      %494 = vmatprep.subr.bf16.mxu0 0
      %495 = vmatpush1.bf16.xpose.msra.mxu0 0
      %496 = vmatprep.subr.bf16.mxu0 0
      %497 = vmatpush1.bf16.xpose.msra.mxu0 0
      %498 = vmatprep.subr.bf16.mxu0 0
      %499 = vmatpush1.bf16.xpose.msra.mxu0 0
      %500 = vmatprep.subr.bf16.mxu0 0
      %501 = vmatpush1.bf16.xpose.msra.mxu0 0
      %502 = vmatprep.subr.bf16.mxu0 0
      %503 = vmatpush1.bf16.xpose.msra.mxu0 0
      %504 = vmatprep.subr.bf16.mxu0 0
      %505 = vmatpush1.bf16.xpose.msra.mxu0 0
      %506 = vmatprep.subr.bf16.mxu0 0
      %507 = vmatpush1.bf16.xpose.msra.mxu0 0
      %508 = vmatprep.subr.bf16.mxu0 0
      %509 = vmatpush1.bf16.xpose.msra.mxu0 0
      %510 = vmatprep.subr.bf16.mxu0 0
      %511 = vmatpush1.bf16.xpose.msra.mxu0 0
      %512 = vmatprep.subr.bf16.mxu0 0
      %513 = vmatpush1.bf16.xpose.msra.mxu0 0
      %514 = vmatprep.mubr.bf16.mxu0 0
      %515 = vmatmul.mubr.bf16.gmra.mrb[0].mxu0 %v477
      %v516 = vpop.f32.mrb[0].mxu0
      %v517 = vadd.f32 %v277, %v516
      %v518 = vpop.f32.mrb[0].mxu0
      %v519 = vpop.f32.mrb[0].mxu0
      %v520 = vpop.f32.mrb[0].mxu0
      %521 = vdwg.mxu0
      %v522 = vsel %vm364, %v517, -inf
      %523 = vmax.xlane.f32.xlu0 %v522
      %v524 = vpop.xlane.xlu0 %523
      %v525 = vsub.f32 %v517, %v524
      %v526 = vmul.f32 %v525, 1.442695
      %v527 = vpow.pop %v526
      %v528 = vsel %vm364, %v527, 0.0
      %529 = vadd.xlane.f32.xlu0 %v528
      %v530 = vpop.xlane.xlu0 %529
      %v531 = vrcp.pop %v530
      %v532 = vmul.f32 %v527, %v531
      %v533 = vpack.c.bf16 %v532, %v532
      %534 = vrot.lane.b32.xlu0 %v360, 56
      %v535 = vpop.permute.xlu0 %534
      %v537 = vsel %vm364, %v533, 0
      %v540 = vsel %vm428, %v535, 0
      %542 = vmatprep.subr.bf16.mxu0 0
      %543 = vmatpush1.bf16.msra.mxu0 %v540
      %544 = vmatprep.subr.bf16.mxu0 0
      %545 = vmatpush1.bf16.msra.mxu0 0
      %546 = vmatprep.subr.bf16.mxu0 0
      %547 = vmatpush1.bf16.msra.mxu0 0
      %548 = vmatprep.subr.bf16.mxu0 0
      %549 = vmatpush1.bf16.msra.mxu0 0
      %550 = vmatprep.subr.bf16.mxu0 0
      %551 = vmatpush1.bf16.msra.mxu0 0
      %552 = vmatprep.subr.bf16.mxu0 0
      %553 = vmatpush1.bf16.msra.mxu0 0
      %554 = vmatprep.subr.bf16.mxu0 0
      %555 = vmatpush1.bf16.msra.mxu0 0
      %556 = vmatprep.subr.bf16.mxu0 0
      %557 = vmatpush1.bf16.msra.mxu0 0
      %558 = vmatprep.subr.bf16.mxu0 0
      %559 = vmatpush1.bf16.msra.mxu0 0
      %560 = vmatprep.subr.bf16.mxu0 0
      %561 = vmatpush1.bf16.msra.mxu0 0
      %562 = vmatprep.subr.bf16.mxu0 0
      %563 = vmatpush1.bf16.msra.mxu0 0
      %564 = vmatprep.subr.bf16.mxu0 0
      %565 = vmatpush1.bf16.msra.mxu0 0
      %566 = vmatprep.subr.bf16.mxu0 0
      %567 = vmatpush1.bf16.msra.mxu0 0
      %568 = vmatprep.subr.bf16.mxu0 0
      %569 = vmatpush1.bf16.msra.mxu0 0
      %570 = vmatprep.subr.bf16.mxu0 0
      %571 = vmatpush1.bf16.msra.mxu0 0
      %572 = vmatprep.subr.bf16.mxu0 0
      %573 = vmatpush1.bf16.msra.mxu0 0
      %574 = vmatprep.mubr.bf16.mxu0 0
      %575 = vmatmul.mubr.bf16.gmra.mrb[0].mxu0 %v537
      %v576 = vpop.f32.mrb[0].mxu0
      %v577 = vadd.f32 0.0, %v576
      %v578 = vpop.f32.mrb[0].mxu0
      %v579 = vpop.f32.mrb[0].mxu0
      %v580 = vpop.f32.mrb[0].mxu0
      %581 = vdwg.mxu0
      %582 = vrot.lane.b32.xlu0 %v360, 112
      %v583 = vpop.permute.xlu0 %582
      %584 = vrot.lane.b32.xlu0 %v360, 80
      %v585 = vpop.permute.xlu0 %584
      %v587 = vsel %vm364, %v583, 0
      %v590 = vsel %vm364, %v585, 0
      %592 = vmatprep.subr.bf16.mxu0 0
      %593 = vmatpush1.bf16.xpose.msra.mxu0 %v590
      %594 = vmatprep.subr.bf16.mxu0 0
      %595 = vmatpush1.bf16.xpose.msra.mxu0 0
      %596 = vmatprep.subr.bf16.mxu0 0
      %597 = vmatpush1.bf16.xpose.msra.mxu0 0
      %598 = vmatprep.subr.bf16.mxu0 0
      %599 = vmatpush1.bf16.xpose.msra.mxu0 0
      %600 = vmatprep.subr.bf16.mxu0 0
      %601 = vmatpush1.bf16.xpose.msra.mxu0 0
      %602 = vmatprep.subr.bf16.mxu0 0
      %603 = vmatpush1.bf16.xpose.msra.mxu0 0
      %604 = vmatprep.subr.bf16.mxu0 0
      %605 = vmatpush1.bf16.xpose.msra.mxu0 0
      %606 = vmatprep.subr.bf16.mxu0 0
      %607 = vmatpush1.bf16.xpose.msra.mxu0 0
      %608 = vmatprep.subr.bf16.mxu0 0
      %609 = vmatpush1.bf16.xpose.msra.mxu0 0
      %610 = vmatprep.subr.bf16.mxu0 0
      %611 = vmatpush1.bf16.xpose.msra.mxu0 0
      %612 = vmatprep.subr.bf16.mxu0 0
      %613 = vmatpush1.bf16.xpose.msra.mxu0 0
      %614 = vmatprep.subr.bf16.mxu0 0
      %615 = vmatpush1.bf16.xpose.msra.mxu0 0
      %616 = vmatprep.subr.bf16.mxu0 0
      %617 = vmatpush1.bf16.xpose.msra.mxu0 0
      %618 = vmatprep.subr.bf16.mxu0 0
      %619 = vmatpush1.bf16.xpose.msra.mxu0 0
      %620 = vmatprep.subr.bf16.mxu0 0
      %621 = vmatpush1.bf16.xpose.msra.mxu0 0
      %622 = vmatprep.subr.bf16.mxu0 0
      %623 = vmatpush1.bf16.xpose.msra.mxu0 0
      %624 = vmatprep.mubr.bf16.mxu0 0
      %625 = vmatmul.mubr.bf16.gmra.mrb[0].mxu0 %v587
      %v626 = vpop.f32.mrb[0].mxu0
      %v627 = vadd.f32 %v278, %v626
      %v628 = vpop.f32.mrb[0].mxu0
      %v629 = vpop.f32.mrb[0].mxu0
      %v630 = vpop.f32.mrb[0].mxu0
      %631 = vdwg.mxu0
      %v632 = vsel %vm364, %v627, -inf
      %633 = vmax.xlane.f32.xlu0 %v632
      %v634 = vpop.xlane.xlu0 %633
      %v635 = vsub.f32 %v627, %v634
      %v636 = vmul.f32 %v635, 1.442695
      %v637 = vpow.pop %v636
      %v638 = vsel %vm364, %v637, 0.0
      %639 = vadd.xlane.f32.xlu0 %v638
      %v640 = vpop.xlane.xlu0 %639
      %v641 = vrcp.pop %v640
      %v642 = vmul.f32 %v637, %v641
      %v643 = vpack.c.bf16 %v642, %v642
      %644 = vrot.lane.b32.xlu0 %v360, 48
      %v645 = vpop.permute.xlu0 %644
      %v647 = vsel %vm364, %v643, 0
      %v650 = vsel %vm428, %v645, 0
      %652 = vmatprep.subr.bf16.mxu0 0
      %653 = vmatpush1.bf16.msra.mxu0 %v650
      %654 = vmatprep.subr.bf16.mxu0 0
      %655 = vmatpush1.bf16.msra.mxu0 0
      %656 = vmatprep.subr.bf16.mxu0 0
      %657 = vmatpush1.bf16.msra.mxu0 0
      %658 = vmatprep.subr.bf16.mxu0 0
      %659 = vmatpush1.bf16.msra.mxu0 0
      %660 = vmatprep.subr.bf16.mxu0 0
      %661 = vmatpush1.bf16.msra.mxu0 0
      %662 = vmatprep.subr.bf16.mxu0 0
      %663 = vmatpush1.bf16.msra.mxu0 0
      %664 = vmatprep.subr.bf16.mxu0 0
      %665 = vmatpush1.bf16.msra.mxu0 0
      %666 = vmatprep.subr.bf16.mxu0 0
      %667 = vmatpush1.bf16.msra.mxu0 0
      %668 = vmatprep.subr.bf16.mxu0 0
      %669 = vmatpush1.bf16.msra.mxu0 0
      %670 = vmatprep.subr.bf16.mxu0 0
      %671 = vmatpush1.bf16.msra.mxu0 0
      %672 = vmatprep.subr.bf16.mxu0 0
      %673 = vmatpush1.bf16.msra.mxu0 0
      %674 = vmatprep.subr.bf16.mxu0 0
      %675 = vmatpush1.bf16.msra.mxu0 0
      %676 = vmatprep.subr.bf16.mxu0 0
      %677 = vmatpush1.bf16.msra.mxu0 0
      %678 = vmatprep.subr.bf16.mxu0 0
      %679 = vmatpush1.bf16.msra.mxu0 0
      %680 = vmatprep.subr.bf16.mxu0 0
      %681 = vmatpush1.bf16.msra.mxu0 0
      %682 = vmatprep.subr.bf16.mxu0 0
      %683 = vmatpush1.bf16.msra.mxu0 0
      %684 = vmatprep.mubr.bf16.mxu0 0
      %685 = vmatmul.mubr.bf16.gmra.mrb[0].mxu0 %v647
      %v686 = vpop.f32.mrb[0].mxu0
      %v687 = vadd.f32 0.0, %v686
      %v688 = vpop.f32.mrb[0].mxu0
      %v689 = vpop.f32.mrb[0].mxu0
      %v690 = vpop.f32.mrb[0].mxu0
      %691 = vdwg.mxu0
      %692 = vrot.lane.b32.xlu0 %v360, 104
      %v693 = vpop.permute.xlu0 %692
      %694 = vrot.lane.b32.xlu0 %v360, 72
      %v695 = vpop.permute.xlu0 %694
      %v697 = vsel %vm364, %v693, 0
      %v700 = vsel %vm364, %v695, 0
      %702 = vmatprep.subr.bf16.mxu0 0
      %703 = vmatpush1.bf16.xpose.msra.mxu0 %v700
      %704 = vmatprep.subr.bf16.mxu0 0
      %705 = vmatpush1.bf16.xpose.msra.mxu0 0
      %706 = vmatprep.subr.bf16.mxu0 0
      %707 = vmatpush1.bf16.xpose.msra.mxu0 0
      %708 = vmatprep.subr.bf16.mxu0 0
      %709 = vmatpush1.bf16.xpose.msra.mxu0 0
      %710 = vmatprep.subr.bf16.mxu0 0
      %711 = vmatpush1.bf16.xpose.msra.mxu0 0
      %712 = vmatprep.subr.bf16.mxu0 0
      %713 = vmatpush1.bf16.xpose.msra.mxu0 0
      %714 = vmatprep.subr.bf16.mxu0 0
      %715 = vmatpush1.bf16.xpose.msra.mxu0 0
      %716 = vmatprep.subr.bf16.mxu0 0
      %717 = vmatpush1.bf16.xpose.msra.mxu0 0
      %718 = vmatprep.subr.bf16.mxu0 0
      %719 = vmatpush1.bf16.xpose.msra.mxu0 0
      %720 = vmatprep.subr.bf16.mxu0 0
      %721 = vmatpush1.bf16.xpose.msra.mxu0 0
      %722 = vmatprep.subr.bf16.mxu0 0
      %723 = vmatpush1.bf16.xpose.msra.mxu0 0
      %724 = vmatprep.subr.bf16.mxu0 0
      %725 = vmatpush1.bf16.xpose.msra.mxu0 0
      %726 = vmatprep.subr.bf16.mxu0 0
      %727 = vmatpush1.bf16.xpose.msra.mxu0 0
      %728 = vmatprep.subr.bf16.mxu0 0
      %729 = vmatpush1.bf16.xpose.msra.mxu0 0
      %730 = vmatprep.subr.bf16.mxu0 0
      %731 = vmatpush1.bf16.xpose.msra.mxu0 0
      %732 = vmatprep.subr.bf16.mxu0 0
      %733 = vmatpush1.bf16.xpose.msra.mxu0 0
      %734 = vmatprep.mubr.bf16.mxu0 0
      %735 = vmatmul.mubr.bf16.gmra.mrb[0].mxu0 %v697
      %v736 = vpop.f32.mrb[0].mxu0
      %v737 = vadd.f32 %v279, %v736
      %v738 = vpop.f32.mrb[0].mxu0
      %v739 = vpop.f32.mrb[0].mxu0
      %v740 = vpop.f32.mrb[0].mxu0
      %741 = vdwg.mxu0
      %v742 = vsel %vm364, %v737, -inf
      %743 = vmax.xlane.f32.xlu0 %v742
      %v744 = vpop.xlane.xlu0 %743
      %v745 = vsub.f32 %v737, %v744
      %v746 = vmul.f32 %v745, 1.442695
      %v747 = vpow.pop %v746
      %v748 = vsel %vm364, %v747, 0.0
      %749 = vadd.xlane.f32.xlu0 %v748
      %v750 = vpop.xlane.xlu0 %749
      %v751 = vrcp.pop %v750
      %v752 = vmul.f32 %v747, %v751
      %v753 = vpack.c.bf16 %v752, %v752
      %754 = vrot.lane.b32.xlu0 %v360, 40
      %v755 = vpop.permute.xlu0 %754
      %v757 = vsel %vm364, %v753, 0
      %v760 = vsel %vm428, %v755, 0
      %762 = vmatprep.subr.bf16.mxu0 0
      %763 = vmatpush1.bf16.msra.mxu0 %v760
      %764 = vmatprep.subr.bf16.mxu0 0
      %765 = vmatpush1.bf16.msra.mxu0 0
      %766 = vmatprep.subr.bf16.mxu0 0
      %767 = vmatpush1.bf16.msra.mxu0 0
      %768 = vmatprep.subr.bf16.mxu0 0
      %769 = vmatpush1.bf16.msra.mxu0 0
      %770 = vmatprep.subr.bf16.mxu0 0
      %771 = vmatpush1.bf16.msra.mxu0 0
      %772 = vmatprep.subr.bf16.mxu0 0
      %773 = vmatpush1.bf16.msra.mxu0 0
      %774 = vmatprep.subr.bf16.mxu0 0
      %775 = vmatpush1.bf16.msra.mxu0 0
      %776 = vmatprep.subr.bf16.mxu0 0
      %777 = vmatpush1.bf16.msra.mxu0 0
      %778 = vmatprep.subr.bf16.mxu0 0
      %779 = vmatpush1.bf16.msra.mxu0 0
      %780 = vmatprep.subr.bf16.mxu0 0
      %781 = vmatpush1.bf16.msra.mxu0 0
      %782 = vmatprep.subr.bf16.mxu0 0
      %783 = vmatpush1.bf16.msra.mxu0 0
      %784 = vmatprep.subr.bf16.mxu0 0
      %785 = vmatpush1.bf16.msra.mxu0 0
      %786 = vmatprep.subr.bf16.mxu0 0
      %787 = vmatpush1.bf16.msra.mxu0 0
      %788 = vmatprep.subr.bf16.mxu0 0
      %789 = vmatpush1.bf16.msra.mxu0 0
      %790 = vmatprep.subr.bf16.mxu0 0
      %791 = vmatpush1.bf16.msra.mxu0 0
      %792 = vmatprep.subr.bf16.mxu0 0
      %793 = vmatpush1.bf16.msra.mxu0 0
      %794 = vmatprep.mubr.bf16.mxu0 0
      %795 = vmatmul.mubr.bf16.gmra.mrb[0].mxu0 %v757
      %v796 = vpop.f32.mrb[0].mxu0
      %v797 = vadd.f32 0.0, %v796
      %v798 = vpop.f32.mrb[0].mxu0
      %v799 = vpop.f32.mrb[0].mxu0
      %v800 = vpop.f32.mrb[0].mxu0
      %801 = vdwg.mxu0
      %803 = vrot.lane.b32.xlu0 %v577, 8
      %v804 = vpop.permute.xlu0 %803
      %807 = vrot.lane.b32.xlu0 %v687, 16
      %v808 = vpop.permute.xlu0 %807
      %811 = vrot.lane.b32.xlu0 %v797, 24
      %v812 = vpop.permute.xlu0 %811
      %v814 = vsel %vm364, %v467, %v804
      %vm815 = vcmask 130048
      %v816 = vsel %vm815, %v814, %v808
      %vm817 = vcmask 195584
      %v818 = vsel %vm817, %v816, %v812
      %v819 = vpack.c.bf16 %v818, %v818
      %v824 = vunpack.c.l.b16 %v356
      %v825 = vunpack.c.l.b16 %v357
      %v826 = vunpack.c.l.b16 %v358
      %v827 = vunpack.c.l.b16 %v359
      %v828 = vpack.c.b16 %v825, %v824
      %v829 = vpack.c.b16 %v827, %v826
      %v833 = vsel %vm282, %v819, 0
      %835 = vmatprep.subr.bf16.mxu0 0
      %836 = vmatpush1.bf16.msra.mxu0 %v828
      %837 = vmatprep.subr.bf16.mxu0 0
      %838 = vmatpush1.bf16.msra.mxu0 %v829
      %839 = vmatprep.subr.bf16.mxu0 0
      %840 = vmatpush1.bf16.msra.mxu0 0
      %841 = vmatprep.subr.bf16.mxu0 0
      %842 = vmatpush1.bf16.msra.mxu0 0
      %843 = vmatprep.subr.bf16.mxu0 0
      %844 = vmatpush1.bf16.msra.mxu0 0
      %845 = vmatprep.subr.bf16.mxu0 0
      %846 = vmatpush1.bf16.msra.mxu0 0
      %847 = vmatprep.subr.bf16.mxu0 0
      %848 = vmatpush1.bf16.msra.mxu0 0
      %849 = vmatprep.subr.bf16.mxu0 0
      %850 = vmatpush1.bf16.msra.mxu0 0
      %851 = vmatprep.subr.bf16.mxu0 0
      %852 = vmatpush1.bf16.msra.mxu0 0
      %853 = vmatprep.subr.bf16.mxu0 0
      %854 = vmatpush1.bf16.msra.mxu0 0
      %855 = vmatprep.subr.bf16.mxu0 0
      %856 = vmatpush1.bf16.msra.mxu0 0
      %857 = vmatprep.subr.bf16.mxu0 0
      %858 = vmatpush1.bf16.msra.mxu0 0
      %859 = vmatprep.subr.bf16.mxu0 0
      %860 = vmatpush1.bf16.msra.mxu0 0
      %861 = vmatprep.subr.bf16.mxu0 0
      %862 = vmatpush1.bf16.msra.mxu0 0
      %863 = vmatprep.subr.bf16.mxu0 0
      %864 = vmatpush1.bf16.msra.mxu0 0
      %865 = vmatprep.subr.bf16.mxu0 0
      %866 = vmatpush1.bf16.msra.mxu0 0
      %867 = vmatprep.mubr.bf16.mxu0 0
      %868 = vmatmul.mubr.bf16.gmra.mrb[0].mxu0 %v833
      %v869 = vpop.f32.mrb[0].mxu0
      %v870 = vadd.f32 0.0, %v869
      %v871 = vpop.f32.mrb[0].mxu0
      %v872 = vpop.f32.mrb[0].mxu0
      %v873 = vpop.f32.mrb[0].mxu0
      %874 = vdwg.mxu0
      %v875 = vadd.f32 %v275, %v870
      %v876 = vld [vmem:[%s5] sm:$0xf]
      %v877 = vld [vmem:[%s5 + $0x4] sm:$0xf]
      %v878 = vld [vmem:[%s5 + $0x8] sm:$0xf]
      %v879 = vld [vmem:[%s5 + $0xc] sm:$0xf]
      %v880 = vld [vmem:[%s6] sm:$0xf]
      %v881 = vld [vmem:[%s6 + $0x4] sm:$0xf]
      %v882 = vld [vmem:[%s6 + $0x8] sm:$0xf]
      %v883 = vld [vmem:[%s6 + $0xc] sm:$0xf]
      %v884 = vld [vmem:[%s6 + $0x10] sm:$0xf]
      %v885 = vld [vmem:[%s6 + $0x14] sm:$0xf]
      %v886 = vld [vmem:[%s6 + $0x18] sm:$0xf]
      %v887 = vld [vmem:[%s6 + $0x1c] sm:$0xf]
      %v888 = vmul.f32 %v875, %v875
      %v889 = vsel %vm282, %v888, 0.0
      %890 = vadd.xlane.f32.xlu0 %v889
      %v891 = vpop.xlane.xlu0 %890
      %v892 = vmul.f32 %v891, %v286
      %v893 = vadd.f32 %v892, 1e-06
      %v894 = vrsqrt.pop %v893
      %v895 = vmul.f32 %v875, %v894
      %v896 = vlaneseq
      %v897 = vshrl.u32 %v896, 7
      %v898 = vsub.s32 1, %v897
      %v899 = vrot.slane %v280, %v898
      %v900 = vmul.f32 %v895, %v899
      %v901 = vpack.c.bf16 %v900, %v900
      %v906 = vunpack.c.l.b16 %v876
      %v907 = vunpack.c.l.b16 %v877
      %v908 = vunpack.c.l.b16 %v878
      %v909 = vunpack.c.l.b16 %v879
      %v910 = vpack.c.b16 %v907, %v906
      %v911 = vpack.c.b16 %v909, %v908
      %v915 = vsel %vm282, %v901, 0
      %917 = vmatprep.subr.bf16.mxu0 0
      %918 = vmatpush1.bf16.msra.mxu0 %v910
      %919 = vmatprep.subr.bf16.mxu0 0
      %920 = vmatpush1.bf16.msra.mxu0 %v911
      %921 = vmatprep.subr.bf16.mxu0 0
      %922 = vmatpush1.bf16.msra.mxu0 0
      %923 = vmatprep.subr.bf16.mxu0 0
      %924 = vmatpush1.bf16.msra.mxu0 0
      %925 = vmatprep.subr.bf16.mxu0 0
      %926 = vmatpush1.bf16.msra.mxu0 0
      %927 = vmatprep.subr.bf16.mxu0 0
      %928 = vmatpush1.bf16.msra.mxu0 0
      %929 = vmatprep.subr.bf16.mxu0 0
      %930 = vmatpush1.bf16.msra.mxu0 0
      %931 = vmatprep.subr.bf16.mxu0 0
      %932 = vmatpush1.bf16.msra.mxu0 0
      %933 = vmatprep.subr.bf16.mxu0 0
      %934 = vmatpush1.bf16.msra.mxu0 0
      %935 = vmatprep.subr.bf16.mxu0 0
      %936 = vmatpush1.bf16.msra.mxu0 0
      %937 = vmatprep.subr.bf16.mxu0 0
      %938 = vmatpush1.bf16.msra.mxu0 0
      %939 = vmatprep.subr.bf16.mxu0 0
      %940 = vmatpush1.bf16.msra.mxu0 0
      %941 = vmatprep.subr.bf16.mxu0 0
      %942 = vmatpush1.bf16.msra.mxu0 0
      %943 = vmatprep.subr.bf16.mxu0 0
      %944 = vmatpush1.bf16.msra.mxu0 0
      %945 = vmatprep.subr.bf16.mxu0 0
      %946 = vmatpush1.bf16.msra.mxu0 0
      %947 = vmatprep.subr.bf16.mxu0 0
      %948 = vmatpush1.bf16.msra.mxu0 0
      %949 = vmatprep.mubr.bf16.mxu0 0
      %950 = vmatmul.mubr.bf16.gmra.mrb[0].mxu0 %v915
      %v951 = vpop.f32.mrb[0].mxu0
      %v952 = vadd.f32 0.0, %v951
      %v953 = vpop.f32.mrb[0].mxu0
      %v954 = vpop.f32.mrb[0].mxu0
      %v955 = vpop.f32.mrb[0].mxu0
      %956 = vdwg.mxu0
      %v957 = vmul.f32 %v952, %v952
      %v958 = vmul.f32 %v952, %v957
      %v959 = vmul.f32 %v958, 0.044715
      %v960 = vadd.f32 %v952, %v959
      %v961 = vmul.f32 %v960, 0.7978846
      %v962 = vtanh.pop %v961
      %v963 = vadd.f32 %v962, 1.0
      %v964 = vmul.f32 %v963, 0.5
      %v965 = vmul.f32 %v952, %v964
      %967 = vrot.lane.b32.xlu0 %v952, 64
      %v968 = vpop.permute.xlu0 %967
      %v970 = vmul.f32 %v965, %v968
      %v971 = vpack.c.bf16 %v970, %v970
      %v980 = vunpack.c.l.b16 %v880
      %v981 = vunpack.c.l.b16 %v881
      %v982 = vunpack.c.l.b16 %v882
      %v983 = vunpack.c.l.b16 %v883
      %v984 = vunpack.c.l.b16 %v884
      %v985 = vunpack.c.l.b16 %v885
      %v986 = vunpack.c.l.b16 %v886
      %v987 = vunpack.c.l.b16 %v887
      %v988 = vpack.c.b16 %v981, %v980
      %v989 = vpack.c.b16 %v983, %v982
      %v990 = vpack.c.b16 %v985, %v984
      %v991 = vpack.c.b16 %v987, %v986
      %vm996 = vcmask 523264
      %v998 = vsel %vm996, %v971, 0
      %1000 = vmatprep.subr.bf16.mxu0 0
      %1001 = vmatpush1.bf16.msra.mxu0 %v988
      %1002 = vmatprep.subr.bf16.mxu0 0
      %1003 = vmatpush1.bf16.msra.mxu0 %v989
      %1004 = vmatprep.subr.bf16.mxu0 0
      %1005 = vmatpush1.bf16.msra.mxu0 %v990
      %1006 = vmatprep.subr.bf16.mxu0 0
      %1007 = vmatpush1.bf16.msra.mxu0 %v991
      %1008 = vmatprep.subr.bf16.mxu0 0
      %1009 = vmatpush1.bf16.msra.mxu0 0
      %1010 = vmatprep.subr.bf16.mxu0 0
      %1011 = vmatpush1.bf16.msra.mxu0 0
      %1012 = vmatprep.subr.bf16.mxu0 0
      %1013 = vmatpush1.bf16.msra.mxu0 0
      %1014 = vmatprep.subr.bf16.mxu0 0
      %1015 = vmatpush1.bf16.msra.mxu0 0
      %1016 = vmatprep.subr.bf16.mxu0 0
      %1017 = vmatpush1.bf16.msra.mxu0 0
      %1018 = vmatprep.subr.bf16.mxu0 0
      %1019 = vmatpush1.bf16.msra.mxu0 0
      %1020 = vmatprep.subr.bf16.mxu0 0
      %1021 = vmatpush1.bf16.msra.mxu0 0
      %1022 = vmatprep.subr.bf16.mxu0 0
      %1023 = vmatpush1.bf16.msra.mxu0 0
      %1024 = vmatprep.subr.bf16.mxu0 0
      %1025 = vmatpush1.bf16.msra.mxu0 0
      %1026 = vmatprep.subr.bf16.mxu0 0
      %1027 = vmatpush1.bf16.msra.mxu0 0
      %1028 = vmatprep.subr.bf16.mxu0 0
      %1029 = vmatpush1.bf16.msra.mxu0 0
      %1030 = vmatprep.subr.bf16.mxu0 0
      %1031 = vmatpush1.bf16.msra.mxu0 0
      %1032 = vmatprep.mubr.bf16.mxu0 0
      %1033 = vmatmul.mubr.bf16.gmra.mrb[0].mxu0 %v998
      %v1034 = vpop.f32.mrb[0].mxu0
      %v1035 = vadd.f32 0.0, %v1034
      %v1036 = vpop.f32.mrb[0].mxu0
      %v1037 = vpop.f32.mrb[0].mxu0
      %v1038 = vpop.f32.mrb[0].mxu0
      %1039 = vdwg.mxu0
      %v1040 = vadd.f32 %v875, %v1035
      %v1041 = vmul.f32 %v1040, %v1040
      %v1042 = vsel %vm282, %v1041, 0.0
      %1043 = vadd.xlane.f32.xlu0 %v1042
      %v1044 = vpop.xlane.xlu0 %1043
      %v1045 = vmul.f32 %v1044, %v286
      %v1046 = vadd.f32 %v1045, 1e-06
      %v1047 = vrsqrt.pop %v1046
      %v1048 = vmul.f32 %v1040, %v1047
      %v1049 = vlaneseq
      %v1050 = vshrl.u32 %v1049, 7
      %v1051 = vsub.s32 2, %v1050
      %v1052 = vrot.slane %v280, %v1051
      %v1053 = vmul.f32 %v1048, %v1052
      %v1054 = vpack.c.bf16 %v1053, %v1053
      %s1055 = scalar_lea.vmem %s3, 16
      %v1056 = vld [vmem:[%s1055] sm:$0xf]
      %v1057 = vld [vmem:[%s1055 + $0x4] sm:$0xf]
      %v1058 = vld [vmem:[%s1055 + $0x8] sm:$0xf]
      %v1059 = vld [vmem:[%s1055 + $0xc] sm:$0xf]
      %v1064 = vunpack.c.l.b16 %v1056
      %v1065 = vunpack.c.l.b16 %v1057
      %v1066 = vunpack.c.l.b16 %v1058
      %v1067 = vunpack.c.l.b16 %v1059
      %v1068 = vpack.c.b16 %v1065, %v1064
      %v1069 = vpack.c.b16 %v1067, %v1066
      %v1073 = vsel %vm282, %v1054, 0
      %1075 = vmatprep.subr.bf16.mxu0 0
      %1076 = vmatpush1.bf16.msra.mxu0 %v1068
      %1077 = vmatprep.subr.bf16.mxu0 0
      %1078 = vmatpush1.bf16.msra.mxu0 %v1069
      %1079 = vmatprep.subr.bf16.mxu0 0
      %1080 = vmatpush1.bf16.msra.mxu0 0
      %1081 = vmatprep.subr.bf16.mxu0 0
      %1082 = vmatpush1.bf16.msra.mxu0 0
      %1083 = vmatprep.subr.bf16.mxu0 0
      %1084 = vmatpush1.bf16.msra.mxu0 0
      %1085 = vmatprep.subr.bf16.mxu0 0
      %1086 = vmatpush1.bf16.msra.mxu0 0
      %1087 = vmatprep.subr.bf16.mxu0 0
      %1088 = vmatpush1.bf16.msra.mxu0 0
      %1089 = vmatprep.subr.bf16.mxu0 0
      %1090 = vmatpush1.bf16.msra.mxu0 0
      %1091 = vmatprep.subr.bf16.mxu0 0
      %1092 = vmatpush1.bf16.msra.mxu0 0
      %1093 = vmatprep.subr.bf16.mxu0 0
      %1094 = vmatpush1.bf16.msra.mxu0 0
      %1095 = vmatprep.subr.bf16.mxu0 0
      %1096 = vmatpush1.bf16.msra.mxu0 0
      %1097 = vmatprep.subr.bf16.mxu0 0
      %1098 = vmatpush1.bf16.msra.mxu0 0
      %1099 = vmatprep.subr.bf16.mxu0 0
      %1100 = vmatpush1.bf16.msra.mxu0 0
      %1101 = vmatprep.subr.bf16.mxu0 0
      %1102 = vmatpush1.bf16.msra.mxu0 0
      %1103 = vmatprep.subr.bf16.mxu0 0
      %1104 = vmatpush1.bf16.msra.mxu0 0
      %1105 = vmatprep.subr.bf16.mxu0 0
      %1106 = vmatpush1.bf16.msra.mxu0 0
      %1107 = vmatprep.mubr.bf16.mxu0 0
      %1108 = vmatmul.mubr.bf16.gmra.mrb[0].mxu0 %v1073
      %v1109 = vpop.f32.mrb[0].mxu0
      %v1110 = vadd.f32 0.0, %v1109
      %v1111 = vpop.f32.mrb[0].mxu0
      %v1112 = vpop.f32.mrb[0].mxu0
      %v1113 = vpop.f32.mrb[0].mxu0
      %1114 = vdwg.mxu0
      %s1115 = scalar_lea.vmem %s4, 16
      %v1116 = vld [vmem:[%s1115] sm:$0xf]
      %v1117 = vld [vmem:[%s1115 + $0x4] sm:$0xf]
      %v1118 = vld [vmem:[%s1115 + $0x8] sm:$0xf]
      %v1119 = vld [vmem:[%s1115 + $0xc] sm:$0xf]
      %v1120 = vpack.c.bf16 %v1110, %v1110
      %1122 = vrot.lane.b32.xlu0 %v1120, 96
      %v1123 = vpop.permute.xlu0 %1122
      %v1125 = vsel %vm364, %v1120, 0
      %v1128 = vsel %vm364, %v1123, 0
      %1130 = vmatprep.subr.bf16.mxu0 0
      %1131 = vmatpush1.bf16.xpose.msra.mxu0 %v1128
      %1132 = vmatprep.subr.bf16.mxu0 0
      %1133 = vmatpush1.bf16.xpose.msra.mxu0 0
      %1134 = vmatprep.subr.bf16.mxu0 0
      %1135 = vmatpush1.bf16.xpose.msra.mxu0 0
      %1136 = vmatprep.subr.bf16.mxu0 0
      %1137 = vmatpush1.bf16.xpose.msra.mxu0 0
      %1138 = vmatprep.subr.bf16.mxu0 0
      %1139 = vmatpush1.bf16.xpose.msra.mxu0 0
      %1140 = vmatprep.subr.bf16.mxu0 0
      %1141 = vmatpush1.bf16.xpose.msra.mxu0 0
      %1142 = vmatprep.subr.bf16.mxu0 0
      %1143 = vmatpush1.bf16.xpose.msra.mxu0 0
      %1144 = vmatprep.subr.bf16.mxu0 0
      %1145 = vmatpush1.bf16.xpose.msra.mxu0 0
      %1146 = vmatprep.subr.bf16.mxu0 0
      %1147 = vmatpush1.bf16.xpose.msra.mxu0 0
      %1148 = vmatprep.subr.bf16.mxu0 0
      %1149 = vmatpush1.bf16.xpose.msra.mxu0 0
      %1150 = vmatprep.subr.bf16.mxu0 0
      %1151 = vmatpush1.bf16.xpose.msra.mxu0 0
      %1152 = vmatprep.subr.bf16.mxu0 0
      %1153 = vmatpush1.bf16.xpose.msra.mxu0 0
      %1154 = vmatprep.subr.bf16.mxu0 0
      %1155 = vmatpush1.bf16.xpose.msra.mxu0 0
      %1156 = vmatprep.subr.bf16.mxu0 0
      %1157 = vmatpush1.bf16.xpose.msra.mxu0 0
      %1158 = vmatprep.subr.bf16.mxu0 0
      %1159 = vmatpush1.bf16.xpose.msra.mxu0 0
      %1160 = vmatprep.subr.bf16.mxu0 0
      %1161 = vmatpush1.bf16.xpose.msra.mxu0 0
      %1162 = vmatprep.mubr.bf16.mxu0 0
      %1163 = vmatmul.mubr.bf16.gmra.mrb[0].mxu0 %v1125
      %v1164 = vpop.f32.mrb[0].mxu0
      %v1165 = vadd.f32 %v276, %v1164
      %v1166 = vpop.f32.mrb[0].mxu0
      %v1167 = vpop.f32.mrb[0].mxu0
      %v1168 = vpop.f32.mrb[0].mxu0
      %1169 = vdwg.mxu0
      %v1170 = vsel %vm364, %v1165, -inf
      %1171 = vmax.xlane.f32.xlu0 %v1170
      %v1172 = vpop.xlane.xlu0 %1171
      %v1173 = vsub.f32 %v1165, %v1172
      %v1174 = vmul.f32 %v1173, 1.442695
      %v1175 = vpow.pop %v1174
      %v1176 = vsel %vm364, %v1175, 0.0
      %1177 = vadd.xlane.f32.xlu0 %v1176
      %v1178 = vpop.xlane.xlu0 %1177
      %v1179 = vrcp.pop %v1178
      %v1180 = vmul.f32 %v1175, %v1179
      %v1181 = vpack.c.bf16 %v1180, %v1180
      %1182 = vrot.lane.b32.xlu0 %v1120, 64
      %v1183 = vpop.permute.xlu0 %1182
      %v1185 = vsel %vm364, %v1181, 0
      %v1188 = vsel %vm428, %v1183, 0
      %1190 = vmatprep.subr.bf16.mxu0 0
      %1191 = vmatpush1.bf16.msra.mxu0 %v1188
      %1192 = vmatprep.subr.bf16.mxu0 0
      %1193 = vmatpush1.bf16.msra.mxu0 0
      %1194 = vmatprep.subr.bf16.mxu0 0
      %1195 = vmatpush1.bf16.msra.mxu0 0
      %1196 = vmatprep.subr.bf16.mxu0 0
      %1197 = vmatpush1.bf16.msra.mxu0 0
      %1198 = vmatprep.subr.bf16.mxu0 0
      %1199 = vmatpush1.bf16.msra.mxu0 0
      %1200 = vmatprep.subr.bf16.mxu0 0
      %1201 = vmatpush1.bf16.msra.mxu0 0
      %1202 = vmatprep.subr.bf16.mxu0 0
      %1203 = vmatpush1.bf16.msra.mxu0 0
      %1204 = vmatprep.subr.bf16.mxu0 0
      %1205 = vmatpush1.bf16.msra.mxu0 0
      %1206 = vmatprep.subr.bf16.mxu0 0
      %1207 = vmatpush1.bf16.msra.mxu0 0
      %1208 = vmatprep.subr.bf16.mxu0 0
      %1209 = vmatpush1.bf16.msra.mxu0 0
      %1210 = vmatprep.subr.bf16.mxu0 0
      %1211 = vmatpush1.bf16.msra.mxu0 0
      %1212 = vmatprep.subr.bf16.mxu0 0
      %1213 = vmatpush1.bf16.msra.mxu0 0
      %1214 = vmatprep.subr.bf16.mxu0 0
      %1215 = vmatpush1.bf16.msra.mxu0 0
      %1216 = vmatprep.subr.bf16.mxu0 0
      %1217 = vmatpush1.bf16.msra.mxu0 0
      %1218 = vmatprep.subr.bf16.mxu0 0
      %1219 = vmatpush1.bf16.msra.mxu0 0
      %1220 = vmatprep.subr.bf16.mxu0 0
      %1221 = vmatpush1.bf16.msra.mxu0 0
      %1222 = vmatprep.mubr.bf16.mxu0 0
      %1223 = vmatmul.mubr.bf16.gmra.mrb[0].mxu0 %v1185
      %v1224 = vpop.f32.mrb[0].mxu0
      %v1225 = vadd.f32 0.0, %v1224
      %v1226 = vpop.f32.mrb[0].mxu0
      %v1227 = vpop.f32.mrb[0].mxu0
      %v1228 = vpop.f32.mrb[0].mxu0
      %1229 = vdwg.mxu0
      %1230 = vrot.lane.b32.xlu0 %v1120, 120
      %v1231 = vpop.permute.xlu0 %1230
      %1232 = vrot.lane.b32.xlu0 %v1120, 88
      %v1233 = vpop.permute.xlu0 %1232
      %v1235 = vsel %vm364, %v1231, 0
      %v1238 = vsel %vm364, %v1233, 0
      %1240 = vmatprep.subr.bf16.mxu0 0
      %1241 = vmatpush1.bf16.xpose.msra.mxu0 %v1238
      %1242 = vmatprep.subr.bf16.mxu0 0
      %1243 = vmatpush1.bf16.xpose.msra.mxu0 0
      %1244 = vmatprep.subr.bf16.mxu0 0
      %1245 = vmatpush1.bf16.xpose.msra.mxu0 0
      %1246 = vmatprep.subr.bf16.mxu0 0
      %1247 = vmatpush1.bf16.xpose.msra.mxu0 0
      %1248 = vmatprep.subr.bf16.mxu0 0
      %1249 = vmatpush1.bf16.xpose.msra.mxu0 0
      %1250 = vmatprep.subr.bf16.mxu0 0
      %1251 = vmatpush1.bf16.xpose.msra.mxu0 0
      %1252 = vmatprep.subr.bf16.mxu0 0
      %1253 = vmatpush1.bf16.xpose.msra.mxu0 0
      %1254 = vmatprep.subr.bf16.mxu0 0
      %1255 = vmatpush1.bf16.xpose.msra.mxu0 0
      %1256 = vmatprep.subr.bf16.mxu0 0
      %1257 = vmatpush1.bf16.xpose.msra.mxu0 0
      %1258 = vmatprep.subr.bf16.mxu0 0
      %1259 = vmatpush1.bf16.xpose.msra.mxu0 0
      %1260 = vmatprep.subr.bf16.mxu0 0
      %1261 = vmatpush1.bf16.xpose.msra.mxu0 0
      %1262 = vmatprep.subr.bf16.mxu0 0
      %1263 = vmatpush1.bf16.xpose.msra.mxu0 0
      %1264 = vmatprep.subr.bf16.mxu0 0
      %1265 = vmatpush1.bf16.xpose.msra.mxu0 0
      %1266 = vmatprep.subr.bf16.mxu0 0
      %1267 = vmatpush1.bf16.xpose.msra.mxu0 0
      %1268 = vmatprep.subr.bf16.mxu0 0
      %1269 = vmatpush1.bf16.xpose.msra.mxu0 0
      %1270 = vmatprep.subr.bf16.mxu0 0
      %1271 = vmatpush1.bf16.xpose.msra.mxu0 0
      %1272 = vmatprep.mubr.bf16.mxu0 0
      %1273 = vmatmul.mubr.bf16.gmra.mrb[0].mxu0 %v1235
      %v1274 = vpop.f32.mrb[0].mxu0
      %v1275 = vadd.f32 %v277, %v1274
      %v1276 = vpop.f32.mrb[0].mxu0
      %v1277 = vpop.f32.mrb[0].mxu0
      %v1278 = vpop.f32.mrb[0].mxu0
      %1279 = vdwg.mxu0
      %v1280 = vsel %vm364, %v1275, -inf
      %1281 = vmax.xlane.f32.xlu0 %v1280
      %v1282 = vpop.xlane.xlu0 %1281
      %v1283 = vsub.f32 %v1275, %v1282
      %v1284 = vmul.f32 %v1283, 1.442695
      %v1285 = vpow.pop %v1284
      %v1286 = vsel %vm364, %v1285, 0.0
      %1287 = vadd.xlane.f32.xlu0 %v1286
      %v1288 = vpop.xlane.xlu0 %1287
      %v1289 = vrcp.pop %v1288
      %v1290 = vmul.f32 %v1285, %v1289
      %v1291 = vpack.c.bf16 %v1290, %v1290
      %1292 = vrot.lane.b32.xlu0 %v1120, 56
      %v1293 = vpop.permute.xlu0 %1292
      %v1295 = vsel %vm364, %v1291, 0
      %v1298 = vsel %vm428, %v1293, 0
      %1300 = vmatprep.subr.bf16.mxu0 0
      %1301 = vmatpush1.bf16.msra.mxu0 %v1298
      %1302 = vmatprep.subr.bf16.mxu0 0
      %1303 = vmatpush1.bf16.msra.mxu0 0
      %1304 = vmatprep.subr.bf16.mxu0 0
      %1305 = vmatpush1.bf16.msra.mxu0 0
      %1306 = vmatprep.subr.bf16.mxu0 0
      %1307 = vmatpush1.bf16.msra.mxu0 0
      %1308 = vmatprep.subr.bf16.mxu0 0
      %1309 = vmatpush1.bf16.msra.mxu0 0
      %1310 = vmatprep.subr.bf16.mxu0 0
      %1311 = vmatpush1.bf16.msra.mxu0 0
      %1312 = vmatprep.subr.bf16.mxu0 0
      %1313 = vmatpush1.bf16.msra.mxu0 0
      %1314 = vmatprep.subr.bf16.mxu0 0
      %1315 = vmatpush1.bf16.msra.mxu0 0
      %1316 = vmatprep.subr.bf16.mxu0 0
      %1317 = vmatpush1.bf16.msra.mxu0 0
      %1318 = vmatprep.subr.bf16.mxu0 0
      %1319 = vmatpush1.bf16.msra.mxu0 0
      %1320 = vmatprep.subr.bf16.mxu0 0
      %1321 = vmatpush1.bf16.msra.mxu0 0
      %1322 = vmatprep.subr.bf16.mxu0 0
      %1323 = vmatpush1.bf16.msra.mxu0 0
      %1324 = vmatprep.subr.bf16.mxu0 0
      %1325 = vmatpush1.bf16.msra.mxu0 0
      %1326 = vmatprep.subr.bf16.mxu0 0
      %1327 = vmatpush1.bf16.msra.mxu0 0
      %1328 = vmatprep.subr.bf16.mxu0 0
      %1329 = vmatpush1.bf16.msra.mxu0 0
      %1330 = vmatprep.subr.bf16.mxu0 0
      %1331 = vmatpush1.bf16.msra.mxu0 0
      %1332 = vmatprep.mubr.bf16.mxu0 0
      %1333 = vmatmul.mubr.bf16.gmra.mrb[0].mxu0 %v1295
      %v1334 = vpop.f32.mrb[0].mxu0
      %v1335 = vadd.f32 0.0, %v1334
      %v1336 = vpop.f32.mrb[0].mxu0
      %v1337 = vpop.f32.mrb[0].mxu0
      %v1338 = vpop.f32.mrb[0].mxu0
      %1339 = vdwg.mxu0
      %1340 = vrot.lane.b32.xlu0 %v1120, 112
      %v1341 = vpop.permute.xlu0 %1340
      %1342 = vrot.lane.b32.xlu0 %v1120, 80
      %v1343 = vpop.permute.xlu0 %1342
      %v1345 = vsel %vm364, %v1341, 0
      %v1348 = vsel %vm364, %v1343, 0
      %1350 = vmatprep.subr.bf16.mxu0 0
      %1351 = vmatpush1.bf16.xpose.msra.mxu0 %v1348
      %1352 = vmatprep.subr.bf16.mxu0 0
      %1353 = vmatpush1.bf16.xpose.msra.mxu0 0
      %1354 = vmatprep.subr.bf16.mxu0 0
      %1355 = vmatpush1.bf16.xpose.msra.mxu0 0
      %1356 = vmatprep.subr.bf16.mxu0 0
      %1357 = vmatpush1.bf16.xpose.msra.mxu0 0
      %1358 = vmatprep.subr.bf16.mxu0 0
      %1359 = vmatpush1.bf16.xpose.msra.mxu0 0
      %1360 = vmatprep.subr.bf16.mxu0 0
      %1361 = vmatpush1.bf16.xpose.msra.mxu0 0
      %1362 = vmatprep.subr.bf16.mxu0 0
      %1363 = vmatpush1.bf16.xpose.msra.mxu0 0
      %1364 = vmatprep.subr.bf16.mxu0 0
      %1365 = vmatpush1.bf16.xpose.msra.mxu0 0
      %1366 = vmatprep.subr.bf16.mxu0 0
      %1367 = vmatpush1.bf16.xpose.msra.mxu0 0
      %1368 = vmatprep.subr.bf16.mxu0 0
      %1369 = vmatpush1.bf16.xpose.msra.mxu0 0
      %1370 = vmatprep.subr.bf16.mxu0 0
      %1371 = vmatpush1.bf16.xpose.msra.mxu0 0
      %1372 = vmatprep.subr.bf16.mxu0 0
      %1373 = vmatpush1.bf16.xpose.msra.mxu0 0
      %1374 = vmatprep.subr.bf16.mxu0 0
      %1375 = vmatpush1.bf16.xpose.msra.mxu0 0
      %1376 = vmatprep.subr.bf16.mxu0 0
      %1377 = vmatpush1.bf16.xpose.msra.mxu0 0
      %1378 = vmatprep.subr.bf16.mxu0 0
      %1379 = vmatpush1.bf16.xpose.msra.mxu0 0
      %1380 = vmatprep.subr.bf16.mxu0 0
      %1381 = vmatpush1.bf16.xpose.msra.mxu0 0
      %1382 = vmatprep.mubr.bf16.mxu0 0
      %1383 = vmatmul.mubr.bf16.gmra.mrb[0].mxu0 %v1345
      %v1384 = vpop.f32.mrb[0].mxu0
      %v1385 = vadd.f32 %v278, %v1384
      %v1386 = vpop.f32.mrb[0].mxu0
      %v1387 = vpop.f32.mrb[0].mxu0
      %v1388 = vpop.f32.mrb[0].mxu0
      %1389 = vdwg.mxu0
      %v1390 = vsel %vm364, %v1385, -inf
      %1391 = vmax.xlane.f32.xlu0 %v1390
      %v1392 = vpop.xlane.xlu0 %1391
      %v1393 = vsub.f32 %v1385, %v1392
      %v1394 = vmul.f32 %v1393, 1.442695
      %v1395 = vpow.pop %v1394
      %v1396 = vsel %vm364, %v1395, 0.0
      %1397 = vadd.xlane.f32.xlu0 %v1396
      %v1398 = vpop.xlane.xlu0 %1397
      %v1399 = vrcp.pop %v1398
      %v1400 = vmul.f32 %v1395, %v1399
      %v1401 = vpack.c.bf16 %v1400, %v1400
      %1402 = vrot.lane.b32.xlu0 %v1120, 48
      %v1403 = vpop.permute.xlu0 %1402
      %v1405 = vsel %vm364, %v1401, 0
      %v1408 = vsel %vm428, %v1403, 0
      %1410 = vmatprep.subr.bf16.mxu0 0
      %1411 = vmatpush1.bf16.msra.mxu0 %v1408
      %1412 = vmatprep.subr.bf16.mxu0 0
      %1413 = vmatpush1.bf16.msra.mxu0 0
      %1414 = vmatprep.subr.bf16.mxu0 0
      %1415 = vmatpush1.bf16.msra.mxu0 0
      %1416 = vmatprep.subr.bf16.mxu0 0
      %1417 = vmatpush1.bf16.msra.mxu0 0
      %1418 = vmatprep.subr.bf16.mxu0 0
      %1419 = vmatpush1.bf16.msra.mxu0 0
      %1420 = vmatprep.subr.bf16.mxu0 0
      %1421 = vmatpush1.bf16.msra.mxu0 0
      %1422 = vmatprep.subr.bf16.mxu0 0
      %1423 = vmatpush1.bf16.msra.mxu0 0
      %1424 = vmatprep.subr.bf16.mxu0 0
      %1425 = vmatpush1.bf16.msra.mxu0 0
      %1426 = vmatprep.subr.bf16.mxu0 0
      %1427 = vmatpush1.bf16.msra.mxu0 0
      %1428 = vmatprep.subr.bf16.mxu0 0
      %1429 = vmatpush1.bf16.msra.mxu0 0
      %1430 = vmatprep.subr.bf16.mxu0 0
      %1431 = vmatpush1.bf16.msra.mxu0 0
      %1432 = vmatprep.subr.bf16.mxu0 0
      %1433 = vmatpush1.bf16.msra.mxu0 0
      %1434 = vmatprep.subr.bf16.mxu0 0
      %1435 = vmatpush1.bf16.msra.mxu0 0
      %1436 = vmatprep.subr.bf16.mxu0 0
      %1437 = vmatpush1.bf16.msra.mxu0 0
      %1438 = vmatprep.subr.bf16.mxu0 0
      %1439 = vmatpush1.bf16.msra.mxu0 0
      %1440 = vmatprep.subr.bf16.mxu0 0
      %1441 = vmatpush1.bf16.msra.mxu0 0
      %1442 = vmatprep.mubr.bf16.mxu0 0
      %1443 = vmatmul.mubr.bf16.gmra.mrb[0].mxu0 %v1405
      %v1444 = vpop.f32.mrb[0].mxu0
      %v1445 = vadd.f32 0.0, %v1444
      %v1446 = vpop.f32.mrb[0].mxu0
      %v1447 = vpop.f32.mrb[0].mxu0
      %v1448 = vpop.f32.mrb[0].mxu0
      %1449 = vdwg.mxu0
      %1450 = vrot.lane.b32.xlu0 %v1120, 104
      %v1451 = vpop.permute.xlu0 %1450
      %1452 = vrot.lane.b32.xlu0 %v1120, 72
      %v1453 = vpop.permute.xlu0 %1452
      %v1455 = vsel %vm364, %v1451, 0
      %v1458 = vsel %vm364, %v1453, 0
      %1460 = vmatprep.subr.bf16.mxu0 0
      %1461 = vmatpush1.bf16.xpose.msra.mxu0 %v1458
      %1462 = vmatprep.subr.bf16.mxu0 0
      %1463 = vmatpush1.bf16.xpose.msra.mxu0 0
      %1464 = vmatprep.subr.bf16.mxu0 0
      %1465 = vmatpush1.bf16.xpose.msra.mxu0 0
      %1466 = vmatprep.subr.bf16.mxu0 0
      %1467 = vmatpush1.bf16.xpose.msra.mxu0 0
      %1468 = vmatprep.subr.bf16.mxu0 0
      %1469 = vmatpush1.bf16.xpose.msra.mxu0 0
      %1470 = vmatprep.subr.bf16.mxu0 0
      %1471 = vmatpush1.bf16.xpose.msra.mxu0 0
      %1472 = vmatprep.subr.bf16.mxu0 0
      %1473 = vmatpush1.bf16.xpose.msra.mxu0 0
      %1474 = vmatprep.subr.bf16.mxu0 0
      %1475 = vmatpush1.bf16.xpose.msra.mxu0 0
      %1476 = vmatprep.subr.bf16.mxu0 0
      %1477 = vmatpush1.bf16.xpose.msra.mxu0 0
      %1478 = vmatprep.subr.bf16.mxu0 0
      %1479 = vmatpush1.bf16.xpose.msra.mxu0 0
      %1480 = vmatprep.subr.bf16.mxu0 0
      %1481 = vmatpush1.bf16.xpose.msra.mxu0 0
      %1482 = vmatprep.subr.bf16.mxu0 0
      %1483 = vmatpush1.bf16.xpose.msra.mxu0 0
      %1484 = vmatprep.subr.bf16.mxu0 0
      %1485 = vmatpush1.bf16.xpose.msra.mxu0 0
      %1486 = vmatprep.subr.bf16.mxu0 0
      %1487 = vmatpush1.bf16.xpose.msra.mxu0 0
      %1488 = vmatprep.subr.bf16.mxu0 0
      %1489 = vmatpush1.bf16.xpose.msra.mxu0 0
      %1490 = vmatprep.subr.bf16.mxu0 0
      %1491 = vmatpush1.bf16.xpose.msra.mxu0 0
      %1492 = vmatprep.mubr.bf16.mxu0 0
      %1493 = vmatmul.mubr.bf16.gmra.mrb[0].mxu0 %v1455
      %v1494 = vpop.f32.mrb[0].mxu0
      %v1495 = vadd.f32 %v279, %v1494
      %v1496 = vpop.f32.mrb[0].mxu0
      %v1497 = vpop.f32.mrb[0].mxu0
      %v1498 = vpop.f32.mrb[0].mxu0
      %1499 = vdwg.mxu0
      %v1500 = vsel %vm364, %v1495, -inf
      %1501 = vmax.xlane.f32.xlu0 %v1500
      %v1502 = vpop.xlane.xlu0 %1501
      %v1503 = vsub.f32 %v1495, %v1502
      %v1504 = vmul.f32 %v1503, 1.442695
      %v1505 = vpow.pop %v1504
      %v1506 = vsel %vm364, %v1505, 0.0
      %1507 = vadd.xlane.f32.xlu0 %v1506
      %v1508 = vpop.xlane.xlu0 %1507
      %v1509 = vrcp.pop %v1508
      %v1510 = vmul.f32 %v1505, %v1509
      %v1511 = vpack.c.bf16 %v1510, %v1510
      %1512 = vrot.lane.b32.xlu0 %v1120, 40
      %v1513 = vpop.permute.xlu0 %1512
      %v1515 = vsel %vm364, %v1511, 0
      %v1518 = vsel %vm428, %v1513, 0
      %1520 = vmatprep.subr.bf16.mxu0 0
      %1521 = vmatpush1.bf16.msra.mxu0 %v1518
      %1522 = vmatprep.subr.bf16.mxu0 0
      %1523 = vmatpush1.bf16.msra.mxu0 0
      %1524 = vmatprep.subr.bf16.mxu0 0
      %1525 = vmatpush1.bf16.msra.mxu0 0
      %1526 = vmatprep.subr.bf16.mxu0 0
      %1527 = vmatpush1.bf16.msra.mxu0 0
      %1528 = vmatprep.subr.bf16.mxu0 0
      %1529 = vmatpush1.bf16.msra.mxu0 0
      %1530 = vmatprep.subr.bf16.mxu0 0
      %1531 = vmatpush1.bf16.msra.mxu0 0
      %1532 = vmatprep.subr.bf16.mxu0 0
      %1533 = vmatpush1.bf16.msra.mxu0 0
      %1534 = vmatprep.subr.bf16.mxu0 0
      %1535 = vmatpush1.bf16.msra.mxu0 0
      %1536 = vmatprep.subr.bf16.mxu0 0
      %1537 = vmatpush1.bf16.msra.mxu0 0
      %1538 = vmatprep.subr.bf16.mxu0 0
      %1539 = vmatpush1.bf16.msra.mxu0 0
      %1540 = vmatprep.subr.bf16.mxu0 0
      %1541 = vmatpush1.bf16.msra.mxu0 0
      %1542 = vmatprep.subr.bf16.mxu0 0
      %1543 = vmatpush1.bf16.msra.mxu0 0
      %1544 = vmatprep.subr.bf16.mxu0 0
      %1545 = vmatpush1.bf16.msra.mxu0 0
      %1546 = vmatprep.subr.bf16.mxu0 0
      %1547 = vmatpush1.bf16.msra.mxu0 0
      %1548 = vmatprep.subr.bf16.mxu0 0
      %1549 = vmatpush1.bf16.msra.mxu0 0
      %1550 = vmatprep.subr.bf16.mxu0 0
      %1551 = vmatpush1.bf16.msra.mxu0 0
      %1552 = vmatprep.mubr.bf16.mxu0 0
      %1553 = vmatmul.mubr.bf16.gmra.mrb[0].mxu0 %v1515
      %v1554 = vpop.f32.mrb[0].mxu0
      %v1555 = vadd.f32 0.0, %v1554
      %v1556 = vpop.f32.mrb[0].mxu0
      %v1557 = vpop.f32.mrb[0].mxu0
      %v1558 = vpop.f32.mrb[0].mxu0
      %1559 = vdwg.mxu0
      %1561 = vrot.lane.b32.xlu0 %v1335, 8
      %v1562 = vpop.permute.xlu0 %1561
      %1565 = vrot.lane.b32.xlu0 %v1445, 16
      %v1566 = vpop.permute.xlu0 %1565
      %1569 = vrot.lane.b32.xlu0 %v1555, 24
      %v1570 = vpop.permute.xlu0 %1569
      %v1572 = vsel %vm364, %v1225, %v1562
      %v1573 = vsel %vm815, %v1572, %v1566
      %v1574 = vsel %vm817, %v1573, %v1570
      %v1575 = vpack.c.bf16 %v1574, %v1574
      %v1580 = vunpack.c.l.b16 %v1116
      %v1581 = vunpack.c.l.b16 %v1117
      %v1582 = vunpack.c.l.b16 %v1118
      %v1583 = vunpack.c.l.b16 %v1119
      %v1584 = vpack.c.b16 %v1581, %v1580
      %v1585 = vpack.c.b16 %v1583, %v1582
      %v1589 = vsel %vm282, %v1575, 0
      %1591 = vmatprep.subr.bf16.mxu0 0
      %1592 = vmatpush1.bf16.msra.mxu0 %v1584
      %1593 = vmatprep.subr.bf16.mxu0 0
      %1594 = vmatpush1.bf16.msra.mxu0 %v1585
      %1595 = vmatprep.subr.bf16.mxu0 0
      %1596 = vmatpush1.bf16.msra.mxu0 0
      %1597 = vmatprep.subr.bf16.mxu0 0
      %1598 = vmatpush1.bf16.msra.mxu0 0
      %1599 = vmatprep.subr.bf16.mxu0 0
      %1600 = vmatpush1.bf16.msra.mxu0 0
      %1601 = vmatprep.subr.bf16.mxu0 0
      %1602 = vmatpush1.bf16.msra.mxu0 0
      %1603 = vmatprep.subr.bf16.mxu0 0
      %1604 = vmatpush1.bf16.msra.mxu0 0
      %1605 = vmatprep.subr.bf16.mxu0 0
      %1606 = vmatpush1.bf16.msra.mxu0 0
      %1607 = vmatprep.subr.bf16.mxu0 0
      %1608 = vmatpush1.bf16.msra.mxu0 0
      %1609 = vmatprep.subr.bf16.mxu0 0
      %1610 = vmatpush1.bf16.msra.mxu0 0
      %1611 = vmatprep.subr.bf16.mxu0 0
      %1612 = vmatpush1.bf16.msra.mxu0 0
      %1613 = vmatprep.subr.bf16.mxu0 0
      %1614 = vmatpush1.bf16.msra.mxu0 0
      %1615 = vmatprep.subr.bf16.mxu0 0
      %1616 = vmatpush1.bf16.msra.mxu0 0
      %1617 = vmatprep.subr.bf16.mxu0 0
      %1618 = vmatpush1.bf16.msra.mxu0 0
      %1619 = vmatprep.subr.bf16.mxu0 0
      %1620 = vmatpush1.bf16.msra.mxu0 0
      %1621 = vmatprep.subr.bf16.mxu0 0
      %1622 = vmatpush1.bf16.msra.mxu0 0
      %1623 = vmatprep.mubr.bf16.mxu0 0
      %1624 = vmatmul.mubr.bf16.gmra.mrb[0].mxu0 %v1589
      %v1625 = vpop.f32.mrb[0].mxu0
      %v1626 = vadd.f32 0.0, %v1625
      %v1627 = vpop.f32.mrb[0].mxu0
      %v1628 = vpop.f32.mrb[0].mxu0
      %v1629 = vpop.f32.mrb[0].mxu0
      %1630 = vdwg.mxu0
      %v1631 = vadd.f32 %v1040, %v1626
      %s1632 = scalar_lea.vmem %s5, 16
      %v1633 = vld [vmem:[%s1632] sm:$0xf]
      %v1634 = vld [vmem:[%s1632 + $0x4] sm:$0xf]
      %v1635 = vld [vmem:[%s1632 + $0x8] sm:$0xf]
      %v1636 = vld [vmem:[%s1632 + $0xc] sm:$0xf]
      %s1637 = scalar_lea.vmem %s6, 32
      %v1638 = vld [vmem:[%s1637] sm:$0xf]
      %v1639 = vld [vmem:[%s1637 + $0x4] sm:$0xf]
      %v1640 = vld [vmem:[%s1637 + $0x8] sm:$0xf]
      %v1641 = vld [vmem:[%s1637 + $0xc] sm:$0xf]
      %v1642 = vld [vmem:[%s1637 + $0x10] sm:$0xf]
      %v1643 = vld [vmem:[%s1637 + $0x14] sm:$0xf]
      %v1644 = vld [vmem:[%s1637 + $0x18] sm:$0xf]
      %v1645 = vld [vmem:[%s1637 + $0x1c] sm:$0xf]
      %v1646 = vmul.f32 %v1631, %v1631
      %v1647 = vsel %vm282, %v1646, 0.0
      %1648 = vadd.xlane.f32.xlu0 %v1647
      %v1649 = vpop.xlane.xlu0 %1648
      %v1650 = vmul.f32 %v1649, %v286
      %v1651 = vadd.f32 %v1650, 1e-06
      %v1652 = vrsqrt.pop %v1651
      %v1653 = vmul.f32 %v1631, %v1652
      %v1654 = vlaneseq
      %v1655 = vshrl.u32 %v1654, 7
      %v1656 = vsub.s32 3, %v1655
      %v1657 = vrot.slane %v280, %v1656
      %v1658 = vmul.f32 %v1653, %v1657
      %v1659 = vpack.c.bf16 %v1658, %v1658
      %v1664 = vunpack.c.l.b16 %v1633
      %v1665 = vunpack.c.l.b16 %v1634
      %v1666 = vunpack.c.l.b16 %v1635
      %v1667 = vunpack.c.l.b16 %v1636
      %v1668 = vpack.c.b16 %v1665, %v1664
      %v1669 = vpack.c.b16 %v1667, %v1666
      %v1673 = vsel %vm282, %v1659, 0
      %1675 = vmatprep.subr.bf16.mxu0 0
      %1676 = vmatpush1.bf16.msra.mxu0 %v1668
      %1677 = vmatprep.subr.bf16.mxu0 0
      %1678 = vmatpush1.bf16.msra.mxu0 %v1669
      %1679 = vmatprep.subr.bf16.mxu0 0
      %1680 = vmatpush1.bf16.msra.mxu0 0
      %1681 = vmatprep.subr.bf16.mxu0 0
      %1682 = vmatpush1.bf16.msra.mxu0 0
      %1683 = vmatprep.subr.bf16.mxu0 0
      %1684 = vmatpush1.bf16.msra.mxu0 0
      %1685 = vmatprep.subr.bf16.mxu0 0
      %1686 = vmatpush1.bf16.msra.mxu0 0
      %1687 = vmatprep.subr.bf16.mxu0 0
      %1688 = vmatpush1.bf16.msra.mxu0 0
      %1689 = vmatprep.subr.bf16.mxu0 0
      %1690 = vmatpush1.bf16.msra.mxu0 0
      %1691 = vmatprep.subr.bf16.mxu0 0
      %1692 = vmatpush1.bf16.msra.mxu0 0
      %1693 = vmatprep.subr.bf16.mxu0 0
      %1694 = vmatpush1.bf16.msra.mxu0 0
      %1695 = vmatprep.subr.bf16.mxu0 0
      %1696 = vmatpush1.bf16.msra.mxu0 0
      %1697 = vmatprep.subr.bf16.mxu0 0
      %1698 = vmatpush1.bf16.msra.mxu0 0
      %1699 = vmatprep.subr.bf16.mxu0 0
      %1700 = vmatpush1.bf16.msra.mxu0 0
      %1701 = vmatprep.subr.bf16.mxu0 0
      %1702 = vmatpush1.bf16.msra.mxu0 0
      %1703 = vmatprep.subr.bf16.mxu0 0
      %1704 = vmatpush1.bf16.msra.mxu0 0
      %1705 = vmatprep.subr.bf16.mxu0 0
      %1706 = vmatpush1.bf16.msra.mxu0 0
      %1707 = vmatprep.mubr.bf16.mxu0 0
      %1708 = vmatmul.mubr.bf16.gmra.mrb[0].mxu0 %v1673
      %v1709 = vpop.f32.mrb[0].mxu0
      %v1710 = vadd.f32 0.0, %v1709
      %v1711 = vpop.f32.mrb[0].mxu0
      %v1712 = vpop.f32.mrb[0].mxu0
      %v1713 = vpop.f32.mrb[0].mxu0
      %1714 = vdwg.mxu0
      %v1715 = vmul.f32 %v1710, %v1710
      %v1716 = vmul.f32 %v1710, %v1715
      %v1717 = vmul.f32 %v1716, 0.044715
      %v1718 = vadd.f32 %v1710, %v1717
      %v1719 = vmul.f32 %v1718, 0.7978846
      %v1720 = vtanh.pop %v1719
      %v1721 = vadd.f32 %v1720, 1.0
      %v1722 = vmul.f32 %v1721, 0.5
      %v1723 = vmul.f32 %v1710, %v1722
      %1725 = vrot.lane.b32.xlu0 %v1710, 64
      %v1726 = vpop.permute.xlu0 %1725
      %v1728 = vmul.f32 %v1723, %v1726
      %v1729 = vpack.c.bf16 %v1728, %v1728
      %v1738 = vunpack.c.l.b16 %v1638
      %v1739 = vunpack.c.l.b16 %v1639
      %v1740 = vunpack.c.l.b16 %v1640
      %v1741 = vunpack.c.l.b16 %v1641
      %v1742 = vunpack.c.l.b16 %v1642
      %v1743 = vunpack.c.l.b16 %v1643
      %v1744 = vunpack.c.l.b16 %v1644
      %v1745 = vunpack.c.l.b16 %v1645
      %v1746 = vpack.c.b16 %v1739, %v1738
      %v1747 = vpack.c.b16 %v1741, %v1740
      %v1748 = vpack.c.b16 %v1743, %v1742
      %v1749 = vpack.c.b16 %v1745, %v1744
      %v1755 = vsel %vm996, %v1729, 0
      %1757 = vmatprep.subr.bf16.mxu0 0
      %1758 = vmatpush1.bf16.msra.mxu0 %v1746
      %1759 = vmatprep.subr.bf16.mxu0 0
      %1760 = vmatpush1.bf16.msra.mxu0 %v1747
      %1761 = vmatprep.subr.bf16.mxu0 0
      %1762 = vmatpush1.bf16.msra.mxu0 %v1748
      %1763 = vmatprep.subr.bf16.mxu0 0
      %1764 = vmatpush1.bf16.msra.mxu0 %v1749
      %1765 = vmatprep.subr.bf16.mxu0 0
      %1766 = vmatpush1.bf16.msra.mxu0 0
      %1767 = vmatprep.subr.bf16.mxu0 0
      %1768 = vmatpush1.bf16.msra.mxu0 0
      %1769 = vmatprep.subr.bf16.mxu0 0
      %1770 = vmatpush1.bf16.msra.mxu0 0
      %1771 = vmatprep.subr.bf16.mxu0 0
      %1772 = vmatpush1.bf16.msra.mxu0 0
      %1773 = vmatprep.subr.bf16.mxu0 0
      %1774 = vmatpush1.bf16.msra.mxu0 0
      %1775 = vmatprep.subr.bf16.mxu0 0
      %1776 = vmatpush1.bf16.msra.mxu0 0
      %1777 = vmatprep.subr.bf16.mxu0 0
      %1778 = vmatpush1.bf16.msra.mxu0 0
      %1779 = vmatprep.subr.bf16.mxu0 0
      %1780 = vmatpush1.bf16.msra.mxu0 0
      %1781 = vmatprep.subr.bf16.mxu0 0
      %1782 = vmatpush1.bf16.msra.mxu0 0
      %1783 = vmatprep.subr.bf16.mxu0 0
      %1784 = vmatpush1.bf16.msra.mxu0 0
      %1785 = vmatprep.subr.bf16.mxu0 0
      %1786 = vmatpush1.bf16.msra.mxu0 0
      %1787 = vmatprep.subr.bf16.mxu0 0
      %1788 = vmatpush1.bf16.msra.mxu0 0
      %1789 = vmatprep.mubr.bf16.mxu0 0
      %1790 = vmatmul.mubr.bf16.gmra.mrb[0].mxu0 %v1755
      %v1791 = vpop.f32.mrb[0].mxu0
      %v1792 = vadd.f32 0.0, %v1791
      %v1793 = vpop.f32.mrb[0].mxu0
      %v1794 = vpop.f32.mrb[0].mxu0
      %v1795 = vpop.f32.mrb[0].mxu0
      %1796 = vdwg.mxu0
      %v1797 = vadd.f32 %v1631, %v1792
      %v1798 = vmul.f32 %v1797, %v1797
      %v1799 = vsel %vm282, %v1798, 0.0
      %1800 = vadd.xlane.f32.xlu0 %v1799
      %v1801 = vpop.xlane.xlu0 %1800
      %v1802 = vmul.f32 %v1801, %v286
      %v1803 = vadd.f32 %v1802, 1e-06
      %v1804 = vrsqrt.pop %v1803
      %v1805 = vmul.f32 %v1797, %v1804
      %v1806 = vlaneseq
      %v1807 = vshrl.u32 %v1806, 7
      %v1808 = vsub.s32 4, %v1807
      %v1809 = vrot.slane %v280, %v1808
      %v1810 = vmul.f32 %v1805, %v1809
      %1811 = vst.msk [vmem:[%s273] sm:$0xff] %vm282, %v1810
      %p1812 = scmp.lt.s32.totalorder %s18, 1
      %s1813 = scalar_select %p1812, %s18, 1
      %s1814 = smul.addr %s1813, 8
      %s1815 = scalar_lea.vmem %s7, %s1814
      // Predicated region
      $region49: #{mt5_forward.3} parent=47 // pred_check
        %p1816 = pneg %p188
      $region50: #{mt5_forward.3} parent=47 // pred_check_branch
        %1818 = sbr.rel (%p1816) target = $region52
      $region51: #{mt5_forward.3} parent=47 // pred_region
        _
      $region52: #{mt5_forward.3} parent=47 // pred_fallthru
        _
    $region48: #{mt5_forward.3} parent=5 // pred_fallthru
      _
    %p1819 = scmp.le.s32.totalorder 2, %s13
    // Predicated region
    $region53: #{mt5_forward.3} parent=5 // pred_check
      %p1820 = pneg %p1819
    $region54: #{mt5_forward.3} parent=5 // pred_check_branch
      %1822 = sbr.rel (%p1820) target = $region56
    $region55: #{mt5_forward.3} parent=5 // pred_region
      %s1823 = ssub.s32 %s13, 2
      // Predicated region
      $region57: #{mt5_forward.3} parent=55 // pred_check
        %p1824 = pneg %p194
      $region58: #{mt5_forward.3} parent=55 // pred_check_branch
        %1826 = sbr.rel (%p1824) target = $region60
      $region59: #{mt5_forward.3} parent=55 // pred_region
        %p1827 = scmp.lt.s32.totalorder %s19, 1
        %s1828 = scalar_select %p1827, %s19, 1
        %s1829 = smul.addr %s1828, 8
        %s1830 = scalar_lea.vmem %s7, %s1829
      $region60: #{mt5_forward.3} parent=55 // pred_fallthru
        _
    $region56: #{mt5_forward.3} parent=5 // pred_fallthru
      _
  $region6: #{mt5_forward.3} parent=0 // loop_footer
    %s17 = sadd.s32 1, %s13
  $region7: #{mt5_forward.3} parent=0 // loop_footer_branch
    %12 = sbr.rel target = $region3
  $region8: #{mt5_forward.3} parent=0 // loop_exit
    _

// kernel: mt5_forward.4
$region0: #{mt5_forward.4}
  #allocation0 [shape = 'u32[]', space=smem, size = 0x4, offset = 0x4, fixed_abs, tag = 'smem constant byte address 0x4 - core index']
  #allocation1 [shape = 'u32[144,128]{1,0:T(1,128)}', space=vmem, size = 0x12000, scoped, tag = 'internal scratch']
  %s0 = inlined_call_operand.vmem [shape: f32[16,32], index: 0, kind: input, shape index: {}]
  %s1 = inlined_call_operand.vmem [shape: f32[16,32], index: 1, kind: input, shape index: {}]
  %s2 = inlined_call_operand.vmem [shape: f32[4,8,8], index: 2, kind: input, shape index: {}]
  %s3 = inlined_call_operand.vmem [shape: f32[7,32], index: 3, kind: input, shape index: {}]
  %s4 = inlined_call_operand.vmem [shape: bf16[2,32,192], index: 4, kind: input, shape index: {}]
  %s5 = inlined_call_operand.vmem [shape: bf16[2,64,32], index: 5, kind: input, shape index: {}]
  %s6 = inlined_call_operand.vmem [shape: bf16[2,32,128], index: 6, kind: input, shape index: {}]
  %s7 = inlined_call_operand.vmem [shape: bf16[2,64,32], index: 7, kind: input, shape index: {}]
  %s8 = inlined_call_operand.vmem [shape: f32[16,32], index: 8, kind: output, shape index: {}]
  %s9 = sld [smem:[#allocation0]]
  $region65: #{mt5_forward.4} parent=0
    _
  %s11 = ssub.s32 1, %s9
  %s12 = scalar_select 0, %s11, %s9
  loop: start=0, step=1, limit=4
  $region2: #{mt5_forward.4} parent=0 // loop_pre_header
    _
  $region3: #{mt5_forward.4} parent=0 // loop_header
    %s14 = sphi 0, %s18
    %p15 = scmp.ge.s32.totalorder %s14, 4
    %s24 = sphi 0, %s26
    %s27 = sphi 0, %s24
    %s28 = sphi 0, %s27
    %s44 = sphi 0, %s28
    %s50 = sphi 0, %s52
    %s53 = sphi 0, %s50
    %s54 = sphi 0, %s53
    %s70 = sphi 0, %s54
    %s74 = sphi 0, %s74
    %s76 = sphi 0, %s74
    %s77 = sphi 0, %s76
    %s91 = sphi 0, %s77
    %s95 = sphi 0, %s95
    %s97 = sphi 0, %s95
    %s98 = sphi 0, %s97
    %s112 = sphi 0, %s98
    %s116 = sphi 0, %s116
    %s118 = sphi 0, %s116
    %s119 = sphi 0, %s118
    %s133 = sphi 0, %s119
    %s137 = sphi 0, %s137
    %s139 = sphi 0, %s137
    %s140 = sphi 0, %s139
    %s154 = sphi 0, %s140
    %s158 = sphi 0, %s158
    %s160 = sphi 0, %s158
    %s161 = sphi 0, %s160
    %s175 = sphi 0, %s161
    %s179 = sphi 0, %s179
    %s181 = sphi 0, %s179
    %s182 = sphi 0, %s181
    %s196 = sphi 0, %s182
    %s202 = sphi 0, %s204
    %s205 = sphi 0, %s202
    %s206 = sphi 0, %s205
    %s222 = sphi 0, %s206
  $region4: #{mt5_forward.4} parent=0 // loop_header_branch
    %17 = sbr.rel (%p15) target = $region8
  $region5: #{mt5_forward.4} parent=0 // loop_body
    %s19 = ssub.s32 %s14, 1
    %s20 = ssub.s32 %s14, 2
    %s21 = sadd.s32 %s14, 1
    %s22 = ssub.s32 %s14, %s21
    %p23 = scmp.eq.s32.totalorder %s22, 0
    %s25 = sadd.s32 %s24, 1
    %s26 = scalar_select %p23, %s24, %s25
    %p29 = pneg %p23
    %p30 = scmp.eq.s32.totalorder %s14, 1
    %p31 = por %p29, %p30
    %p32 = scmp.ne.s32.totalorder %s24, %s27
    %p33 = scmp.eq.s32.totalorder %s14, 0
    %p34 = por %p32, %p33
    %p35 = scmp.ne.s32.totalorder %s24, %s27
    %p36 = scmp.eq.s32.totalorder %s19, 1
    %p37 = por %p35, %p36
    %p38 = scmp.ne.s32.totalorder %s27, %s28
    %p39 = scmp.eq.s32.totalorder %s19, 0
    %p40 = por %p38, %p39
    %p41 = scmp.ne.s32.totalorder %s27, %s28
    %p42 = scmp.eq.s32.totalorder %s20, 1
    %p43 = por %p41, %p42
    %p45 = scmp.ne.s32.totalorder %s28, %s44
    %p46 = scmp.eq.s32.totalorder %s20, 0
    %p47 = por %p45, %p46
    %s48 = ssub.s32 %s14, %s21
    %p49 = scmp.eq.s32.totalorder %s48, 0
    %s51 = sadd.s32 %s50, 1
    %s52 = scalar_select %p49, %s50, %s51
    %p55 = pneg %p49
    %p56 = scmp.eq.s32.totalorder %s14, 1
    %p57 = por %p55, %p56
    %p58 = scmp.ne.s32.totalorder %s50, %s53
    %p59 = scmp.eq.s32.totalorder %s14, 0
    %p60 = por %p58, %p59
    %p61 = scmp.ne.s32.totalorder %s50, %s53
    %p62 = scmp.eq.s32.totalorder %s19, 1
    %p63 = por %p61, %p62
    %p64 = scmp.ne.s32.totalorder %s53, %s54
    %p65 = scmp.eq.s32.totalorder %s19, 0
    %p66 = por %p64, %p65
    %p67 = scmp.ne.s32.totalorder %s53, %s54
    %p68 = scmp.eq.s32.totalorder %s20, 1
    %p69 = por %p67, %p68
    %p71 = scmp.ne.s32.totalorder %s54, %s70
    %p72 = scmp.eq.s32.totalorder %s20, 0
    %p73 = por %p71, %p72
    %s75 = sadd.s32 %s74, 1
    %p78 = scmp.eq.s32.totalorder %s14, 1
    %p79 = scmp.ne.s32.totalorder %s74, %s76
    %p80 = scmp.eq.s32.totalorder %s14, 0
    %p81 = por %p79, %p80
    %p82 = scmp.ne.s32.totalorder %s74, %s76
    %p83 = scmp.eq.s32.totalorder %s19, 1
    %p84 = por %p82, %p83
    %p85 = scmp.ne.s32.totalorder %s76, %s77
    %p86 = scmp.eq.s32.totalorder %s19, 0
    %p87 = por %p85, %p86
    %p88 = scmp.ne.s32.totalorder %s76, %s77
    %p89 = scmp.eq.s32.totalorder %s20, 1
    %p90 = por %p88, %p89
    %p92 = scmp.ne.s32.totalorder %s77, %s91
    %p93 = scmp.eq.s32.totalorder %s20, 0
    %p94 = por %p92, %p93
    %s96 = sadd.s32 %s95, 1
    %p99 = scmp.eq.s32.totalorder %s14, 1
    %p100 = scmp.ne.s32.totalorder %s95, %s97
    %p101 = scmp.eq.s32.totalorder %s14, 0
    %p102 = por %p100, %p101
    %p103 = scmp.ne.s32.totalorder %s95, %s97
    %p104 = scmp.eq.s32.totalorder %s19, 1
    %p105 = por %p103, %p104
    %p106 = scmp.ne.s32.totalorder %s97, %s98
    %p107 = scmp.eq.s32.totalorder %s19, 0
    %p108 = por %p106, %p107
    %p109 = scmp.ne.s32.totalorder %s97, %s98
    %p110 = scmp.eq.s32.totalorder %s20, 1
    %p111 = por %p109, %p110
    %p113 = scmp.ne.s32.totalorder %s98, %s112
    %p114 = scmp.eq.s32.totalorder %s20, 0
    %p115 = por %p113, %p114
    %s117 = sadd.s32 %s116, 1
    %p120 = scmp.eq.s32.totalorder %s14, 1
    %p121 = scmp.ne.s32.totalorder %s116, %s118
    %p122 = scmp.eq.s32.totalorder %s14, 0
    %p123 = por %p121, %p122
    %p124 = scmp.ne.s32.totalorder %s116, %s118
    %p125 = scmp.eq.s32.totalorder %s19, 1
    %p126 = por %p124, %p125
    %p127 = scmp.ne.s32.totalorder %s118, %s119
    %p128 = scmp.eq.s32.totalorder %s19, 0
    %p129 = por %p127, %p128
    %p130 = scmp.ne.s32.totalorder %s118, %s119
    %p131 = scmp.eq.s32.totalorder %s20, 1
    %p132 = por %p130, %p131
    %p134 = scmp.ne.s32.totalorder %s119, %s133
    %p135 = scmp.eq.s32.totalorder %s20, 0
    %p136 = por %p134, %p135
    %s138 = sadd.s32 %s137, 1
    %p141 = scmp.eq.s32.totalorder %s14, 1
    %p142 = scmp.ne.s32.totalorder %s137, %s139
    %p143 = scmp.eq.s32.totalorder %s14, 0
    %p144 = por %p142, %p143
    %p145 = scmp.ne.s32.totalorder %s137, %s139
    %p146 = scmp.eq.s32.totalorder %s19, 1
    %p147 = por %p145, %p146
    %p148 = scmp.ne.s32.totalorder %s139, %s140
    %p149 = scmp.eq.s32.totalorder %s19, 0
    %p150 = por %p148, %p149
    %p151 = scmp.ne.s32.totalorder %s139, %s140
    %p152 = scmp.eq.s32.totalorder %s20, 1
    %p153 = por %p151, %p152
    %p155 = scmp.ne.s32.totalorder %s140, %s154
    %p156 = scmp.eq.s32.totalorder %s20, 0
    %p157 = por %p155, %p156
    %s159 = sadd.s32 %s158, 1
    %p162 = scmp.eq.s32.totalorder %s14, 1
    %p163 = scmp.ne.s32.totalorder %s158, %s160
    %p164 = scmp.eq.s32.totalorder %s14, 0
    %p165 = por %p163, %p164
    %p166 = scmp.ne.s32.totalorder %s158, %s160
    %p167 = scmp.eq.s32.totalorder %s19, 1
    %p168 = por %p166, %p167
    %p169 = scmp.ne.s32.totalorder %s160, %s161
    %p170 = scmp.eq.s32.totalorder %s19, 0
    %p171 = por %p169, %p170
    %p172 = scmp.ne.s32.totalorder %s160, %s161
    %p173 = scmp.eq.s32.totalorder %s20, 1
    %p174 = por %p172, %p173
    %p176 = scmp.ne.s32.totalorder %s161, %s175
    %p177 = scmp.eq.s32.totalorder %s20, 0
    %p178 = por %p176, %p177
    %s180 = sadd.s32 %s179, 1
    %p183 = scmp.eq.s32.totalorder %s14, 1
    %p184 = scmp.ne.s32.totalorder %s179, %s181
    %p185 = scmp.eq.s32.totalorder %s14, 0
    %p186 = por %p184, %p185
    %p187 = scmp.ne.s32.totalorder %s179, %s181
    %p188 = scmp.eq.s32.totalorder %s19, 1
    %p189 = por %p187, %p188
    %p190 = scmp.ne.s32.totalorder %s181, %s182
    %p191 = scmp.eq.s32.totalorder %s19, 0
    %p192 = por %p190, %p191
    %p193 = scmp.ne.s32.totalorder %s181, %s182
    %p194 = scmp.eq.s32.totalorder %s20, 1
    %p195 = por %p193, %p194
    %p197 = scmp.ne.s32.totalorder %s182, %s196
    %p198 = scmp.eq.s32.totalorder %s20, 0
    %p199 = por %p197, %p198
    %s200 = ssub.s32 %s14, %s21
    %p201 = scmp.eq.s32.totalorder %s200, 0
    %s203 = sadd.s32 %s202, 1
    %s204 = scalar_select %p201, %s202, %s203
    %p207 = pneg %p201
    %p208 = scmp.eq.s32.totalorder %s14, 1
    %p209 = por %p207, %p208
    %p210 = scmp.ne.s32.totalorder %s202, %s205
    %p211 = scmp.eq.s32.totalorder %s14, 0
    %p212 = por %p210, %p211
    %p213 = scmp.ne.s32.totalorder %s202, %s205
    %p214 = scmp.eq.s32.totalorder %s19, 1
    %p215 = por %p213, %p214
    %p216 = scmp.ne.s32.totalorder %s205, %s206
    %p217 = scmp.eq.s32.totalorder %s19, 0
    %p218 = por %p216, %p217
    %p219 = scmp.ne.s32.totalorder %s205, %s206
    %p220 = scmp.eq.s32.totalorder %s20, 1
    %p221 = por %p219, %p220
    %p223 = scmp.ne.s32.totalorder %s206, %s222
    %p224 = scmp.eq.s32.totalorder %s20, 0
    %p225 = por %p223, %p224
    %p226 = scmp.le.s32.totalorder 1, %s14
    %p227 = scmp.lt.s32.totalorder %s14, 3
    %p228 = pnand %p226, %p227
    %p229 = pneg %p228
    // Predicated region
    $region9: #{mt5_forward.4} parent=5 // pred_check
      _
    $region10: #{mt5_forward.4} parent=5 // pred_check_branch
      %231 = sbr.rel (%p228) target = $region12
    $region11: #{mt5_forward.4} parent=5 // pred_region
      %s232 = ssub.s32 %s14, 1
      // Predicated region
      $region13: #{mt5_forward.4} parent=11 // pred_check
        %p233 = pneg %p87
      $region14: #{mt5_forward.4} parent=11 // pred_check_branch
        %235 = sbr.rel (%p233) target = $region16
      $region15: #{mt5_forward.4} parent=11 // pred_region
        _
      $region16: #{mt5_forward.4} parent=11 // pred_fallthru
        _
      // Predicated region
      $region17: #{mt5_forward.4} parent=11 // pred_check
        %p236 = pneg %p108
      $region18: #{mt5_forward.4} parent=11 // pred_check_branch
        %238 = sbr.rel (%p236) target = $region20
      $region19: #{mt5_forward.4} parent=11 // pred_region
        _
      $region20: #{mt5_forward.4} parent=11 // pred_fallthru
        _
      // Predicated region
      $region21: #{mt5_forward.4} parent=11 // pred_check
        %p239 = pneg %p129
      $region22: #{mt5_forward.4} parent=11 // pred_check_branch
        %241 = sbr.rel (%p239) target = $region24
      $region23: #{mt5_forward.4} parent=11 // pred_region
        _
      $region24: #{mt5_forward.4} parent=11 // pred_fallthru
        _
      // Predicated region
      $region25: #{mt5_forward.4} parent=11 // pred_check
        %p242 = pneg %p150
      $region26: #{mt5_forward.4} parent=11 // pred_check_branch
        %244 = sbr.rel (%p242) target = $region28
      $region27: #{mt5_forward.4} parent=11 // pred_region
        _
      $region28: #{mt5_forward.4} parent=11 // pred_fallthru
        _
      // Predicated region
      $region29: #{mt5_forward.4} parent=11 // pred_check
        %p245 = pneg %p171
      $region30: #{mt5_forward.4} parent=11 // pred_check_branch
        %247 = sbr.rel (%p245) target = $region32
      $region31: #{mt5_forward.4} parent=11 // pred_region
        _
      $region32: #{mt5_forward.4} parent=11 // pred_fallthru
        _
      // Predicated region
      $region33: #{mt5_forward.4} parent=11 // pred_check
        %p248 = pneg %p192
      $region34: #{mt5_forward.4} parent=11 // pred_check_branch
        %250 = sbr.rel (%p248) target = $region36
      $region35: #{mt5_forward.4} parent=11 // pred_region
        _
      $region36: #{mt5_forward.4} parent=11 // pred_fallthru
        _
    $region12: #{mt5_forward.4} parent=5 // pred_fallthru
      _
    %p251 = scmp.lt.s32.totalorder %s14, 2
    // Predicated region
    $region37: #{mt5_forward.4} parent=5 // pred_check
      %p252 = pneg %p251
    $region38: #{mt5_forward.4} parent=5 // pred_check_branch
      %254 = sbr.rel (%p252) target = $region40
    $region39: #{mt5_forward.4} parent=5 // pred_region
      // Predicated region
      $region41: #{mt5_forward.4} parent=39 // pred_check
        %p255 = pneg %p34
      $region42: #{mt5_forward.4} parent=39 // pred_check_branch
        %257 = sbr.rel (%p255) target = $region44
      $region43: #{mt5_forward.4} parent=39 // pred_region
        %p258 = scmp.lt.s32.totalorder %s14, 1
        %s259 = scalar_select %p258, %s14, 1
        %s260 = smul.addr %s259, 8
        %s261 = scalar_lea.vmem %s0, %s260
      $region44: #{mt5_forward.4} parent=39 // pred_fallthru
        _
      // Predicated region
      $region45: #{mt5_forward.4} parent=39 // pred_check
        %p262 = pneg %p60
      $region46: #{mt5_forward.4} parent=39 // pred_check_branch
        %264 = sbr.rel (%p262) target = $region48
      $region47: #{mt5_forward.4} parent=39 // pred_region
        %p265 = scmp.lt.s32.totalorder %s14, 1
        %s266 = scalar_select %p265, %s14, 1
        %s267 = smul.addr %s266, 8
        %s268 = scalar_lea.vmem %s1, %s267
      $region48: #{mt5_forward.4} parent=39 // pred_fallthru
        _
    $region40: #{mt5_forward.4} parent=5 // pred_fallthru
      _
    %p269 = scmp.le.s32.totalorder 1, %s14
    %p270 = scmp.lt.s32.totalorder %s14, 3
    %p271 = pnand %p269, %p270
    %p272 = pneg %p271
    // Predicated region
    $region49: #{mt5_forward.4} parent=5 // pred_check
      _
    $region50: #{mt5_forward.4} parent=5 // pred_check_branch
      %274 = sbr.rel (%p271) target = $region52
    $region51: #{mt5_forward.4} parent=5 // pred_region
      %s275 = ssub.s32 %s14, 1
      %p276 = scmp.lt.s32.totalorder %s19, 1
      %s277 = scalar_select %p276, %s19, 1
      %s278 = smul.addr %s277, 8
      %s279 = scalar_lea.vmem %s0, %s278
      %p280 = pneg %p40
      %p281 = pneg %p37
      %p282 = scmp.lt.s32.totalorder %s19, 1
      %s283 = scalar_select %p282, %s19, 1
      %s284 = smul.addr %s283, 8
      %s285 = scalar_lea.vmem %s1, %s284
      %p286 = pneg %p66
      %p287 = pneg %p63
      %p288 = pneg %p87
      %p289 = pneg %p84
      %p290 = pneg %p108
      %p291 = pneg %p105
      %p292 = pneg %p129
      %p293 = pneg %p126
      %p294 = pneg %p150
      %p295 = pneg %p147
      %p296 = pneg %p171
      %p297 = pneg %p168
      %p298 = pneg %p192
      %p299 = pneg %p189
      %p300 = pneg %p218
      %p301 = pneg %p215
      %p302 = scmp.lt.s32.totalorder %s19, 1
      %s303 = scalar_select %p302, %s19, 1
      %s304 = smul.addr %s303, 8
      %s305 = scalar_lea.vmem %s8, %s304
      %p306 = scmp.lt.s32.totalorder %s19, 1
      %s307 = scalar_select %p306, %s19, 1
      %s308 = smul.addr %s307, 8
      %s309 = scalar_lea.vmem %s0, %s308
      %p310 = scmp.lt.s32.totalorder %s19, 1
      %s311 = scalar_select %p310, %s19, 1
      %s312 = smul.addr %s311, 8
      %s313 = scalar_lea.vmem %s1, %s312
      %p314 = scmp.lt.s32.totalorder %s19, 1
      %s315 = scalar_select %p314, %s19, 1
      %s316 = smul.addr %s315, 8
      %s317 = scalar_lea.vmem %s8, %s316
      %v319 = vld [vmem:[%s309] sm:$0xff]
      %v320 = vld [vmem:[%s313] sm:$0xff]
      %v321 = vpack.c.bf16 %v320, %v320
      %v322 = vld [vmem:[%s2] sm:$0xff]
      %v323 = vld [vmem:[%s2 + $0x8] sm:$0xff]
      %v324 = vld [vmem:[%s2 + $0x10] sm:$0xff]
      %v325 = vld [vmem:[%s2 + $0x18] sm:$0xff]
      %v326 = vld [vmem:[%s3] sm:$0x7f]
      %v327 = vld [vmem:[%s4] sm:$0xff]
      %v328 = vld [vmem:[%s4 + $0x8] sm:$0xff]
      %v329 = vld [vmem:[%s4 + $0x10] sm:$0xff]
      %v330 = vld [vmem:[%s4 + $0x18] sm:$0xff]
      %v331 = vld [vmem:[%s5] sm:$0xf]
      %v332 = vld [vmem:[%s5 + $0x4] sm:$0xf]
      %v333 = vld [vmem:[%s5 + $0x8] sm:$0xf]
      %v334 = vld [vmem:[%s5 + $0xc] sm:$0xf]
      %v335 = vld [vmem:[%s5 + $0x10] sm:$0xf]
      %v336 = vld [vmem:[%s5 + $0x14] sm:$0xf]
      %v337 = vld [vmem:[%s5 + $0x18] sm:$0xf]
      %v338 = vld [vmem:[%s5 + $0x1c] sm:$0xf]
      %v339 = vmul.f32 %v319, %v319
      %vm340 = vcmask 261120
      %v341 = vsel %vm340, %v339, 0.0
      %342 = vadd.xlane.f32.xlu0 %v341
      %v343 = vpop.xlane.xlu0 %342
      %v344 = vrcp.pop 32.0
      %v345 = vmul.f32 %v343, %v344
      %v346 = vadd.f32 %v345, 1e-06
      %v347 = vrsqrt.pop %v346
      %v348 = vmul.f32 %v319, %v347
      %v349 = vlaneseq
      %v350 = vshrl.u32 %v349, 7
      %v351 = vsub.s32 0, %v350
      %v352 = vrot.slane %v326, %v351
      %v353 = vmul.f32 %v348, %v352
      %v354 = vpack.c.bf16 %v353, %v353
      %v359 = vunpack.c.l.b16 %v327
      %v360 = vunpack.c.l.b16 %v328
      %v361 = vunpack.c.l.b16 %v329
      %v362 = vunpack.c.l.b16 %v330
      %v363 = vpack.c.b16 %v360, %v359
      %v364 = vpack.c.b16 %v362, %v361
      %v368 = vsel %vm340, %v354, 0
      %370 = vmatprep.subr.bf16.mxu0 0
      %371 = vmatpush1.bf16.msra.mxu0 %v363
      %372 = vmatprep.subr.bf16.mxu0 0
      %373 = vmatpush1.bf16.msra.mxu0 %v364
      %374 = vmatprep.subr.bf16.mxu0 0
      %375 = vmatpush1.bf16.msra.mxu0 0
      %376 = vmatprep.subr.bf16.mxu0 0
      %377 = vmatpush1.bf16.msra.mxu0 0
      %378 = vmatprep.subr.bf16.mxu0 0
      %379 = vmatpush1.bf16.msra.mxu0 0
      %380 = vmatprep.subr.bf16.mxu0 0
      %381 = vmatpush1.bf16.msra.mxu0 0
      %382 = vmatprep.subr.bf16.mxu0 0
      %383 = vmatpush1.bf16.msra.mxu0 0
      %384 = vmatprep.subr.bf16.mxu0 0
      %385 = vmatpush1.bf16.msra.mxu0 0
      %386 = vmatprep.subr.bf16.mxu0 0
      %387 = vmatpush1.bf16.msra.mxu0 0
      %388 = vmatprep.subr.bf16.mxu0 0
      %389 = vmatpush1.bf16.msra.mxu0 0
      %390 = vmatprep.subr.bf16.mxu0 0
      %391 = vmatpush1.bf16.msra.mxu0 0
      %392 = vmatprep.subr.bf16.mxu0 0
      %393 = vmatpush1.bf16.msra.mxu0 0
      %394 = vmatprep.subr.bf16.mxu0 0
      %395 = vmatpush1.bf16.msra.mxu0 0
      %396 = vmatprep.subr.bf16.mxu0 0
      %397 = vmatpush1.bf16.msra.mxu0 0
      %398 = vmatprep.subr.bf16.mxu0 0
      %399 = vmatpush1.bf16.msra.mxu0 0
      %400 = vmatprep.subr.bf16.mxu0 0
      %401 = vmatpush1.bf16.msra.mxu0 0
      %402 = vmatprep.mubr.bf16.mxu0 0
      %403 = vmatmul.mubr.bf16.gmra.mrb[0].mxu0 %v368
      %v404 = vpop.f32.mrb[0].mxu0
      %v405 = vadd.f32 0.0, %v404
      %v406 = vpop.f32.mrb[0].mxu0
      %v407 = vpop.f32.mrb[0].mxu0
      %v408 = vpop.f32.mrb[0].mxu0
      %409 = vdwg.mxu0
      %v410 = vpack.c.bf16 %v405, %v405
      %412 = vrot.lane.b32.xlu0 %v410, 96
      %v413 = vpop.permute.xlu0 %412
      %vm414 = vcmask 64512
      %v416 = vsel %vm414, %v410, 0
      %v419 = vsel %vm414, %v413, 0
      %421 = vmatprep.subr.bf16.mxu0 0
      %422 = vmatpush1.bf16.xpose.msra.mxu0 %v419
      %423 = vmatprep.subr.bf16.mxu0 0
      %424 = vmatpush1.bf16.xpose.msra.mxu0 0
      %425 = vmatprep.subr.bf16.mxu0 0
      %426 = vmatpush1.bf16.xpose.msra.mxu0 0
      %427 = vmatprep.subr.bf16.mxu0 0
      %428 = vmatpush1.bf16.xpose.msra.mxu0 0
      %429 = vmatprep.subr.bf16.mxu0 0
      %430 = vmatpush1.bf16.xpose.msra.mxu0 0
      %431 = vmatprep.subr.bf16.mxu0 0
      %432 = vmatpush1.bf16.xpose.msra.mxu0 0
      %433 = vmatprep.subr.bf16.mxu0 0
      %434 = vmatpush1.bf16.xpose.msra.mxu0 0
      %435 = vmatprep.subr.bf16.mxu0 0
      %436 = vmatpush1.bf16.xpose.msra.mxu0 0
      %437 = vmatprep.subr.bf16.mxu0 0
      %438 = vmatpush1.bf16.xpose.msra.mxu0 0
      %439 = vmatprep.subr.bf16.mxu0 0
      %440 = vmatpush1.bf16.xpose.msra.mxu0 0
      %441 = vmatprep.subr.bf16.mxu0 0
      %442 = vmatpush1.bf16.xpose.msra.mxu0 0
      %443 = vmatprep.subr.bf16.mxu0 0
      %444 = vmatpush1.bf16.xpose.msra.mxu0 0
      %445 = vmatprep.subr.bf16.mxu0 0
      %446 = vmatpush1.bf16.xpose.msra.mxu0 0
      %447 = vmatprep.subr.bf16.mxu0 0
      %448 = vmatpush1.bf16.xpose.msra.mxu0 0
      %449 = vmatprep.subr.bf16.mxu0 0
      %450 = vmatpush1.bf16.xpose.msra.mxu0 0
      %451 = vmatprep.subr.bf16.mxu0 0
      %452 = vmatpush1.bf16.xpose.msra.mxu0 0
      %453 = vmatprep.mubr.bf16.mxu0 0
      %454 = vmatmul.mubr.bf16.gmra.mrb[0].mxu0 %v416
      %v455 = vpop.f32.mrb[0].mxu0
      %v456 = vadd.f32 %v322, %v455
      %v457 = vpop.f32.mrb[0].mxu0
      %v458 = vpop.f32.mrb[0].mxu0
      %v459 = vpop.f32.mrb[0].mxu0
      %460 = vdwg.mxu0
      %v461 = vsel %vm414, %v456, -inf
      %462 = vmax.xlane.f32.xlu0 %v461
      %v463 = vpop.xlane.xlu0 %462
      %v464 = vsub.f32 %v456, %v463
      %v465 = vmul.f32 %v464, 1.442695
      %v466 = vpow.pop %v465
      %v467 = vsel %vm414, %v466, 0.0
      %468 = vadd.xlane.f32.xlu0 %v467
      %v469 = vpop.xlane.xlu0 %468
      %v470 = vrcp.pop %v469
      %v471 = vmul.f32 %v466, %v470
      %v472 = vpack.c.bf16 %v471, %v471
      %473 = vrot.lane.b32.xlu0 %v410, 64
      %v474 = vpop.permute.xlu0 %473
      %v476 = vsel %vm414, %v472, 0
      %vm478 = vcmask 1043456
      %v480 = vsel %vm478, %v474, 0
      %482 = vmatprep.subr.bf16.mxu0 0
      %483 = vmatpush1.bf16.msra.mxu0 %v480
      %484 = vmatprep.subr.bf16.mxu0 0
      %485 = vmatpush1.bf16.msra.mxu0 0
      %486 = vmatprep.subr.bf16.mxu0 0
      %487 = vmatpush1.bf16.msra.mxu0 0
      %488 = vmatprep.subr.bf16.mxu0 0
      %489 = vmatpush1.bf16.msra.mxu0 0
      %490 = vmatprep.subr.bf16.mxu0 0
      %491 = vmatpush1.bf16.msra.mxu0 0
      %492 = vmatprep.subr.bf16.mxu0 0
      %493 = vmatpush1.bf16.msra.mxu0 0
      %494 = vmatprep.subr.bf16.mxu0 0
      %495 = vmatpush1.bf16.msra.mxu0 0
      %496 = vmatprep.subr.bf16.mxu0 0
      %497 = vmatpush1.bf16.msra.mxu0 0
      %498 = vmatprep.subr.bf16.mxu0 0
      %499 = vmatpush1.bf16.msra.mxu0 0
      %500 = vmatprep.subr.bf16.mxu0 0
      %501 = vmatpush1.bf16.msra.mxu0 0
      %502 = vmatprep.subr.bf16.mxu0 0
      %503 = vmatpush1.bf16.msra.mxu0 0
      %504 = vmatprep.subr.bf16.mxu0 0
      %505 = vmatpush1.bf16.msra.mxu0 0
      %506 = vmatprep.subr.bf16.mxu0 0
      %507 = vmatpush1.bf16.msra.mxu0 0
      %508 = vmatprep.subr.bf16.mxu0 0
      %509 = vmatpush1.bf16.msra.mxu0 0
      %510 = vmatprep.subr.bf16.mxu0 0
      %511 = vmatpush1.bf16.msra.mxu0 0
      %512 = vmatprep.subr.bf16.mxu0 0
      %513 = vmatpush1.bf16.msra.mxu0 0
      %514 = vmatprep.mubr.bf16.mxu0 0
      %515 = vmatmul.mubr.bf16.gmra.mrb[0].mxu0 %v476
      %v516 = vpop.f32.mrb[0].mxu0
      %v517 = vadd.f32 0.0, %v516
      %v518 = vpop.f32.mrb[0].mxu0
      %v519 = vpop.f32.mrb[0].mxu0
      %v520 = vpop.f32.mrb[0].mxu0
      %521 = vdwg.mxu0
      %522 = vrot.lane.b32.xlu0 %v410, 120
      %v523 = vpop.permute.xlu0 %522
      %524 = vrot.lane.b32.xlu0 %v410, 88
      %v525 = vpop.permute.xlu0 %524
      %v527 = vsel %vm414, %v523, 0
      %v530 = vsel %vm414, %v525, 0
      %532 = vmatprep.subr.bf16.mxu0 0
      %533 = vmatpush1.bf16.xpose.msra.mxu0 %v530
      %534 = vmatprep.subr.bf16.mxu0 0
      %535 = vmatpush1.bf16.xpose.msra.mxu0 0
      %536 = vmatprep.subr.bf16.mxu0 0
      %537 = vmatpush1.bf16.xpose.msra.mxu0 0
      %538 = vmatprep.subr.bf16.mxu0 0
      %539 = vmatpush1.bf16.xpose.msra.mxu0 0
      %540 = vmatprep.subr.bf16.mxu0 0
      %541 = vmatpush1.bf16.xpose.msra.mxu0 0
      %542 = vmatprep.subr.bf16.mxu0 0
      %543 = vmatpush1.bf16.xpose.msra.mxu0 0
      %544 = vmatprep.subr.bf16.mxu0 0
      %545 = vmatpush1.bf16.xpose.msra.mxu0 0
      %546 = vmatprep.subr.bf16.mxu0 0
      %547 = vmatpush1.bf16.xpose.msra.mxu0 0
      %548 = vmatprep.subr.bf16.mxu0 0
      %549 = vmatpush1.bf16.xpose.msra.mxu0 0
      %550 = vmatprep.subr.bf16.mxu0 0
      %551 = vmatpush1.bf16.xpose.msra.mxu0 0
      %552 = vmatprep.subr.bf16.mxu0 0
      %553 = vmatpush1.bf16.xpose.msra.mxu0 0
      %554 = vmatprep.subr.bf16.mxu0 0
      %555 = vmatpush1.bf16.xpose.msra.mxu0 0
      %556 = vmatprep.subr.bf16.mxu0 0
      %557 = vmatpush1.bf16.xpose.msra.mxu0 0
      %558 = vmatprep.subr.bf16.mxu0 0
      %559 = vmatpush1.bf16.xpose.msra.mxu0 0
      %560 = vmatprep.subr.bf16.mxu0 0
      %561 = vmatpush1.bf16.xpose.msra.mxu0 0
      %562 = vmatprep.subr.bf16.mxu0 0
      %563 = vmatpush1.bf16.xpose.msra.mxu0 0
      %564 = vmatprep.mubr.bf16.mxu0 0
      %565 = vmatmul.mubr.bf16.gmra.mrb[0].mxu0 %v527
      %v566 = vpop.f32.mrb[0].mxu0
      %v567 = vadd.f32 %v323, %v566
      %v568 = vpop.f32.mrb[0].mxu0
      %v569 = vpop.f32.mrb[0].mxu0
      %v570 = vpop.f32.mrb[0].mxu0
      %571 = vdwg.mxu0
      %v572 = vsel %vm414, %v567, -inf
      %573 = vmax.xlane.f32.xlu0 %v572
      %v574 = vpop.xlane.xlu0 %573
      %v575 = vsub.f32 %v567, %v574
      %v576 = vmul.f32 %v575, 1.442695
      %v577 = vpow.pop %v576
      %v578 = vsel %vm414, %v577, 0.0
      %579 = vadd.xlane.f32.xlu0 %v578
      %v580 = vpop.xlane.xlu0 %579
      %v581 = vrcp.pop %v580
      %v582 = vmul.f32 %v577, %v581
      %v583 = vpack.c.bf16 %v582, %v582
      %584 = vrot.lane.b32.xlu0 %v410, 56
      %v585 = vpop.permute.xlu0 %584
      %v587 = vsel %vm414, %v583, 0
      %v590 = vsel %vm478, %v585, 0
      %592 = vmatprep.subr.bf16.mxu0 0
      %593 = vmatpush1.bf16.msra.mxu0 %v590
      %594 = vmatprep.subr.bf16.mxu0 0
      %595 = vmatpush1.bf16.msra.mxu0 0
      %596 = vmatprep.subr.bf16.mxu0 0
      %597 = vmatpush1.bf16.msra.mxu0 0
      %598 = vmatprep.subr.bf16.mxu0 0
      %599 = vmatpush1.bf16.msra.mxu0 0
      %600 = vmatprep.subr.bf16.mxu0 0
      %601 = vmatpush1.bf16.msra.mxu0 0
      %602 = vmatprep.subr.bf16.mxu0 0
      %603 = vmatpush1.bf16.msra.mxu0 0
      %604 = vmatprep.subr.bf16.mxu0 0
      %605 = vmatpush1.bf16.msra.mxu0 0
      %606 = vmatprep.subr.bf16.mxu0 0
      %607 = vmatpush1.bf16.msra.mxu0 0
      %608 = vmatprep.subr.bf16.mxu0 0
      %609 = vmatpush1.bf16.msra.mxu0 0
      %610 = vmatprep.subr.bf16.mxu0 0
      %611 = vmatpush1.bf16.msra.mxu0 0
      %612 = vmatprep.subr.bf16.mxu0 0
      %613 = vmatpush1.bf16.msra.mxu0 0
      %614 = vmatprep.subr.bf16.mxu0 0
      %615 = vmatpush1.bf16.msra.mxu0 0
      %616 = vmatprep.subr.bf16.mxu0 0
      %617 = vmatpush1.bf16.msra.mxu0 0
      %618 = vmatprep.subr.bf16.mxu0 0
      %619 = vmatpush1.bf16.msra.mxu0 0
      %620 = vmatprep.subr.bf16.mxu0 0
      %621 = vmatpush1.bf16.msra.mxu0 0
      %622 = vmatprep.subr.bf16.mxu0 0
      %623 = vmatpush1.bf16.msra.mxu0 0
      %624 = vmatprep.mubr.bf16.mxu0 0
      %625 = vmatmul.mubr.bf16.gmra.mrb[0].mxu0 %v587
      %v626 = vpop.f32.mrb[0].mxu0
      %v627 = vadd.f32 0.0, %v626
      %v628 = vpop.f32.mrb[0].mxu0
      %v629 = vpop.f32.mrb[0].mxu0
      %v630 = vpop.f32.mrb[0].mxu0
      %631 = vdwg.mxu0
      %632 = vrot.lane.b32.xlu0 %v410, 112
      %v633 = vpop.permute.xlu0 %632
      %634 = vrot.lane.b32.xlu0 %v410, 80
      %v635 = vpop.permute.xlu0 %634
      %v637 = vsel %vm414, %v633, 0
      %v640 = vsel %vm414, %v635, 0
      %642 = vmatprep.subr.bf16.mxu0 0
      %643 = vmatpush1.bf16.xpose.msra.mxu0 %v640
      %644 = vmatprep.subr.bf16.mxu0 0
      %645 = vmatpush1.bf16.xpose.msra.mxu0 0
      %646 = vmatprep.subr.bf16.mxu0 0
      %647 = vmatpush1.bf16.xpose.msra.mxu0 0
      %648 = vmatprep.subr.bf16.mxu0 0
      %649 = vmatpush1.bf16.xpose.msra.mxu0 0
      %650 = vmatprep.subr.bf16.mxu0 0
      %651 = vmatpush1.bf16.xpose.msra.mxu0 0
      %652 = vmatprep.subr.bf16.mxu0 0
      %653 = vmatpush1.bf16.xpose.msra.mxu0 0
      %654 = vmatprep.subr.bf16.mxu0 0
      %655 = vmatpush1.bf16.xpose.msra.mxu0 0
      %656 = vmatprep.subr.bf16.mxu0 0
      %657 = vmatpush1.bf16.xpose.msra.mxu0 0
      %658 = vmatprep.subr.bf16.mxu0 0
      %659 = vmatpush1.bf16.xpose.msra.mxu0 0
      %660 = vmatprep.subr.bf16.mxu0 0
      %661 = vmatpush1.bf16.xpose.msra.mxu0 0
      %662 = vmatprep.subr.bf16.mxu0 0
      %663 = vmatpush1.bf16.xpose.msra.mxu0 0
      %664 = vmatprep.subr.bf16.mxu0 0
      %665 = vmatpush1.bf16.xpose.msra.mxu0 0
      %666 = vmatprep.subr.bf16.mxu0 0
      %667 = vmatpush1.bf16.xpose.msra.mxu0 0
      %668 = vmatprep.subr.bf16.mxu0 0
      %669 = vmatpush1.bf16.xpose.msra.mxu0 0
      %670 = vmatprep.subr.bf16.mxu0 0
      %671 = vmatpush1.bf16.xpose.msra.mxu0 0
      %672 = vmatprep.subr.bf16.mxu0 0
      %673 = vmatpush1.bf16.xpose.msra.mxu0 0
      %674 = vmatprep.mubr.bf16.mxu0 0
      %675 = vmatmul.mubr.bf16.gmra.mrb[0].mxu0 %v637
      %v676 = vpop.f32.mrb[0].mxu0
      %v677 = vadd.f32 %v324, %v676
      %v678 = vpop.f32.mrb[0].mxu0
      %v679 = vpop.f32.mrb[0].mxu0
      %v680 = vpop.f32.mrb[0].mxu0
      %681 = vdwg.mxu0
      %v682 = vsel %vm414, %v677, -inf
      %683 = vmax.xlane.f32.xlu0 %v682
      %v684 = vpop.xlane.xlu0 %683
      %v685 = vsub.f32 %v677, %v684
      %v686 = vmul.f32 %v685, 1.442695
      %v687 = vpow.pop %v686
      %v688 = vsel %vm414, %v687, 0.0
      %689 = vadd.xlane.f32.xlu0 %v688
      %v690 = vpop.xlane.xlu0 %689
      %v691 = vrcp.pop %v690
      %v692 = vmul.f32 %v687, %v691
      %v693 = vpack.c.bf16 %v692, %v692
      %694 = vrot.lane.b32.xlu0 %v410, 48
      %v695 = vpop.permute.xlu0 %694
      %v697 = vsel %vm414, %v693, 0
      %v700 = vsel %vm478, %v695, 0
      %702 = vmatprep.subr.bf16.mxu0 0
      %703 = vmatpush1.bf16.msra.mxu0 %v700
      %704 = vmatprep.subr.bf16.mxu0 0
      %705 = vmatpush1.bf16.msra.mxu0 0
      %706 = vmatprep.subr.bf16.mxu0 0
      %707 = vmatpush1.bf16.msra.mxu0 0
      %708 = vmatprep.subr.bf16.mxu0 0
      %709 = vmatpush1.bf16.msra.mxu0 0
      %710 = vmatprep.subr.bf16.mxu0 0
      %711 = vmatpush1.bf16.msra.mxu0 0
      %712 = vmatprep.subr.bf16.mxu0 0
      %713 = vmatpush1.bf16.msra.mxu0 0
      %714 = vmatprep.subr.bf16.mxu0 0
      %715 = vmatpush1.bf16.msra.mxu0 0
      %716 = vmatprep.subr.bf16.mxu0 0
      %717 = vmatpush1.bf16.msra.mxu0 0
      %718 = vmatprep.subr.bf16.mxu0 0
      %719 = vmatpush1.bf16.msra.mxu0 0
      %720 = vmatprep.subr.bf16.mxu0 0
      %721 = vmatpush1.bf16.msra.mxu0 0
      %722 = vmatprep.subr.bf16.mxu0 0
      %723 = vmatpush1.bf16.msra.mxu0 0
      %724 = vmatprep.subr.bf16.mxu0 0
      %725 = vmatpush1.bf16.msra.mxu0 0
      %726 = vmatprep.subr.bf16.mxu0 0
      %727 = vmatpush1.bf16.msra.mxu0 0
      %728 = vmatprep.subr.bf16.mxu0 0
      %729 = vmatpush1.bf16.msra.mxu0 0
      %730 = vmatprep.subr.bf16.mxu0 0
      %731 = vmatpush1.bf16.msra.mxu0 0
      %732 = vmatprep.subr.bf16.mxu0 0
      %733 = vmatpush1.bf16.msra.mxu0 0
      %734 = vmatprep.mubr.bf16.mxu0 0
      %735 = vmatmul.mubr.bf16.gmra.mrb[0].mxu0 %v697
      %v736 = vpop.f32.mrb[0].mxu0
      %v737 = vadd.f32 0.0, %v736
      %v738 = vpop.f32.mrb[0].mxu0
      %v739 = vpop.f32.mrb[0].mxu0
      %v740 = vpop.f32.mrb[0].mxu0
      %741 = vdwg.mxu0
      %742 = vrot.lane.b32.xlu0 %v410, 104
      %v743 = vpop.permute.xlu0 %742
      %744 = vrot.lane.b32.xlu0 %v410, 72
      %v745 = vpop.permute.xlu0 %744
      %v747 = vsel %vm414, %v743, 0
      %v750 = vsel %vm414, %v745, 0
      %752 = vmatprep.subr.bf16.mxu0 0
      %753 = vmatpush1.bf16.xpose.msra.mxu0 %v750
      %754 = vmatprep.subr.bf16.mxu0 0
      %755 = vmatpush1.bf16.xpose.msra.mxu0 0
      %756 = vmatprep.subr.bf16.mxu0 0
      %757 = vmatpush1.bf16.xpose.msra.mxu0 0
      %758 = vmatprep.subr.bf16.mxu0 0
      %759 = vmatpush1.bf16.xpose.msra.mxu0 0
      %760 = vmatprep.subr.bf16.mxu0 0
      %761 = vmatpush1.bf16.xpose.msra.mxu0 0
      %762 = vmatprep.subr.bf16.mxu0 0
      %763 = vmatpush1.bf16.xpose.msra.mxu0 0
      %764 = vmatprep.subr.bf16.mxu0 0
      %765 = vmatpush1.bf16.xpose.msra.mxu0 0
      %766 = vmatprep.subr.bf16.mxu0 0
      %767 = vmatpush1.bf16.xpose.msra.mxu0 0
      %768 = vmatprep.subr.bf16.mxu0 0
      %769 = vmatpush1.bf16.xpose.msra.mxu0 0
      %770 = vmatprep.subr.bf16.mxu0 0
      %771 = vmatpush1.bf16.xpose.msra.mxu0 0
      %772 = vmatprep.subr.bf16.mxu0 0
      %773 = vmatpush1.bf16.xpose.msra.mxu0 0
      %774 = vmatprep.subr.bf16.mxu0 0
      %775 = vmatpush1.bf16.xpose.msra.mxu0 0
      %776 = vmatprep.subr.bf16.mxu0 0
      %777 = vmatpush1.bf16.xpose.msra.mxu0 0
      %778 = vmatprep.subr.bf16.mxu0 0
      %779 = vmatpush1.bf16.xpose.msra.mxu0 0
      %780 = vmatprep.subr.bf16.mxu0 0
      %781 = vmatpush1.bf16.xpose.msra.mxu0 0
      %782 = vmatprep.subr.bf16.mxu0 0
      %783 = vmatpush1.bf16.xpose.msra.mxu0 0
      %784 = vmatprep.mubr.bf16.mxu0 0
      %785 = vmatmul.mubr.bf16.gmra.mrb[0].mxu0 %v747
      %v786 = vpop.f32.mrb[0].mxu0
      %v787 = vadd.f32 %v325, %v786
      %v788 = vpop.f32.mrb[0].mxu0
      %v789 = vpop.f32.mrb[0].mxu0
      %v790 = vpop.f32.mrb[0].mxu0
      %791 = vdwg.mxu0
      %v792 = vsel %vm414, %v787, -inf
      %793 = vmax.xlane.f32.xlu0 %v792
      %v794 = vpop.xlane.xlu0 %793
      %v795 = vsub.f32 %v787, %v794
      %v796 = vmul.f32 %v795, 1.442695
      %v797 = vpow.pop %v796
      %v798 = vsel %vm414, %v797, 0.0
      %799 = vadd.xlane.f32.xlu0 %v798
      %v800 = vpop.xlane.xlu0 %799
      %v801 = vrcp.pop %v800
      %v802 = vmul.f32 %v797, %v801
      %v803 = vpack.c.bf16 %v802, %v802
      %804 = vrot.lane.b32.xlu0 %v410, 40
      %v805 = vpop.permute.xlu0 %804
      %v807 = vsel %vm414, %v803, 0
      %v810 = vsel %vm478, %v805, 0
      %812 = vmatprep.subr.bf16.mxu0 0
      %813 = vmatpush1.bf16.msra.mxu0 %v810
      %814 = vmatprep.subr.bf16.mxu0 0
      %815 = vmatpush1.bf16.msra.mxu0 0
      %816 = vmatprep.subr.bf16.mxu0 0
      %817 = vmatpush1.bf16.msra.mxu0 0
      %818 = vmatprep.subr.bf16.mxu0 0
      %819 = vmatpush1.bf16.msra.mxu0 0
      %820 = vmatprep.subr.bf16.mxu0 0
      %821 = vmatpush1.bf16.msra.mxu0 0
      %822 = vmatprep.subr.bf16.mxu0 0
      %823 = vmatpush1.bf16.msra.mxu0 0
      %824 = vmatprep.subr.bf16.mxu0 0
      %825 = vmatpush1.bf16.msra.mxu0 0
      %826 = vmatprep.subr.bf16.mxu0 0
      %827 = vmatpush1.bf16.msra.mxu0 0
      %828 = vmatprep.subr.bf16.mxu0 0
      %829 = vmatpush1.bf16.msra.mxu0 0
      %830 = vmatprep.subr.bf16.mxu0 0
      %831 = vmatpush1.bf16.msra.mxu0 0
      %832 = vmatprep.subr.bf16.mxu0 0
      %833 = vmatpush1.bf16.msra.mxu0 0
      %834 = vmatprep.subr.bf16.mxu0 0
      %835 = vmatpush1.bf16.msra.mxu0 0
      %836 = vmatprep.subr.bf16.mxu0 0
      %837 = vmatpush1.bf16.msra.mxu0 0
      %838 = vmatprep.subr.bf16.mxu0 0
      %839 = vmatpush1.bf16.msra.mxu0 0
      %840 = vmatprep.subr.bf16.mxu0 0
      %841 = vmatpush1.bf16.msra.mxu0 0
      %842 = vmatprep.subr.bf16.mxu0 0
      %843 = vmatpush1.bf16.msra.mxu0 0
      %844 = vmatprep.mubr.bf16.mxu0 0
      %845 = vmatmul.mubr.bf16.gmra.mrb[0].mxu0 %v807
      %v846 = vpop.f32.mrb[0].mxu0
      %v847 = vadd.f32 0.0, %v846
      %v848 = vpop.f32.mrb[0].mxu0
      %v849 = vpop.f32.mrb[0].mxu0
      %v850 = vpop.f32.mrb[0].mxu0
      %851 = vdwg.mxu0
      %853 = vrot.lane.b32.xlu0 %v627, 8
      %v854 = vpop.permute.xlu0 %853
      %857 = vrot.lane.b32.xlu0 %v737, 16
      %v858 = vpop.permute.xlu0 %857
      %861 = vrot.lane.b32.xlu0 %v847, 24
      %v862 = vpop.permute.xlu0 %861
      %v864 = vsel %vm414, %v517, %v854
      %vm865 = vcmask 130048
      %v866 = vsel %vm865, %v864, %v858
      %vm867 = vcmask 195584
      %v868 = vsel %vm867, %v866, %v862
      %v869 = vpack.c.bf16 %v868, %v868
      %v874 = vunpack.c.l.b16 %v331
      %v875 = vunpack.c.l.b16 %v332
      %v876 = vunpack.c.l.b16 %v333
      %v877 = vunpack.c.l.b16 %v334
      %v878 = vpack.c.b16 %v875, %v874
      %v879 = vpack.c.b16 %v877, %v876
      %v883 = vsel %vm340, %v869, 0
      %885 = vmatprep.subr.bf16.mxu0 0
      %886 = vmatpush1.bf16.msra.mxu0 %v878
      %887 = vmatprep.subr.bf16.mxu0 0
      %888 = vmatpush1.bf16.msra.mxu0 %v879
      %889 = vmatprep.subr.bf16.mxu0 0
      %890 = vmatpush1.bf16.msra.mxu0 0
      %891 = vmatprep.subr.bf16.mxu0 0
      %892 = vmatpush1.bf16.msra.mxu0 0
      %893 = vmatprep.subr.bf16.mxu0 0
      %894 = vmatpush1.bf16.msra.mxu0 0
      %895 = vmatprep.subr.bf16.mxu0 0
      %896 = vmatpush1.bf16.msra.mxu0 0
      %897 = vmatprep.subr.bf16.mxu0 0
      %898 = vmatpush1.bf16.msra.mxu0 0
      %899 = vmatprep.subr.bf16.mxu0 0
      %900 = vmatpush1.bf16.msra.mxu0 0
      %901 = vmatprep.subr.bf16.mxu0 0
      %902 = vmatpush1.bf16.msra.mxu0 0
      %903 = vmatprep.subr.bf16.mxu0 0
      %904 = vmatpush1.bf16.msra.mxu0 0
      %905 = vmatprep.subr.bf16.mxu0 0
      %906 = vmatpush1.bf16.msra.mxu0 0
      %907 = vmatprep.subr.bf16.mxu0 0
      %908 = vmatpush1.bf16.msra.mxu0 0
      %909 = vmatprep.subr.bf16.mxu0 0
      %910 = vmatpush1.bf16.msra.mxu0 0
      %911 = vmatprep.subr.bf16.mxu0 0
      %912 = vmatpush1.bf16.msra.mxu0 0
      %913 = vmatprep.subr.bf16.mxu0 0
      %914 = vmatpush1.bf16.msra.mxu0 0
      %915 = vmatprep.subr.bf16.mxu0 0
      %916 = vmatpush1.bf16.msra.mxu0 0
      %917 = vmatprep.mubr.bf16.mxu0 0
      %918 = vmatmul.mubr.bf16.gmra.mrb[0].mxu0 %v883
      %v919 = vpop.f32.mrb[0].mxu0
      %v920 = vadd.f32 0.0, %v919
      %v921 = vpop.f32.mrb[0].mxu0
      %v922 = vpop.f32.mrb[0].mxu0
      %v923 = vpop.f32.mrb[0].mxu0
      %924 = vdwg.mxu0
      %v925 = vadd.f32 %v319, %v920
      %v926 = vmul.f32 %v925, %v925
      %v927 = vsel %vm340, %v926, 0.0
      %928 = vadd.xlane.f32.xlu0 %v927
      %v929 = vpop.xlane.xlu0 %928
      %v930 = vmul.f32 %v929, %v344
      %v931 = vadd.f32 %v930, 1e-06
      %v932 = vrsqrt.pop %v931
      %v933 = vmul.f32 %v925, %v932
      %v934 = vlaneseq
      %v935 = vshrl.u32 %v934, 7
      %v936 = vsub.s32 1, %v935
      %v937 = vrot.slane %v326, %v936
      %v938 = vmul.f32 %v933, %v937
      %v939 = vpack.c.bf16 %v938, %v938
      %940 = vrot.lane.b32.xlu0 %v363, 32
      %v941 = vpop.permute.xlu0 %940
      %942 = vrot.lane.b32.xlu0 %v364, 32
      %v943 = vpop.permute.xlu0 %942
      %v947 = vsel %vm340, %v939, 0
      %949 = vmatprep.subr.bf16.mxu0 0
      %950 = vmatpush1.bf16.msra.mxu0 %v941
      %951 = vmatprep.subr.bf16.mxu0 0
      %952 = vmatpush1.bf16.msra.mxu0 %v943
      %953 = vmatprep.subr.bf16.mxu0 0
      %954 = vmatpush1.bf16.msra.mxu0 0
      %955 = vmatprep.subr.bf16.mxu0 0
      %956 = vmatpush1.bf16.msra.mxu0 0
      %957 = vmatprep.subr.bf16.mxu0 0
      %958 = vmatpush1.bf16.msra.mxu0 0
      %959 = vmatprep.subr.bf16.mxu0 0
      %960 = vmatpush1.bf16.msra.mxu0 0
      %961 = vmatprep.subr.bf16.mxu0 0
      %962 = vmatpush1.bf16.msra.mxu0 0
      %963 = vmatprep.subr.bf16.mxu0 0
      %964 = vmatpush1.bf16.msra.mxu0 0
      %965 = vmatprep.subr.bf16.mxu0 0
      %966 = vmatpush1.bf16.msra.mxu0 0
      %967 = vmatprep.subr.bf16.mxu0 0
      %968 = vmatpush1.bf16.msra.mxu0 0
      %969 = vmatprep.subr.bf16.mxu0 0
      %970 = vmatpush1.bf16.msra.mxu0 0
      %971 = vmatprep.subr.bf16.mxu0 0
      %972 = vmatpush1.bf16.msra.mxu0 0
      %973 = vmatprep.subr.bf16.mxu0 0
      %974 = vmatpush1.bf16.msra.mxu0 0
      %975 = vmatprep.subr.bf16.mxu0 0
      %976 = vmatpush1.bf16.msra.mxu0 0
      %977 = vmatprep.subr.bf16.mxu0 0
      %978 = vmatpush1.bf16.msra.mxu0 0
      %979 = vmatprep.subr.bf16.mxu0 0
      %980 = vmatpush1.bf16.msra.mxu0 0
      %981 = vmatprep.mubr.bf16.mxu0 0
      %982 = vmatmul.mubr.bf16.gmra.mrb[0].mxu0 %v947
      %v983 = vpop.f32.mrb[0].mxu0
      %v984 = vadd.f32 0.0, %v983
      %v985 = vpop.f32.mrb[0].mxu0
      %v986 = vpop.f32.mrb[0].mxu0
      %v987 = vpop.f32.mrb[0].mxu0
      %988 = vdwg.mxu0
      %v989 = vunpack.c.h.b16 %v327
      %v990 = vunpack.c.h.b16 %v328
      %v991 = vunpack.c.h.b16 %v329
      %v992 = vunpack.c.h.b16 %v330
      %v993 = vpack.c.b16 %v990, %v989
      %v994 = vpack.c.b16 %v992, %v991
      %v998 = vsel %vm340, %v321, 0
      %1000 = vmatprep.subr.bf16.mxu0 0
      %1001 = vmatpush1.bf16.msra.mxu0 %v993
      %1002 = vmatprep.subr.bf16.mxu0 0
      %1003 = vmatpush1.bf16.msra.mxu0 %v994
      %1004 = vmatprep.subr.bf16.mxu0 0
      %1005 = vmatpush1.bf16.msra.mxu0 0
      %1006 = vmatprep.subr.bf16.mxu0 0
      %1007 = vmatpush1.bf16.msra.mxu0 0
      %1008 = vmatprep.subr.bf16.mxu0 0
      %1009 = vmatpush1.bf16.msra.mxu0 0
      %1010 = vmatprep.subr.bf16.mxu0 0
      %1011 = vmatpush1.bf16.msra.mxu0 0
      %1012 = vmatprep.subr.bf16.mxu0 0
      %1013 = vmatpush1.bf16.msra.mxu0 0
      %1014 = vmatprep.subr.bf16.mxu0 0
      %1015 = vmatpush1.bf16.msra.mxu0 0
      %1016 = vmatprep.subr.bf16.mxu0 0
      %1017 = vmatpush1.bf16.msra.mxu0 0
      %1018 = vmatprep.subr.bf16.mxu0 0
      %1019 = vmatpush1.bf16.msra.mxu0 0
      %1020 = vmatprep.subr.bf16.mxu0 0
      %1021 = vmatpush1.bf16.msra.mxu0 0
      %1022 = vmatprep.subr.bf16.mxu0 0
      %1023 = vmatpush1.bf16.msra.mxu0 0
      %1024 = vmatprep.subr.bf16.mxu0 0
      %1025 = vmatpush1.bf16.msra.mxu0 0
      %1026 = vmatprep.subr.bf16.mxu0 0
      %1027 = vmatpush1.bf16.msra.mxu0 0
      %1028 = vmatprep.subr.bf16.mxu0 0
      %1029 = vmatpush1.bf16.msra.mxu0 0
      %1030 = vmatprep.subr.bf16.mxu0 0
      %1031 = vmatpush1.bf16.msra.mxu0 0
      %1032 = vmatprep.mubr.bf16.mxu0 0
      %1033 = vmatmul.mubr.bf16.gmra.mrb[0].mxu0 %v998
      %v1034 = vpop.f32.mrb[0].mxu0
      %v1035 = vadd.f32 0.0, %v1034
      %v1036 = vpop.f32.mrb[0].mxu0
      %v1037 = vpop.f32.mrb[0].mxu0
      %v1038 = vpop.f32.mrb[0].mxu0
      %1039 = vdwg.mxu0
      %v1040 = vpack.c.bf16 %v984, %v984
      %v1041 = vpack.c.bf16 %v1035, %v1035
      %v1043 = vsel %vm414, %v1040, 0
      %v1046 = vsel %vm414, %v1041, 0
      %1048 = vmatprep.subr.bf16.mxu0 0
      %1049 = vmatpush1.bf16.xpose.msra.mxu0 %v1046
      %1050 = vmatprep.subr.bf16.mxu0 0
      %1051 = vmatpush1.bf16.xpose.msra.mxu0 0
      %1052 = vmatprep.subr.bf16.mxu0 0
      %1053 = vmatpush1.bf16.xpose.msra.mxu0 0
      %1054 = vmatprep.subr.bf16.mxu0 0
      %1055 = vmatpush1.bf16.xpose.msra.mxu0 0
      %1056 = vmatprep.subr.bf16.mxu0 0
      %1057 = vmatpush1.bf16.xpose.msra.mxu0 0
      %1058 = vmatprep.subr.bf16.mxu0 0
      %1059 = vmatpush1.bf16.xpose.msra.mxu0 0
      %1060 = vmatprep.subr.bf16.mxu0 0
      %1061 = vmatpush1.bf16.xpose.msra.mxu0 0
      %1062 = vmatprep.subr.bf16.mxu0 0
      %1063 = vmatpush1.bf16.xpose.msra.mxu0 0
      %1064 = vmatprep.subr.bf16.mxu0 0
      %1065 = vmatpush1.bf16.xpose.msra.mxu0 0
      %1066 = vmatprep.subr.bf16.mxu0 0
      %1067 = vmatpush1.bf16.xpose.msra.mxu0 0
      %1068 = vmatprep.subr.bf16.mxu0 0
      %1069 = vmatpush1.bf16.xpose.msra.mxu0 0
      %1070 = vmatprep.subr.bf16.mxu0 0
      %1071 = vmatpush1.bf16.xpose.msra.mxu0 0
      %1072 = vmatprep.subr.bf16.mxu0 0
      %1073 = vmatpush1.bf16.xpose.msra.mxu0 0
      %1074 = vmatprep.subr.bf16.mxu0 0
      %1075 = vmatpush1.bf16.xpose.msra.mxu0 0
      %1076 = vmatprep.subr.bf16.mxu0 0
      %1077 = vmatpush1.bf16.xpose.msra.mxu0 0
      %1078 = vmatprep.subr.bf16.mxu0 0
      %1079 = vmatpush1.bf16.xpose.msra.mxu0 0
      %1080 = vmatprep.mubr.bf16.mxu0 0
      %1081 = vmatmul.mubr.bf16.gmra.mrb[0].mxu0 %v1043
      %v1082 = vpop.f32.mrb[0].mxu0
      %v1083 = vadd.f32 0.0, %v1082
      %v1084 = vpop.f32.mrb[0].mxu0
      %v1085 = vpop.f32.mrb[0].mxu0
      %v1086 = vpop.f32.mrb[0].mxu0
      %1087 = vdwg.mxu0
      %v1088 = vsel %vm414, %v1083, -inf
      %1089 = vmax.xlane.f32.xlu0 %v1088
      %v1090 = vpop.xlane.xlu0 %1089
      %v1091 = vsub.f32 %v1083, %v1090
      %v1092 = vmul.f32 %v1091, 1.442695
      %v1093 = vpow.pop %v1092
      %v1094 = vsel %vm414, %v1093, 0.0
      %1095 = vadd.xlane.f32.xlu0 %v1094
      %v1096 = vpop.xlane.xlu0 %1095
      %v1097 = vrcp.pop %v1096
      %v1098 = vmul.f32 %v1093, %v1097
      %v1099 = vpack.c.bf16 %v1098, %v1098
      %1101 = vrot.lane.b32.xlu0 %v1041, 96
      %v1102 = vpop.permute.xlu0 %1101
      %v1104 = vsel %vm414, %v1099, 0
      %v1107 = vsel %vm478, %v1102, 0
      %1109 = vmatprep.subr.bf16.mxu0 0
      %1110 = vmatpush1.bf16.msra.mxu0 %v1107
      %1111 = vmatprep.subr.bf16.mxu0 0
      %1112 = vmatpush1.bf16.msra.mxu0 0
      %1113 = vmatprep.subr.bf16.mxu0 0
      %1114 = vmatpush1.bf16.msra.mxu0 0
      %1115 = vmatprep.subr.bf16.mxu0 0
      %1116 = vmatpush1.bf16.msra.mxu0 0
      %1117 = vmatprep.subr.bf16.mxu0 0
      %1118 = vmatpush1.bf16.msra.mxu0 0
      %1119 = vmatprep.subr.bf16.mxu0 0
      %1120 = vmatpush1.bf16.msra.mxu0 0
      %1121 = vmatprep.subr.bf16.mxu0 0
      %1122 = vmatpush1.bf16.msra.mxu0 0
      %1123 = vmatprep.subr.bf16.mxu0 0
      %1124 = vmatpush1.bf16.msra.mxu0 0
      %1125 = vmatprep.subr.bf16.mxu0 0
      %1126 = vmatpush1.bf16.msra.mxu0 0
      %1127 = vmatprep.subr.bf16.mxu0 0
      %1128 = vmatpush1.bf16.msra.mxu0 0
      %1129 = vmatprep.subr.bf16.mxu0 0
      %1130 = vmatpush1.bf16.msra.mxu0 0
      %1131 = vmatprep.subr.bf16.mxu0 0
      %1132 = vmatpush1.bf16.msra.mxu0 0
      %1133 = vmatprep.subr.bf16.mxu0 0
      %1134 = vmatpush1.bf16.msra.mxu0 0
      %1135 = vmatprep.subr.bf16.mxu0 0
      %1136 = vmatpush1.bf16.msra.mxu0 0
      %1137 = vmatprep.subr.bf16.mxu0 0
      %1138 = vmatpush1.bf16.msra.mxu0 0
      %1139 = vmatprep.subr.bf16.mxu0 0
      %1140 = vmatpush1.bf16.msra.mxu0 0
      %1141 = vmatprep.mubr.bf16.mxu0 0
      %1142 = vmatmul.mubr.bf16.gmra.mrb[0].mxu0 %v1104
      %v1143 = vpop.f32.mrb[0].mxu0
      %v1144 = vadd.f32 0.0, %v1143
      %v1145 = vpop.f32.mrb[0].mxu0
      %v1146 = vpop.f32.mrb[0].mxu0
      %v1147 = vpop.f32.mrb[0].mxu0
      %1148 = vdwg.mxu0
      %1150 = vrot.lane.b32.xlu0 %v1040, 120
      %v1151 = vpop.permute.xlu0 %1150
      %1152 = vrot.lane.b32.xlu0 %v1041, 120
      %v1153 = vpop.permute.xlu0 %1152
      %v1155 = vsel %vm414, %v1151, 0
      %v1158 = vsel %vm414, %v1153, 0
      %1160 = vmatprep.subr.bf16.mxu0 0
      %1161 = vmatpush1.bf16.xpose.msra.mxu0 %v1158
      %1162 = vmatprep.subr.bf16.mxu0 0
      %1163 = vmatpush1.bf16.xpose.msra.mxu0 0
      %1164 = vmatprep.subr.bf16.mxu0 0
      %1165 = vmatpush1.bf16.xpose.msra.mxu0 0
      %1166 = vmatprep.subr.bf16.mxu0 0
      %1167 = vmatpush1.bf16.xpose.msra.mxu0 0
      %1168 = vmatprep.subr.bf16.mxu0 0
      %1169 = vmatpush1.bf16.xpose.msra.mxu0 0
      %1170 = vmatprep.subr.bf16.mxu0 0
      %1171 = vmatpush1.bf16.xpose.msra.mxu0 0
      %1172 = vmatprep.subr.bf16.mxu0 0
      %1173 = vmatpush1.bf16.xpose.msra.mxu0 0
      %1174 = vmatprep.subr.bf16.mxu0 0
      %1175 = vmatpush1.bf16.xpose.msra.mxu0 0
      %1176 = vmatprep.subr.bf16.mxu0 0
      %1177 = vmatpush1.bf16.xpose.msra.mxu0 0
      %1178 = vmatprep.subr.bf16.mxu0 0
      %1179 = vmatpush1.bf16.xpose.msra.mxu0 0
      %1180 = vmatprep.subr.bf16.mxu0 0
      %1181 = vmatpush1.bf16.xpose.msra.mxu0 0
      %1182 = vmatprep.subr.bf16.mxu0 0
      %1183 = vmatpush1.bf16.xpose.msra.mxu0 0
      %1184 = vmatprep.subr.bf16.mxu0 0
      %1185 = vmatpush1.bf16.xpose.msra.mxu0 0
      %1186 = vmatprep.subr.bf16.mxu0 0
      %1187 = vmatpush1.bf16.xpose.msra.mxu0 0
      %1188 = vmatprep.subr.bf16.mxu0 0
      %1189 = vmatpush1.bf16.xpose.msra.mxu0 0
      %1190 = vmatprep.subr.bf16.mxu0 0
      %1191 = vmatpush1.bf16.xpose.msra.mxu0 0
      %1192 = vmatprep.mubr.bf16.mxu0 0
      %1193 = vmatmul.mubr.bf16.gmra.mrb[0].mxu0 %v1155
      %v1194 = vpop.f32.mrb[0].mxu0
      %v1195 = vadd.f32 0.0, %v1194
      %v1196 = vpop.f32.mrb[0].mxu0
      %v1197 = vpop.f32.mrb[0].mxu0
      %v1198 = vpop.f32.mrb[0].mxu0
      %1199 = vdwg.mxu0
      %v1200 = vsel %vm414, %v1195, -inf
      %1201 = vmax.xlane.f32.xlu0 %v1200
      %v1202 = vpop.xlane.xlu0 %1201
      %v1203 = vsub.f32 %v1195, %v1202
      %v1204 = vmul.f32 %v1203, 1.442695
      %v1205 = vpow.pop %v1204
      %v1206 = vsel %vm414, %v1205, 0.0
      %1207 = vadd.xlane.f32.xlu0 %v1206
      %v1208 = vpop.xlane.xlu0 %1207
      %v1209 = vrcp.pop %v1208
      %v1210 = vmul.f32 %v1205, %v1209
      %v1211 = vpack.c.bf16 %v1210, %v1210
      %1212 = vrot.lane.b32.xlu0 %v1041, 88
      %v1213 = vpop.permute.xlu0 %1212
      %v1215 = vsel %vm414, %v1211, 0
      %v1218 = vsel %vm478, %v1213, 0
      %1220 = vmatprep.subr.bf16.mxu0 0
      %1221 = vmatpush1.bf16.msra.mxu0 %v1218
      %1222 = vmatprep.subr.bf16.mxu0 0
      %1223 = vmatpush1.bf16.msra.mxu0 0
      %1224 = vmatprep.subr.bf16.mxu0 0
      %1225 = vmatpush1.bf16.msra.mxu0 0
      %1226 = vmatprep.subr.bf16.mxu0 0
      %1227 = vmatpush1.bf16.msra.mxu0 0
      %1228 = vmatprep.subr.bf16.mxu0 0
      %1229 = vmatpush1.bf16.msra.mxu0 0
      %1230 = vmatprep.subr.bf16.mxu0 0
      %1231 = vmatpush1.bf16.msra.mxu0 0
      %1232 = vmatprep.subr.bf16.mxu0 0
      %1233 = vmatpush1.bf16.msra.mxu0 0
      %1234 = vmatprep.subr.bf16.mxu0 0
      %1235 = vmatpush1.bf16.msra.mxu0 0
      %1236 = vmatprep.subr.bf16.mxu0 0
      %1237 = vmatpush1.bf16.msra.mxu0 0
      %1238 = vmatprep.subr.bf16.mxu0 0
      %1239 = vmatpush1.bf16.msra.mxu0 0
      %1240 = vmatprep.subr.bf16.mxu0 0
      %1241 = vmatpush1.bf16.msra.mxu0 0
      %1242 = vmatprep.subr.bf16.mxu0 0
      %1243 = vmatpush1.bf16.msra.mxu0 0
      %1244 = vmatprep.subr.bf16.mxu0 0
      %1245 = vmatpush1.bf16.msra.mxu0 0
      %1246 = vmatprep.subr.bf16.mxu0 0
      %1247 = vmatpush1.bf16.msra.mxu0 0
      %1248 = vmatprep.subr.bf16.mxu0 0
      %1249 = vmatpush1.bf16.msra.mxu0 0
      %1250 = vmatprep.subr.bf16.mxu0 0
      %1251 = vmatpush1.bf16.msra.mxu0 0
      %1252 = vmatprep.mubr.bf16.mxu0 0
      %1253 = vmatmul.mubr.bf16.gmra.mrb[0].mxu0 %v1215
      %v1254 = vpop.f32.mrb[0].mxu0
      %v1255 = vadd.f32 0.0, %v1254
      %v1256 = vpop.f32.mrb[0].mxu0
      %v1257 = vpop.f32.mrb[0].mxu0
      %v1258 = vpop.f32.mrb[0].mxu0
      %1259 = vdwg.mxu0
      %1260 = vrot.lane.b32.xlu0 %v1040, 112
      %v1261 = vpop.permute.xlu0 %1260
      %1262 = vrot.lane.b32.xlu0 %v1041, 112
      %v1263 = vpop.permute.xlu0 %1262
      %v1265 = vsel %vm414, %v1261, 0
      %v1268 = vsel %vm414, %v1263, 0
      %1270 = vmatprep.subr.bf16.mxu0 0
      %1271 = vmatpush1.bf16.xpose.msra.mxu0 %v1268
      %1272 = vmatprep.subr.bf16.mxu0 0
      %1273 = vmatpush1.bf16.xpose.msra.mxu0 0
      %1274 = vmatprep.subr.bf16.mxu0 0
      %1275 = vmatpush1.bf16.xpose.msra.mxu0 0
      %1276 = vmatprep.subr.bf16.mxu0 0
      %1277 = vmatpush1.bf16.xpose.msra.mxu0 0
      %1278 = vmatprep.subr.bf16.mxu0 0
      %1279 = vmatpush1.bf16.xpose.msra.mxu0 0
      %1280 = vmatprep.subr.bf16.mxu0 0
      %1281 = vmatpush1.bf16.xpose.msra.mxu0 0
      %1282 = vmatprep.subr.bf16.mxu0 0
      %1283 = vmatpush1.bf16.xpose.msra.mxu0 0
      %1284 = vmatprep.subr.bf16.mxu0 0
      %1285 = vmatpush1.bf16.xpose.msra.mxu0 0
      %1286 = vmatprep.subr.bf16.mxu0 0
      %1287 = vmatpush1.bf16.xpose.msra.mxu0 0
      %1288 = vmatprep.subr.bf16.mxu0 0
      %1289 = vmatpush1.bf16.xpose.msra.mxu0 0
      %1290 = vmatprep.subr.bf16.mxu0 0
      %1291 = vmatpush1.bf16.xpose.msra.mxu0 0
      %1292 = vmatprep.subr.bf16.mxu0 0
      %1293 = vmatpush1.bf16.xpose.msra.mxu0 0
      %1294 = vmatprep.subr.bf16.mxu0 0
      %1295 = vmatpush1.bf16.xpose.msra.mxu0 0
      %1296 = vmatprep.subr.bf16.mxu0 0
      %1297 = vmatpush1.bf16.xpose.msra.mxu0 0
      %1298 = vmatprep.subr.bf16.mxu0 0
      %1299 = vmatpush1.bf16.xpose.msra.mxu0 0
      %1300 = vmatprep.subr.bf16.mxu0 0
      %1301 = vmatpush1.bf16.xpose.msra.mxu0 0
      %1302 = vmatprep.mubr.bf16.mxu0 0
      %1303 = vmatmul.mubr.bf16.gmra.mrb[0].mxu0 %v1265
      %v1304 = vpop.f32.mrb[0].mxu0
      %v1305 = vadd.f32 0.0, %v1304
      %v1306 = vpop.f32.mrb[0].mxu0
      %v1307 = vpop.f32.mrb[0].mxu0
      %v1308 = vpop.f32.mrb[0].mxu0
      %1309 = vdwg.mxu0
      %v1310 = vsel %vm414, %v1305, -inf
      %1311 = vmax.xlane.f32.xlu0 %v1310
      %v1312 = vpop.xlane.xlu0 %1311
      %v1313 = vsub.f32 %v1305, %v1312
      %v1314 = vmul.f32 %v1313, 1.442695
      %v1315 = vpow.pop %v1314
      %v1316 = vsel %vm414, %v1315, 0.0
      %1317 = vadd.xlane.f32.xlu0 %v1316
      %v1318 = vpop.xlane.xlu0 %1317
      %v1319 = vrcp.pop %v1318
      %v1320 = vmul.f32 %v1315, %v1319
      %v1321 = vpack.c.bf16 %v1320, %v1320
      %1322 = vrot.lane.b32.xlu0 %v1041, 80
      %v1323 = vpop.permute.xlu0 %1322
      %v1325 = vsel %vm414, %v1321, 0
      %v1328 = vsel %vm478, %v1323, 0
      %1330 = vmatprep.subr.bf16.mxu0 0
      %1331 = vmatpush1.bf16.msra.mxu0 %v1328
      %1332 = vmatprep.subr.bf16.mxu0 0
      %1333 = vmatpush1.bf16.msra.mxu0 0
      %1334 = vmatprep.subr.bf16.mxu0 0
      %1335 = vmatpush1.bf16.msra.mxu0 0
      %1336 = vmatprep.subr.bf16.mxu0 0
      %1337 = vmatpush1.bf16.msra.mxu0 0
      %1338 = vmatprep.subr.bf16.mxu0 0
      %1339 = vmatpush1.bf16.msra.mxu0 0
      %1340 = vmatprep.subr.bf16.mxu0 0
      %1341 = vmatpush1.bf16.msra.mxu0 0
      %1342 = vmatprep.subr.bf16.mxu0 0
      %1343 = vmatpush1.bf16.msra.mxu0 0
      %1344 = vmatprep.subr.bf16.mxu0 0
      %1345 = vmatpush1.bf16.msra.mxu0 0
      %1346 = vmatprep.subr.bf16.mxu0 0
      %1347 = vmatpush1.bf16.msra.mxu0 0
      %1348 = vmatprep.subr.bf16.mxu0 0
      %1349 = vmatpush1.bf16.msra.mxu0 0
      %1350 = vmatprep.subr.bf16.mxu0 0
      %1351 = vmatpush1.bf16.msra.mxu0 0
      %1352 = vmatprep.subr.bf16.mxu0 0
      %1353 = vmatpush1.bf16.msra.mxu0 0
      %1354 = vmatprep.subr.bf16.mxu0 0
      %1355 = vmatpush1.bf16.msra.mxu0 0
      %1356 = vmatprep.subr.bf16.mxu0 0
      %1357 = vmatpush1.bf16.msra.mxu0 0
      %1358 = vmatprep.subr.bf16.mxu0 0
      %1359 = vmatpush1.bf16.msra.mxu0 0
      %1360 = vmatprep.subr.bf16.mxu0 0
      %1361 = vmatpush1.bf16.msra.mxu0 0
      %1362 = vmatprep.mubr.bf16.mxu0 0
      %1363 = vmatmul.mubr.bf16.gmra.mrb[0].mxu0 %v1325
      %v1364 = vpop.f32.mrb[0].mxu0
      %v1365 = vadd.f32 0.0, %v1364
      %v1366 = vpop.f32.mrb[0].mxu0
      %v1367 = vpop.f32.mrb[0].mxu0
      %v1368 = vpop.f32.mrb[0].mxu0
      %1369 = vdwg.mxu0
      %1370 = vrot.lane.b32.xlu0 %v1040, 104
      %v1371 = vpop.permute.xlu0 %1370
      %1372 = vrot.lane.b32.xlu0 %v1041, 104
      %v1373 = vpop.permute.xlu0 %1372
      %v1375 = vsel %vm414, %v1371, 0
      %v1378 = vsel %vm414, %v1373, 0
      %1380 = vmatprep.subr.bf16.mxu0 0
      %1381 = vmatpush1.bf16.xpose.msra.mxu0 %v1378
      %1382 = vmatprep.subr.bf16.mxu0 0
      %1383 = vmatpush1.bf16.xpose.msra.mxu0 0
      %1384 = vmatprep.subr.bf16.mxu0 0
      %1385 = vmatpush1.bf16.xpose.msra.mxu0 0
      %1386 = vmatprep.subr.bf16.mxu0 0
      %1387 = vmatpush1.bf16.xpose.msra.mxu0 0
      %1388 = vmatprep.subr.bf16.mxu0 0
      %1389 = vmatpush1.bf16.xpose.msra.mxu0 0
      %1390 = vmatprep.subr.bf16.mxu0 0
      %1391 = vmatpush1.bf16.xpose.msra.mxu0 0
      %1392 = vmatprep.subr.bf16.mxu0 0
      %1393 = vmatpush1.bf16.xpose.msra.mxu0 0
      %1394 = vmatprep.subr.bf16.mxu0 0
      %1395 = vmatpush1.bf16.xpose.msra.mxu0 0
      %1396 = vmatprep.subr.bf16.mxu0 0
      %1397 = vmatpush1.bf16.xpose.msra.mxu0 0
      %1398 = vmatprep.subr.bf16.mxu0 0
      %1399 = vmatpush1.bf16.xpose.msra.mxu0 0
      %1400 = vmatprep.subr.bf16.mxu0 0
      %1401 = vmatpush1.bf16.xpose.msra.mxu0 0
      %1402 = vmatprep.subr.bf16.mxu0 0
      %1403 = vmatpush1.bf16.xpose.msra.mxu0 0
      %1404 = vmatprep.subr.bf16.mxu0 0
      %1405 = vmatpush1.bf16.xpose.msra.mxu0 0
      %1406 = vmatprep.subr.bf16.mxu0 0
      %1407 = vmatpush1.bf16.xpose.msra.mxu0 0
      %1408 = vmatprep.subr.bf16.mxu0 0
      %1409 = vmatpush1.bf16.xpose.msra.mxu0 0
      %1410 = vmatprep.subr.bf16.mxu0 0
      %1411 = vmatpush1.bf16.xpose.msra.mxu0 0
      %1412 = vmatprep.mubr.bf16.mxu0 0
      %1413 = vmatmul.mubr.bf16.gmra.mrb[0].mxu0 %v1375
      %v1414 = vpop.f32.mrb[0].mxu0
      %v1415 = vadd.f32 0.0, %v1414
      %v1416 = vpop.f32.mrb[0].mxu0
      %v1417 = vpop.f32.mrb[0].mxu0
      %v1418 = vpop.f32.mrb[0].mxu0
      %1419 = vdwg.mxu0
      %v1420 = vsel %vm414, %v1415, -inf
      %1421 = vmax.xlane.f32.xlu0 %v1420
      %v1422 = vpop.xlane.xlu0 %1421
      %v1423 = vsub.f32 %v1415, %v1422
      %v1424 = vmul.f32 %v1423, 1.442695
      %v1425 = vpow.pop %v1424
      %v1426 = vsel %vm414, %v1425, 0.0
      %1427 = vadd.xlane.f32.xlu0 %v1426
      %v1428 = vpop.xlane.xlu0 %1427
      %v1429 = vrcp.pop %v1428
      %v1430 = vmul.f32 %v1425, %v1429
      %v1431 = vpack.c.bf16 %v1430, %v1430
      %1432 = vrot.lane.b32.xlu0 %v1041, 72
      %v1433 = vpop.permute.xlu0 %1432
      %v1435 = vsel %vm414, %v1431, 0
      %v1438 = vsel %vm478, %v1433, 0
      %1440 = vmatprep.subr.bf16.mxu0 0
      %1441 = vmatpush1.bf16.msra.mxu0 %v1438
      %1442 = vmatprep.subr.bf16.mxu0 0
      %1443 = vmatpush1.bf16.msra.mxu0 0
      %1444 = vmatprep.subr.bf16.mxu0 0
      %1445 = vmatpush1.bf16.msra.mxu0 0
      %1446 = vmatprep.subr.bf16.mxu0 0
      %1447 = vmatpush1.bf16.msra.mxu0 0
      %1448 = vmatprep.subr.bf16.mxu0 0
      %1449 = vmatpush1.bf16.msra.mxu0 0
      %1450 = vmatprep.subr.bf16.mxu0 0
      %1451 = vmatpush1.bf16.msra.mxu0 0
      %1452 = vmatprep.subr.bf16.mxu0 0
      %1453 = vmatpush1.bf16.msra.mxu0 0
      %1454 = vmatprep.subr.bf16.mxu0 0
      %1455 = vmatpush1.bf16.msra.mxu0 0
      %1456 = vmatprep.subr.bf16.mxu0 0
      %1457 = vmatpush1.bf16.msra.mxu0 0
      %1458 = vmatprep.subr.bf16.mxu0 0
      %1459 = vmatpush1.bf16.msra.mxu0 0
      %1460 = vmatprep.subr.bf16.mxu0 0
      %1461 = vmatpush1.bf16.msra.mxu0 0
      %1462 = vmatprep.subr.bf16.mxu0 0
      %1463 = vmatpush1.bf16.msra.mxu0 0
      %1464 = vmatprep.subr.bf16.mxu0 0
      %1465 = vmatpush1.bf16.msra.mxu0 0
      %1466 = vmatprep.subr.bf16.mxu0 0
      %1467 = vmatpush1.bf16.msra.mxu0 0
      %1468 = vmatprep.subr.bf16.mxu0 0
      %1469 = vmatpush1.bf16.msra.mxu0 0
      %1470 = vmatprep.subr.bf16.mxu0 0
      %1471 = vmatpush1.bf16.msra.mxu0 0
      %1472 = vmatprep.mubr.bf16.mxu0 0
      %1473 = vmatmul.mubr.bf16.gmra.mrb[0].mxu0 %v1435
      %v1474 = vpop.f32.mrb[0].mxu0
      %v1475 = vadd.f32 0.0, %v1474
      %v1476 = vpop.f32.mrb[0].mxu0
      %v1477 = vpop.f32.mrb[0].mxu0
      %v1478 = vpop.f32.mrb[0].mxu0
      %1479 = vdwg.mxu0
      %1481 = vrot.lane.b32.xlu0 %v1255, 8
      %v1482 = vpop.permute.xlu0 %1481
      %1485 = vrot.lane.b32.xlu0 %v1365, 16
      %v1486 = vpop.permute.xlu0 %1485
      %1489 = vrot.lane.b32.xlu0 %v1475, 24
      %v1490 = vpop.permute.xlu0 %1489
      %v1492 = vsel %vm414, %v1144, %v1482
      %v1493 = vsel %vm865, %v1492, %v1486
      %v1494 = vsel %vm867, %v1493, %v1490
      %v1495 = vpack.c.bf16 %v1494, %v1494
      %v1500 = vunpack.c.l.b16 %v335
      %v1501 = vunpack.c.l.b16 %v336
      %v1502 = vunpack.c.l.b16 %v337
      %v1503 = vunpack.c.l.b16 %v338
      %v1504 = vpack.c.b16 %v1501, %v1500
      %v1505 = vpack.c.b16 %v1503, %v1502
      %v1509 = vsel %vm340, %v1495, 0
      %1511 = vmatprep.subr.bf16.mxu0 0
      %1512 = vmatpush1.bf16.msra.mxu0 %v1504
      %1513 = vmatprep.subr.bf16.mxu0 0
      %1514 = vmatpush1.bf16.msra.mxu0 %v1505
      %1515 = vmatprep.subr.bf16.mxu0 0
      %1516 = vmatpush1.bf16.msra.mxu0 0
      %1517 = vmatprep.subr.bf16.mxu0 0
      %1518 = vmatpush1.bf16.msra.mxu0 0
      %1519 = vmatprep.subr.bf16.mxu0 0
      %1520 = vmatpush1.bf16.msra.mxu0 0
      %1521 = vmatprep.subr.bf16.mxu0 0
      %1522 = vmatpush1.bf16.msra.mxu0 0
      %1523 = vmatprep.subr.bf16.mxu0 0
      %1524 = vmatpush1.bf16.msra.mxu0 0
      %1525 = vmatprep.subr.bf16.mxu0 0
      %1526 = vmatpush1.bf16.msra.mxu0 0
      %1527 = vmatprep.subr.bf16.mxu0 0
      %1528 = vmatpush1.bf16.msra.mxu0 0
      %1529 = vmatprep.subr.bf16.mxu0 0
      %1530 = vmatpush1.bf16.msra.mxu0 0
      %1531 = vmatprep.subr.bf16.mxu0 0
      %1532 = vmatpush1.bf16.msra.mxu0 0
      %1533 = vmatprep.subr.bf16.mxu0 0
      %1534 = vmatpush1.bf16.msra.mxu0 0
      %1535 = vmatprep.subr.bf16.mxu0 0
      %1536 = vmatpush1.bf16.msra.mxu0 0
      %1537 = vmatprep.subr.bf16.mxu0 0
      %1538 = vmatpush1.bf16.msra.mxu0 0
      %1539 = vmatprep.subr.bf16.mxu0 0
      %1540 = vmatpush1.bf16.msra.mxu0 0
      %1541 = vmatprep.subr.bf16.mxu0 0
      %1542 = vmatpush1.bf16.msra.mxu0 0
      %1543 = vmatprep.mubr.bf16.mxu0 0
      %1544 = vmatmul.mubr.bf16.gmra.mrb[0].mxu0 %v1509
      %v1545 = vpop.f32.mrb[0].mxu0
      %v1546 = vadd.f32 0.0, %v1545
      %v1547 = vpop.f32.mrb[0].mxu0
      %v1548 = vpop.f32.mrb[0].mxu0
      %v1549 = vpop.f32.mrb[0].mxu0
      %1550 = vdwg.mxu0
      %v1551 = vadd.f32 %v925, %v1546
      %v1552 = vld [vmem:[%s6] sm:$0xf]
      %v1553 = vld [vmem:[%s6 + $0x4] sm:$0xf]
      %v1554 = vld [vmem:[%s6 + $0x8] sm:$0xf]
      %v1555 = vld [vmem:[%s6 + $0xc] sm:$0xf]
      %v1556 = vld [vmem:[%s7] sm:$0xf]
      %v1557 = vld [vmem:[%s7 + $0x4] sm:$0xf]
      %v1558 = vld [vmem:[%s7 + $0x8] sm:$0xf]
      %v1559 = vld [vmem:[%s7 + $0xc] sm:$0xf]
      %v1560 = vld [vmem:[%s7 + $0x10] sm:$0xf]
      %v1561 = vld [vmem:[%s7 + $0x14] sm:$0xf]
      %v1562 = vld [vmem:[%s7 + $0x18] sm:$0xf]
      %v1563 = vld [vmem:[%s7 + $0x1c] sm:$0xf]
      %v1564 = vmul.f32 %v1551, %v1551
      %v1565 = vsel %vm340, %v1564, 0.0
      %1566 = vadd.xlane.f32.xlu0 %v1565
      %v1567 = vpop.xlane.xlu0 %1566
      %v1568 = vmul.f32 %v1567, %v344
      %v1569 = vadd.f32 %v1568, 1e-06
      %v1570 = vrsqrt.pop %v1569
      %v1571 = vmul.f32 %v1551, %v1570
      %v1572 = vlaneseq
      %v1573 = vshrl.u32 %v1572, 7
      %v1574 = vsub.s32 2, %v1573
      %v1575 = vrot.slane %v326, %v1574
      %v1576 = vmul.f32 %v1571, %v1575
      %v1577 = vpack.c.bf16 %v1576, %v1576
      %v1582 = vunpack.c.l.b16 %v1552
      %v1583 = vunpack.c.l.b16 %v1553
      %v1584 = vunpack.c.l.b16 %v1554
      %v1585 = vunpack.c.l.b16 %v1555
      %v1586 = vpack.c.b16 %v1583, %v1582
      %v1587 = vpack.c.b16 %v1585, %v1584
      %v1591 = vsel %vm340, %v1577, 0
      %1593 = vmatprep.subr.bf16.mxu0 0
      %1594 = vmatpush1.bf16.msra.mxu0 %v1586
      %1595 = vmatprep.subr.bf16.mxu0 0
      %1596 = vmatpush1.bf16.msra.mxu0 %v1587
      %1597 = vmatprep.subr.bf16.mxu0 0
      %1598 = vmatpush1.bf16.msra.mxu0 0
      %1599 = vmatprep.subr.bf16.mxu0 0
      %1600 = vmatpush1.bf16.msra.mxu0 0
      %1601 = vmatprep.subr.bf16.mxu0 0
      %1602 = vmatpush1.bf16.msra.mxu0 0
      %1603 = vmatprep.subr.bf16.mxu0 0
      %1604 = vmatpush1.bf16.msra.mxu0 0
      %1605 = vmatprep.subr.bf16.mxu0 0
      %1606 = vmatpush1.bf16.msra.mxu0 0
      %1607 = vmatprep.subr.bf16.mxu0 0
      %1608 = vmatpush1.bf16.msra.mxu0 0
      %1609 = vmatprep.subr.bf16.mxu0 0
      %1610 = vmatpush1.bf16.msra.mxu0 0
      %1611 = vmatprep.subr.bf16.mxu0 0
      %1612 = vmatpush1.bf16.msra.mxu0 0
      %1613 = vmatprep.subr.bf16.mxu0 0
      %1614 = vmatpush1.bf16.msra.mxu0 0
      %1615 = vmatprep.subr.bf16.mxu0 0
      %1616 = vmatpush1.bf16.msra.mxu0 0
      %1617 = vmatprep.subr.bf16.mxu0 0
      %1618 = vmatpush1.bf16.msra.mxu0 0
      %1619 = vmatprep.subr.bf16.mxu0 0
      %1620 = vmatpush1.bf16.msra.mxu0 0
      %1621 = vmatprep.subr.bf16.mxu0 0
      %1622 = vmatpush1.bf16.msra.mxu0 0
      %1623 = vmatprep.subr.bf16.mxu0 0
      %1624 = vmatpush1.bf16.msra.mxu0 0
      %1625 = vmatprep.mubr.bf16.mxu0 0
      %1626 = vmatmul.mubr.bf16.gmra.mrb[0].mxu0 %v1591
      %v1627 = vpop.f32.mrb[0].mxu0
      %v1628 = vadd.f32 0.0, %v1627
      %v1629 = vpop.f32.mrb[0].mxu0
      %v1630 = vpop.f32.mrb[0].mxu0
      %v1631 = vpop.f32.mrb[0].mxu0
      %1632 = vdwg.mxu0
      %v1633 = vmul.f32 %v1628, %v1628
      %v1634 = vmul.f32 %v1628, %v1633
      %v1635 = vmul.f32 %v1634, 0.044715
      %v1636 = vadd.f32 %v1628, %v1635
      %v1637 = vmul.f32 %v1636, 0.7978846
      %v1638 = vtanh.pop %v1637
      %v1639 = vadd.f32 %v1638, 1.0
      %v1640 = vmul.f32 %v1639, 0.5
      %v1641 = vmul.f32 %v1628, %v1640
      %1643 = vrot.lane.b32.xlu0 %v1628, 64
      %v1644 = vpop.permute.xlu0 %1643
      %v1646 = vmul.f32 %v1641, %v1644
      %v1647 = vpack.c.bf16 %v1646, %v1646
      %v1656 = vunpack.c.l.b16 %v1556
      %v1657 = vunpack.c.l.b16 %v1557
      %v1658 = vunpack.c.l.b16 %v1558
      %v1659 = vunpack.c.l.b16 %v1559
      %v1660 = vunpack.c.l.b16 %v1560
      %v1661 = vunpack.c.l.b16 %v1561
      %v1662 = vunpack.c.l.b16 %v1562
      %v1663 = vunpack.c.l.b16 %v1563
      %v1664 = vpack.c.b16 %v1657, %v1656
      %v1665 = vpack.c.b16 %v1659, %v1658
      %v1666 = vpack.c.b16 %v1661, %v1660
      %v1667 = vpack.c.b16 %v1663, %v1662
      %vm1672 = vcmask 523264
      %v1674 = vsel %vm1672, %v1647, 0
      %1676 = vmatprep.subr.bf16.mxu0 0
      %1677 = vmatpush1.bf16.msra.mxu0 %v1664
      %1678 = vmatprep.subr.bf16.mxu0 0
      %1679 = vmatpush1.bf16.msra.mxu0 %v1665
      %1680 = vmatprep.subr.bf16.mxu0 0
      %1681 = vmatpush1.bf16.msra.mxu0 %v1666
      %1682 = vmatprep.subr.bf16.mxu0 0
      %1683 = vmatpush1.bf16.msra.mxu0 %v1667
      %1684 = vmatprep.subr.bf16.mxu0 0
      %1685 = vmatpush1.bf16.msra.mxu0 0
      %1686 = vmatprep.subr.bf16.mxu0 0
      %1687 = vmatpush1.bf16.msra.mxu0 0
      %1688 = vmatprep.subr.bf16.mxu0 0
      %1689 = vmatpush1.bf16.msra.mxu0 0
      %1690 = vmatprep.subr.bf16.mxu0 0
      %1691 = vmatpush1.bf16.msra.mxu0 0
      %1692 = vmatprep.subr.bf16.mxu0 0
      %1693 = vmatpush1.bf16.msra.mxu0 0
      %1694 = vmatprep.subr.bf16.mxu0 0
      %1695 = vmatpush1.bf16.msra.mxu0 0
      %1696 = vmatprep.subr.bf16.mxu0 0
      %1697 = vmatpush1.bf16.msra.mxu0 0
      %1698 = vmatprep.subr.bf16.mxu0 0
      %1699 = vmatpush1.bf16.msra.mxu0 0
      %1700 = vmatprep.subr.bf16.mxu0 0
      %1701 = vmatpush1.bf16.msra.mxu0 0
      %1702 = vmatprep.subr.bf16.mxu0 0
      %1703 = vmatpush1.bf16.msra.mxu0 0
      %1704 = vmatprep.subr.bf16.mxu0 0
      %1705 = vmatpush1.bf16.msra.mxu0 0
      %1706 = vmatprep.subr.bf16.mxu0 0
      %1707 = vmatpush1.bf16.msra.mxu0 0
      %1708 = vmatprep.mubr.bf16.mxu0 0
      %1709 = vmatmul.mubr.bf16.gmra.mrb[0].mxu0 %v1674
      %v1710 = vpop.f32.mrb[0].mxu0
      %v1711 = vadd.f32 0.0, %v1710
      %v1712 = vpop.f32.mrb[0].mxu0
      %v1713 = vpop.f32.mrb[0].mxu0
      %v1714 = vpop.f32.mrb[0].mxu0
      %1715 = vdwg.mxu0
      %v1716 = vadd.f32 %v1551, %v1711
      %s1717 = scalar_lea.vmem %s4, 32
      %v1718 = vld [vmem:[%s1717] sm:$0xff]
      %v1719 = vld [vmem:[%s1717 + $0x8] sm:$0xff]
      %v1720 = vld [vmem:[%s1717 + $0x10] sm:$0xff]
      %v1721 = vld [vmem:[%s1717 + $0x18] sm:$0xff]
      %s1722 = scalar_lea.vmem %s5, 32
      %v1723 = vld [vmem:[%s1722] sm:$0xf]
      %v1724 = vld [vmem:[%s1722 + $0x4] sm:$0xf]
      %v1725 = vld [vmem:[%s1722 + $0x8] sm:$0xf]
      %v1726 = vld [vmem:[%s1722 + $0xc] sm:$0xf]
      %v1727 = vld [vmem:[%s1722 + $0x10] sm:$0xf]
      %v1728 = vld [vmem:[%s1722 + $0x14] sm:$0xf]
      %v1729 = vld [vmem:[%s1722 + $0x18] sm:$0xf]
      %v1730 = vld [vmem:[%s1722 + $0x1c] sm:$0xf]
      %v1731 = vmul.f32 %v1716, %v1716
      %v1732 = vsel %vm340, %v1731, 0.0
      %1733 = vadd.xlane.f32.xlu0 %v1732
      %v1734 = vpop.xlane.xlu0 %1733
      %v1735 = vmul.f32 %v1734, %v344
      %v1736 = vadd.f32 %v1735, 1e-06
      %v1737 = vrsqrt.pop %v1736
      %v1738 = vmul.f32 %v1716, %v1737
      %v1739 = vlaneseq
      %v1740 = vshrl.u32 %v1739, 7
      %v1741 = vsub.s32 3, %v1740
      %v1742 = vrot.slane %v326, %v1741
      %v1743 = vmul.f32 %v1738, %v1742
      %v1744 = vpack.c.bf16 %v1743, %v1743
      %v1749 = vunpack.c.l.b16 %v1718
      %v1750 = vunpack.c.l.b16 %v1719
      %v1751 = vunpack.c.l.b16 %v1720
      %v1752 = vunpack.c.l.b16 %v1721
      %v1753 = vpack.c.b16 %v1750, %v1749
      %v1754 = vpack.c.b16 %v1752, %v1751
      %v1758 = vsel %vm340, %v1744, 0
      %1760 = vmatprep.subr.bf16.mxu0 0
      %1761 = vmatpush1.bf16.msra.mxu0 %v1753
      %1762 = vmatprep.subr.bf16.mxu0 0
      %1763 = vmatpush1.bf16.msra.mxu0 %v1754
      %1764 = vmatprep.subr.bf16.mxu0 0
      %1765 = vmatpush1.bf16.msra.mxu0 0
      %1766 = vmatprep.subr.bf16.mxu0 0
      %1767 = vmatpush1.bf16.msra.mxu0 0
      %1768 = vmatprep.subr.bf16.mxu0 0
      %1769 = vmatpush1.bf16.msra.mxu0 0
      %1770 = vmatprep.subr.bf16.mxu0 0
      %1771 = vmatpush1.bf16.msra.mxu0 0
      %1772 = vmatprep.subr.bf16.mxu0 0
      %1773 = vmatpush1.bf16.msra.mxu0 0
      %1774 = vmatprep.subr.bf16.mxu0 0
      %1775 = vmatpush1.bf16.msra.mxu0 0
      %1776 = vmatprep.subr.bf16.mxu0 0
      %1777 = vmatpush1.bf16.msra.mxu0 0
      %1778 = vmatprep.subr.bf16.mxu0 0
      %1779 = vmatpush1.bf16.msra.mxu0 0
      %1780 = vmatprep.subr.bf16.mxu0 0
      %1781 = vmatpush1.bf16.msra.mxu0 0
      %1782 = vmatprep.subr.bf16.mxu0 0
      %1783 = vmatpush1.bf16.msra.mxu0 0
      %1784 = vmatprep.subr.bf16.mxu0 0
      %1785 = vmatpush1.bf16.msra.mxu0 0
      %1786 = vmatprep.subr.bf16.mxu0 0
      %1787 = vmatpush1.bf16.msra.mxu0 0
      %1788 = vmatprep.subr.bf16.mxu0 0
      %1789 = vmatpush1.bf16.msra.mxu0 0
      %1790 = vmatprep.subr.bf16.mxu0 0
      %1791 = vmatpush1.bf16.msra.mxu0 0
      %1792 = vmatprep.mubr.bf16.mxu0 0
      %1793 = vmatmul.mubr.bf16.gmra.mrb[0].mxu0 %v1758
      %v1794 = vpop.f32.mrb[0].mxu0
      %v1795 = vadd.f32 0.0, %v1794
      %v1796 = vpop.f32.mrb[0].mxu0
      %v1797 = vpop.f32.mrb[0].mxu0
      %v1798 = vpop.f32.mrb[0].mxu0
      %1799 = vdwg.mxu0
      %v1800 = vpack.c.bf16 %v1795, %v1795
      %1802 = vrot.lane.b32.xlu0 %v1800, 96
      %v1803 = vpop.permute.xlu0 %1802
      %v1805 = vsel %vm414, %v1800, 0
      %v1808 = vsel %vm414, %v1803, 0
      %1810 = vmatprep.subr.bf16.mxu0 0
      %1811 = vmatpush1.bf16.xpose.msra.mxu0 %v1808
      %1812 = vmatprep.subr.bf16.mxu0 0
      %1813 = vmatpush1.bf16.xpose.msra.mxu0 0
      %1814 = vmatprep.subr.bf16.mxu0 0
      %1815 = vmatpush1.bf16.xpose.msra.mxu0 0
      %1816 = vmatprep.subr.bf16.mxu0 0
      %1817 = vmatpush1.bf16.xpose.msra.mxu0 0
      %1818 = vmatprep.subr.bf16.mxu0 0
      %1819 = vmatpush1.bf16.xpose.msra.mxu0 0
      %1820 = vmatprep.subr.bf16.mxu0 0
      %1821 = vmatpush1.bf16.xpose.msra.mxu0 0
      %1822 = vmatprep.subr.bf16.mxu0 0
      %1823 = vmatpush1.bf16.xpose.msra.mxu0 0
      %1824 = vmatprep.subr.bf16.mxu0 0
      %1825 = vmatpush1.bf16.xpose.msra.mxu0 0
      %1826 = vmatprep.subr.bf16.mxu0 0
      %1827 = vmatpush1.bf16.xpose.msra.mxu0 0
      %1828 = vmatprep.subr.bf16.mxu0 0
      %1829 = vmatpush1.bf16.xpose.msra.mxu0 0
      %1830 = vmatprep.subr.bf16.mxu0 0
      %1831 = vmatpush1.bf16.xpose.msra.mxu0 0
      %1832 = vmatprep.subr.bf16.mxu0 0
      %1833 = vmatpush1.bf16.xpose.msra.mxu0 0
      %1834 = vmatprep.subr.bf16.mxu0 0
      %1835 = vmatpush1.bf16.xpose.msra.mxu0 0
      %1836 = vmatprep.subr.bf16.mxu0 0
      %1837 = vmatpush1.bf16.xpose.msra.mxu0 0
      %1838 = vmatprep.subr.bf16.mxu0 0
      %1839 = vmatpush1.bf16.xpose.msra.mxu0 0
      %1840 = vmatprep.subr.bf16.mxu0 0
      %1841 = vmatpush1.bf16.xpose.msra.mxu0 0
      %1842 = vmatprep.mubr.bf16.mxu0 0
      %1843 = vmatmul.mubr.bf16.gmra.mrb[0].mxu0 %v1805
      %v1844 = vpop.f32.mrb[0].mxu0
      %v1845 = vadd.f32 %v322, %v1844
      %v1846 = vpop.f32.mrb[0].mxu0
      %v1847 = vpop.f32.mrb[0].mxu0
      %v1848 = vpop.f32.mrb[0].mxu0
      %1849 = vdwg.mxu0
      %v1850 = vsel %vm414, %v1845, -inf
      %1851 = vmax.xlane.f32.xlu0 %v1850
      %v1852 = vpop.xlane.xlu0 %1851
      %v1853 = vsub.f32 %v1845, %v1852
      %v1854 = vmul.f32 %v1853, 1.442695
      %v1855 = vpow.pop %v1854
      %v1856 = vsel %vm414, %v1855, 0.0
      %1857 = vadd.xlane.f32.xlu0 %v1856
      %v1858 = vpop.xlane.xlu0 %1857
      %v1859 = vrcp.pop %v1858
      %v1860 = vmul.f32 %v1855, %v1859
      %v1861 = vpack.c.bf16 %v1860, %v1860
      %1862 = vrot.lane.b32.xlu0 %v1800, 64
      %v1863 = vpop.permute.xlu0 %1862
      %v1865 = vsel %vm414, %v1861, 0
      %v1868 = vsel %vm478, %v1863, 0
      %1870 = vmatprep.subr.bf16.mxu0 0
      %1871 = vmatpush1.bf16.msra.mxu0 %v1868
      %1872 = vmatprep.subr.bf16.mxu0 0
      %1873 = vmatpush1.bf16.msra.mxu0 0
      %1874 = vmatprep.subr.bf16.mxu0 0
      %1875 = vmatpush1.bf16.msra.mxu0 0
      %1876 = vmatprep.subr.bf16.mxu0 0
      %1877 = vmatpush1.bf16.msra.mxu0 0
      %1878 = vmatprep.subr.bf16.mxu0 0
      %1879 = vmatpush1.bf16.msra.mxu0 0
      %1880 = vmatprep.subr.bf16.mxu0 0
      %1881 = vmatpush1.bf16.msra.mxu0 0
      %1882 = vmatprep.subr.bf16.mxu0 0
      %1883 = vmatpush1.bf16.msra.mxu0 0
      %1884 = vmatprep.subr.bf16.mxu0 0
      %1885 = vmatpush1.bf16.msra.mxu0 0
      %1886 = vmatprep.subr.bf16.mxu0 0
      %1887 = vmatpush1.bf16.msra.mxu0 0
      %1888 = vmatprep.subr.bf16.mxu0 0
      %1889 = vmatpush1.bf16.msra.mxu0 0
      %1890 = vmatprep.subr.bf16.mxu0 0
      %1891 = vmatpush1.bf16.msra.mxu0 0
      %1892 = vmatprep.subr.bf16.mxu0 0
      %1893 = vmatpush1.bf16.msra.mxu0 0
      %1894 = vmatprep.subr.bf16.mxu0 0
      %1895 = vmatpush1.bf16.msra.mxu0 0
      %1896 = vmatprep.subr.bf16.mxu0 0
      %1897 = vmatpush1.bf16.msra.mxu0 0
      %1898 = vmatprep.subr.bf16.mxu0 0
      %1899 = vmatpush1.bf16.msra.mxu0 0
      %1900 = vmatprep.subr.bf16.mxu0 0
      %1901 = vmatpush1.bf16.msra.mxu0 0
      %1902 = vmatprep.mubr.bf16.mxu0 0
      %1903 = vmatmul.mubr.bf16.gmra.mrb[0].mxu0 %v1865
      %v1904 = vpop.f32.mrb[0].mxu0
      %v1905 = vadd.f32 0.0, %v1904
      %v1906 = vpop.f32.mrb[0].mxu0
      %v1907 = vpop.f32.mrb[0].mxu0
      %v1908 = vpop.f32.mrb[0].mxu0
      %1909 = vdwg.mxu0
      %1910 = vrot.lane.b32.xlu0 %v1800, 120
      %v1911 = vpop.permute.xlu0 %1910
      %1912 = vrot.lane.b32.xlu0 %v1800, 88
      %v1913 = vpop.permute.xlu0 %1912
      %v1915 = vsel %vm414, %v1911, 0
      %v1918 = vsel %vm414, %v1913, 0
      %1920 = vmatprep.subr.bf16.mxu0 0
      %1921 = vmatpush1.bf16.xpose.msra.mxu0 %v1918
      %1922 = vmatprep.subr.bf16.mxu0 0
      %1923 = vmatpush1.bf16.xpose.msra.mxu0 0
      %1924 = vmatprep.subr.bf16.mxu0 0
      %1925 = vmatpush1.bf16.xpose.msra.mxu0 0
      %1926 = vmatprep.subr.bf16.mxu0 0
      %1927 = vmatpush1.bf16.xpose.msra.mxu0 0
      %1928 = vmatprep.subr.bf16.mxu0 0
      %1929 = vmatpush1.bf16.xpose.msra.mxu0 0
      %1930 = vmatprep.subr.bf16.mxu0 0
      %1931 = vmatpush1.bf16.xpose.msra.mxu0 0
      %1932 = vmatprep.subr.bf16.mxu0 0
      %1933 = vmatpush1.bf16.xpose.msra.mxu0 0
      %1934 = vmatprep.subr.bf16.mxu0 0
      %1935 = vmatpush1.bf16.xpose.msra.mxu0 0
      %1936 = vmatprep.subr.bf16.mxu0 0
      %1937 = vmatpush1.bf16.xpose.msra.mxu0 0
      %1938 = vmatprep.subr.bf16.mxu0 0
      %1939 = vmatpush1.bf16.xpose.msra.mxu0 0
      %1940 = vmatprep.subr.bf16.mxu0 0
      %1941 = vmatpush1.bf16.xpose.msra.mxu0 0
      %1942 = vmatprep.subr.bf16.mxu0 0
      %1943 = vmatpush1.bf16.xpose.msra.mxu0 0
      %1944 = vmatprep.subr.bf16.mxu0 0
      %1945 = vmatpush1.bf16.xpose.msra.mxu0 0
      %1946 = vmatprep.subr.bf16.mxu0 0
      %1947 = vmatpush1.bf16.xpose.msra.mxu0 0
      %1948 = vmatprep.subr.bf16.mxu0 0
      %1949 = vmatpush1.bf16.xpose.msra.mxu0 0
      %1950 = vmatprep.subr.bf16.mxu0 0
      %1951 = vmatpush1.bf16.xpose.msra.mxu0 0
      %1952 = vmatprep.mubr.bf16.mxu0 0
      %1953 = vmatmul.mubr.bf16.gmra.mrb[0].mxu0 %v1915
      %v1954 = vpop.f32.mrb[0].mxu0
      %v1955 = vadd.f32 %v323, %v1954
      %v1956 = vpop.f32.mrb[0].mxu0
      %v1957 = vpop.f32.mrb[0].mxu0
      %v1958 = vpop.f32.mrb[0].mxu0
      %1959 = vdwg.mxu0
      %v1960 = vsel %vm414, %v1955, -inf
      %1961 = vmax.xlane.f32.xlu0 %v1960
      %v1962 = vpop.xlane.xlu0 %1961
      %v1963 = vsub.f32 %v1955, %v1962
      %v1964 = vmul.f32 %v1963, 1.442695
      %v1965 = vpow.pop %v1964
      %v1966 = vsel %vm414, %v1965, 0.0
      %1967 = vadd.xlane.f32.xlu0 %v1966
      %v1968 = vpop.xlane.xlu0 %1967
      %v1969 = vrcp.pop %v1968
      %v1970 = vmul.f32 %v1965, %v1969
      %v1971 = vpack.c.bf16 %v1970, %v1970
      %1972 = vrot.lane.b32.xlu0 %v1800, 56
      %v1973 = vpop.permute.xlu0 %1972
      %v1975 = vsel %vm414, %v1971, 0
      %v1978 = vsel %vm478, %v1973, 0
      %1980 = vmatprep.subr.bf16.mxu0 0
      %1981 = vmatpush1.bf16.msra.mxu0 %v1978
      %1982 = vmatprep.subr.bf16.mxu0 0
      %1983 = vmatpush1.bf16.msra.mxu0 0
      %1984 = vmatprep.subr.bf16.mxu0 0
      %1985 = vmatpush1.bf16.msra.mxu0 0
      %1986 = vmatprep.subr.bf16.mxu0 0
      %1987 = vmatpush1.bf16.msra.mxu0 0
      %1988 = vmatprep.subr.bf16.mxu0 0
      %1989 = vmatpush1.bf16.msra.mxu0 0
      %1990 = vmatprep.subr.bf16.mxu0 0
      %1991 = vmatpush1.bf16.msra.mxu0 0
      %1992 = vmatprep.subr.bf16.mxu0 0
      %1993 = vmatpush1.bf16.msra.mxu0 0
      %1994 = vmatprep.subr.bf16.mxu0 0
      %1995 = vmatpush1.bf16.msra.mxu0 0
      %1996 = vmatprep.subr.bf16.mxu0 0
      %1997 = vmatpush1.bf16.msra.mxu0 0
      %1998 = vmatprep.subr.bf16.mxu0 0
      %1999 = vmatpush1.bf16.msra.mxu0 0
      %2000 = vmatprep.subr.bf16.mxu0 0
      %2001 = vmatpush1.bf16.msra.mxu0 0
      %2002 = vmatprep.subr.bf16.mxu0 0
      %2003 = vmatpush1.bf16.msra.mxu0 0
      %2004 = vmatprep.subr.bf16.mxu0 0
      %2005 = vmatpush1.bf16.msra.mxu0 0
      %2006 = vmatprep.subr.bf16.mxu0 0
      %2007 = vmatpush1.bf16.msra.mxu0 0
      %2008 = vmatprep.subr.bf16.mxu0 0
      %2009 = vmatpush1.bf16.msra.mxu0 0
      %2010 = vmatprep.subr.bf16.mxu0 0
      %2011 = vmatpush1.bf16.msra.mxu0 0
      %2012 = vmatprep.mubr.bf16.mxu0 0
      %2013 = vmatmul.mubr.bf16.gmra.mrb[0].mxu0 %v1975
      %v2014 = vpop.f32.mrb[0].mxu0
      %v2015 = vadd.f32 0.0, %v2014
      %v2016 = vpop.f32.mrb[0].mxu0
      %v2017 = vpop.f32.mrb[0].mxu0
      %v2018 = vpop.f32.mrb[0].mxu0
      %2019 = vdwg.mxu0
      %2020 = vrot.lane.b32.xlu0 %v1800, 112
      %v2021 = vpop.permute.xlu0 %2020
      %2022 = vrot.lane.b32.xlu0 %v1800, 80
      %v2023 = vpop.permute.xlu0 %2022
      %v2025 = vsel %vm414, %v2021, 0
      %v2028 = vsel %vm414, %v2023, 0
      %2030 = vmatprep.subr.bf16.mxu0 0
      %2031 = vmatpush1.bf16.xpose.msra.mxu0 %v2028
      %2032 = vmatprep.subr.bf16.mxu0 0
      %2033 = vmatpush1.bf16.xpose.msra.mxu0 0
      %2034 = vmatprep.subr.bf16.mxu0 0
      %2035 = vmatpush1.bf16.xpose.msra.mxu0 0
      %2036 = vmatprep.subr.bf16.mxu0 0
      %2037 = vmatpush1.bf16.xpose.msra.mxu0 0
      %2038 = vmatprep.subr.bf16.mxu0 0
      %2039 = vmatpush1.bf16.xpose.msra.mxu0 0
      %2040 = vmatprep.subr.bf16.mxu0 0
      %2041 = vmatpush1.bf16.xpose.msra.mxu0 0
      %2042 = vmatprep.subr.bf16.mxu0 0
      %2043 = vmatpush1.bf16.xpose.msra.mxu0 0
      %2044 = vmatprep.subr.bf16.mxu0 0
      %2045 = vmatpush1.bf16.xpose.msra.mxu0 0
      %2046 = vmatprep.subr.bf16.mxu0 0
      %2047 = vmatpush1.bf16.xpose.msra.mxu0 0
      %2048 = vmatprep.subr.bf16.mxu0 0
      %2049 = vmatpush1.bf16.xpose.msra.mxu0 0
      %2050 = vmatprep.subr.bf16.mxu0 0
      %2051 = vmatpush1.bf16.xpose.msra.mxu0 0
      %2052 = vmatprep.subr.bf16.mxu0 0
      %2053 = vmatpush1.bf16.xpose.msra.mxu0 0
      %2054 = vmatprep.subr.bf16.mxu0 0
      %2055 = vmatpush1.bf16.xpose.msra.mxu0 0
      %2056 = vmatprep.subr.bf16.mxu0 0
      %2057 = vmatpush1.bf16.xpose.msra.mxu0 0
      %2058 = vmatprep.subr.bf16.mxu0 0
      %2059 = vmatpush1.bf16.xpose.msra.mxu0 0
      %2060 = vmatprep.subr.bf16.mxu0 0
      %2061 = vmatpush1.bf16.xpose.msra.mxu0 0
      %2062 = vmatprep.mubr.bf16.mxu0 0
      %2063 = vmatmul.mubr.bf16.gmra.mrb[0].mxu0 %v2025
      %v2064 = vpop.f32.mrb[0].mxu0
      %v2065 = vadd.f32 %v324, %v2064
      %v2066 = vpop.f32.mrb[0].mxu0
      %v2067 = vpop.f32.mrb[0].mxu0
      %v2068 = vpop.f32.mrb[0].mxu0
      %2069 = vdwg.mxu0
      %v2070 = vsel %vm414, %v2065, -inf
      %2071 = vmax.xlane.f32.xlu0 %v2070
      %v2072 = vpop.xlane.xlu0 %2071
      %v2073 = vsub.f32 %v2065, %v2072
      %v2074 = vmul.f32 %v2073, 1.442695
      %v2075 = vpow.pop %v2074
      %v2076 = vsel %vm414, %v2075, 0.0
      %2077 = vadd.xlane.f32.xlu0 %v2076
      %v2078 = vpop.xlane.xlu0 %2077
      %v2079 = vrcp.pop %v2078
      %v2080 = vmul.f32 %v2075, %v2079
      %v2081 = vpack.c.bf16 %v2080, %v2080
      %2082 = vrot.lane.b32.xlu0 %v1800, 48
      %v2083 = vpop.permute.xlu0 %2082
      %v2085 = vsel %vm414, %v2081, 0
      %v2088 = vsel %vm478, %v2083, 0
      %2090 = vmatprep.subr.bf16.mxu0 0
      %2091 = vmatpush1.bf16.msra.mxu0 %v2088
      %2092 = vmatprep.subr.bf16.mxu0 0
      %2093 = vmatpush1.bf16.msra.mxu0 0
      %2094 = vmatprep.subr.bf16.mxu0 0
      %2095 = vmatpush1.bf16.msra.mxu0 0
      %2096 = vmatprep.subr.bf16.mxu0 0
      %2097 = vmatpush1.bf16.msra.mxu0 0
      %2098 = vmatprep.subr.bf16.mxu0 0
      %2099 = vmatpush1.bf16.msra.mxu0 0
      %2100 = vmatprep.subr.bf16.mxu0 0
      %2101 = vmatpush1.bf16.msra.mxu0 0
      %2102 = vmatprep.subr.bf16.mxu0 0
      %2103 = vmatpush1.bf16.msra.mxu0 0
      %2104 = vmatprep.subr.bf16.mxu0 0
      %2105 = vmatpush1.bf16.msra.mxu0 0
      %2106 = vmatprep.subr.bf16.mxu0 0
      %2107 = vmatpush1.bf16.msra.mxu0 0
      %2108 = vmatprep.subr.bf16.mxu0 0
      %2109 = vmatpush1.bf16.msra.mxu0 0
      %2110 = vmatprep.subr.bf16.mxu0 0
      %2111 = vmatpush1.bf16.msra.mxu0 0
      %2112 = vmatprep.subr.bf16.mxu0 0
      %2113 = vmatpush1.bf16.msra.mxu0 0
      %2114 = vmatprep.subr.bf16.mxu0 0
      %2115 = vmatpush1.bf16.msra.mxu0 0
      %2116 = vmatprep.subr.bf16.mxu0 0
      %2117 = vmatpush1.bf16.msra.mxu0 0
      %2118 = vmatprep.subr.bf16.mxu0 0
      %2119 = vmatpush1.bf16.msra.mxu0 0
      %2120 = vmatprep.subr.bf16.mxu0 0
      %2121 = vmatpush1.bf16.msra.mxu0 0
      %2122 = vmatprep.mubr.bf16.mxu0 0
      %2123 = vmatmul.mubr.bf16.gmra.mrb[0].mxu0 %v2085
      %v2124 = vpop.f32.mrb[0].mxu0
      %v2125 = vadd.f32 0.0, %v2124
      %v2126 = vpop.f32.mrb[0].mxu0
      %v2127 = vpop.f32.mrb[0].mxu0
      %v2128 = vpop.f32.mrb[0].mxu0
      %2129 = vdwg.mxu0
      %2130 = vrot.lane.b32.xlu0 %v1800, 104
      %v2131 = vpop.permute.xlu0 %2130
      %2132 = vrot.lane.b32.xlu0 %v1800, 72
      %v2133 = vpop.permute.xlu0 %2132
      %v2135 = vsel %vm414, %v2131, 0
      %v2138 = vsel %vm414, %v2133, 0
      %2140 = vmatprep.subr.bf16.mxu0 0
      %2141 = vmatpush1.bf16.xpose.msra.mxu0 %v2138
      %2142 = vmatprep.subr.bf16.mxu0 0
      %2143 = vmatpush1.bf16.xpose.msra.mxu0 0
      %2144 = vmatprep.subr.bf16.mxu0 0
      %2145 = vmatpush1.bf16.xpose.msra.mxu0 0
      %2146 = vmatprep.subr.bf16.mxu0 0
      %2147 = vmatpush1.bf16.xpose.msra.mxu0 0
      %2148 = vmatprep.subr.bf16.mxu0 0
      %2149 = vmatpush1.bf16.xpose.msra.mxu0 0
      %2150 = vmatprep.subr.bf16.mxu0 0
      %2151 = vmatpush1.bf16.xpose.msra.mxu0 0
      %2152 = vmatprep.subr.bf16.mxu0 0
      %2153 = vmatpush1.bf16.xpose.msra.mxu0 0
      %2154 = vmatprep.subr.bf16.mxu0 0
      %2155 = vmatpush1.bf16.xpose.msra.mxu0 0
      %2156 = vmatprep.subr.bf16.mxu0 0
      %2157 = vmatpush1.bf16.xpose.msra.mxu0 0
      %2158 = vmatprep.subr.bf16.mxu0 0
      %2159 = vmatpush1.bf16.xpose.msra.mxu0 0
      %2160 = vmatprep.subr.bf16.mxu0 0
      %2161 = vmatpush1.bf16.xpose.msra.mxu0 0
      %2162 = vmatprep.subr.bf16.mxu0 0
      %2163 = vmatpush1.bf16.xpose.msra.mxu0 0
      %2164 = vmatprep.subr.bf16.mxu0 0
      %2165 = vmatpush1.bf16.xpose.msra.mxu0 0
      %2166 = vmatprep.subr.bf16.mxu0 0
      %2167 = vmatpush1.bf16.xpose.msra.mxu0 0
      %2168 = vmatprep.subr.bf16.mxu0 0
      %2169 = vmatpush1.bf16.xpose.msra.mxu0 0
      %2170 = vmatprep.subr.bf16.mxu0 0
      %2171 = vmatpush1.bf16.xpose.msra.mxu0 0
      %2172 = vmatprep.mubr.bf16.mxu0 0
      %2173 = vmatmul.mubr.bf16.gmra.mrb[0].mxu0 %v2135
      %v2174 = vpop.f32.mrb[0].mxu0
      %v2175 = vadd.f32 %v325, %v2174
      %v2176 = vpop.f32.mrb[0].mxu0
      %v2177 = vpop.f32.mrb[0].mxu0
      %v2178 = vpop.f32.mrb[0].mxu0
      %2179 = vdwg.mxu0
      %v2180 = vsel %vm414, %v2175, -inf
      %2181 = vmax.xlane.f32.xlu0 %v2180
      %v2182 = vpop.xlane.xlu0 %2181
      %v2183 = vsub.f32 %v2175, %v2182
      %v2184 = vmul.f32 %v2183, 1.442695
      %v2185 = vpow.pop %v2184
      %v2186 = vsel %vm414, %v2185, 0.0
      %2187 = vadd.xlane.f32.xlu0 %v2186
      %v2188 = vpop.xlane.xlu0 %2187
      %v2189 = vrcp.pop %v2188
      %v2190 = vmul.f32 %v2185, %v2189
      %v2191 = vpack.c.bf16 %v2190, %v2190
      %2192 = vrot.lane.b32.xlu0 %v1800, 40
      %v2193 = vpop.permute.xlu0 %2192
      %v2195 = vsel %vm414, %v2191, 0
      %v2198 = vsel %vm478, %v2193, 0
      %2200 = vmatprep.subr.bf16.mxu0 0
      %2201 = vmatpush1.bf16.msra.mxu0 %v2198
      %2202 = vmatprep.subr.bf16.mxu0 0
      %2203 = vmatpush1.bf16.msra.mxu0 0
      %2204 = vmatprep.subr.bf16.mxu0 0
      %2205 = vmatpush1.bf16.msra.mxu0 0
      %2206 = vmatprep.subr.bf16.mxu0 0
      %2207 = vmatpush1.bf16.msra.mxu0 0
      %2208 = vmatprep.subr.bf16.mxu0 0
      %2209 = vmatpush1.bf16.msra.mxu0 0
      %2210 = vmatprep.subr.bf16.mxu0 0
      %2211 = vmatpush1.bf16.msra.mxu0 0
      %2212 = vmatprep.subr.bf16.mxu0 0
      %2213 = vmatpush1.bf16.msra.mxu0 0
      %2214 = vmatprep.subr.bf16.mxu0 0
      %2215 = vmatpush1.bf16.msra.mxu0 0
      %2216 = vmatprep.subr.bf16.mxu0 0
      %2217 = vmatpush1.bf16.msra.mxu0 0
      %2218 = vmatprep.subr.bf16.mxu0 0
      %2219 = vmatpush1.bf16.msra.mxu0 0
      %2220 = vmatprep.subr.bf16.mxu0 0
      %2221 = vmatpush1.bf16.msra.mxu0 0
      %2222 = vmatprep.subr.bf16.mxu0 0
      %2223 = vmatpush1.bf16.msra.mxu0 0
      %2224 = vmatprep.subr.bf16.mxu0 0
      %2225 = vmatpush1.bf16.msra.mxu0 0
      %2226 = vmatprep.subr.bf16.mxu0 0
      %2227 = vmatpush1.bf16.msra.mxu0 0
      %2228 = vmatprep.subr.bf16.mxu0 0
      %2229 = vmatpush1.bf16.msra.mxu0 0
      %2230 = vmatprep.subr.bf16.mxu0 0
      %2231 = vmatpush1.bf16.msra.mxu0 0
      %2232 = vmatprep.mubr.bf16.mxu0 0
      %2233 = vmatmul.mubr.bf16.gmra.mrb[0].mxu0 %v2195
      %v2234 = vpop.f32.mrb[0].mxu0
      %v2235 = vadd.f32 0.0, %v2234
      %v2236 = vpop.f32.mrb[0].mxu0
      %v2237 = vpop.f32.mrb[0].mxu0
      %v2238 = vpop.f32.mrb[0].mxu0
      %2239 = vdwg.mxu0
      %2241 = vrot.lane.b32.xlu0 %v2015, 8
      %v2242 = vpop.permute.xlu0 %2241
      %2245 = vrot.lane.b32.xlu0 %v2125, 16
      %v2246 = vpop.permute.xlu0 %2245
      %2249 = vrot.lane.b32.xlu0 %v2235, 24
      %v2250 = vpop.permute.xlu0 %2249
      %v2252 = vsel %vm414, %v1905, %v2242
      %v2253 = vsel %vm865, %v2252, %v2246
      %v2254 = vsel %vm867, %v2253, %v2250
      %v2255 = vpack.c.bf16 %v2254, %v2254
      %v2260 = vunpack.c.l.b16 %v1723
      %v2261 = vunpack.c.l.b16 %v1724
      %v2262 = vunpack.c.l.b16 %v1725
      %v2263 = vunpack.c.l.b16 %v1726
      %v2264 = vpack.c.b16 %v2261, %v2260
      %v2265 = vpack.c.b16 %v2263, %v2262
      %v2269 = vsel %vm340, %v2255, 0
      %2271 = vmatprep.subr.bf16.mxu0 0
      %2272 = vmatpush1.bf16.msra.mxu0 %v2264
      %2273 = vmatprep.subr.bf16.mxu0 0
      %2274 = vmatpush1.bf16.msra.mxu0 %v2265
      %2275 = vmatprep.subr.bf16.mxu0 0
      %2276 = vmatpush1.bf16.msra.mxu0 0
      %2277 = vmatprep.subr.bf16.mxu0 0
      %2278 = vmatpush1.bf16.msra.mxu0 0
      %2279 = vmatprep.subr.bf16.mxu0 0
      %2280 = vmatpush1.bf16.msra.mxu0 0
      %2281 = vmatprep.subr.bf16.mxu0 0
      %2282 = vmatpush1.bf16.msra.mxu0 0
      %2283 = vmatprep.subr.bf16.mxu0 0
      %2284 = vmatpush1.bf16.msra.mxu0 0
      %2285 = vmatprep.subr.bf16.mxu0 0
      %2286 = vmatpush1.bf16.msra.mxu0 0
      %2287 = vmatprep.subr.bf16.mxu0 0
      %2288 = vmatpush1.bf16.msra.mxu0 0
      %2289 = vmatprep.subr.bf16.mxu0 0
      %2290 = vmatpush1.bf16.msra.mxu0 0
      %2291 = vmatprep.subr.bf16.mxu0 0
      %2292 = vmatpush1.bf16.msra.mxu0 0
      %2293 = vmatprep.subr.bf16.mxu0 0
      %2294 = vmatpush1.bf16.msra.mxu0 0
      %2295 = vmatprep.subr.bf16.mxu0 0
      %2296 = vmatpush1.bf16.msra.mxu0 0
      %2297 = vmatprep.subr.bf16.mxu0 0
      %2298 = vmatpush1.bf16.msra.mxu0 0
      %2299 = vmatprep.subr.bf16.mxu0 0
      %2300 = vmatpush1.bf16.msra.mxu0 0
      %2301 = vmatprep.subr.bf16.mxu0 0
      %2302 = vmatpush1.bf16.msra.mxu0 0
      %2303 = vmatprep.mubr.bf16.mxu0 0
      %2304 = vmatmul.mubr.bf16.gmra.mrb[0].mxu0 %v2269
      %v2305 = vpop.f32.mrb[0].mxu0
      %v2306 = vadd.f32 0.0, %v2305
      %v2307 = vpop.f32.mrb[0].mxu0
      %v2308 = vpop.f32.mrb[0].mxu0
      %v2309 = vpop.f32.mrb[0].mxu0
      %2310 = vdwg.mxu0
      %v2311 = vadd.f32 %v1716, %v2306
      %v2312 = vmul.f32 %v2311, %v2311
      %v2313 = vsel %vm340, %v2312, 0.0
      %2314 = vadd.xlane.f32.xlu0 %v2313
      %v2315 = vpop.xlane.xlu0 %2314
      %v2316 = vmul.f32 %v2315, %v344
      %v2317 = vadd.f32 %v2316, 1e-06
      %v2318 = vrsqrt.pop %v2317
      %v2319 = vmul.f32 %v2311, %v2318
      %v2320 = vlaneseq
      %v2321 = vshrl.u32 %v2320, 7
      %v2322 = vsub.s32 4, %v2321
      %v2323 = vrot.slane %v326, %v2322
      %v2324 = vmul.f32 %v2319, %v2323
      %v2325 = vpack.c.bf16 %v2324, %v2324
      %2326 = vrot.lane.b32.xlu0 %v1753, 32
      %v2327 = vpop.permute.xlu0 %2326
      %2328 = vrot.lane.b32.xlu0 %v1754, 32
      %v2329 = vpop.permute.xlu0 %2328
      %v2333 = vsel %vm340, %v2325, 0
      %2335 = vmatprep.subr.bf16.mxu0 0
      %2336 = vmatpush1.bf16.msra.mxu0 %v2327
      %2337 = vmatprep.subr.bf16.mxu0 0
      %2338 = vmatpush1.bf16.msra.mxu0 %v2329
      %2339 = vmatprep.subr.bf16.mxu0 0
      %2340 = vmatpush1.bf16.msra.mxu0 0
      %2341 = vmatprep.subr.bf16.mxu0 0
      %2342 = vmatpush1.bf16.msra.mxu0 0
      %2343 = vmatprep.subr.bf16.mxu0 0
      %2344 = vmatpush1.bf16.msra.mxu0 0
      %2345 = vmatprep.subr.bf16.mxu0 0
      %2346 = vmatpush1.bf16.msra.mxu0 0
      %2347 = vmatprep.subr.bf16.mxu0 0
      %2348 = vmatpush1.bf16.msra.mxu0 0
      %2349 = vmatprep.subr.bf16.mxu0 0
      %2350 = vmatpush1.bf16.msra.mxu0 0
      %2351 = vmatprep.subr.bf16.mxu0 0
      %2352 = vmatpush1.bf16.msra.mxu0 0
      %2353 = vmatprep.subr.bf16.mxu0 0
      %2354 = vmatpush1.bf16.msra.mxu0 0
      %2355 = vmatprep.subr.bf16.mxu0 0
      %2356 = vmatpush1.bf16.msra.mxu0 0
      %2357 = vmatprep.subr.bf16.mxu0 0
      %2358 = vmatpush1.bf16.msra.mxu0 0
      %2359 = vmatprep.subr.bf16.mxu0 0
      %2360 = vmatpush1.bf16.msra.mxu0 0
      %2361 = vmatprep.subr.bf16.mxu0 0
      %2362 = vmatpush1.bf16.msra.mxu0 0
      %2363 = vmatprep.subr.bf16.mxu0 0
      %2364 = vmatpush1.bf16.msra.mxu0 0
      %2365 = vmatprep.subr.bf16.mxu0 0
      %2366 = vmatpush1.bf16.msra.mxu0 0
      %2367 = vmatprep.mubr.bf16.mxu0 0
      %2368 = vmatmul.mubr.bf16.gmra.mrb[0].mxu0 %v2333
      %v2369 = vpop.f32.mrb[0].mxu0
      %v2370 = vadd.f32 0.0, %v2369
      %v2371 = vpop.f32.mrb[0].mxu0
      %v2372 = vpop.f32.mrb[0].mxu0
      %v2373 = vpop.f32.mrb[0].mxu0
      %2374 = vdwg.mxu0
      %v2375 = vunpack.c.h.b16 %v1718
      %v2376 = vunpack.c.h.b16 %v1719
      %v2377 = vunpack.c.h.b16 %v1720
      %v2378 = vunpack.c.h.b16 %v1721
      %v2379 = vpack.c.b16 %v2376, %v2375
      %v2380 = vpack.c.b16 %v2378, %v2377
      %2383 = vmatprep.subr.bf16.mxu0 0
      %2384 = vmatpush1.bf16.msra.mxu0 %v2379
      %2385 = vmatprep.subr.bf16.mxu0 0
      %2386 = vmatpush1.bf16.msra.mxu0 %v2380
      %2387 = vmatprep.subr.bf16.mxu0 0
      %2388 = vmatpush1.bf16.msra.mxu0 0
      %2389 = vmatprep.subr.bf16.mxu0 0
      %2390 = vmatpush1.bf16.msra.mxu0 0
      %2391 = vmatprep.subr.bf16.mxu0 0
      %2392 = vmatpush1.bf16.msra.mxu0 0
      %2393 = vmatprep.subr.bf16.mxu0 0
      %2394 = vmatpush1.bf16.msra.mxu0 0
      %2395 = vmatprep.subr.bf16.mxu0 0
      %2396 = vmatpush1.bf16.msra.mxu0 0
      %2397 = vmatprep.subr.bf16.mxu0 0
      %2398 = vmatpush1.bf16.msra.mxu0 0
      %2399 = vmatprep.subr.bf16.mxu0 0
      %2400 = vmatpush1.bf16.msra.mxu0 0
      %2401 = vmatprep.subr.bf16.mxu0 0
      %2402 = vmatpush1.bf16.msra.mxu0 0
      %2403 = vmatprep.subr.bf16.mxu0 0
      %2404 = vmatpush1.bf16.msra.mxu0 0
      %2405 = vmatprep.subr.bf16.mxu0 0
      %2406 = vmatpush1.bf16.msra.mxu0 0
      %2407 = vmatprep.subr.bf16.mxu0 0
      %2408 = vmatpush1.bf16.msra.mxu0 0
      %2409 = vmatprep.subr.bf16.mxu0 0
      %2410 = vmatpush1.bf16.msra.mxu0 0
      %2411 = vmatprep.subr.bf16.mxu0 0
      %2412 = vmatpush1.bf16.msra.mxu0 0
      %2413 = vmatprep.subr.bf16.mxu0 0
      %2414 = vmatpush1.bf16.msra.mxu0 0
      %2415 = vmatprep.mubr.bf16.mxu0 0
      %2416 = vmatmul.mubr.bf16.gmra.mrb[0].mxu0 %v998
      %v2417 = vpop.f32.mrb[0].mxu0
      %v2418 = vadd.f32 0.0, %v2417
      %v2419 = vpop.f32.mrb[0].mxu0
      %v2420 = vpop.f32.mrb[0].mxu0
      %v2421 = vpop.f32.mrb[0].mxu0
      %2422 = vdwg.mxu0
      %v2423 = vpack.c.bf16 %v2370, %v2370
      %v2424 = vpack.c.bf16 %v2418, %v2418
      %v2426 = vsel %vm414, %v2423, 0
      %v2429 = vsel %vm414, %v2424, 0
      %2431 = vmatprep.subr.bf16.mxu0 0
      %2432 = vmatpush1.bf16.xpose.msra.mxu0 %v2429
      %2433 = vmatprep.subr.bf16.mxu0 0
      %2434 = vmatpush1.bf16.xpose.msra.mxu0 0
      %2435 = vmatprep.subr.bf16.mxu0 0
      %2436 = vmatpush1.bf16.xpose.msra.mxu0 0
      %2437 = vmatprep.subr.bf16.mxu0 0
      %2438 = vmatpush1.bf16.xpose.msra.mxu0 0
      %2439 = vmatprep.subr.bf16.mxu0 0
      %2440 = vmatpush1.bf16.xpose.msra.mxu0 0
      %2441 = vmatprep.subr.bf16.mxu0 0
      %2442 = vmatpush1.bf16.xpose.msra.mxu0 0
      %2443 = vmatprep.subr.bf16.mxu0 0
      %2444 = vmatpush1.bf16.xpose.msra.mxu0 0
      %2445 = vmatprep.subr.bf16.mxu0 0
      %2446 = vmatpush1.bf16.xpose.msra.mxu0 0
      %2447 = vmatprep.subr.bf16.mxu0 0
      %2448 = vmatpush1.bf16.xpose.msra.mxu0 0
      %2449 = vmatprep.subr.bf16.mxu0 0
      %2450 = vmatpush1.bf16.xpose.msra.mxu0 0
      %2451 = vmatprep.subr.bf16.mxu0 0
      %2452 = vmatpush1.bf16.xpose.msra.mxu0 0
      %2453 = vmatprep.subr.bf16.mxu0 0
      %2454 = vmatpush1.bf16.xpose.msra.mxu0 0
      %2455 = vmatprep.subr.bf16.mxu0 0
      %2456 = vmatpush1.bf16.xpose.msra.mxu0 0
      %2457 = vmatprep.subr.bf16.mxu0 0
      %2458 = vmatpush1.bf16.xpose.msra.mxu0 0
      %2459 = vmatprep.subr.bf16.mxu0 0
      %2460 = vmatpush1.bf16.xpose.msra.mxu0 0
      %2461 = vmatprep.subr.bf16.mxu0 0
      %2462 = vmatpush1.bf16.xpose.msra.mxu0 0
      %2463 = vmatprep.mubr.bf16.mxu0 0
      %2464 = vmatmul.mubr.bf16.gmra.mrb[0].mxu0 %v2426
      %v2465 = vpop.f32.mrb[0].mxu0
      %v2466 = vadd.f32 0.0, %v2465
      %v2467 = vpop.f32.mrb[0].mxu0
      %v2468 = vpop.f32.mrb[0].mxu0
      %v2469 = vpop.f32.mrb[0].mxu0
      %2470 = vdwg.mxu0
      %v2471 = vsel %vm414, %v2466, -inf
      %2472 = vmax.xlane.f32.xlu0 %v2471
      %v2473 = vpop.xlane.xlu0 %2472
      %v2474 = vsub.f32 %v2466, %v2473
      %v2475 = vmul.f32 %v2474, 1.442695
      %v2476 = vpow.pop %v2475
      %v2477 = vsel %vm414, %v2476, 0.0
      %2478 = vadd.xlane.f32.xlu0 %v2477
      %v2479 = vpop.xlane.xlu0 %2478
      %v2480 = vrcp.pop %v2479
      %v2481 = vmul.f32 %v2476, %v2480
      %v2482 = vpack.c.bf16 %v2481, %v2481
      %2484 = vrot.lane.b32.xlu0 %v2424, 96
      %v2485 = vpop.permute.xlu0 %2484
      %v2487 = vsel %vm414, %v2482, 0
      %v2490 = vsel %vm478, %v2485, 0
      %2492 = vmatprep.subr.bf16.mxu0 0
      %2493 = vmatpush1.bf16.msra.mxu0 %v2490
      %2494 = vmatprep.subr.bf16.mxu0 0
      %2495 = vmatpush1.bf16.msra.mxu0 0
      %2496 = vmatprep.subr.bf16.mxu0 0
      %2497 = vmatpush1.bf16.msra.mxu0 0
      %2498 = vmatprep.subr.bf16.mxu0 0
      %2499 = vmatpush1.bf16.msra.mxu0 0
      %2500 = vmatprep.subr.bf16.mxu0 0
      %2501 = vmatpush1.bf16.msra.mxu0 0
      %2502 = vmatprep.subr.bf16.mxu0 0
      %2503 = vmatpush1.bf16.msra.mxu0 0
      %2504 = vmatprep.subr.bf16.mxu0 0
      %2505 = vmatpush1.bf16.msra.mxu0 0
      %2506 = vmatprep.subr.bf16.mxu0 0
      %2507 = vmatpush1.bf16.msra.mxu0 0
      %2508 = vmatprep.subr.bf16.mxu0 0
      %2509 = vmatpush1.bf16.msra.mxu0 0
      %2510 = vmatprep.subr.bf16.mxu0 0
      %2511 = vmatpush1.bf16.msra.mxu0 0
      %2512 = vmatprep.subr.bf16.mxu0 0
      %2513 = vmatpush1.bf16.msra.mxu0 0
      %2514 = vmatprep.subr.bf16.mxu0 0
      %2515 = vmatpush1.bf16.msra.mxu0 0
      %2516 = vmatprep.subr.bf16.mxu0 0
      %2517 = vmatpush1.bf16.msra.mxu0 0
      %2518 = vmatprep.subr.bf16.mxu0 0
      %2519 = vmatpush1.bf16.msra.mxu0 0
      %2520 = vmatprep.subr.bf16.mxu0 0
      %2521 = vmatpush1.bf16.msra.mxu0 0
      %2522 = vmatprep.subr.bf16.mxu0 0
      %2523 = vmatpush1.bf16.msra.mxu0 0
      %2524 = vmatprep.mubr.bf16.mxu0 0
      %2525 = vmatmul.mubr.bf16.gmra.mrb[0].mxu0 %v2487
      %v2526 = vpop.f32.mrb[0].mxu0
      %v2527 = vadd.f32 0.0, %v2526
      %v2528 = vpop.f32.mrb[0].mxu0
      %v2529 = vpop.f32.mrb[0].mxu0
      %v2530 = vpop.f32.mrb[0].mxu0
      %2531 = vdwg.mxu0
      %2533 = vrot.lane.b32.xlu0 %v2423, 120
      %v2534 = vpop.permute.xlu0 %2533
      %2535 = vrot.lane.b32.xlu0 %v2424, 120
      %v2536 = vpop.permute.xlu0 %2535
      %v2538 = vsel %vm414, %v2534, 0
      %v2541 = vsel %vm414, %v2536, 0
      %2543 = vmatprep.subr.bf16.mxu0 0
      %2544 = vmatpush1.bf16.xpose.msra.mxu0 %v2541
      %2545 = vmatprep.subr.bf16.mxu0 0
      %2546 = vmatpush1.bf16.xpose.msra.mxu0 0
      %2547 = vmatprep.subr.bf16.mxu0 0
      %2548 = vmatpush1.bf16.xpose.msra.mxu0 0
      %2549 = vmatprep.subr.bf16.mxu0 0
      %2550 = vmatpush1.bf16.xpose.msra.mxu0 0
      %2551 = vmatprep.subr.bf16.mxu0 0
      %2552 = vmatpush1.bf16.xpose.msra.mxu0 0
      %2553 = vmatprep.subr.bf16.mxu0 0
      %2554 = vmatpush1.bf16.xpose.msra.mxu0 0
      %2555 = vmatprep.subr.bf16.mxu0 0
      %2556 = vmatpush1.bf16.xpose.msra.mxu0 0
      %2557 = vmatprep.subr.bf16.mxu0 0
      %2558 = vmatpush1.bf16.xpose.msra.mxu0 0
      %2559 = vmatprep.subr.bf16.mxu0 0
      %2560 = vmatpush1.bf16.xpose.msra.mxu0 0
      %2561 = vmatprep.subr.bf16.mxu0 0
      %2562 = vmatpush1.bf16.xpose.msra.mxu0 0
      %2563 = vmatprep.subr.bf16.mxu0 0
      %2564 = vmatpush1.bf16.xpose.msra.mxu0 0
      %2565 = vmatprep.subr.bf16.mxu0 0
      %2566 = vmatpush1.bf16.xpose.msra.mxu0 0
      %2567 = vmatprep.subr.bf16.mxu0 0
      %2568 = vmatpush1.bf16.xpose.msra.mxu0 0
      %2569 = vmatprep.subr.bf16.mxu0 0
      %2570 = vmatpush1.bf16.xpose.msra.mxu0 0
      %2571 = vmatprep.subr.bf16.mxu0 0
      %2572 = vmatpush1.bf16.xpose.msra.mxu0 0
      %2573 = vmatprep.subr.bf16.mxu0 0
      %2574 = vmatpush1.bf16.xpose.msra.mxu0 0
      %2575 = vmatprep.mubr.bf16.mxu0 0
      %2576 = vmatmul.mubr.bf16.gmra.mrb[0].mxu0 %v2538
      %v2577 = vpop.f32.mrb[0].mxu0
      %v2578 = vadd.f32 0.0, %v2577
      %v2579 = vpop.f32.mrb[0].mxu0
      %v2580 = vpop.f32.mrb[0].mxu0
      %v2581 = vpop.f32.mrb[0].mxu0
      %2582 = vdwg.mxu0
      %v2583 = vsel %vm414, %v2578, -inf
      %2584 = vmax.xlane.f32.xlu0 %v2583
      %v2585 = vpop.xlane.xlu0 %2584
      %v2586 = vsub.f32 %v2578, %v2585
      %v2587 = vmul.f32 %v2586, 1.442695
      %v2588 = vpow.pop %v2587
      %v2589 = vsel %vm414, %v2588, 0.0
      %2590 = vadd.xlane.f32.xlu0 %v2589
      %v2591 = vpop.xlane.xlu0 %2590
      %v2592 = vrcp.pop %v2591
      %v2593 = vmul.f32 %v2588, %v2592
      %v2594 = vpack.c.bf16 %v2593, %v2593
      %2595 = vrot.lane.b32.xlu0 %v2424, 88
      %v2596 = vpop.permute.xlu0 %2595
      %v2598 = vsel %vm414, %v2594, 0
      %v2601 = vsel %vm478, %v2596, 0
      %2603 = vmatprep.subr.bf16.mxu0 0
      %2604 = vmatpush1.bf16.msra.mxu0 %v2601
      %2605 = vmatprep.subr.bf16.mxu0 0
      %2606 = vmatpush1.bf16.msra.mxu0 0
      %2607 = vmatprep.subr.bf16.mxu0 0
      %2608 = vmatpush1.bf16.msra.mxu0 0
      %2609 = vmatprep.subr.bf16.mxu0 0
      %2610 = vmatpush1.bf16.msra.mxu0 0
      %2611 = vmatprep.subr.bf16.mxu0 0
      %2612 = vmatpush1.bf16.msra.mxu0 0
      %2613 = vmatprep.subr.bf16.mxu0 0
      %2614 = vmatpush1.bf16.msra.mxu0 0
      %2615 = vmatprep.subr.bf16.mxu0 0
      %2616 = vmatpush1.bf16.msra.mxu0 0
      %2617 = vmatprep.subr.bf16.mxu0 0
      %2618 = vmatpush1.bf16.msra.mxu0 0
      %2619 = vmatprep.subr.bf16.mxu0 0
      %2620 = vmatpush1.bf16.msra.mxu0 0
      %2621 = vmatprep.subr.bf16.mxu0 0
      %2622 = vmatpush1.bf16.msra.mxu0 0
      %2623 = vmatprep.subr.bf16.mxu0 0
      %2624 = vmatpush1.bf16.msra.mxu0 0
      %2625 = vmatprep.subr.bf16.mxu0 0
      %2626 = vmatpush1.bf16.msra.mxu0 0
      %2627 = vmatprep.subr.bf16.mxu0 0
      %2628 = vmatpush1.bf16.msra.mxu0 0
      %2629 = vmatprep.subr.bf16.mxu0 0
      %2630 = vmatpush1.bf16.msra.mxu0 0
      %2631 = vmatprep.subr.bf16.mxu0 0
      %2632 = vmatpush1.bf16.msra.mxu0 0
      %2633 = vmatprep.subr.bf16.mxu0 0
      %2634 = vmatpush1.bf16.msra.mxu0 0
      %2635 = vmatprep.mubr.bf16.mxu0 0
      %2636 = vmatmul.mubr.bf16.gmra.mrb[0].mxu0 %v2598
      %v2637 = vpop.f32.mrb[0].mxu0
      %v2638 = vadd.f32 0.0, %v2637
      %v2639 = vpop.f32.mrb[0].mxu0
      %v2640 = vpop.f32.mrb[0].mxu0
      %v2641 = vpop.f32.mrb[0].mxu0
      %2642 = vdwg.mxu0
      %2643 = vrot.lane.b32.xlu0 %v2423, 112
      %v2644 = vpop.permute.xlu0 %2643
      %2645 = vrot.lane.b32.xlu0 %v2424, 112
      %v2646 = vpop.permute.xlu0 %2645
      %v2648 = vsel %vm414, %v2644, 0
      %v2651 = vsel %vm414, %v2646, 0
      %2653 = vmatprep.subr.bf16.mxu0 0
      %2654 = vmatpush1.bf16.xpose.msra.mxu0 %v2651
      %2655 = vmatprep.subr.bf16.mxu0 0
      %2656 = vmatpush1.bf16.xpose.msra.mxu0 0
      %2657 = vmatprep.subr.bf16.mxu0 0
      %2658 = vmatpush1.bf16.xpose.msra.mxu0 0
      %2659 = vmatprep.subr.bf16.mxu0 0
      %2660 = vmatpush1.bf16.xpose.msra.mxu0 0
      %2661 = vmatprep.subr.bf16.mxu0 0
      %2662 = vmatpush1.bf16.xpose.msra.mxu0 0
      %2663 = vmatprep.subr.bf16.mxu0 0
      %2664 = vmatpush1.bf16.xpose.msra.mxu0 0
      %2665 = vmatprep.subr.bf16.mxu0 0
      %2666 = vmatpush1.bf16.xpose.msra.mxu0 0
      %2667 = vmatprep.subr.bf16.mxu0 0
      %2668 = vmatpush1.bf16.xpose.msra.mxu0 0
      %2669 = vmatprep.subr.bf16.mxu0 0
      %2670 = vmatpush1.bf16.xpose.msra.mxu0 0
      %2671 = vmatprep.subr.bf16.mxu0 0
      %2672 = vmatpush1.bf16.xpose.msra.mxu0 0
      %2673 = vmatprep.subr.bf16.mxu0 0
      %2674 = vmatpush1.bf16.xpose.msra.mxu0 0
      %2675 = vmatprep.subr.bf16.mxu0 0
      %2676 = vmatpush1.bf16.xpose.msra.mxu0 0
      %2677 = vmatprep.subr.bf16.mxu0 0
      %2678 = vmatpush1.bf16.xpose.msra.mxu0 0
      %2679 = vmatprep.subr.bf16.mxu0 0
      %2680 = vmatpush1.bf16.xpose.msra.mxu0 0
      %2681 = vmatprep.subr.bf16.mxu0 0
      %2682 = vmatpush1.bf16.xpose.msra.mxu0 0
      %2683 = vmatprep.subr.bf16.mxu0 0
      %2684 = vmatpush1.bf16.xpose.msra.mxu0 0
      %2685 = vmatprep.mubr.bf16.mxu0 0
      %2686 = vmatmul.mubr.bf16.gmra.mrb[0].mxu0 %v2648
      %v2687 = vpop.f32.mrb[0].mxu0
      %v2688 = vadd.f32 0.0, %v2687
      %v2689 = vpop.f32.mrb[0].mxu0
      %v2690 = vpop.f32.mrb[0].mxu0
      %v2691 = vpop.f32.mrb[0].mxu0
      %2692 = vdwg.mxu0
      %v2693 = vsel %vm414, %v2688, -inf
      %2694 = vmax.xlane.f32.xlu0 %v2693
      %v2695 = vpop.xlane.xlu0 %2694
      %v2696 = vsub.f32 %v2688, %v2695
      %v2697 = vmul.f32 %v2696, 1.442695
      %v2698 = vpow.pop %v2697
      %v2699 = vsel %vm414, %v2698, 0.0
      %2700 = vadd.xlane.f32.xlu0 %v2699
      %v2701 = vpop.xlane.xlu0 %2700
      %v2702 = vrcp.pop %v2701
      %v2703 = vmul.f32 %v2698, %v2702
      %v2704 = vpack.c.bf16 %v2703, %v2703
      %2705 = vrot.lane.b32.xlu0 %v2424, 80
      %v2706 = vpop.permute.xlu0 %2705
      %v2708 = vsel %vm414, %v2704, 0
      %v2711 = vsel %vm478, %v2706, 0
      %2713 = vmatprep.subr.bf16.mxu0 0
      %2714 = vmatpush1.bf16.msra.mxu0 %v2711
      %2715 = vmatprep.subr.bf16.mxu0 0
      %2716 = vmatpush1.bf16.msra.mxu0 0
      %2717 = vmatprep.subr.bf16.mxu0 0
      %2718 = vmatpush1.bf16.msra.mxu0 0
      %2719 = vmatprep.subr.bf16.mxu0 0
      %2720 = vmatpush1.bf16.msra.mxu0 0
      %2721 = vmatprep.subr.bf16.mxu0 0
      %2722 = vmatpush1.bf16.msra.mxu0 0
      %2723 = vmatprep.subr.bf16.mxu0 0
      %2724 = vmatpush1.bf16.msra.mxu0 0
      %2725 = vmatprep.subr.bf16.mxu0 0
      %2726 = vmatpush1.bf16.msra.mxu0 0
      %2727 = vmatprep.subr.bf16.mxu0 0
      %2728 = vmatpush1.bf16.msra.mxu0 0
      %2729 = vmatprep.subr.bf16.mxu0 0
      %2730 = vmatpush1.bf16.msra.mxu0 0
      %2731 = vmatprep.subr.bf16.mxu0 0
      %2732 = vmatpush1.bf16.msra.mxu0 0
      %2733 = vmatprep.subr.bf16.mxu0 0
      %2734 = vmatpush1.bf16.msra.mxu0 0
      %2735 = vmatprep.subr.bf16.mxu0 0
      %2736 = vmatpush1.bf16.msra.mxu0 0
      %2737 = vmatprep.subr.bf16.mxu0 0
      %2738 = vmatpush1.bf16.msra.mxu0 0
      %2739 = vmatprep.subr.bf16.mxu0 0
      %2740 = vmatpush1.bf16.msra.mxu0 0
      %2741 = vmatprep.subr.bf16.mxu0 0
      %2742 = vmatpush1.bf16.msra.mxu0 0
      %2743 = vmatprep.subr.bf16.mxu0 0
      %2744 = vmatpush1.bf16.msra.mxu0 0
      %2745 = vmatprep.mubr.bf16.mxu0 0
      %2746 = vmatmul.mubr.bf16.gmra.mrb[0].mxu0 %v2708
      %v2747 = vpop.f32.mrb[0].mxu0
      %v2748 = vadd.f32 0.0, %v2747
      %v2749 = vpop.f32.mrb[0].mxu0
      %v2750 = vpop.f32.mrb[0].mxu0
      %v2751 = vpop.f32.mrb[0].mxu0
      %2752 = vdwg.mxu0
      %2753 = vrot.lane.b32.xlu0 %v2423, 104
      %v2754 = vpop.permute.xlu0 %2753
      %2755 = vrot.lane.b32.xlu0 %v2424, 104
      %v2756 = vpop.permute.xlu0 %2755
      %v2758 = vsel %vm414, %v2754, 0
      %v2761 = vsel %vm414, %v2756, 0
      %2763 = vmatprep.subr.bf16.mxu0 0
      %2764 = vmatpush1.bf16.xpose.msra.mxu0 %v2761
      %2765 = vmatprep.subr.bf16.mxu0 0
      %2766 = vmatpush1.bf16.xpose.msra.mxu0 0
      %2767 = vmatprep.subr.bf16.mxu0 0
      %2768 = vmatpush1.bf16.xpose.msra.mxu0 0
      %2769 = vmatprep.subr.bf16.mxu0 0
      %2770 = vmatpush1.bf16.xpose.msra.mxu0 0
      %2771 = vmatprep.subr.bf16.mxu0 0
      %2772 = vmatpush1.bf16.xpose.msra.mxu0 0
      %2773 = vmatprep.subr.bf16.mxu0 0
      %2774 = vmatpush1.bf16.xpose.msra.mxu0 0
      %2775 = vmatprep.subr.bf16.mxu0 0
      %2776 = vmatpush1.bf16.xpose.msra.mxu0 0
      %2777 = vmatprep.subr.bf16.mxu0 0
      %2778 = vmatpush1.bf16.xpose.msra.mxu0 0
      %2779 = vmatprep.subr.bf16.mxu0 0
      %2780 = vmatpush1.bf16.xpose.msra.mxu0 0
      %2781 = vmatprep.subr.bf16.mxu0 0
      %2782 = vmatpush1.bf16.xpose.msra.mxu0 0
      %2783 = vmatprep.subr.bf16.mxu0 0
      %2784 = vmatpush1.bf16.xpose.msra.mxu0 0
      %2785 = vmatprep.subr.bf16.mxu0 0
      %2786 = vmatpush1.bf16.xpose.msra.mxu0 0
      %2787 = vmatprep.subr.bf16.mxu0 0
      %2788 = vmatpush1.bf16.xpose.msra.mxu0 0
      %2789 = vmatprep.subr.bf16.mxu0 0
      %2790 = vmatpush1.bf16.xpose.msra.mxu0 0
      %2791 = vmatprep.subr.bf16.mxu0 0
      %2792 = vmatpush1.bf16.xpose.msra.mxu0 0
      %2793 = vmatprep.subr.bf16.mxu0 0
      %2794 = vmatpush1.bf16.xpose.msra.mxu0 0
      %2795 = vmatprep.mubr.bf16.mxu0 0
      %2796 = vmatmul.mubr.bf16.gmra.mrb[0].mxu0 %v2758
      %v2797 = vpop.f32.mrb[0].mxu0
      %v2798 = vadd.f32 0.0, %v2797
      %v2799 = vpop.f32.mrb[0].mxu0
      %v2800 = vpop.f32.mrb[0].mxu0
      %v2801 = vpop.f32.mrb[0].mxu0
      %2802 = vdwg.mxu0
      %v2803 = vsel %vm414, %v2798, -inf
      %2804 = vmax.xlane.f32.xlu0 %v2803
      %v2805 = vpop.xlane.xlu0 %2804
      %v2806 = vsub.f32 %v2798, %v2805
      %v2807 = vmul.f32 %v2806, 1.442695
      %v2808 = vpow.pop %v2807
      %v2809 = vsel %vm414, %v2808, 0.0
      %2810 = vadd.xlane.f32.xlu0 %v2809
      %v2811 = vpop.xlane.xlu0 %2810
      %v2812 = vrcp.pop %v2811
      %v2813 = vmul.f32 %v2808, %v2812
      %v2814 = vpack.c.bf16 %v2813, %v2813
      %2815 = vrot.lane.b32.xlu0 %v2424, 72
      %v2816 = vpop.permute.xlu0 %2815
      %v2818 = vsel %vm414, %v2814, 0
      %v2821 = vsel %vm478, %v2816, 0
      %2823 = vmatprep.subr.bf16.mxu0 0
      %2824 = vmatpush1.bf16.msra.mxu0 %v2821
      %2825 = vmatprep.subr.bf16.mxu0 0
      %2826 = vmatpush1.bf16.msra.mxu0 0
      %2827 = vmatprep.subr.bf16.mxu0 0
      %2828 = vmatpush1.bf16.msra.mxu0 0
      %2829 = vmatprep.subr.bf16.mxu0 0
      %2830 = vmatpush1.bf16.msra.mxu0 0
      %2831 = vmatprep.subr.bf16.mxu0 0
      %2832 = vmatpush1.bf16.msra.mxu0 0
      %2833 = vmatprep.subr.bf16.mxu0 0
      %2834 = vmatpush1.bf16.msra.mxu0 0
      %2835 = vmatprep.subr.bf16.mxu0 0
      %2836 = vmatpush1.bf16.msra.mxu0 0
      %2837 = vmatprep.subr.bf16.mxu0 0
      %2838 = vmatpush1.bf16.msra.mxu0 0
      %2839 = vmatprep.subr.bf16.mxu0 0
      %2840 = vmatpush1.bf16.msra.mxu0 0
      %2841 = vmatprep.subr.bf16.mxu0 0
      %2842 = vmatpush1.bf16.msra.mxu0 0
      %2843 = vmatprep.subr.bf16.mxu0 0
      %2844 = vmatpush1.bf16.msra.mxu0 0
      %2845 = vmatprep.subr.bf16.mxu0 0
      %2846 = vmatpush1.bf16.msra.mxu0 0
      %2847 = vmatprep.subr.bf16.mxu0 0
      %2848 = vmatpush1.bf16.msra.mxu0 0
      %2849 = vmatprep.subr.bf16.mxu0 0
      %2850 = vmatpush1.bf16.msra.mxu0 0
      %2851 = vmatprep.subr.bf16.mxu0 0
      %2852 = vmatpush1.bf16.msra.mxu0 0
      %2853 = vmatprep.subr.bf16.mxu0 0
      %2854 = vmatpush1.bf16.msra.mxu0 0
      %2855 = vmatprep.mubr.bf16.mxu0 0
      %2856 = vmatmul.mubr.bf16.gmra.mrb[0].mxu0 %v2818
      %v2857 = vpop.f32.mrb[0].mxu0
      %v2858 = vadd.f32 0.0, %v2857
      %v2859 = vpop.f32.mrb[0].mxu0
      %v2860 = vpop.f32.mrb[0].mxu0
      %v2861 = vpop.f32.mrb[0].mxu0
      %2862 = vdwg.mxu0
      %2864 = vrot.lane.b32.xlu0 %v2638, 8
      %v2865 = vpop.permute.xlu0 %2864
      %2868 = vrot.lane.b32.xlu0 %v2748, 16
      %v2869 = vpop.permute.xlu0 %2868
      %2872 = vrot.lane.b32.xlu0 %v2858, 24
      %v2873 = vpop.permute.xlu0 %2872
      %v2875 = vsel %vm414, %v2527, %v2865
      %v2876 = vsel %vm865, %v2875, %v2869
      %v2877 = vsel %vm867, %v2876, %v2873
      %v2878 = vpack.c.bf16 %v2877, %v2877
      %v2883 = vunpack.c.l.b16 %v1727
      %v2884 = vunpack.c.l.b16 %v1728
      %v2885 = vunpack.c.l.b16 %v1729
      %v2886 = vunpack.c.l.b16 %v1730
      %v2887 = vpack.c.b16 %v2884, %v2883
      %v2888 = vpack.c.b16 %v2886, %v2885
      %v2892 = vsel %vm340, %v2878, 0
      %2894 = vmatprep.subr.bf16.mxu0 0
      %2895 = vmatpush1.bf16.msra.mxu0 %v2887
      %2896 = vmatprep.subr.bf16.mxu0 0
      %2897 = vmatpush1.bf16.msra.mxu0 %v2888
      %2898 = vmatprep.subr.bf16.mxu0 0
      %2899 = vmatpush1.bf16.msra.mxu0 0
      %2900 = vmatprep.subr.bf16.mxu0 0
      %2901 = vmatpush1.bf16.msra.mxu0 0
      %2902 = vmatprep.subr.bf16.mxu0 0
      %2903 = vmatpush1.bf16.msra.mxu0 0
      %2904 = vmatprep.subr.bf16.mxu0 0
      %2905 = vmatpush1.bf16.msra.mxu0 0
      %2906 = vmatprep.subr.bf16.mxu0 0
      %2907 = vmatpush1.bf16.msra.mxu0 0
      %2908 = vmatprep.subr.bf16.mxu0 0
      %2909 = vmatpush1.bf16.msra.mxu0 0
      %2910 = vmatprep.subr.bf16.mxu0 0
      %2911 = vmatpush1.bf16.msra.mxu0 0
      %2912 = vmatprep.subr.bf16.mxu0 0
      %2913 = vmatpush1.bf16.msra.mxu0 0
      %2914 = vmatprep.subr.bf16.mxu0 0
      %2915 = vmatpush1.bf16.msra.mxu0 0
      %2916 = vmatprep.subr.bf16.mxu0 0
      %2917 = vmatpush1.bf16.msra.mxu0 0
      %2918 = vmatprep.subr.bf16.mxu0 0
      %2919 = vmatpush1.bf16.msra.mxu0 0
      %2920 = vmatprep.subr.bf16.mxu0 0
      %2921 = vmatpush1.bf16.msra.mxu0 0
      %2922 = vmatprep.subr.bf16.mxu0 0
      %2923 = vmatpush1.bf16.msra.mxu0 0
      %2924 = vmatprep.subr.bf16.mxu0 0
      %2925 = vmatpush1.bf16.msra.mxu0 0
      %2926 = vmatprep.mubr.bf16.mxu0 0
      %2927 = vmatmul.mubr.bf16.gmra.mrb[0].mxu0 %v2892
      %v2928 = vpop.f32.mrb[0].mxu0
      %v2929 = vadd.f32 0.0, %v2928
      %v2930 = vpop.f32.mrb[0].mxu0
      %v2931 = vpop.f32.mrb[0].mxu0
      %v2932 = vpop.f32.mrb[0].mxu0
      %2933 = vdwg.mxu0
      %v2934 = vadd.f32 %v2311, %v2929
      %s2935 = scalar_lea.vmem %s6, 16
      %v2936 = vld [vmem:[%s2935] sm:$0xf]
      %v2937 = vld [vmem:[%s2935 + $0x4] sm:$0xf]
      %v2938 = vld [vmem:[%s2935 + $0x8] sm:$0xf]
      %v2939 = vld [vmem:[%s2935 + $0xc] sm:$0xf]
      %s2940 = scalar_lea.vmem %s7, 32
      %v2941 = vld [vmem:[%s2940] sm:$0xf]
      %v2942 = vld [vmem:[%s2940 + $0x4] sm:$0xf]
      %v2943 = vld [vmem:[%s2940 + $0x8] sm:$0xf]
      %v2944 = vld [vmem:[%s2940 + $0xc] sm:$0xf]
      %v2945 = vld [vmem:[%s2940 + $0x10] sm:$0xf]
      %v2946 = vld [vmem:[%s2940 + $0x14] sm:$0xf]
      %v2947 = vld [vmem:[%s2940 + $0x18] sm:$0xf]
      %v2948 = vld [vmem:[%s2940 + $0x1c] sm:$0xf]
      %v2949 = vmul.f32 %v2934, %v2934
      %v2950 = vsel %vm340, %v2949, 0.0
      %2951 = vadd.xlane.f32.xlu0 %v2950
      %v2952 = vpop.xlane.xlu0 %2951
      %v2953 = vmul.f32 %v2952, %v344
      %v2954 = vadd.f32 %v2953, 1e-06
      %v2955 = vrsqrt.pop %v2954
      %v2956 = vmul.f32 %v2934, %v2955
      %v2957 = vlaneseq
      %v2958 = vshrl.u32 %v2957, 7
      %v2959 = vsub.s32 5, %v2958
      %v2960 = vrot.slane %v326, %v2959
      %v2961 = vmul.f32 %v2956, %v2960
      %v2962 = vpack.c.bf16 %v2961, %v2961
      %v2967 = vunpack.c.l.b16 %v2936
      %v2968 = vunpack.c.l.b16 %v2937
      %v2969 = vunpack.c.l.b16 %v2938
      %v2970 = vunpack.c.l.b16 %v2939
      %v2971 = vpack.c.b16 %v2968, %v2967
      %v2972 = vpack.c.b16 %v2970, %v2969
      %v2976 = vsel %vm340, %v2962, 0
      %2978 = vmatprep.subr.bf16.mxu0 0
      %2979 = vmatpush1.bf16.msra.mxu0 %v2971
      %2980 = vmatprep.subr.bf16.mxu0 0
      %2981 = vmatpush1.bf16.msra.mxu0 %v2972
      %2982 = vmatprep.subr.bf16.mxu0 0
      %2983 = vmatpush1.bf16.msra.mxu0 0
      %2984 = vmatprep.subr.bf16.mxu0 0
      %2985 = vmatpush1.bf16.msra.mxu0 0
      %2986 = vmatprep.subr.bf16.mxu0 0
      %2987 = vmatpush1.bf16.msra.mxu0 0
      %2988 = vmatprep.subr.bf16.mxu0 0
      %2989 = vmatpush1.bf16.msra.mxu0 0
      %2990 = vmatprep.subr.bf16.mxu0 0
      %2991 = vmatpush1.bf16.msra.mxu0 0
      %2992 = vmatprep.subr.bf16.mxu0 0
      %2993 = vmatpush1.bf16.msra.mxu0 0
      %2994 = vmatprep.subr.bf16.mxu0 0
      %2995 = vmatpush1.bf16.msra.mxu0 0
      %2996 = vmatprep.subr.bf16.mxu0 0
      %2997 = vmatpush1.bf16.msra.mxu0 0
      %2998 = vmatprep.subr.bf16.mxu0 0
      %2999 = vmatpush1.bf16.msra.mxu0 0
      %3000 = vmatprep.subr.bf16.mxu0 0
      %3001 = vmatpush1.bf16.msra.mxu0 0
      %3002 = vmatprep.subr.bf16.mxu0 0
      %3003 = vmatpush1.bf16.msra.mxu0 0
      %3004 = vmatprep.subr.bf16.mxu0 0
      %3005 = vmatpush1.bf16.msra.mxu0 0
      %3006 = vmatprep.subr.bf16.mxu0 0
      %3007 = vmatpush1.bf16.msra.mxu0 0
      %3008 = vmatprep.subr.bf16.mxu0 0
      %3009 = vmatpush1.bf16.msra.mxu0 0
      %3010 = vmatprep.mubr.bf16.mxu0 0
      %3011 = vmatmul.mubr.bf16.gmra.mrb[0].mxu0 %v2976
      %v3012 = vpop.f32.mrb[0].mxu0
      %v3013 = vadd.f32 0.0, %v3012
      %v3014 = vpop.f32.mrb[0].mxu0
      %v3015 = vpop.f32.mrb[0].mxu0
      %v3016 = vpop.f32.mrb[0].mxu0
      %3017 = vdwg.mxu0
      %v3018 = vmul.f32 %v3013, %v3013
      %v3019 = vmul.f32 %v3013, %v3018
      %v3020 = vmul.f32 %v3019, 0.044715
      %v3021 = vadd.f32 %v3013, %v3020
      %v3022 = vmul.f32 %v3021, 0.7978846
      %v3023 = vtanh.pop %v3022
      %v3024 = vadd.f32 %v3023, 1.0
      %v3025 = vmul.f32 %v3024, 0.5
      %v3026 = vmul.f32 %v3013, %v3025
      %3028 = vrot.lane.b32.xlu0 %v3013, 64
      %v3029 = vpop.permute.xlu0 %3028
      %v3031 = vmul.f32 %v3026, %v3029
      %v3032 = vpack.c.bf16 %v3031, %v3031
      %v3041 = vunpack.c.l.b16 %v2941
      %v3042 = vunpack.c.l.b16 %v2942
      %v3043 = vunpack.c.l.b16 %v2943
      %v3044 = vunpack.c.l.b16 %v2944
      %v3045 = vunpack.c.l.b16 %v2945
      %v3046 = vunpack.c.l.b16 %v2946
      %v3047 = vunpack.c.l.b16 %v2947
      %v3048 = vunpack.c.l.b16 %v2948
      %v3049 = vpack.c.b16 %v3042, %v3041
      %v3050 = vpack.c.b16 %v3044, %v3043
      %v3051 = vpack.c.b16 %v3046, %v3045
      %v3052 = vpack.c.b16 %v3048, %v3047
      %v3058 = vsel %vm1672, %v3032, 0
      %3060 = vmatprep.subr.bf16.mxu0 0
      %3061 = vmatpush1.bf16.msra.mxu0 %v3049
      %3062 = vmatprep.subr.bf16.mxu0 0
      %3063 = vmatpush1.bf16.msra.mxu0 %v3050
      %3064 = vmatprep.subr.bf16.mxu0 0
      %3065 = vmatpush1.bf16.msra.mxu0 %v3051
      %3066 = vmatprep.subr.bf16.mxu0 0
      %3067 = vmatpush1.bf16.msra.mxu0 %v3052
      %3068 = vmatprep.subr.bf16.mxu0 0
      %3069 = vmatpush1.bf16.msra.mxu0 0
      %3070 = vmatprep.subr.bf16.mxu0 0
      %3071 = vmatpush1.bf16.msra.mxu0 0
      %3072 = vmatprep.subr.bf16.mxu0 0
      %3073 = vmatpush1.bf16.msra.mxu0 0
      %3074 = vmatprep.subr.bf16.mxu0 0
      %3075 = vmatpush1.bf16.msra.mxu0 0
      %3076 = vmatprep.subr.bf16.mxu0 0
      %3077 = vmatpush1.bf16.msra.mxu0 0
      %3078 = vmatprep.subr.bf16.mxu0 0
      %3079 = vmatpush1.bf16.msra.mxu0 0
      %3080 = vmatprep.subr.bf16.mxu0 0
      %3081 = vmatpush1.bf16.msra.mxu0 0
      %3082 = vmatprep.subr.bf16.mxu0 0
      %3083 = vmatpush1.bf16.msra.mxu0 0
      %3084 = vmatprep.subr.bf16.mxu0 0
      %3085 = vmatpush1.bf16.msra.mxu0 0
      %3086 = vmatprep.subr.bf16.mxu0 0
      %3087 = vmatpush1.bf16.msra.mxu0 0
      %3088 = vmatprep.subr.bf16.mxu0 0
      %3089 = vmatpush1.bf16.msra.mxu0 0
      %3090 = vmatprep.subr.bf16.mxu0 0
      %3091 = vmatpush1.bf16.msra.mxu0 0
      %3092 = vmatprep.mubr.bf16.mxu0 0
      %3093 = vmatmul.mubr.bf16.gmra.mrb[0].mxu0 %v3058
      %v3094 = vpop.f32.mrb[0].mxu0
      %v3095 = vadd.f32 0.0, %v3094
      %v3096 = vpop.f32.mrb[0].mxu0
      %v3097 = vpop.f32.mrb[0].mxu0
      %v3098 = vpop.f32.mrb[0].mxu0
      %3099 = vdwg.mxu0
      %v3100 = vadd.f32 %v2934, %v3095
      %v3101 = vmul.f32 %v3100, %v3100
      %v3102 = vsel %vm340, %v3101, 0.0
      %3103 = vadd.xlane.f32.xlu0 %v3102
      %v3104 = vpop.xlane.xlu0 %3103
      %v3105 = vmul.f32 %v3104, %v344
      %v3106 = vadd.f32 %v3105, 1e-06
      %v3107 = vrsqrt.pop %v3106
      %v3108 = vmul.f32 %v3100, %v3107
      %v3109 = vlaneseq
      %v3110 = vshrl.u32 %v3109, 7
      %v3111 = vsub.s32 6, %v3110
      %v3112 = vrot.slane %v326, %v3111
      %v3113 = vmul.f32 %v3108, %v3112
      %3114 = vst.msk [vmem:[%s317] sm:$0xff] %vm340, %v3113
      %p3115 = scmp.lt.s32.totalorder %s19, 1
      %s3116 = scalar_select %p3115, %s19, 1
      %s3117 = smul.addr %s3116, 8
      %s3118 = scalar_lea.vmem %s8, %s3117
      // Predicated region
      $region53: #{mt5_forward.4} parent=51 // pred_check
        %p3119 = pneg %p215
      $region54: #{mt5_forward.4} parent=51 // pred_check_branch
        %3121 = sbr.rel (%p3119) target = $region56
      $region55: #{mt5_forward.4} parent=51 // pred_region
        _
      $region56: #{mt5_forward.4} parent=51 // pred_fallthru
        _
    $region52: #{mt5_forward.4} parent=5 // pred_fallthru
      _
    %p3122 = scmp.le.s32.totalorder 2, %s14
    // Predicated region
    $region57: #{mt5_forward.4} parent=5 // pred_check
      %p3123 = pneg %p3122
    $region58: #{mt5_forward.4} parent=5 // pred_check_branch
      %3125 = sbr.rel (%p3123) target = $region60
    $region59: #{mt5_forward.4} parent=5 // pred_region
      %s3126 = ssub.s32 %s14, 2
      // Predicated region
      $region61: #{mt5_forward.4} parent=59 // pred_check
        %p3127 = pneg %p221
      $region62: #{mt5_forward.4} parent=59 // pred_check_branch
        %3129 = sbr.rel (%p3127) target = $region64
      $region63: #{mt5_forward.4} parent=59 // pred_region
        %p3130 = scmp.lt.s32.totalorder %s20, 1
        %s3131 = scalar_select %p3130, %s20, 1
        %s3132 = smul.addr %s3131, 8
        %s3133 = scalar_lea.vmem %s8, %s3132
      $region64: #{mt5_forward.4} parent=59 // pred_fallthru
        _
    $region60: #{mt5_forward.4} parent=5 // pred_fallthru
      _
  $region6: #{mt5_forward.4} parent=0 // loop_footer
    %s18 = sadd.s32 1, %s14
  $region7: #{mt5_forward.4} parent=0 // loop_footer_branch
    %13 = sbr.rel target = $region3
  $region8: #{mt5_forward.4} parent=0 // loop_exit
    _

</llo_original>
